<compile_context>
chip_gen: v6e
topology: v6e:2x2x1
jax: 0.10.0
libtpu: 0.0.40
codegen_flags: <defaults>
</compile_context>

<pallas_src>
import functools
import math

import jax
import jax.numpy as jnp
from jax.experimental import pallas as pl
from jax.experimental.pallas import tpu as pltpu


# ----------------------------------------------------------------------------------
# tiling helper
# ----------------------------------------------------------------------------------
def _pick_tile(dim, max_t, align):
    """Largest legal tile <= max_t: either the full dim, or an `align`-multiple
    that divides the dim evenly (keeps BlockSpecs (8,128)-legal)."""
    if dim <= max_t:
        return dim
    t = (max_t // align) * align
    while t >= align:
        if dim % t == 0:
            return t
        t -= align
    return dim


# ----------------------------------------------------------------------------------
# Pallas kernels
# ----------------------------------------------------------------------------------
def dense_kernel(x_ref, w_ref, b_ref, o_ref, acc_ref, *, act):
    k = pl.program_id(2)

    @pl.when(k == 0)
    def _():
        acc_ref[...] = jnp.zeros_like(acc_ref)

    acc_ref[...] += jnp.dot(x_ref[...], w_ref[...],
                            preferred_element_type=jnp.float32)

    @pl.when(k == pl.num_programs(2) - 1)
    def _():
        y = acc_ref[...] + b_ref[...]
        if act == "gelu":
            # TODO(synk): HF BERT default is exact (erf) GELU; tanh approximation
            # kept here for robust TPU lowering (small systematic difference).
            y = jax.nn.gelu(y, approximate=True)
        o_ref[...] = y.astype(o_ref.dtype)


def dense2_kernel(xa_ref, xb_ref, wa_ref, wb_ref, b_ref, o_ref, acc_ref, *, act):
    # y = concat(xa, xb) @ concat(wa, wb) + b   (concat fused away)
    k = pl.program_id(2)

    @pl.when(k == 0)
    def _():
        acc_ref[...] = jnp.zeros_like(acc_ref)

    acc_ref[...] += (jnp.dot(xa_ref[...], wa_ref[...], preferred_element_type=jnp.float32)
                     + jnp.dot(xb_ref[...], wb_ref[...], preferred_element_type=jnp.float32))

    @pl.when(k == pl.num_programs(2) - 1)
    def _():
        y = acc_ref[...] + b_ref[...]
        if act == "gelu":
            y = jax.nn.gelu(y, approximate=True)
        o_ref[...] = y.astype(o_ref.dtype)


def layernorm_kernel(x_ref, g_ref, b_ref, o_ref, *, eps):
    x = x_ref[...].astype(jnp.float32)
    mu = jnp.mean(x, axis=-1, keepdims=True)
    var = jnp.mean((x - mu) * (x - mu), axis=-1, keepdims=True)
    o_ref[...] = ((x - mu) * jax.lax.rsqrt(var + eps) * g_ref[...]
                  + b_ref[...]).astype(o_ref.dtype)


def add_layernorm_kernel(x_ref, r_ref, g_ref, b_ref, o_ref, *, eps):
    # residual add fused into the LN pass (saves one HBM read+write per residual)
    x = x_ref[...].astype(jnp.float32) + r_ref[...].astype(jnp.float32)
    mu = jnp.mean(x, axis=-1, keepdims=True)
    var = jnp.mean((x - mu) * (x - mu), axis=-1, keepdims=True)
    o_ref[...] = ((x - mu) * jax.lax.rsqrt(var + eps) * g_ref[...]
                  + b_ref[...]).astype(o_ref.dtype)


def attn_kernel(mask_ref, qkv_ref, o_ref, *, nheads, scale):
    # One batch element per grid step.  qkv_ref holds the fused (S, 3H) bf16
    # projection; head split, softmax and the hqd->qhd re-layout all stay in
    # VMEM.  Heads are processed sequentially so only one SxS score matrix is
    # live at a time (keeps the working set small on v7x's 64 MiB VMEM).
    # TODO(synk): for long sequences (S >= 512) tile over (head, q_block) with
    # an online-softmax flash pattern instead of the full SxS matrix per head.
    x = qkv_ref[0]                                   # (S, 3H)  bf16
    m = mask_ref[0]                                  # (1, S)   f32 additive mask
    S, H3 = x.shape
    H = H3 // 3
    Dh = H // nheads

    outs = []
    for h in range(nheads):
        qh = x[:, h * Dh:(h + 1) * Dh]               # (S, Dh)
        kh = x[:, H + h * Dh:H + (h + 1) * Dh]
        vh = x[:, 2 * H + h * Dh:2 * H + (h + 1) * Dh]
        s = jax.lax.dot_general(qh, kh, (((1,), (1,)), ((), ())),
                                preferred_element_type=jnp.float32) * scale + m
        s_max = jnp.max(s, axis=-1, keepdims=True)
        p = jnp.exp(s - s_max)
        p = p * pl.reciprocal(jnp.sum(p, axis=-1, keepdims=True), approx=True)
        outs.append(jnp.dot(p.astype(vh.dtype), vh,
                            preferred_element_type=jnp.float32))
    # single lane-dense (S, H) bf16 store; next dense consumes it directly
    o_ref[0] = jnp.concatenate(outs, axis=-1).astype(o_ref.dtype)


def bilstm_kernel(gxf_ref, gxb_ref, whf_ref, whb_ref, of_ref, ob_ref,
                  hf, cf, hb, cb, *, t_blk):
    # grid axis 0 = time blocks (sequential).  Each grid step processes t_blk
    # unrolled timesteps for BOTH directions; h/c are carried in vregs inside
    # the block and in VMEM scratch across blocks.  The x @ W_ih projection
    # (+biases) is precomputed outside (gx*), so per-step work is only the
    # small recurrent dot + VPU gates.
    # TODO(synk): hold W_hh resident on the MXU across the block via
    # pltpu.matmul_push_rhs / matmul_acc_lhs for a further modest win.
    blk = pl.program_id(0)

    @pl.when(blk == 0)
    def _():
        hf[...] = jnp.zeros_like(hf)
        cf[...] = jnp.zeros_like(cf)
        hb[...] = jnp.zeros_like(hb)
        cb[...] = jnp.zeros_like(cb)

    Hd = hf.shape[1]
    whf = whf_ref[...]
    whb = whb_ref[...]

    def cell(gx, whh, h, c):
        gates = gx.astype(jnp.float32) + jnp.dot(h.astype(jnp.bfloat16), whh,
                                                 preferred_element_type=jnp.float32)
        i_g = jax.nn.sigmoid(gates[:, 0:Hd])
        f_g = jax.nn.sigmoid(gates[:, Hd:2 * Hd])
        g_g = jnp.tanh(gates[:, 2 * Hd:3 * Hd])
        o_g = jax.nn.sigmoid(gates[:, 3 * Hd:4 * Hd])
        c_new = f_g * c + i_g * g_g
        h_new = o_g * jnp.tanh(c_new)
        return h_new, c_new

    hf_v, cf_v = hf[...], cf[...]
    hb_v, cb_v = hb[...], cb[...]
    for j in range(t_blk):                           # unrolled local timesteps
        # forward direction: local time j
        hf_v, cf_v = cell(gxf_ref[:, j, :], whf, hf_v, cf_v)
        of_ref[:, j, :] = hf_v.astype(of_ref.dtype)
        # backward direction: local time t_blk-1-j (its block is time-mirrored)
        jb = t_blk - 1 - j
        hb_v, cb_v = cell(gxb_ref[:, jb, :], whb, hb_v, cb_v)
        ob_ref[:, jb, :] = hb_v.astype(ob_ref.dtype)
    hf[...], cf[...] = hf_v, cf_v
    hb[...], cb[...] = hb_v, cb_v


def nll_kernel(logits_ref, labels_ref, mask_ref, out_ref):
    # masked token NLL; loss-sum and active-count accumulated into a single
    # lane-dense (1,128) output block (lane 0 = loss sum, lane 1 = count).
    i = pl.program_id(0)

    @pl.when(i == 0)
    def _():
        out_ref[...] = jnp.zeros_like(out_ref)

    z = logits_ref[...]                                       # (tm, C_pad) f32
    m = jnp.max(z, axis=-1, keepdims=True)
    lse = jnp.log(jnp.sum(jnp.exp(z - m), axis=-1, keepdims=True)) + m
    cls = jax.lax.broadcasted_iota(jnp.int32, z.shape, 1)
    picked = jnp.sum(jnp.where(cls == labels_ref[...], z, 0.0),
                     axis=-1, keepdims=True)
    per = (lse - picked) * mask_ref[...]                      # (tm, 1)
    lsum = jnp.sum(per)
    csum = jnp.sum(mask_ref[...])
    lane = jax.lax.broadcasted_iota(jnp.int32, out_ref.shape, 1)
    out_ref[...] += jnp.where(lane == 0, lsum, 0.0) + jnp.where(lane == 1, csum, 0.0)


# ----------------------------------------------------------------------------------
# pallas_call wrappers
# ----------------------------------------------------------------------------------
def dense(x, w, b, act=None, out_dtype=jnp.bfloat16, *, tm=256, tn=256, tk=512):
    """Tiled matmul: bf16 MXU operands, f32 accumulation, bias(+gelu) epilogue.
    x and w are expected to already be bf16 (no per-call converts)."""
    M, K = x.shape
    N = w.shape[1]
    tm = _pick_tile(M, tm, 16)        # bf16 sublane packing; ideally 128/256
    tn = _pick_tile(N, tn, 128)
    tk = _pick_tile(K, tk, 128)
    grid = (M // tm, N // tn, K // tk)
    return pl.pallas_call(
        functools.partial(dense_kernel, act=act),
        grid=grid,
        in_specs=[
            pl.BlockSpec((tm, tk), lambda i, j, k: (i, k)),
            pl.BlockSpec((tk, tn), lambda i, j, k: (k, j)),
            pl.BlockSpec((1, tn), lambda i, j, k: (0, j)),
        ],
        out_specs=pl.BlockSpec((tm, tn), lambda i, j, k: (i, j)),
        out_shape=jax.ShapeDtypeStruct((M, N), out_dtype),
        scratch_shapes=[pltpu.VMEM((tm, tn), jnp.float32)],
        compiler_params=pltpu.CompilerParams(
            dimension_semantics=("parallel", "parallel", "arbitrary")),
    )(x, w, b.reshape(1, N))


def dense2(xa, xb, wa, wb, b, act=None, out_dtype=jnp.bfloat16,
           *, tm=256, tn=256, tk=512):
    """y = concat(xa, xb, axis=1) @ concat(wa, wb, axis=0) + b, without ever
    materializing the concatenation in HBM (fuses the BiLSTM fwd/bwd merge)."""
    M, Ka = xa.shape
    assert xb.shape == (M, Ka) and wa.shape[0] == Ka and wb.shape[0] == Ka
    N = wa.shape[1]
    tm = _pick_tile(M, tm, 16)
    tn = _pick_tile(N, tn, 128)
    tk = _pick_tile(Ka, tk, 128)
    grid = (M // tm, N // tn, Ka // tk)
    return pl.pallas_call(
        functools.partial(dense2_kernel, act=act),
        grid=grid,
        in_specs=[
            pl.BlockSpec((tm, tk), lambda i, j, k: (i, k)),
            pl.BlockSpec((tm, tk), lambda i, j, k: (i, k)),
            pl.BlockSpec((tk, tn), lambda i, j, k: (k, j)),
            pl.BlockSpec((tk, tn), lambda i, j, k: (k, j)),
            pl.BlockSpec((1, tn), lambda i, j, k: (0, j)),
        ],
        out_specs=pl.BlockSpec((tm, tn), lambda i, j, k: (i, j)),
        out_shape=jax.ShapeDtypeStruct((M, N), out_dtype),
        scratch_shapes=[pltpu.VMEM((tm, tn), jnp.float32)],
        compiler_params=pltpu.CompilerParams(
            dimension_semantics=("parallel", "parallel", "arbitrary")),
    )(xa, xb, wa, wb, b.reshape(1, N))


def layernorm(x, g, b, residual=None, eps=1e-12, tm=512):
    """LN (optionally fused residual add); f32 stats, bf16 output."""
    M, H = x.shape
    tm = _pick_tile(M, tm, 8)
    row = pl.BlockSpec((tm, H), lambda i: (i, 0))
    vec = pl.BlockSpec((1, H), lambda i: (0, 0))
    g2, b2 = g.reshape(1, H), b.reshape(1, H)
    if residual is None:
        kernel = functools.partial(layernorm_kernel, eps=eps)
        ins, specs = (x, g2, b2), [row, vec, vec]
    else:
        kernel = functools.partial(add_layernorm_kernel, eps=eps)
        ins, specs = (x, residual, g2, b2), [row, row, vec, vec]
    return pl.pallas_call(
        kernel,
        grid=(M // tm,),
        in_specs=specs,
        out_specs=row,
        out_shape=jax.ShapeDtypeStruct((M, H), jnp.bfloat16),
        compiler_params=pltpu.CompilerParams(dimension_semantics=("parallel",)),
    )(*ins)


def attention(addmask, qkv_bsd, nheads, scale):
    """Self-attention over the fused (B, S, 3H) bf16 QKV tensor -> (B, S, H) bf16."""
    B, S, H3 = qkv_bsd.shape
    H = H3 // 3
    return pl.pallas_call(
        functools.partial(attn_kernel, nheads=nheads, scale=scale),
        grid=(B,),
        in_specs=[
            pl.BlockSpec((1, 1, S), lambda b: (b, 0, 0)),
            pl.BlockSpec((1, S, H3), lambda b: (b, 0, 0)),
        ],
        out_specs=pl.BlockSpec((1, S, H), lambda b: (b, 0, 0)),
        out_shape=jax.ShapeDtypeStruct((B, S, H), jnp.bfloat16),
        compiler_params=pltpu.CompilerParams(dimension_semantics=("parallel",)),
    )(addmask, qkv_bsd)


def bilstm_layer(gx_f, gx_b, whh_f, whh_b):
    """Fused fwd+bwd LSTM recurrence over precomputed input projections.
    gx_*: (B, S, 4Hd) bf16 batch-major (x @ W_ih + b_ih + b_hh); whh_*: (Hd, 4Hd) bf16."""
    B, S, H4 = gx_f.shape
    Hd = H4 // 4
    t_blk = _pick_tile(S, 16, 8)      # timesteps per grid step (amortizes overhead)
    nb = S // t_blk
    gsp_f = pl.BlockSpec((B, t_blk, H4), lambda i: (0, i, 0))
    gsp_b = pl.BlockSpec((B, t_blk, H4), lambda i: (0, nb - 1 - i, 0))
    wsp = pl.BlockSpec((Hd, H4), lambda i: (0, 0))
    osp_f = pl.BlockSpec((B, t_blk, Hd), lambda i: (0, i, 0))
    osp_b = pl.BlockSpec((B, t_blk, Hd), lambda i: (0, nb - 1 - i, 0))
    out_f, out_b = pl.pallas_call(
        functools.partial(bilstm_kernel, t_blk=t_blk),
        grid=(nb,),
        in_specs=[gsp_f, gsp_b, wsp, wsp],
        out_specs=(osp_f, osp_b),
        out_shape=(jax.ShapeDtypeStruct((B, S, Hd), jnp.bfloat16),
                   jax.ShapeDtypeStruct((B, S, Hd), jnp.bfloat16)),
        scratch_shapes=[pltpu.VMEM((B, Hd), jnp.float32)] * 4,   # h_f, c_f, h_b, c_b
        compiler_params=pltpu.CompilerParams(dimension_semantics=("arbitrary",)),
    )(gx_f, gx_b, whh_f, whh_b)
    return out_f, out_b


def token_nll(logits_pad, labels, active_mask, tm=512):
    """Returns a (1,128) accumulator: [0,0] = sum of masked NLL, [0,1] = active count."""
    M, Cp = logits_pad.shape
    tm = _pick_tile(M, tm, 8)
    return pl.pallas_call(
        nll_kernel,
        grid=(M // tm,),
        in_specs=[pl.BlockSpec((tm, Cp), lambda i: (i, 0)),
                  pl.BlockSpec((tm, 1), lambda i: (i, 0)),
                  pl.BlockSpec((tm, 1), lambda i: (i, 0))],
        out_specs=pl.BlockSpec((1, 128), lambda i: (0, 0)),
        out_shape=jax.ShapeDtypeStruct((1, 128), jnp.float32),
        compiler_params=pltpu.CompilerParams(dimension_semantics=("arbitrary",)),
    )(logits_pad, labels, active_mask)


# ----------------------------------------------------------------------------------
# Model forward (glue in plain JAX, compute in Pallas kernels above)
# ----------------------------------------------------------------------------------
def bert_encoder(p, input_ids, attention_mask, cfg):
    B, S = input_ids.shape
    H, nh = cfg["hidden"], cfg["nheads"]
    Dh = H // nh
    scale = 1.0 / math.sqrt(Dh)

    # TODO(synk): token_type_ids assumed all-zero (type embedding row 0).
    emb = (p["word_emb"][input_ids]
           + p["pos_emb"][None, :S, :]
           + p["type_emb"][0][None, None, :])
    x2 = layernorm(emb.reshape(B * S, H), p["emb_ln_g"], p["emb_ln_b"])   # bf16

    addmask = ((1.0 - attention_mask.astype(jnp.float32)) * -1e9).reshape(B, 1, S)

    for lp in p["layers"]:
        # fused Q/K/V projection: one tiled MXU pass with N = 3H, bf16 out
        qkv = dense(x2, lp["w_qkv"], lp["b_qkv"])                     # (B*S, 3H)
        ctx = attention(addmask, qkv.reshape(B, S, 3 * H), nh, scale)  # (B, S, H) bf16
        attn_out = dense(ctx.reshape(B * S, H), lp["wo"], lp["bo"])
        x2 = layernorm(attn_out, lp["ln1_g"], lp["ln1_b"], residual=x2)   # fused add+LN
        # feed-forward (bias+gelu fused in dense epilogue), all bf16 activations
        ffn = dense(dense(x2, lp["w1"], lp["b1"], act="gelu"), lp["w2"], lp["b2"])
        x2 = layernorm(ffn, lp["ln2_g"], lp["ln2_b"], residual=x2)        # fused add+LN

    return x2                                                          # (B*S, H) bf16


def bilstm(x_bsh, lstm_params):
    """Bidirectional multi-layer LSTM, batch-major throughout (no transposes).
    Returns the final layer's forward/backward hidden streams separately; the
    classifier fuses the concat via dense2."""
    B, S, I = x_bsh.shape
    xa = x_bsh.reshape(B * S, I)
    xb = None
    for layer in lstm_params:
        if xb is None:
            gx_f = dense(xa, layer["fwd"]["w_ih_parts"][0], layer["fwd"]["bias"])
            gx_b = dense(xa, layer["bwd"]["w_ih_parts"][0], layer["bwd"]["bias"])
        else:
            fwa, fwb = layer["fwd"]["w_ih_parts"]
            bwa, bwb = layer["bwd"]["w_ih_parts"]
            gx_f = dense2(xa, xb, fwa, fwb, layer["fwd"]["bias"])
            gx_b = dense2(xa, xb, bwa, bwb, layer["bwd"]["bias"])
        H4 = gx_f.shape[-1]
        Hd = H4 // 4
        out_f, out_b = bilstm_layer(gx_f.reshape(B, S, H4), gx_b.reshape(B, S, H4),
                                    layer["fwd"]["w_hh"], layer["bwd"]["w_hh"])
        xa = out_f.reshape(B * S, Hd)
        xb = out_b.reshape(B * S, Hd)
    return xa, xb                                                    # bf16 (B*S, Hd) each


def bert_lstm_forward(params, input_ids, attention_mask, labels, cfg):
    B, S = input_ids.shape
    H = cfg["hidden"]
    seq2d = bert_encoder(params["bert"], input_ids, attention_mask, cfg)  # (B*S, H) bf16

    # nn.Dropout(p=0.1): identity in eval mode.
    # TODO(synk): training-mode dropout (random masking) not implemented.

    out_f2d, out_b2d = bilstm(seq2d.reshape(B, S, H), params["lstm"])

    C = cfg["num_labels"]
    # classifier: lane-padded classes (zero weights / -1e9 bias) keep the
    # logits + NLL tiles lane-dense; concat(fwd,bwd) fused into dense2.
    logits_pad = dense2(out_f2d, out_b2d, params["cls_w_a"], params["cls_w_b"],
                        params["cls_b_pad"], out_dtype=jnp.float32)       # (B*S, C_pad)
    logits = logits_pad[:, :C].reshape(B, S, C)

    loss = None
    if labels is not None:
        # Matches the torch reference exactly: labels==-100 are remapped to 0
        # BEFORE the ignore logic, so only attention_mask==0 positions are
        # excluded; denominator = number of mask==1 positions.
        labels_fixed = jnp.where(labels == -100, 0, labels).reshape(B * S, 1).astype(jnp.int32)
        active = (attention_mask.reshape(B * S, 1) == 1).astype(jnp.float32)
        acc = token_nll(logits_pad, labels_fixed, active)
        loss = acc[0, 0] / acc[0, 1]

    return {"loss": loss, "logits": logits, "hidden_states": None, "attentions": None}


# ----------------------------------------------------------------------------------
# Deterministic synthetic parameter init (bf16 matmul weights, f32 biases/LN)
# ----------------------------------------------------------------------------------
def init_params(key, cfg):
    keys = iter(jax.random.split(key, 512))

    def nrm(shape, std=0.02):
        return std * jax.random.normal(next(keys), shape, jnp.float32)

    def uni(shape, k):
        return jax.random.uniform(next(keys), shape, jnp.float32, -k, k)

    def bf(a):
        return a.astype(jnp.bfloat16)

    H, nh, inter = cfg["hidden"], cfg["nheads"], cfg["inter"]
    bert = {
        "word_emb": nrm((cfg["vocab"], H)),
        "pos_emb": nrm((cfg["max_pos"], H)),
        "type_emb": nrm((2, H)),
        "emb_ln_g": jnp.ones((H,), jnp.float32),
        "emb_ln_b": jnp.zeros((H,), jnp.float32),
        "layers": [],
    }
    for _ in range(cfg["nlayers"]):
        wq, wk, wv = nrm((H, H)), nrm((H, H)), nrm((H, H))
        bert["layers"].append({
            "w_qkv": bf(jnp.concatenate([wq, wk, wv], axis=1)),     # fused QKV weight
            "b_qkv": jnp.zeros((3 * H,), jnp.float32),
            "wo": bf(nrm((H, H))), "bo": jnp.zeros((H,), jnp.float32),
            "ln1_g": jnp.ones((H,), jnp.float32),
            "ln1_b": jnp.zeros((H,), jnp.float32),
            "w1": bf(nrm((H, inter))), "b1": jnp.zeros((inter,), jnp.float32),
            "w2": bf(nrm((inter, H))), "b2": jnp.zeros((H,), jnp.float32),
            "ln2_g": jnp.ones((H,), jnp.float32),
            "ln2_b": jnp.zeros((H,), jnp.float32),
        })

    LH = cfg["lstm_hidden"]
    Hd = LH // 2                        # hidden per direction (bidirectional)
    kinit = 1.0 / math.sqrt(Hd)
    lstm = []
    for li in range(cfg["lstm_layers"]):
        in_size = H if li == 0 else LH
        layer = {}
        for d in ("fwd", "bwd"):
            w_ih = uni((in_size, 4 * Hd), kinit)                     # transposed vs torch
            if li == 0:
                parts = (bf(w_ih),)
            else:
                # pre-split along the input dim so the fwd/bwd concat of the
                # previous layer can be fused into dense2 (no HBM concat).
                parts = (bf(w_ih[:Hd]), bf(w_ih[Hd:]))
            layer[d] = {
                "w_ih_parts": parts,
                "w_hh": bf(uni((Hd, 4 * Hd), kinit)),
                "bias": uni((4 * Hd,), kinit) + uni((4 * Hd,), kinit),   # b_ih + b_hh
            }
        lstm.append(layer)

    C = cfg["num_labels"]
    C_pad = max(128, ((C + 127) // 128) * 128)
    cls_w = nrm((LH, C))                                             # _init_weights: N(0,0.02)
    cls_b = jnp.zeros((C,), jnp.float32)
    w_pad = jnp.zeros((LH, C_pad), jnp.float32).at[:, :C].set(cls_w)
    b_pad = jnp.full((C_pad,), -1e9, jnp.float32).at[:C].set(cls_b)

    return {
        "bert": bert,
        "lstm": lstm,
        "cls_w_a": bf(w_pad[:Hd]),      # applied to the forward LSTM stream
        "cls_w_b": bf(w_pad[Hd:]),      # applied to the backward LSTM stream
        "cls_b_pad": b_pad,
    }


# ----------------------------------------------------------------------------------
if __name__ == "__main__":
    cfg = dict(vocab=100, hidden=32, nheads=2, inter=64, nlayers=2, max_pos=64,
               num_labels=5, lstm_hidden=32, lstm_layers=2)

    root = jax.random.PRNGKey(0)
    pkey, ikey, lkey = jax.random.split(root, 3)
    params = init_params(pkey, cfg)

    B, S = 2, 8
    input_ids = jax.random.randint(ikey, (B, S), 0, cfg["vocab"], dtype=jnp.int32)
    attention_mask = jnp.array([[1, 1, 1, 1, 1, 1, 1, 1],
                                [1, 1, 1, 1, 1, 1, 0, 0]], dtype=jnp.int32)
    labels = jax.random.randint(lkey, (B, S), 0, cfg["num_labels"], dtype=jnp.int32)
    labels = labels.at[1, 6:].set(-100)   # padding positions

    forward = jax.jit(functools.partial(bert_lstm_forward, cfg=cfg))
    out = forward(params, input_ids, attention_mask, labels)
    jax.block_until_ready(out["logits"])
    jax.block_until_ready(out["loss"])

    assert out["logits"].shape == (B, S, cfg["num_labels"])
    assert bool(jnp.isfinite(out["loss"]))
    print("KERNEL_OK")
</pallas_src>

<mosaic_0001>
module attributes {stable_mosaic.version = 11 : i64} {
  func.func @attn_kernel(%arg0: i32, %arg1: memref<1x1x8xf32, #tpu.memory_space<vmem>>, %arg2: memref<1x8x96xbf16, #tpu.memory_space<vmem>>, %arg3: memref<1x8x32xbf16, #tpu.memory_space<vmem>>) attributes {dimension_semantics = [#tpu.dimension_semantics<parallel>], iteration_bounds = array<i64: 2>, scalar_prefetch = 0 : i64, scratch_operands = 0 : i64, tpu.core_type = #tpu.core_type<tc>, window_params = [{transform_indices = @transform_0, window_bounds = array<i64: 1, 1, 8>}, {transform_indices = @transform_1, window_bounds = array<i64: 1, 8, 96>}, {transform_indices = @transform_2, window_bounds = array<i64: 1, 8, 32>}]} {
    %c0 = arith.constant 0 : index
    %c0_0 = arith.constant 0 : index
    %c0_1 = arith.constant 0 : index
    %0 = vector.load %arg2[%c0, %c0_0, %c0_1] : memref<1x8x96xbf16, #tpu.memory_space<vmem>>, vector<1x8x96xbf16>
    %1 = vector.shape_cast %0 : vector<1x8x96xbf16> to vector<8x96xbf16>
    %c0_2 = arith.constant 0 : index
    %c0_3 = arith.constant 0 : index
    %c0_4 = arith.constant 0 : index
    %2 = vector.load %arg1[%c0_2, %c0_3, %c0_4] : memref<1x1x8xf32, #tpu.memory_space<vmem>>, vector<1x1x8xf32>
    %3 = vector.shape_cast %2 : vector<1x1x8xf32> to vector<1x8xf32>
    %4 = vector.extract_strided_slice %1 {offsets = [0, 0], sizes = [8, 16], strides = [1, 1]} : vector<8x96xbf16> to vector<8x16xbf16>
    %5 = vector.extract_strided_slice %1 {offsets = [0, 32], sizes = [8, 16], strides = [1, 1]} : vector<8x96xbf16> to vector<8x16xbf16>
    %6 = vector.extract_strided_slice %1 {offsets = [0, 64], sizes = [8, 16], strides = [1, 1]} : vector<8x96xbf16> to vector<8x16xbf16>
    %cst = arith.constant dense<0.000000e+00> : vector<8x8xf32>
    %7 = tpu.matmul %4, %5, %cst {dimension_numbers = #tpu.dot_dimension_numbers<[1], [1], [0], [0], [0, 0, 1, 0], [], []>} : vector<8x16xbf16>, vector<8x16xbf16>, vector<8x8xf32> -> vector<8x8xf32>
    %cst_5 = arith.constant 2.500000e-01 : f32
    %8 = vector.broadcast %cst_5 : f32 to vector<8x8xf32>
    %9 = arith.mulf %7, %8 : vector<8x8xf32>
    %10 = vector.broadcast %3 : vector<1x8xf32> to vector<8x8xf32>
    %11 = arith.addf %9, %10 : vector<8x8xf32>
    %cst_6 = arith.constant dense<0xFF800000> : vector<8xf32>
    %12 = vector.multi_reduction <maximumf>, %11, %cst_6 [1] : vector<8x8xf32> to vector<8xf32>
    %13 = vector.shape_cast %12 : vector<8xf32> to vector<8x1xf32>
    %14 = vector.broadcast %13 : vector<8x1xf32> to vector<8x8xf32>
    %15 = arith.subf %11, %14 : vector<8x8xf32>
    %16 = math.exp %15 : vector<8x8xf32>
    %cst_7 = arith.constant dense<0.000000e+00> : vector<8xf32>
    %17 = vector.multi_reduction <add>, %16, %cst_7 [1] : vector<8x8xf32> to vector<8xf32>
    %18 = vector.shape_cast %17 : vector<8xf32> to vector<8x1xf32>
    %19 = tpu.reciprocal %18 {approx = true} : vector<8x1xf32> -> vector<8x1xf32>
    %20 = vector.broadcast %19 : vector<8x1xf32> to vector<8x8xf32>
    %21 = arith.mulf %16, %20 : vector<8x8xf32>
    %22 = arith.truncf %21 : vector<8x8xf32> to vector<8x8xbf16>
    %cst_8 = arith.constant dense<0.000000e+00> : vector<8x16xf32>
    %23 = tpu.matmul %22, %6, %cst_8 {dimension_numbers = #tpu.dot_dimension_numbers<[1], [0], [0], [1], [0, 0, 1, 1], [], []>} : vector<8x8xbf16>, vector<8x16xbf16>, vector<8x16xf32> -> vector<8x16xf32>
    %24 = vector.extract_strided_slice %1 {offsets = [0, 16], sizes = [8, 16], strides = [1, 1]} : vector<8x96xbf16> to vector<8x16xbf16>
    %25 = vector.extract_strided_slice %1 {offsets = [0, 48], sizes = [8, 16], strides = [1, 1]} : vector<8x96xbf16> to vector<8x16xbf16>
    %26 = vector.extract_strided_slice %1 {offsets = [0, 80], sizes = [8, 16], strides = [1, 1]} : vector<8x96xbf16> to vector<8x16xbf16>
    %cst_9 = arith.constant dense<0.000000e+00> : vector<8x8xf32>
    %27 = tpu.matmul %24, %25, %cst_9 {dimension_numbers = #tpu.dot_dimension_numbers<[1], [1], [0], [0], [0, 0, 1, 0], [], []>} : vector<8x16xbf16>, vector<8x16xbf16>, vector<8x8xf32> -> vector<8x8xf32>
    %cst_10 = arith.constant 2.500000e-01 : f32
    %28 = vector.broadcast %cst_10 : f32 to vector<8x8xf32>
    %29 = arith.mulf %27, %28 : vector<8x8xf32>
    %30 = vector.broadcast %3 : vector<1x8xf32> to vector<8x8xf32>
    %31 = arith.addf %29, %30 : vector<8x8xf32>
    %cst_11 = arith.constant dense<0xFF800000> : vector<8xf32>
    %32 = vector.multi_reduction <maximumf>, %31, %cst_11 [1] : vector<8x8xf32> to vector<8xf32>
    %33 = vector.shape_cast %32 : vector<8xf32> to vector<8x1xf32>
    %34 = vector.broadcast %33 : vector<8x1xf32> to vector<8x8xf32>
    %35 = arith.subf %31, %34 : vector<8x8xf32>
    %36 = math.exp %35 : vector<8x8xf32>
    %cst_12 = arith.constant dense<0.000000e+00> : vector<8xf32>
    %37 = vector.multi_reduction <add>, %36, %cst_12 [1] : vector<8x8xf32> to vector<8xf32>
    %38 = vector.shape_cast %37 : vector<8xf32> to vector<8x1xf32>
    %39 = tpu.reciprocal %38 {approx = true} : vector<8x1xf32> -> vector<8x1xf32>
    %40 = vector.broadcast %39 : vector<8x1xf32> to vector<8x8xf32>
    %41 = arith.mulf %36, %40 : vector<8x8xf32>
    %42 = arith.truncf %41 : vector<8x8xf32> to vector<8x8xbf16>
    %cst_13 = arith.constant dense<0.000000e+00> : vector<8x16xf32>
    %43 = tpu.matmul %42, %26, %cst_13 {dimension_numbers = #tpu.dot_dimension_numbers<[1], [0], [0], [1], [0, 0, 1, 1], [], []>} : vector<8x8xbf16>, vector<8x16xbf16>, vector<8x16xf32> -> vector<8x16xf32>
    %44 = tpu.concatenate %23, %43 in 1 : vector<8x16xf32>, vector<8x16xf32> -> vector<8x32xf32>
    %45 = arith.truncf %44 : vector<8x32xf32> to vector<8x32xbf16>
    %c0_14 = arith.constant 0 : index
    %c0_15 = arith.constant 0 : index
    %c0_16 = arith.constant 0 : index
    %46 = vector.load %arg3[%c0_14, %c0_15, %c0_16] : memref<1x8x32xbf16, #tpu.memory_space<vmem>>, vector<1x8x32xbf16>
    %47 = vector.shape_cast %46 : vector<1x8x32xbf16> to vector<8x32xbf16>
    %48 = vector.shape_cast %45 : vector<8x32xbf16> to vector<1x8x32xbf16>
    tpu.vector_store %arg3[%c0_14, %c0_15, %c0_16], %48 {strides = array<i32>} : memref<1x8x32xbf16, #tpu.memory_space<vmem>>, vector<1x8x32xbf16>,
    return
  }
  func.func @transform_0(%arg0: i32) -> (i32, i32, i32) {
    %c0_i32 = arith.constant 0 : i32
    %c0_i32_0 = arith.constant 0 : i32
    %c0_i32_1 = arith.constant 0 : i32
    return %arg0, %c0_i32, %c0_i32_0 : i32, i32, i32
  }
  func.func @transform_1(%arg0: i32) -> (i32, i32, i32) {
    %c0_i32 = arith.constant 0 : i32
    %c0_i32_0 = arith.constant 0 : i32
    %c0_i32_1 = arith.constant 0 : i32
    return %arg0, %c0_i32, %c0_i32_0 : i32, i32, i32
  }
  func.func @transform_2(%arg0: i32) -> (i32, i32, i32) {
    %c0_i32 = arith.constant 0 : i32
    %c0_i32_0 = arith.constant 0 : i32
    %c0_i32_1 = arith.constant 0 : i32
    return %arg0, %c0_i32, %c0_i32_0 : i32, i32, i32
  }
}

module attributes {stable_mosaic.version = 11 : i64} {
  func.func @layernorm_kernel(%arg0: i32, %arg1: memref<16x32xf32, #tpu.memory_space<vmem>>, %arg2: memref<1x32xf32, #tpu.memory_space<vmem>>, %arg3: memref<1x32xf32, #tpu.memory_space<vmem>>, %arg4: memref<16x32xbf16, #tpu.memory_space<vmem>>) attributes {dimension_semantics = [#tpu.dimension_semantics<parallel>], iteration_bounds = array<i64: 1>, scalar_prefetch = 0 : i64, scratch_operands = 0 : i64, tpu.core_type = #tpu.core_type<tc>, window_params = [{transform_indices = @transform_0, window_bounds = array<i64: 16, 32>}, {pipeline_mode = #tpu.pipeline_mode<synchronous>, transform_indices = @transform_1, window_bounds = array<i64: 1, 32>}, {pipeline_mode = #tpu.pipeline_mode<synchronous>, transform_indices = @transform_2, window_bounds = array<i64: 1, 32>}, {transform_indices = @transform_3, window_bounds = array<i64: 16, 32>}]} {
    %c0 = arith.constant 0 : index
    %c0_0 = arith.constant 0 : index
    %0 = vector.load %arg1[%c0, %c0_0] : memref<16x32xf32, #tpu.memory_space<vmem>>, vector<16x32xf32>
    %cst = arith.constant dense<0.000000e+00> : vector<16xf32>
    %1 = vector.multi_reduction <add>, %0, %cst [1] : vector<16x32xf32> to vector<16xf32>
    %2 = vector.shape_cast %1 : vector<16xf32> to vector<16x1xf32>
    %cst_1 = arith.constant 3.200000e+01 : f32
    %3 = vector.broadcast %cst_1 : f32 to vector<16x1xf32>
    %4 = arith.divf %2, %3 : vector<16x1xf32>
    %5 = vector.broadcast %4 : vector<16x1xf32> to vector<16x32xf32>
    %6 = arith.subf %0, %5 : vector<16x32xf32>
    %7 = vector.broadcast %4 : vector<16x1xf32> to vector<16x32xf32>
    %8 = arith.subf %0, %7 : vector<16x32xf32>
    %9 = arith.mulf %6, %8 : vector<16x32xf32>
    %cst_2 = arith.constant dense<0.000000e+00> : vector<16xf32>
    %10 = vector.multi_reduction <add>, %9, %cst_2 [1] : vector<16x32xf32> to vector<16xf32>
    %11 = vector.shape_cast %10 : vector<16xf32> to vector<16x1xf32>
    %cst_3 = arith.constant 3.200000e+01 : f32
    %12 = vector.broadcast %cst_3 : f32 to vector<16x1xf32>
    %13 = arith.divf %11, %12 : vector<16x1xf32>
    %14 = vector.broadcast %4 : vector<16x1xf32> to vector<16x32xf32>
    %15 = arith.subf %0, %14 : vector<16x32xf32>
    %cst_4 = arith.constant 9.99999996E-13 : f32
    %16 = vector.broadcast %cst_4 : f32 to vector<16x1xf32>
    %17 = arith.addf %13, %16 : vector<16x1xf32>
    %18 = math.rsqrt %17 : vector<16x1xf32>
    %19 = vector.broadcast %18 : vector<16x1xf32> to vector<16x32xf32>
    %20 = arith.mulf %15, %19 : vector<16x32xf32>
    %c0_5 = arith.constant 0 : index
    %c0_6 = arith.constant 0 : index
    %21 = vector.load %arg2[%c0_5, %c0_6] : memref<1x32xf32, #tpu.memory_space<vmem>>, vector<1x32xf32>
    %22 = vector.broadcast %21 : vector<1x32xf32> to vector<16x32xf32>
    %23 = arith.mulf %20, %22 : vector<16x32xf32>
    %c0_7 = arith.constant 0 : index
    %c0_8 = arith.constant 0 : index
    %24 = vector.load %arg3[%c0_7, %c0_8] : memref<1x32xf32, #tpu.memory_space<vmem>>, vector<1x32xf32>
    %25 = vector.broadcast %24 : vector<1x32xf32> to vector<16x32xf32>
    %26 = arith.addf %23, %25 : vector<16x32xf32>
    %27 = arith.truncf %26 : vector<16x32xf32> to vector<16x32xbf16>
    %c0_9 = arith.constant 0 : index
    %c0_10 = arith.constant 0 : index
    %28 = vector.load %arg4[%c0_9, %c0_10] : memref<16x32xbf16, #tpu.memory_space<vmem>>, vector<16x32xbf16>
    tpu.vector_store %arg4[%c0_9, %c0_10], %27 {strides = array<i32>} : memref<16x32xbf16, #tpu.memory_space<vmem>>, vector<16x32xbf16>,
    return
  }
  func.func @transform_0(%arg0: i32) -> (i32, i32) {
    %c0_i32 = arith.constant 0 : i32
    %c0_i32_0 = arith.constant 0 : i32
    return %arg0, %c0_i32 : i32, i32
  }
  func.func @transform_1(%arg0: i32) -> (i32, i32) {
    %c0_i32 = arith.constant 0 : i32
    %c0_i32_0 = arith.constant 0 : i32
    %c0_i32_1 = arith.constant 0 : i32
    return %c0_i32, %c0_i32_0 : i32, i32
  }
  func.func @transform_2(%arg0: i32) -> (i32, i32) {
    %c0_i32 = arith.constant 0 : i32
    %c0_i32_0 = arith.constant 0 : i32
    %c0_i32_1 = arith.constant 0 : i32
    return %c0_i32, %c0_i32_0 : i32, i32
  }
  func.func @transform_3(%arg0: i32) -> (i32, i32) {
    %c0_i32 = arith.constant 0 : i32
    %c0_i32_0 = arith.constant 0 : i32
    return %arg0, %c0_i32 : i32, i32
  }
}

module attributes {stable_mosaic.version = 11 : i64} {
  func.func @dense_kernel(%arg0: i32, %arg1: i32, %arg2: i32, %arg3: memref<16x32xbf16, #tpu.memory_space<vmem>>, %arg4: memref<32x96xbf16, #tpu.memory_space<vmem>>, %arg5: memref<1x96xf32, #tpu.memory_space<vmem>>, %arg6: memref<16x96xbf16, #tpu.memory_space<vmem>>, %arg7: memref<16x96xf32, #tpu.memory_space<vmem>>) attributes {dimension_semantics = [#tpu.dimension_semantics<parallel>, #tpu.dimension_semantics<parallel>, #tpu.dimension_semantics<arbitrary>], iteration_bounds = array<i64: 1, 1, 1>, scalar_prefetch = 0 : i64, scratch_operands = 1 : i64, tpu.core_type = #tpu.core_type<tc>, window_params = [{transform_indices = @transform_0, window_bounds = array<i64: 16, 32>}, {transform_indices = @transform_1, window_bounds = array<i64: 32, 96>}, {transform_indices = @transform_2, window_bounds = array<i64: 1, 96>}, {transform_indices = @transform_3, window_bounds = array<i64: 16, 96>}]} {
    %c0_i32 = arith.constant 0 : i32
    %0 = arith.cmpi eq, %arg2, %c0_i32 : i32
    %1 = arith.extui %0 : i1 to i32
    %c0_i32_0 = arith.constant 0 : i32
    %2 = arith.cmpi ne, %1, %c0_i32_0 : i32
    scf.if %2 {
      %cst_10 = arith.constant 0.000000e+00 : f32
      %12 = vector.broadcast %cst_10 : f32 to vector<16x96xf32>
      %c0_11 = arith.constant 0 : index
      %c0_12 = arith.constant 0 : index
      %13 = vector.load %arg7[%c0_11, %c0_12] : memref<16x96xf32, #tpu.memory_space<vmem>>, vector<16x96xf32>
      tpu.vector_store %arg7[%c0_11, %c0_12], %12 {strides = array<i32>} : memref<16x96xf32, #tpu.memory_space<vmem>>, vector<16x96xf32>,
    } else {
    }
    %c0 = arith.constant 0 : index
    %c0_1 = arith.constant 0 : index
    %3 = vector.load %arg7[%c0, %c0_1] : memref<16x96xf32, #tpu.memory_space<vmem>>, vector<16x96xf32>
    %c0_2 = arith.constant 0 : index
    %c0_3 = arith.constant 0 : index
    %4 = vector.load %arg3[%c0_2, %c0_3] : memref<16x32xbf16, #tpu.memory_space<vmem>>, vector<16x32xbf16>
    %c0_4 = arith.constant 0 : index
    %c0_5 = arith.constant 0 : index
    %5 = vector.load %arg4[%c0_4, %c0_5] : memref<32x96xbf16, #tpu.memory_space<vmem>>, vector<32x96xbf16>
    %cst = arith.constant dense<0.000000e+00> : vector<16x96xf32>
    %6 = tpu.matmul %4, %5, %cst {dimension_numbers = #tpu.dot_dimension_numbers<[1], [0], [0], [1], [0, 0, 1, 1], [], []>} : vector<16x32xbf16>, vector<32x96xbf16>, vector<16x96xf32> -> vector<16x96xf32>
    %7 = arith.addf %3, %6 : vector<16x96xf32>
    %c0_6 = arith.constant 0 : index
    %c0_7 = arith.constant 0 : index
    %8 = vector.load %arg7[%c0_6, %c0_7] : memref<16x96xf32, #tpu.memory_space<vmem>>, vector<16x96xf32>
    tpu.vector_store %arg7[%c0_6, %c0_7], %7 {strides = array<i32>} : memref<16x96xf32, #tpu.memory_space<vmem>>, vector<16x96xf32>,
    %c0_i32_8 = arith.constant 0 : i32
    %9 = arith.cmpi eq, %arg2, %c0_i32_8 : i32
    %10 = arith.extui %9 : i1 to i32
    %c0_i32_9 = arith.constant 0 : i32
    %11 = arith.cmpi ne, %10, %c0_i32_9 : i32
    scf.if %11 {
      %c0_10 = arith.constant 0 : index
      %c0_11 = arith.constant 0 : index
      %12 = vector.load %arg7[%c0_10, %c0_11] : memref<16x96xf32, #tpu.memory_space<vmem>>, vector<16x96xf32>
      %c0_12 = arith.constant 0 : index
      %c0_13 = arith.constant 0 : index
      %13 = vector.load %arg5[%c0_12, %c0_13] : memref<1x96xf32, #tpu.memory_space<vmem>>, vector<1x96xf32>
      %14 = vector.broadcast %13 : vector<1x96xf32> to vector<16x96xf32>
      %15 = arith.addf %12, %14 : vector<16x96xf32>
      %16 = arith.truncf %15 : vector<16x96xf32> to vector<16x96xbf16>
      %c0_14 = arith.constant 0 : index
      %c0_15 = arith.constant 0 : index
      %17 = vector.load %arg6[%c0_14, %c0_15] : memref<16x96xbf16, #tpu.memory_space<vmem>>, vector<16x96xbf16>
      tpu.vector_store %arg6[%c0_14, %c0_15], %16 {strides = array<i32>} : memref<16x96xbf16, #tpu.memory_space<vmem>>, vector<16x96xbf16>,
    } else {
    }
    return
  }
  func.func @transform_0(%arg0: i32, %arg1: i32, %arg2: i32) -> (i32, i32) {
    %c0_i32 = arith.constant 0 : i32
    return %arg0, %arg2 : i32, i32
  }
  func.func @transform_1(%arg0: i32, %arg1: i32, %arg2: i32) -> (i32, i32) {
    %c0_i32 = arith.constant 0 : i32
    return %arg2, %arg1 : i32, i32
  }
  func.func @transform_2(%arg0: i32, %arg1: i32, %arg2: i32) -> (i32, i32) {
    %c0_i32 = arith.constant 0 : i32
    %c0_i32_0 = arith.constant 0 : i32
    return %c0_i32, %arg1 : i32, i32
  }
  func.func @transform_3(%arg0: i32, %arg1: i32, %arg2: i32) -> (i32, i32) {
    %c0_i32 = arith.constant 0 : i32
    return %arg0, %arg1 : i32, i32
  }
}

module attributes {stable_mosaic.version = 11 : i64} {
  func.func @dense_kernel(%arg0: i32, %arg1: i32, %arg2: i32, %arg3: memref<16x32xbf16, #tpu.memory_space<vmem>>, %arg4: memref<32x32xbf16, #tpu.memory_space<vmem>>, %arg5: memref<1x32xf32, #tpu.memory_space<vmem>>, %arg6: memref<16x32xbf16, #tpu.memory_space<vmem>>, %arg7: memref<16x32xf32, #tpu.memory_space<vmem>>) attributes {dimension_semantics = [#tpu.dimension_semantics<parallel>, #tpu.dimension_semantics<parallel>, #tpu.dimension_semantics<arbitrary>], iteration_bounds = array<i64: 1, 1, 1>, scalar_prefetch = 0 : i64, scratch_operands = 1 : i64, tpu.core_type = #tpu.core_type<tc>, window_params = [{transform_indices = @transform_0, window_bounds = array<i64: 16, 32>}, {transform_indices = @transform_1, window_bounds = array<i64: 32, 32>}, {transform_indices = @transform_2, window_bounds = array<i64: 1, 32>}, {transform_indices = @transform_3, window_bounds = array<i64: 16, 32>}]} {
    %c0_i32 = arith.constant 0 : i32
    %0 = arith.cmpi eq, %arg2, %c0_i32 : i32
    %1 = arith.extui %0 : i1 to i32
    %c0_i32_0 = arith.constant 0 : i32
    %2 = arith.cmpi ne, %1, %c0_i32_0 : i32
    scf.if %2 {
      %cst_10 = arith.constant 0.000000e+00 : f32
      %12 = vector.broadcast %cst_10 : f32 to vector<16x32xf32>
      %c0_11 = arith.constant 0 : index
      %c0_12 = arith.constant 0 : index
      %13 = vector.load %arg7[%c0_11, %c0_12] : memref<16x32xf32, #tpu.memory_space<vmem>>, vector<16x32xf32>
      tpu.vector_store %arg7[%c0_11, %c0_12], %12 {strides = array<i32>} : memref<16x32xf32, #tpu.memory_space<vmem>>, vector<16x32xf32>,
    } else {
    }
    %c0 = arith.constant 0 : index
    %c0_1 = arith.constant 0 : index
    %3 = vector.load %arg7[%c0, %c0_1] : memref<16x32xf32, #tpu.memory_space<vmem>>, vector<16x32xf32>
    %c0_2 = arith.constant 0 : index
    %c0_3 = arith.constant 0 : index
    %4 = vector.load %arg3[%c0_2, %c0_3] : memref<16x32xbf16, #tpu.memory_space<vmem>>, vector<16x32xbf16>
    %c0_4 = arith.constant 0 : index
    %c0_5 = arith.constant 0 : index
    %5 = vector.load %arg4[%c0_4, %c0_5] : memref<32x32xbf16, #tpu.memory_space<vmem>>, vector<32x32xbf16>
    %cst = arith.constant dense<0.000000e+00> : vector<16x32xf32>
    %6 = tpu.matmul %4, %5, %cst {dimension_numbers = #tpu.dot_dimension_numbers<[1], [0], [0], [1], [0, 0, 1, 1], [], []>} : vector<16x32xbf16>, vector<32x32xbf16>, vector<16x32xf32> -> vector<16x32xf32>
    %7 = arith.addf %3, %6 : vector<16x32xf32>
    %c0_6 = arith.constant 0 : index
    %c0_7 = arith.constant 0 : index
    %8 = vector.load %arg7[%c0_6, %c0_7] : memref<16x32xf32, #tpu.memory_space<vmem>>, vector<16x32xf32>
    tpu.vector_store %arg7[%c0_6, %c0_7], %7 {strides = array<i32>} : memref<16x32xf32, #tpu.memory_space<vmem>>, vector<16x32xf32>,
    %c0_i32_8 = arith.constant 0 : i32
    %9 = arith.cmpi eq, %arg2, %c0_i32_8 : i32
    %10 = arith.extui %9 : i1 to i32
    %c0_i32_9 = arith.constant 0 : i32
    %11 = arith.cmpi ne, %10, %c0_i32_9 : i32
    scf.if %11 {
      %c0_10 = arith.constant 0 : index
      %c0_11 = arith.constant 0 : index
      %12 = vector.load %arg7[%c0_10, %c0_11] : memref<16x32xf32, #tpu.memory_space<vmem>>, vector<16x32xf32>
      %c0_12 = arith.constant 0 : index
      %c0_13 = arith.constant 0 : index
      %13 = vector.load %arg5[%c0_12, %c0_13] : memref<1x32xf32, #tpu.memory_space<vmem>>, vector<1x32xf32>
      %14 = vector.broadcast %13 : vector<1x32xf32> to vector<16x32xf32>
      %15 = arith.addf %12, %14 : vector<16x32xf32>
      %16 = arith.truncf %15 : vector<16x32xf32> to vector<16x32xbf16>
      %c0_14 = arith.constant 0 : index
      %c0_15 = arith.constant 0 : index
      %17 = vector.load %arg6[%c0_14, %c0_15] : memref<16x32xbf16, #tpu.memory_space<vmem>>, vector<16x32xbf16>
      tpu.vector_store %arg6[%c0_14, %c0_15], %16 {strides = array<i32>} : memref<16x32xbf16, #tpu.memory_space<vmem>>, vector<16x32xbf16>,
    } else {
    }
    return
  }
  func.func @transform_0(%arg0: i32, %arg1: i32, %arg2: i32) -> (i32, i32) {
    %c0_i32 = arith.constant 0 : i32
    return %arg0, %arg2 : i32, i32
  }
  func.func @transform_1(%arg0: i32, %arg1: i32, %arg2: i32) -> (i32, i32) {
    %c0_i32 = arith.constant 0 : i32
    return %arg2, %arg1 : i32, i32
  }
  func.func @transform_2(%arg0: i32, %arg1: i32, %arg2: i32) -> (i32, i32) {
    %c0_i32 = arith.constant 0 : i32
    %c0_i32_0 = arith.constant 0 : i32
    return %c0_i32, %arg1 : i32, i32
  }
  func.func @transform_3(%arg0: i32, %arg1: i32, %arg2: i32) -> (i32, i32) {
    %c0_i32 = arith.constant 0 : i32
    return %arg0, %arg1 : i32, i32
  }
}

module attributes {stable_mosaic.version = 11 : i64} {
  func.func @add_layernorm_kernel(%arg0: i32, %arg1: memref<16x32xbf16, #tpu.memory_space<vmem>>, %arg2: memref<16x32xbf16, #tpu.memory_space<vmem>>, %arg3: memref<1x32xf32, #tpu.memory_space<vmem>>, %arg4: memref<1x32xf32, #tpu.memory_space<vmem>>, %arg5: memref<16x32xbf16, #tpu.memory_space<vmem>>) attributes {dimension_semantics = [#tpu.dimension_semantics<parallel>], iteration_bounds = array<i64: 1>, scalar_prefetch = 0 : i64, scratch_operands = 0 : i64, tpu.core_type = #tpu.core_type<tc>, window_params = [{transform_indices = @transform_0, window_bounds = array<i64: 16, 32>}, {transform_indices = @transform_1, window_bounds = array<i64: 16, 32>}, {pipeline_mode = #tpu.pipeline_mode<synchronous>, transform_indices = @transform_2, window_bounds = array<i64: 1, 32>}, {pipeline_mode = #tpu.pipeline_mode<synchronous>, transform_indices = @transform_3, window_bounds = array<i64: 1, 32>}, {transform_indices = @transform_4, window_bounds = array<i64: 16, 32>}]} {
    %c0 = arith.constant 0 : index
    %c0_0 = arith.constant 0 : index
    %0 = vector.load %arg1[%c0, %c0_0] : memref<16x32xbf16, #tpu.memory_space<vmem>>, vector<16x32xbf16>
    %1 = arith.extf %0 : vector<16x32xbf16> to vector<16x32xf32>
    %c0_1 = arith.constant 0 : index
    %c0_2 = arith.constant 0 : index
    %2 = vector.load %arg2[%c0_1, %c0_2] : memref<16x32xbf16, #tpu.memory_space<vmem>>, vector<16x32xbf16>
    %3 = arith.extf %2 : vector<16x32xbf16> to vector<16x32xf32>
    %4 = arith.addf %1, %3 : vector<16x32xf32>
    %cst = arith.constant dense<0.000000e+00> : vector<16xf32>
    %5 = vector.multi_reduction <add>, %4, %cst [1] : vector<16x32xf32> to vector<16xf32>
    %6 = vector.shape_cast %5 : vector<16xf32> to vector<16x1xf32>
    %cst_3 = arith.constant 3.200000e+01 : f32
    %7 = vector.broadcast %cst_3 : f32 to vector<16x1xf32>
    %8 = arith.divf %6, %7 : vector<16x1xf32>
    %9 = vector.broadcast %8 : vector<16x1xf32> to vector<16x32xf32>
    %10 = arith.subf %4, %9 : vector<16x32xf32>
    %11 = vector.broadcast %8 : vector<16x1xf32> to vector<16x32xf32>
    %12 = arith.subf %4, %11 : vector<16x32xf32>
    %13 = arith.mulf %10, %12 : vector<16x32xf32>
    %cst_4 = arith.constant dense<0.000000e+00> : vector<16xf32>
    %14 = vector.multi_reduction <add>, %13, %cst_4 [1] : vector<16x32xf32> to vector<16xf32>
    %15 = vector.shape_cast %14 : vector<16xf32> to vector<16x1xf32>
    %cst_5 = arith.constant 3.200000e+01 : f32
    %16 = vector.broadcast %cst_5 : f32 to vector<16x1xf32>
    %17 = arith.divf %15, %16 : vector<16x1xf32>
    %18 = vector.broadcast %8 : vector<16x1xf32> to vector<16x32xf32>
    %19 = arith.subf %4, %18 : vector<16x32xf32>
    %cst_6 = arith.constant 9.99999996E-13 : f32
    %20 = vector.broadcast %cst_6 : f32 to vector<16x1xf32>
    %21 = arith.addf %17, %20 : vector<16x1xf32>
    %22 = math.rsqrt %21 : vector<16x1xf32>
    %23 = vector.broadcast %22 : vector<16x1xf32> to vector<16x32xf32>
    %24 = arith.mulf %19, %23 : vector<16x32xf32>
    %c0_7 = arith.constant 0 : index
    %c0_8 = arith.constant 0 : index
    %25 = vector.load %arg3[%c0_7, %c0_8] : memref<1x32xf32, #tpu.memory_space<vmem>>, vector<1x32xf32>
    %26 = vector.broadcast %25 : vector<1x32xf32> to vector<16x32xf32>
    %27 = arith.mulf %24, %26 : vector<16x32xf32>
    %c0_9 = arith.constant 0 : index
    %c0_10 = arith.constant 0 : index
    %28 = vector.load %arg4[%c0_9, %c0_10] : memref<1x32xf32, #tpu.memory_space<vmem>>, vector<1x32xf32>
    %29 = vector.broadcast %28 : vector<1x32xf32> to vector<16x32xf32>
    %30 = arith.addf %27, %29 : vector<16x32xf32>
    %31 = arith.truncf %30 : vector<16x32xf32> to vector<16x32xbf16>
    %c0_11 = arith.constant 0 : index
    %c0_12 = arith.constant 0 : index
    %32 = vector.load %arg5[%c0_11, %c0_12] : memref<16x32xbf16, #tpu.memory_space<vmem>>, vector<16x32xbf16>
    tpu.vector_store %arg5[%c0_11, %c0_12], %31 {strides = array<i32>} : memref<16x32xbf16, #tpu.memory_space<vmem>>, vector<16x32xbf16>,
    return
  }
  func.func @transform_0(%arg0: i32) -> (i32, i32) {
    %c0_i32 = arith.constant 0 : i32
    %c0_i32_0 = arith.constant 0 : i32
    return %arg0, %c0_i32 : i32, i32
  }
  func.func @transform_1(%arg0: i32) -> (i32, i32) {
    %c0_i32 = arith.constant 0 : i32
    %c0_i32_0 = arith.constant 0 : i32
    return %arg0, %c0_i32 : i32, i32
  }
  func.func @transform_2(%arg0: i32) -> (i32, i32) {
    %c0_i32 = arith.constant 0 : i32
    %c0_i32_0 = arith.constant 0 : i32
    %c0_i32_1 = arith.constant 0 : i32
    return %c0_i32, %c0_i32_0 : i32, i32
  }
  func.func @transform_3(%arg0: i32) -> (i32, i32) {
    %c0_i32 = arith.constant 0 : i32
    %c0_i32_0 = arith.constant 0 : i32
    %c0_i32_1 = arith.constant 0 : i32
    return %c0_i32, %c0_i32_0 : i32, i32
  }
  func.func @transform_4(%arg0: i32) -> (i32, i32) {
    %c0_i32 = arith.constant 0 : i32
    %c0_i32_0 = arith.constant 0 : i32
    return %arg0, %c0_i32 : i32, i32
  }
}

module attributes {stable_mosaic.version = 11 : i64} {
  func.func @dense_kernel(%arg0: i32, %arg1: i32, %arg2: i32, %arg3: memref<16x32xbf16, #tpu.memory_space<vmem>>, %arg4: memref<32x64xbf16, #tpu.memory_space<vmem>>, %arg5: memref<1x64xf32, #tpu.memory_space<vmem>>, %arg6: memref<16x64xbf16, #tpu.memory_space<vmem>>, %arg7: memref<16x64xf32, #tpu.memory_space<vmem>>) attributes {dimension_semantics = [#tpu.dimension_semantics<parallel>, #tpu.dimension_semantics<parallel>, #tpu.dimension_semantics<arbitrary>], iteration_bounds = array<i64: 1, 1, 1>, scalar_prefetch = 0 : i64, scratch_operands = 1 : i64, tpu.core_type = #tpu.core_type<tc>, window_params = [{transform_indices = @transform_0, window_bounds = array<i64: 16, 32>}, {transform_indices = @transform_1, window_bounds = array<i64: 32, 64>}, {transform_indices = @transform_2, window_bounds = array<i64: 1, 64>}, {transform_indices = @transform_3, window_bounds = array<i64: 16, 64>}]} {
    %c0_i32 = arith.constant 0 : i32
    %0 = arith.cmpi eq, %arg2, %c0_i32 : i32
    %1 = arith.extui %0 : i1 to i32
    %c0_i32_0 = arith.constant 0 : i32
    %2 = arith.cmpi ne, %1, %c0_i32_0 : i32
    scf.if %2 {
      %cst_10 = arith.constant 0.000000e+00 : f32
      %12 = vector.broadcast %cst_10 : f32 to vector<16x64xf32>
      %c0_11 = arith.constant 0 : index
      %c0_12 = arith.constant 0 : index
      %13 = vector.load %arg7[%c0_11, %c0_12] : memref<16x64xf32, #tpu.memory_space<vmem>>, vector<16x64xf32>
      tpu.vector_store %arg7[%c0_11, %c0_12], %12 {strides = array<i32>} : memref<16x64xf32, #tpu.memory_space<vmem>>, vector<16x64xf32>,
    } else {
    }
    %c0 = arith.constant 0 : index
    %c0_1 = arith.constant 0 : index
    %3 = vector.load %arg7[%c0, %c0_1] : memref<16x64xf32, #tpu.memory_space<vmem>>, vector<16x64xf32>
    %c0_2 = arith.constant 0 : index
    %c0_3 = arith.constant 0 : index
    %4 = vector.load %arg3[%c0_2, %c0_3] : memref<16x32xbf16, #tpu.memory_space<vmem>>, vector<16x32xbf16>
    %c0_4 = arith.constant 0 : index
    %c0_5 = arith.constant 0 : index
    %5 = vector.load %arg4[%c0_4, %c0_5] : memref<32x64xbf16, #tpu.memory_space<vmem>>, vector<32x64xbf16>
    %cst = arith.constant dense<0.000000e+00> : vector<16x64xf32>
    %6 = tpu.matmul %4, %5, %cst {dimension_numbers = #tpu.dot_dimension_numbers<[1], [0], [0], [1], [0, 0, 1, 1], [], []>} : vector<16x32xbf16>, vector<32x64xbf16>, vector<16x64xf32> -> vector<16x64xf32>
    %7 = arith.addf %3, %6 : vector<16x64xf32>
    %c0_6 = arith.constant 0 : index
    %c0_7 = arith.constant 0 : index
    %8 = vector.load %arg7[%c0_6, %c0_7] : memref<16x64xf32, #tpu.memory_space<vmem>>, vector<16x64xf32>
    tpu.vector_store %arg7[%c0_6, %c0_7], %7 {strides = array<i32>} : memref<16x64xf32, #tpu.memory_space<vmem>>, vector<16x64xf32>,
    %c0_i32_8 = arith.constant 0 : i32
    %9 = arith.cmpi eq, %arg2, %c0_i32_8 : i32
    %10 = arith.extui %9 : i1 to i32
    %c0_i32_9 = arith.constant 0 : i32
    %11 = arith.cmpi ne, %10, %c0_i32_9 : i32
    scf.if %11 {
      %c0_10 = arith.constant 0 : index
      %c0_11 = arith.constant 0 : index
      %12 = vector.load %arg7[%c0_10, %c0_11] : memref<16x64xf32, #tpu.memory_space<vmem>>, vector<16x64xf32>
      %c0_12 = arith.constant 0 : index
      %c0_13 = arith.constant 0 : index
      %13 = vector.load %arg5[%c0_12, %c0_13] : memref<1x64xf32, #tpu.memory_space<vmem>>, vector<1x64xf32>
      %14 = vector.broadcast %13 : vector<1x64xf32> to vector<16x64xf32>
      %15 = arith.addf %12, %14 : vector<16x64xf32>
      %16 = arith.mulf %15, %15 : vector<16x64xf32>
      %17 = arith.mulf %15, %16 : vector<16x64xf32>
      %cst_14 = arith.constant 4.471500e-02 : f32
      %18 = vector.broadcast %cst_14 : f32 to vector<16x64xf32>
      %19 = arith.mulf %18, %17 : vector<16x64xf32>
      %20 = arith.addf %15, %19 : vector<16x64xf32>
      %cst_15 = arith.constant 0.797884583 : f32
      %21 = vector.broadcast %cst_15 : f32 to vector<16x64xf32>
      %22 = arith.mulf %21, %20 : vector<16x64xf32>
      %23 = math.tanh %22 : vector<16x64xf32>
      %cst_16 = arith.constant 1.000000e+00 : f32
      %24 = vector.broadcast %cst_16 : f32 to vector<16x64xf32>
      %25 = arith.addf %24, %23 : vector<16x64xf32>
      %cst_17 = arith.constant 5.000000e-01 : f32
      %26 = vector.broadcast %cst_17 : f32 to vector<16x64xf32>
      %27 = arith.mulf %26, %25 : vector<16x64xf32>
      %28 = arith.mulf %15, %27 : vector<16x64xf32>
      %29 = arith.truncf %28 : vector<16x64xf32> to vector<16x64xbf16>
      %c0_18 = arith.constant 0 : index
      %c0_19 = arith.constant 0 : index
      %30 = vector.load %arg6[%c0_18, %c0_19] : memref<16x64xbf16, #tpu.memory_space<vmem>>, vector<16x64xbf16>
      tpu.vector_store %arg6[%c0_18, %c0_19], %29 {strides = array<i32>} : memref<16x64xbf16, #tpu.memory_space<vmem>>, vector<16x64xbf16>,
    } else {
    }
    return
  }
  func.func @transform_0(%arg0: i32, %arg1: i32, %arg2: i32) -> (i32, i32) {
    %c0_i32 = arith.constant 0 : i32
    return %arg0, %arg2 : i32, i32
  }
  func.func @transform_1(%arg0: i32, %arg1: i32, %arg2: i32) -> (i32, i32) {
    %c0_i32 = arith.constant 0 : i32
    return %arg2, %arg1 : i32, i32
  }
  func.func @transform_2(%arg0: i32, %arg1: i32, %arg2: i32) -> (i32, i32) {
    %c0_i32 = arith.constant 0 : i32
    %c0_i32_0 = arith.constant 0 : i32
    return %c0_i32, %arg1 : i32, i32
  }
  func.func @transform_3(%arg0: i32, %arg1: i32, %arg2: i32) -> (i32, i32) {
    %c0_i32 = arith.constant 0 : i32
    return %arg0, %arg1 : i32, i32
  }
}

module attributes {stable_mosaic.version = 11 : i64} {
  func.func @dense_kernel(%arg0: i32, %arg1: i32, %arg2: i32, %arg3: memref<16x32xbf16, #tpu.memory_space<vmem>>, %arg4: memref<32x64xbf16, #tpu.memory_space<vmem>>, %arg5: memref<1x64xf32, #tpu.memory_space<vmem>>, %arg6: memref<16x64xbf16, #tpu.memory_space<vmem>>, %arg7: memref<16x64xf32, #tpu.memory_space<vmem>>) attributes {dimension_semantics = [#tpu.dimension_semantics<parallel>, #tpu.dimension_semantics<parallel>, #tpu.dimension_semantics<arbitrary>], iteration_bounds = array<i64: 1, 1, 1>, scalar_prefetch = 0 : i64, scratch_operands = 1 : i64, tpu.core_type = #tpu.core_type<tc>, window_params = [{transform_indices = @transform_0, window_bounds = array<i64: 16, 32>}, {transform_indices = @transform_1, window_bounds = array<i64: 32, 64>}, {transform_indices = @transform_2, window_bounds = array<i64: 1, 64>}, {transform_indices = @transform_3, window_bounds = array<i64: 16, 64>}]} {
    %c0_i32 = arith.constant 0 : i32
    %0 = arith.cmpi eq, %arg2, %c0_i32 : i32
    %1 = arith.extui %0 : i1 to i32
    %c0_i32_0 = arith.constant 0 : i32
    %2 = arith.cmpi ne, %1, %c0_i32_0 : i32
    scf.if %2 {
      %cst_10 = arith.constant 0.000000e+00 : f32
      %12 = vector.broadcast %cst_10 : f32 to vector<16x64xf32>
      %c0_11 = arith.constant 0 : index
      %c0_12 = arith.constant 0 : index
      %13 = vector.load %arg7[%c0_11, %c0_12] : memref<16x64xf32, #tpu.memory_space<vmem>>, vector<16x64xf32>
      tpu.vector_store %arg7[%c0_11, %c0_12], %12 {strides = array<i32>} : memref<16x64xf32, #tpu.memory_space<vmem>>, vector<16x64xf32>,
    } else {
    }
    %c0 = arith.constant 0 : index
    %c0_1 = arith.constant 0 : index
    %3 = vector.load %arg7[%c0, %c0_1] : memref<16x64xf32, #tpu.memory_space<vmem>>, vector<16x64xf32>
    %c0_2 = arith.constant 0 : index
    %c0_3 = arith.constant 0 : index
    %4 = vector.load %arg3[%c0_2, %c0_3] : memref<16x32xbf16, #tpu.memory_space<vmem>>, vector<16x32xbf16>
    %c0_4 = arith.constant 0 : index
    %c0_5 = arith.constant 0 : index
    %5 = vector.load %arg4[%c0_4, %c0_5] : memref<32x64xbf16, #tpu.memory_space<vmem>>, vector<32x64xbf16>
    %cst = arith.constant dense<0.000000e+00> : vector<16x64xf32>
    %6 = tpu.matmul %4, %5, %cst {dimension_numbers = #tpu.dot_dimension_numbers<[1], [0], [0], [1], [0, 0, 1, 1], [], []>} : vector<16x32xbf16>, vector<32x64xbf16>, vector<16x64xf32> -> vector<16x64xf32>
    %7 = arith.addf %3, %6 : vector<16x64xf32>
    %c0_6 = arith.constant 0 : index
    %c0_7 = arith.constant 0 : index
    %8 = vector.load %arg7[%c0_6, %c0_7] : memref<16x64xf32, #tpu.memory_space<vmem>>, vector<16x64xf32>
    tpu.vector_store %arg7[%c0_6, %c0_7], %7 {strides = array<i32>} : memref<16x64xf32, #tpu.memory_space<vmem>>, vector<16x64xf32>,
    %c0_i32_8 = arith.constant 0 : i32
    %9 = arith.cmpi eq, %arg2, %c0_i32_8 : i32
    %10 = arith.extui %9 : i1 to i32
    %c0_i32_9 = arith.constant 0 : i32
    %11 = arith.cmpi ne, %10, %c0_i32_9 : i32
    scf.if %11 {
      %c0_10 = arith.constant 0 : index
      %c0_11 = arith.constant 0 : index
      %12 = vector.load %arg7[%c0_10, %c0_11] : memref<16x64xf32, #tpu.memory_space<vmem>>, vector<16x64xf32>
      %c0_12 = arith.constant 0 : index
      %c0_13 = arith.constant 0 : index
      %13 = vector.load %arg5[%c0_12, %c0_13] : memref<1x64xf32, #tpu.memory_space<vmem>>, vector<1x64xf32>
      %14 = vector.broadcast %13 : vector<1x64xf32> to vector<16x64xf32>
      %15 = arith.addf %12, %14 : vector<16x64xf32>
      %16 = arith.truncf %15 : vector<16x64xf32> to vector<16x64xbf16>
      %c0_14 = arith.constant 0 : index
      %c0_15 = arith.constant 0 : index
      %17 = vector.load %arg6[%c0_14, %c0_15] : memref<16x64xbf16, #tpu.memory_space<vmem>>, vector<16x64xbf16>
      tpu.vector_store %arg6[%c0_14, %c0_15], %16 {strides = array<i32>} : memref<16x64xbf16, #tpu.memory_space<vmem>>, vector<16x64xbf16>,
    } else {
    }
    return
  }
  func.func @transform_0(%arg0: i32, %arg1: i32, %arg2: i32) -> (i32, i32) {
    %c0_i32 = arith.constant 0 : i32
    return %arg0, %arg2 : i32, i32
  }
  func.func @transform_1(%arg0: i32, %arg1: i32, %arg2: i32) -> (i32, i32) {
    %c0_i32 = arith.constant 0 : i32
    return %arg2, %arg1 : i32, i32
  }
  func.func @transform_2(%arg0: i32, %arg1: i32, %arg2: i32) -> (i32, i32) {
    %c0_i32 = arith.constant 0 : i32
    %c0_i32_0 = arith.constant 0 : i32
    return %c0_i32, %arg1 : i32, i32
  }
  func.func @transform_3(%arg0: i32, %arg1: i32, %arg2: i32) -> (i32, i32) {
    %c0_i32 = arith.constant 0 : i32
    return %arg0, %arg1 : i32, i32
  }
}

module attributes {stable_mosaic.version = 11 : i64} {
  func.func @dense_kernel(%arg0: i32, %arg1: i32, %arg2: i32, %arg3: memref<16x64xbf16, #tpu.memory_space<vmem>>, %arg4: memref<64x32xbf16, #tpu.memory_space<vmem>>, %arg5: memref<1x32xf32, #tpu.memory_space<vmem>>, %arg6: memref<16x32xbf16, #tpu.memory_space<vmem>>, %arg7: memref<16x32xf32, #tpu.memory_space<vmem>>) attributes {dimension_semantics = [#tpu.dimension_semantics<parallel>, #tpu.dimension_semantics<parallel>, #tpu.dimension_semantics<arbitrary>], iteration_bounds = array<i64: 1, 1, 1>, scalar_prefetch = 0 : i64, scratch_operands = 1 : i64, tpu.core_type = #tpu.core_type<tc>, window_params = [{transform_indices = @transform_0, window_bounds = array<i64: 16, 64>}, {transform_indices = @transform_1, window_bounds = array<i64: 64, 32>}, {transform_indices = @transform_2, window_bounds = array<i64: 1, 32>}, {transform_indices = @transform_3, window_bounds = array<i64: 16, 32>}]} {
    %c0_i32 = arith.constant 0 : i32
    %0 = arith.cmpi eq, %arg2, %c0_i32 : i32
    %1 = arith.extui %0 : i1 to i32
    %c0_i32_0 = arith.constant 0 : i32
    %2 = arith.cmpi ne, %1, %c0_i32_0 : i32
    scf.if %2 {
      %cst_10 = arith.constant 0.000000e+00 : f32
      %12 = vector.broadcast %cst_10 : f32 to vector<16x32xf32>
      %c0_11 = arith.constant 0 : index
      %c0_12 = arith.constant 0 : index
      %13 = vector.load %arg7[%c0_11, %c0_12] : memref<16x32xf32, #tpu.memory_space<vmem>>, vector<16x32xf32>
      tpu.vector_store %arg7[%c0_11, %c0_12], %12 {strides = array<i32>} : memref<16x32xf32, #tpu.memory_space<vmem>>, vector<16x32xf32>,
    } else {
    }
    %c0 = arith.constant 0 : index
    %c0_1 = arith.constant 0 : index
    %3 = vector.load %arg7[%c0, %c0_1] : memref<16x32xf32, #tpu.memory_space<vmem>>, vector<16x32xf32>
    %c0_2 = arith.constant 0 : index
    %c0_3 = arith.constant 0 : index
    %4 = vector.load %arg3[%c0_2, %c0_3] : memref<16x64xbf16, #tpu.memory_space<vmem>>, vector<16x64xbf16>
    %c0_4 = arith.constant 0 : index
    %c0_5 = arith.constant 0 : index
    %5 = vector.load %arg4[%c0_4, %c0_5] : memref<64x32xbf16, #tpu.memory_space<vmem>>, vector<64x32xbf16>
    %cst = arith.constant dense<0.000000e+00> : vector<16x32xf32>
    %6 = tpu.matmul %4, %5, %cst {dimension_numbers = #tpu.dot_dimension_numbers<[1], [0], [0], [1], [0, 0, 1, 1], [], []>} : vector<16x64xbf16>, vector<64x32xbf16>, vector<16x32xf32> -> vector<16x32xf32>
    %7 = arith.addf %3, %6 : vector<16x32xf32>
    %c0_6 = arith.constant 0 : index
    %c0_7 = arith.constant 0 : index
    %8 = vector.load %arg7[%c0_6, %c0_7] : memref<16x32xf32, #tpu.memory_space<vmem>>, vector<16x32xf32>
    tpu.vector_store %arg7[%c0_6, %c0_7], %7 {strides = array<i32>} : memref<16x32xf32, #tpu.memory_space<vmem>>, vector<16x32xf32>,
    %c0_i32_8 = arith.constant 0 : i32
    %9 = arith.cmpi eq, %arg2, %c0_i32_8 : i32
    %10 = arith.extui %9 : i1 to i32
    %c0_i32_9 = arith.constant 0 : i32
    %11 = arith.cmpi ne, %10, %c0_i32_9 : i32
    scf.if %11 {
      %c0_10 = arith.constant 0 : index
      %c0_11 = arith.constant 0 : index
      %12 = vector.load %arg7[%c0_10, %c0_11] : memref<16x32xf32, #tpu.memory_space<vmem>>, vector<16x32xf32>
      %c0_12 = arith.constant 0 : index
      %c0_13 = arith.constant 0 : index
      %13 = vector.load %arg5[%c0_12, %c0_13] : memref<1x32xf32, #tpu.memory_space<vmem>>, vector<1x32xf32>
      %14 = vector.broadcast %13 : vector<1x32xf32> to vector<16x32xf32>
      %15 = arith.addf %12, %14 : vector<16x32xf32>
      %16 = arith.truncf %15 : vector<16x32xf32> to vector<16x32xbf16>
      %c0_14 = arith.constant 0 : index
      %c0_15 = arith.constant 0 : index
      %17 = vector.load %arg6[%c0_14, %c0_15] : memref<16x32xbf16, #tpu.memory_space<vmem>>, vector<16x32xbf16>
      tpu.vector_store %arg6[%c0_14, %c0_15], %16 {strides = array<i32>} : memref<16x32xbf16, #tpu.memory_space<vmem>>, vector<16x32xbf16>,
    } else {
    }
    return
  }
  func.func @transform_0(%arg0: i32, %arg1: i32, %arg2: i32) -> (i32, i32) {
    %c0_i32 = arith.constant 0 : i32
    return %arg0, %arg2 : i32, i32
  }
  func.func @transform_1(%arg0: i32, %arg1: i32, %arg2: i32) -> (i32, i32) {
    %c0_i32 = arith.constant 0 : i32
    return %arg2, %arg1 : i32, i32
  }
  func.func @transform_2(%arg0: i32, %arg1: i32, %arg2: i32) -> (i32, i32) {
    %c0_i32 = arith.constant 0 : i32
    %c0_i32_0 = arith.constant 0 : i32
    return %c0_i32, %arg1 : i32, i32
  }
  func.func @transform_3(%arg0: i32, %arg1: i32, %arg2: i32) -> (i32, i32) {
    %c0_i32 = arith.constant 0 : i32
    return %arg0, %arg1 : i32, i32
  }
}

module attributes {stable_mosaic.version = 11 : i64} {
  func.func @dense2_kernel(%arg0: i32, %arg1: i32, %arg2: i32, %arg3: memref<16x16xbf16, #tpu.memory_space<vmem>>, %arg4: memref<16x16xbf16, #tpu.memory_space<vmem>>, %arg5: memref<16x128xbf16, #tpu.memory_space<vmem>>, %arg6: memref<16x128xbf16, #tpu.memory_space<vmem>>, %arg7: memref<1x128xf32, #tpu.memory_space<vmem>>, %arg8: memref<16x128xf32, #tpu.memory_space<vmem>>, %arg9: memref<16x128xf32, #tpu.memory_space<vmem>>) attributes {dimension_semantics = [#tpu.dimension_semantics<parallel>, #tpu.dimension_semantics<parallel>, #tpu.dimension_semantics<arbitrary>], iteration_bounds = array<i64: 1, 1, 1>, scalar_prefetch = 0 : i64, scratch_operands = 1 : i64, tpu.core_type = #tpu.core_type<tc>, window_params = [{transform_indices = @transform_0, window_bounds = array<i64: 16, 16>}, {transform_indices = @transform_1, window_bounds = array<i64: 16, 16>}, {transform_indices = @transform_2, window_bounds = array<i64: 16, 128>}, {transform_indices = @transform_3, window_bounds = array<i64: 16, 128>}, {transform_indices = @transform_4, window_bounds = array<i64: 1, 128>}, {transform_indices = @transform_5, window_bounds = array<i64: 16, 128>}]} {
    %c0_i32 = arith.constant 0 : i32
    %0 = arith.cmpi eq, %arg2, %c0_i32 : i32
    %1 = arith.extui %0 : i1 to i32
    %c0_i32_0 = arith.constant 0 : i32
    %2 = arith.cmpi ne, %1, %c0_i32_0 : i32
    scf.if %2 {
      %cst_15 = arith.constant 0.000000e+00 : f32
      %16 = vector.broadcast %cst_15 : f32 to vector<16x128xf32>
      %c0_16 = arith.constant 0 : index
      %c0_17 = arith.constant 0 : index
      %17 = vector.load %arg9[%c0_16, %c0_17] : memref<16x128xf32, #tpu.memory_space<vmem>>, vector<16x128xf32>
      tpu.vector_store %arg9[%c0_16, %c0_17], %16 {strides = array<i32>} : memref<16x128xf32, #tpu.memory_space<vmem>>, vector<16x128xf32>,
    } else {
    }
    %c0 = arith.constant 0 : index
    %c0_1 = arith.constant 0 : index
    %3 = vector.load %arg9[%c0, %c0_1] : memref<16x128xf32, #tpu.memory_space<vmem>>, vector<16x128xf32>
    %c0_2 = arith.constant 0 : index
    %c0_3 = arith.constant 0 : index
    %4 = vector.load %arg3[%c0_2, %c0_3] : memref<16x16xbf16, #tpu.memory_space<vmem>>, vector<16x16xbf16>
    %c0_4 = arith.constant 0 : index
    %c0_5 = arith.constant 0 : index
    %5 = vector.load %arg5[%c0_4, %c0_5] : memref<16x128xbf16, #tpu.memory_space<vmem>>, vector<16x128xbf16>
    %cst = arith.constant dense<0.000000e+00> : vector<16x128xf32>
    %6 = tpu.matmul %4, %5, %cst {dimension_numbers = #tpu.dot_dimension_numbers<[1], [0], [0], [1], [0, 0, 1, 1], [], []>} : vector<16x16xbf16>, vector<16x128xbf16>, vector<16x128xf32> -> vector<16x128xf32>
    %c0_6 = arith.constant 0 : index
    %c0_7 = arith.constant 0 : index
    %7 = vector.load %arg4[%c0_6, %c0_7] : memref<16x16xbf16, #tpu.memory_space<vmem>>, vector<16x16xbf16>
    %c0_8 = arith.constant 0 : index
    %c0_9 = arith.constant 0 : index
    %8 = vector.load %arg6[%c0_8, %c0_9] : memref<16x128xbf16, #tpu.memory_space<vmem>>, vector<16x128xbf16>
    %cst_10 = arith.constant dense<0.000000e+00> : vector<16x128xf32>
    %9 = tpu.matmul %7, %8, %cst_10 {dimension_numbers = #tpu.dot_dimension_numbers<[1], [0], [0], [1], [0, 0, 1, 1], [], []>} : vector<16x16xbf16>, vector<16x128xbf16>, vector<16x128xf32> -> vector<16x128xf32>
    %10 = arith.addf %6, %9 : vector<16x128xf32>
    %11 = arith.addf %3, %10 : vector<16x128xf32>
    %c0_11 = arith.constant 0 : index
    %c0_12 = arith.constant 0 : index
    %12 = vector.load %arg9[%c0_11, %c0_12] : memref<16x128xf32, #tpu.memory_space<vmem>>, vector<16x128xf32>
    tpu.vector_store %arg9[%c0_11, %c0_12], %11 {strides = array<i32>} : memref<16x128xf32, #tpu.memory_space<vmem>>, vector<16x128xf32>,
    %c0_i32_13 = arith.constant 0 : i32
    %13 = arith.cmpi eq, %arg2, %c0_i32_13 : i32
    %14 = arith.extui %13 : i1 to i32
    %c0_i32_14 = arith.constant 0 : i32
    %15 = arith.cmpi ne, %14, %c0_i32_14 : i32
    scf.if %15 {
      %c0_15 = arith.constant 0 : index
      %c0_16 = arith.constant 0 : index
      %16 = vector.load %arg9[%c0_15, %c0_16] : memref<16x128xf32, #tpu.memory_space<vmem>>, vector<16x128xf32>
      %c0_17 = arith.constant 0 : index
      %c0_18 = arith.constant 0 : index
      %17 = vector.load %arg7[%c0_17, %c0_18] : memref<1x128xf32, #tpu.memory_space<vmem>>, vector<1x128xf32>
      %18 = vector.broadcast %17 : vector<1x128xf32> to vector<16x128xf32>
      %19 = arith.addf %16, %18 : vector<16x128xf32>
      %c0_19 = arith.constant 0 : index
      %c0_20 = arith.constant 0 : index
      %20 = vector.load %arg8[%c0_19, %c0_20] : memref<16x128xf32, #tpu.memory_space<vmem>>, vector<16x128xf32>
      tpu.vector_store %arg8[%c0_19, %c0_20], %19 {strides = array<i32>} : memref<16x128xf32, #tpu.memory_space<vmem>>, vector<16x128xf32>,
    } else {
    }
    return
  }
  func.func @transform_0(%arg0: i32, %arg1: i32, %arg2: i32) -> (i32, i32) {
    %c0_i32 = arith.constant 0 : i32
    return %arg0, %arg2 : i32, i32
  }
  func.func @transform_1(%arg0: i32, %arg1: i32, %arg2: i32) -> (i32, i32) {
    %c0_i32 = arith.constant 0 : i32
    return %arg0, %arg2 : i32, i32
  }
  func.func @transform_2(%arg0: i32, %arg1: i32, %arg2: i32) -> (i32, i32) {
    %c0_i32 = arith.constant 0 : i32
    return %arg2, %arg1 : i32, i32
  }
  func.func @transform_3(%arg0: i32, %arg1: i32, %arg2: i32) -> (i32, i32) {
    %c0_i32 = arith.constant 0 : i32
    return %arg2, %arg1 : i32, i32
  }
  func.func @transform_4(%arg0: i32, %arg1: i32, %arg2: i32) -> (i32, i32) {
    %c0_i32 = arith.constant 0 : i32
    %c0_i32_0 = arith.constant 0 : i32
    return %c0_i32, %arg1 : i32, i32
  }
  func.func @transform_5(%arg0: i32, %arg1: i32, %arg2: i32) -> (i32, i32) {
    %c0_i32 = arith.constant 0 : i32
    return %arg0, %arg1 : i32, i32
  }
}

module attributes {stable_mosaic.version = 11 : i64} {
  func.func @dense2_kernel(%arg0: i32, %arg1: i32, %arg2: i32, %arg3: memref<16x16xbf16, #tpu.memory_space<vmem>>, %arg4: memref<16x16xbf16, #tpu.memory_space<vmem>>, %arg5: memref<16x64xbf16, #tpu.memory_space<vmem>>, %arg6: memref<16x64xbf16, #tpu.memory_space<vmem>>, %arg7: memref<1x64xf32, #tpu.memory_space<vmem>>, %arg8: memref<16x64xbf16, #tpu.memory_space<vmem>>, %arg9: memref<16x64xf32, #tpu.memory_space<vmem>>) attributes {dimension_semantics = [#tpu.dimension_semantics<parallel>, #tpu.dimension_semantics<parallel>, #tpu.dimension_semantics<arbitrary>], iteration_bounds = array<i64: 1, 1, 1>, scalar_prefetch = 0 : i64, scratch_operands = 1 : i64, tpu.core_type = #tpu.core_type<tc>, window_params = [{transform_indices = @transform_0, window_bounds = array<i64: 16, 16>}, {transform_indices = @transform_1, window_bounds = array<i64: 16, 16>}, {transform_indices = @transform_2, window_bounds = array<i64: 16, 64>}, {transform_indices = @transform_3, window_bounds = array<i64: 16, 64>}, {transform_indices = @transform_4, window_bounds = array<i64: 1, 64>}, {transform_indices = @transform_5, window_bounds = array<i64: 16, 64>}]} {
    %c0_i32 = arith.constant 0 : i32
    %0 = arith.cmpi eq, %arg2, %c0_i32 : i32
    %1 = arith.extui %0 : i1 to i32
    %c0_i32_0 = arith.constant 0 : i32
    %2 = arith.cmpi ne, %1, %c0_i32_0 : i32
    scf.if %2 {
      %cst_15 = arith.constant 0.000000e+00 : f32
      %16 = vector.broadcast %cst_15 : f32 to vector<16x64xf32>
      %c0_16 = arith.constant 0 : index
      %c0_17 = arith.constant 0 : index
      %17 = vector.load %arg9[%c0_16, %c0_17] : memref<16x64xf32, #tpu.memory_space<vmem>>, vector<16x64xf32>
      tpu.vector_store %arg9[%c0_16, %c0_17], %16 {strides = array<i32>} : memref<16x64xf32, #tpu.memory_space<vmem>>, vector<16x64xf32>,
    } else {
    }
    %c0 = arith.constant 0 : index
    %c0_1 = arith.constant 0 : index
    %3 = vector.load %arg9[%c0, %c0_1] : memref<16x64xf32, #tpu.memory_space<vmem>>, vector<16x64xf32>
    %c0_2 = arith.constant 0 : index
    %c0_3 = arith.constant 0 : index
    %4 = vector.load %arg3[%c0_2, %c0_3] : memref<16x16xbf16, #tpu.memory_space<vmem>>, vector<16x16xbf16>
    %c0_4 = arith.constant 0 : index
    %c0_5 = arith.constant 0 : index
    %5 = vector.load %arg5[%c0_4, %c0_5] : memref<16x64xbf16, #tpu.memory_space<vmem>>, vector<16x64xbf16>
    %cst = arith.constant dense<0.000000e+00> : vector<16x64xf32>
    %6 = tpu.matmul %4, %5, %cst {dimension_numbers = #tpu.dot_dimension_numbers<[1], [0], [0], [1], [0, 0, 1, 1], [], []>} : vector<16x16xbf16>, vector<16x64xbf16>, vector<16x64xf32> -> vector<16x64xf32>
    %c0_6 = arith.constant 0 : index
    %c0_7 = arith.constant 0 : index
    %7 = vector.load %arg4[%c0_6, %c0_7] : memref<16x16xbf16, #tpu.memory_space<vmem>>, vector<16x16xbf16>
    %c0_8 = arith.constant 0 : index
    %c0_9 = arith.constant 0 : index
    %8 = vector.load %arg6[%c0_8, %c0_9] : memref<16x64xbf16, #tpu.memory_space<vmem>>, vector<16x64xbf16>
    %cst_10 = arith.constant dense<0.000000e+00> : vector<16x64xf32>
    %9 = tpu.matmul %7, %8, %cst_10 {dimension_numbers = #tpu.dot_dimension_numbers<[1], [0], [0], [1], [0, 0, 1, 1], [], []>} : vector<16x16xbf16>, vector<16x64xbf16>, vector<16x64xf32> -> vector<16x64xf32>
    %10 = arith.addf %6, %9 : vector<16x64xf32>
    %11 = arith.addf %3, %10 : vector<16x64xf32>
    %c0_11 = arith.constant 0 : index
    %c0_12 = arith.constant 0 : index
    %12 = vector.load %arg9[%c0_11, %c0_12] : memref<16x64xf32, #tpu.memory_space<vmem>>, vector<16x64xf32>
    tpu.vector_store %arg9[%c0_11, %c0_12], %11 {strides = array<i32>} : memref<16x64xf32, #tpu.memory_space<vmem>>, vector<16x64xf32>,
    %c0_i32_13 = arith.constant 0 : i32
    %13 = arith.cmpi eq, %arg2, %c0_i32_13 : i32
    %14 = arith.extui %13 : i1 to i32
    %c0_i32_14 = arith.constant 0 : i32
    %15 = arith.cmpi ne, %14, %c0_i32_14 : i32
    scf.if %15 {
      %c0_15 = arith.constant 0 : index
      %c0_16 = arith.constant 0 : index
      %16 = vector.load %arg9[%c0_15, %c0_16] : memref<16x64xf32, #tpu.memory_space<vmem>>, vector<16x64xf32>
      %c0_17 = arith.constant 0 : index
      %c0_18 = arith.constant 0 : index
      %17 = vector.load %arg7[%c0_17, %c0_18] : memref<1x64xf32, #tpu.memory_space<vmem>>, vector<1x64xf32>
      %18 = vector.broadcast %17 : vector<1x64xf32> to vector<16x64xf32>
      %19 = arith.addf %16, %18 : vector<16x64xf32>
      %20 = arith.truncf %19 : vector<16x64xf32> to vector<16x64xbf16>
      %c0_19 = arith.constant 0 : index
      %c0_20 = arith.constant 0 : index
      %21 = vector.load %arg8[%c0_19, %c0_20] : memref<16x64xbf16, #tpu.memory_space<vmem>>, vector<16x64xbf16>
      tpu.vector_store %arg8[%c0_19, %c0_20], %20 {strides = array<i32>} : memref<16x64xbf16, #tpu.memory_space<vmem>>, vector<16x64xbf16>,
    } else {
    }
    return
  }
  func.func @transform_0(%arg0: i32, %arg1: i32, %arg2: i32) -> (i32, i32) {
    %c0_i32 = arith.constant 0 : i32
    return %arg0, %arg2 : i32, i32
  }
  func.func @transform_1(%arg0: i32, %arg1: i32, %arg2: i32) -> (i32, i32) {
    %c0_i32 = arith.constant 0 : i32
    return %arg0, %arg2 : i32, i32
  }
  func.func @transform_2(%arg0: i32, %arg1: i32, %arg2: i32) -> (i32, i32) {
    %c0_i32 = arith.constant 0 : i32
    return %arg2, %arg1 : i32, i32
  }
  func.func @transform_3(%arg0: i32, %arg1: i32, %arg2: i32) -> (i32, i32) {
    %c0_i32 = arith.constant 0 : i32
    return %arg2, %arg1 : i32, i32
  }
  func.func @transform_4(%arg0: i32, %arg1: i32, %arg2: i32) -> (i32, i32) {
    %c0_i32 = arith.constant 0 : i32
    %c0_i32_0 = arith.constant 0 : i32
    return %c0_i32, %arg1 : i32, i32
  }
  func.func @transform_5(%arg0: i32, %arg1: i32, %arg2: i32) -> (i32, i32) {
    %c0_i32 = arith.constant 0 : i32
    return %arg0, %arg1 : i32, i32
  }
}

module attributes {stable_mosaic.version = 11 : i64} {
  func.func @bilstm_kernel(%arg0: i32, %arg1: memref<2x8x64xbf16, #tpu.memory_space<vmem>>, %arg2: memref<2x8x64xbf16, #tpu.memory_space<vmem>>, %arg3: memref<16x64xbf16, #tpu.memory_space<vmem>>, %arg4: memref<16x64xbf16, #tpu.memory_space<vmem>>, %arg5: memref<2x8x16xbf16, #tpu.memory_space<vmem>>, %arg6: memref<2x8x16xbf16, #tpu.memory_space<vmem>>, %arg7: memref<2x16xf32, #tpu.memory_space<vmem>>, %arg8: memref<2x16xf32, #tpu.memory_space<vmem>>, %arg9: memref<2x16xf32, #tpu.memory_space<vmem>>, %arg10: memref<2x16xf32, #tpu.memory_space<vmem>>) attributes {dimension_semantics = [#tpu.dimension_semantics<arbitrary>], iteration_bounds = array<i64: 1>, scalar_prefetch = 0 : i64, scratch_operands = 4 : i64, tpu.core_type = #tpu.core_type<tc>, window_params = [{transform_indices = @transform_0, window_bounds = array<i64: 2, 8, 64>}, {transform_indices = @transform_1, window_bounds = array<i64: 2, 8, 64>}, {pipeline_mode = #tpu.pipeline_mode<synchronous>, transform_indices = @transform_2, window_bounds = array<i64: 16, 64>}, {pipeline_mode = #tpu.pipeline_mode<synchronous>, transform_indices = @transform_3, window_bounds = array<i64: 16, 64>}, {transform_indices = @transform_4, window_bounds = array<i64: 2, 8, 16>}, {transform_indices = @transform_5, window_bounds = array<i64: 2, 8, 16>}]} {
    %c0_i32 = arith.constant 0 : i32
    %0 = arith.cmpi eq, %arg0, %c0_i32 : i32
    %1 = arith.extui %0 : i1 to i32
    %c0_i32_0 = arith.constant 0 : i32
    %2 = arith.cmpi ne, %1, %c0_i32_0 : i32
    scf.if %2 {
      %cst_172 = arith.constant 0.000000e+00 : f32
      %573 = vector.broadcast %cst_172 : f32 to vector<2x16xf32>
      %c0_173 = arith.constant 0 : index
      %c0_174 = arith.constant 0 : index
      %574 = vector.load %arg7[%c0_173, %c0_174] : memref<2x16xf32, #tpu.memory_space<vmem>>, vector<2x16xf32>
      tpu.vector_store %arg7[%c0_173, %c0_174], %573 {strides = array<i32>} : memref<2x16xf32, #tpu.memory_space<vmem>>, vector<2x16xf32>,
      %cst_175 = arith.constant 0.000000e+00 : f32
      %575 = vector.broadcast %cst_175 : f32 to vector<2x16xf32>
      %c0_176 = arith.constant 0 : index
      %c0_177 = arith.constant 0 : index
      %576 = vector.load %arg8[%c0_176, %c0_177] : memref<2x16xf32, #tpu.memory_space<vmem>>, vector<2x16xf32>
      tpu.vector_store %arg8[%c0_176, %c0_177], %575 {strides = array<i32>} : memref<2x16xf32, #tpu.memory_space<vmem>>, vector<2x16xf32>,
      %cst_178 = arith.constant 0.000000e+00 : f32
      %577 = vector.broadcast %cst_178 : f32 to vector<2x16xf32>
      %c0_179 = arith.constant 0 : index
      %c0_180 = arith.constant 0 : index
      %578 = vector.load %arg9[%c0_179, %c0_180] : memref<2x16xf32, #tpu.memory_space<vmem>>, vector<2x16xf32>
      tpu.vector_store %arg9[%c0_179, %c0_180], %577 {strides = array<i32>} : memref<2x16xf32, #tpu.memory_space<vmem>>, vector<2x16xf32>,
      %cst_181 = arith.constant 0.000000e+00 : f32
      %579 = vector.broadcast %cst_181 : f32 to vector<2x16xf32>
      %c0_182 = arith.constant 0 : index
      %c0_183 = arith.constant 0 : index
      %580 = vector.load %arg10[%c0_182, %c0_183] : memref<2x16xf32, #tpu.memory_space<vmem>>, vector<2x16xf32>
      tpu.vector_store %arg10[%c0_182, %c0_183], %579 {strides = array<i32>} : memref<2x16xf32, #tpu.memory_space<vmem>>, vector<2x16xf32>,
    } else {
    }
    %c0 = arith.constant 0 : index
    %c0_1 = arith.constant 0 : index
    %3 = vector.load %arg3[%c0, %c0_1] : memref<16x64xbf16, #tpu.memory_space<vmem>>, vector<16x64xbf16>
    %c0_2 = arith.constant 0 : index
    %c0_3 = arith.constant 0 : index
    %4 = vector.load %arg4[%c0_2, %c0_3] : memref<16x64xbf16, #tpu.memory_space<vmem>>, vector<16x64xbf16>
    %c0_4 = arith.constant 0 : index
    %c0_5 = arith.constant 0 : index
    %5 = vector.load %arg7[%c0_4, %c0_5] : memref<2x16xf32, #tpu.memory_space<vmem>>, vector<2x16xf32>
    %c0_6 = arith.constant 0 : index
    %c0_7 = arith.constant 0 : index
    %6 = vector.load %arg8[%c0_6, %c0_7] : memref<2x16xf32, #tpu.memory_space<vmem>>, vector<2x16xf32>
    %c0_8 = arith.constant 0 : index
    %c0_9 = arith.constant 0 : index
    %7 = vector.load %arg9[%c0_8, %c0_9] : memref<2x16xf32, #tpu.memory_space<vmem>>, vector<2x16xf32>
    %c0_10 = arith.constant 0 : index
    %c0_11 = arith.constant 0 : index
    %8 = vector.load %arg10[%c0_10, %c0_11] : memref<2x16xf32, #tpu.memory_space<vmem>>, vector<2x16xf32>
    %c0_12 = arith.constant 0 : index
    %c0_13 = arith.constant 0 : index
    %c0_14 = arith.constant 0 : index
    %9 = vector.load %arg1[%c0_12, %c0_13, %c0_14] : memref<2x8x64xbf16, #tpu.memory_space<vmem>>, vector<2x1x64xbf16>
    %10 = vector.shape_cast %9 : vector<2x1x64xbf16> to vector<2x64xbf16>
    %11 = arith.extf %10 : vector<2x64xbf16> to vector<2x64xf32>
    %12 = arith.truncf %5 : vector<2x16xf32> to vector<2x16xbf16>
    %cst = arith.constant dense<0.000000e+00> : vector<2x64xf32>
    %13 = tpu.matmul %12, %3, %cst {dimension_numbers = #tpu.dot_dimension_numbers<[1], [0], [0], [1], [0, 0, 1, 1], [], []>} : vector<2x16xbf16>, vector<16x64xbf16>, vector<2x64xf32> -> vector<2x64xf32>
    %14 = arith.addf %11, %13 : vector<2x64xf32>
    %15 = vector.extract_strided_slice %14 {offsets = [0, 0], sizes = [2, 16], strides = [1, 1]} : vector<2x64xf32> to vector<2x16xf32>
    %16 = arith.negf %15 : vector<2x16xf32>
    %17 = math.exp %16 : vector<2x16xf32>
    %cst_15 = arith.constant 1.000000e+00 : f32
    %18 = vector.broadcast %cst_15 : f32 to vector<2x16xf32>
    %19 = arith.addf %18, %17 : vector<2x16xf32>
    %20 = arith.divf %18, %19 : vector<2x16xf32>
    %21 = vector.extract_strided_slice %14 {offsets = [0, 16], sizes = [2, 16], strides = [1, 1]} : vector<2x64xf32> to vector<2x16xf32>
    %22 = arith.negf %21 : vector<2x16xf32>
    %23 = math.exp %22 : vector<2x16xf32>
    %cst_16 = arith.constant 1.000000e+00 : f32
    %24 = vector.broadcast %cst_16 : f32 to vector<2x16xf32>
    %25 = arith.addf %24, %23 : vector<2x16xf32>
    %26 = arith.divf %24, %25 : vector<2x16xf32>
    %27 = vector.extract_strided_slice %14 {offsets = [0, 32], sizes = [2, 16], strides = [1, 1]} : vector<2x64xf32> to vector<2x16xf32>
    %28 = math.tanh %27 : vector<2x16xf32>
    %29 = vector.extract_strided_slice %14 {offsets = [0, 48], sizes = [2, 16], strides = [1, 1]} : vector<2x64xf32> to vector<2x16xf32>
    %30 = arith.negf %29 : vector<2x16xf32>
    %31 = math.exp %30 : vector<2x16xf32>
    %cst_17 = arith.constant 1.000000e+00 : f32
    %32 = vector.broadcast %cst_17 : f32 to vector<2x16xf32>
    %33 = arith.addf %32, %31 : vector<2x16xf32>
    %34 = arith.divf %32, %33 : vector<2x16xf32>
    %35 = arith.mulf %26, %6 : vector<2x16xf32>
    %36 = arith.mulf %20, %28 : vector<2x16xf32>
    %37 = arith.addf %35, %36 : vector<2x16xf32>
    %38 = math.tanh %37 : vector<2x16xf32>
    %39 = arith.mulf %34, %38 : vector<2x16xf32>
    %40 = arith.truncf %39 : vector<2x16xf32> to vector<2x16xbf16>
    %c0_18 = arith.constant 0 : index
    %c0_19 = arith.constant 0 : index
    %c0_20 = arith.constant 0 : index
    %41 = vector.load %arg5[%c0_18, %c0_19, %c0_20] : memref<2x8x16xbf16, #tpu.memory_space<vmem>>, vector<2x1x16xbf16>
    %42 = vector.shape_cast %41 : vector<2x1x16xbf16> to vector<2x16xbf16>
    %43 = vector.shape_cast %40 : vector<2x16xbf16> to vector<2x1x16xbf16>
    tpu.vector_store %arg5[%c0_18, %c0_19, %c0_20], %43 {strides = array<i32>} : memref<2x8x16xbf16, #tpu.memory_space<vmem>>, vector<2x1x16xbf16>,
    %c0_21 = arith.constant 0 : index
    %c7 = arith.constant 7 : index
    %c0_22 = arith.constant 0 : index
    %44 = vector.load %arg2[%c0_21, %c7, %c0_22] : memref<2x8x64xbf16, #tpu.memory_space<vmem>>, vector<2x1x64xbf16>
    %45 = vector.shape_cast %44 : vector<2x1x64xbf16> to vector<2x64xbf16>
    %46 = arith.extf %45 : vector<2x64xbf16> to vector<2x64xf32>
    %47 = arith.truncf %7 : vector<2x16xf32> to vector<2x16xbf16>
    %cst_23 = arith.constant dense<0.000000e+00> : vector<2x64xf32>
    %48 = tpu.matmul %47, %4, %cst_23 {dimension_numbers = #tpu.dot_dimension_numbers<[1], [0], [0], [1], [0, 0, 1, 1], [], []>} : vector<2x16xbf16>, vector<16x64xbf16>, vector<2x64xf32> -> vector<2x64xf32>
    %49 = arith.addf %46, %48 : vector<2x64xf32>
    %50 = vector.extract_strided_slice %49 {offsets = [0, 0], sizes = [2, 16], strides = [1, 1]} : vector<2x64xf32> to vector<2x16xf32>
    %51 = arith.negf %50 : vector<2x16xf32>
    %52 = math.exp %51 : vector<2x16xf32>
    %cst_24 = arith.constant 1.000000e+00 : f32
    %53 = vector.broadcast %cst_24 : f32 to vector<2x16xf32>
    %54 = arith.addf %53, %52 : vector<2x16xf32>
    %55 = arith.divf %53, %54 : vector<2x16xf32>
    %56 = vector.extract_strided_slice %49 {offsets = [0, 16], sizes = [2, 16], strides = [1, 1]} : vector<2x64xf32> to vector<2x16xf32>
    %57 = arith.negf %56 : vector<2x16xf32>
    %58 = math.exp %57 : vector<2x16xf32>
    %cst_25 = arith.constant 1.000000e+00 : f32
    %59 = vector.broadcast %cst_25 : f32 to vector<2x16xf32>
    %60 = arith.addf %59, %58 : vector<2x16xf32>
    %61 = arith.divf %59, %60 : vector<2x16xf32>
    %62 = vector.extract_strided_slice %49 {offsets = [0, 32], sizes = [2, 16], strides = [1, 1]} : vector<2x64xf32> to vector<2x16xf32>
    %63 = math.tanh %62 : vector<2x16xf32>
    %64 = vector.extract_strided_slice %49 {offsets = [0, 48], sizes = [2, 16], strides = [1, 1]} : vector<2x64xf32> to vector<2x16xf32>
    %65 = arith.negf %64 : vector<2x16xf32>
    %66 = math.exp %65 : vector<2x16xf32>
    %cst_26 = arith.constant 1.000000e+00 : f32
    %67 = vector.broadcast %cst_26 : f32 to vector<2x16xf32>
    %68 = arith.addf %67, %66 : vector<2x16xf32>
    %69 = arith.divf %67, %68 : vector<2x16xf32>
    %70 = arith.mulf %61, %8 : vector<2x16xf32>
    %71 = arith.mulf %55, %63 : vector<2x16xf32>
    %72 = arith.addf %70, %71 : vector<2x16xf32>
    %73 = math.tanh %72 : vector<2x16xf32>
    %74 = arith.mulf %69, %73 : vector<2x16xf32>
    %75 = arith.truncf %74 : vector<2x16xf32> to vector<2x16xbf16>
    %c0_27 = arith.constant 0 : index
    %c7_28 = arith.constant 7 : index
    %c0_29 = arith.constant 0 : index
    %76 = vector.load %arg6[%c0_27, %c7_28, %c0_29] : memref<2x8x16xbf16, #tpu.memory_space<vmem>>, vector<2x1x16xbf16>
    %77 = vector.shape_cast %76 : vector<2x1x16xbf16> to vector<2x16xbf16>
    %78 = vector.shape_cast %75 : vector<2x16xbf16> to vector<2x1x16xbf16>
    tpu.vector_store %arg6[%c0_27, %c7_28, %c0_29], %78 {strides = array<i32>} : memref<2x8x16xbf16, #tpu.memory_space<vmem>>, vector<2x1x16xbf16>,
    %c0_30 = arith.constant 0 : index
    %c1 = arith.constant 1 : index
    %c0_31 = arith.constant 0 : index
    %79 = vector.load %arg1[%c0_30, %c1, %c0_31] : memref<2x8x64xbf16, #tpu.memory_space<vmem>>, vector<2x1x64xbf16>
    %80 = vector.shape_cast %79 : vector<2x1x64xbf16> to vector<2x64xbf16>
    %81 = arith.extf %80 : vector<2x64xbf16> to vector<2x64xf32>
    %82 = arith.truncf %39 : vector<2x16xf32> to vector<2x16xbf16>
    %cst_32 = arith.constant dense<0.000000e+00> : vector<2x64xf32>
    %83 = tpu.matmul %82, %3, %cst_32 {dimension_numbers = #tpu.dot_dimension_numbers<[1], [0], [0], [1], [0, 0, 1, 1], [], []>} : vector<2x16xbf16>, vector<16x64xbf16>, vector<2x64xf32> -> vector<2x64xf32>
    %84 = arith.addf %81, %83 : vector<2x64xf32>
    %85 = vector.extract_strided_slice %84 {offsets = [0, 0], sizes = [2, 16], strides = [1, 1]} : vector<2x64xf32> to vector<2x16xf32>
    %86 = arith.negf %85 : vector<2x16xf32>
    %87 = math.exp %86 : vector<2x16xf32>
    %cst_33 = arith.constant 1.000000e+00 : f32
    %88 = vector.broadcast %cst_33 : f32 to vector<2x16xf32>
    %89 = arith.addf %88, %87 : vector<2x16xf32>
    %90 = arith.divf %88, %89 : vector<2x16xf32>
    %91 = vector.extract_strided_slice %84 {offsets = [0, 16], sizes = [2, 16], strides = [1, 1]} : vector<2x64xf32> to vector<2x16xf32>
    %92 = arith.negf %91 : vector<2x16xf32>
    %93 = math.exp %92 : vector<2x16xf32>
    %cst_34 = arith.constant 1.000000e+00 : f32
    %94 = vector.broadcast %cst_34 : f32 to vector<2x16xf32>
    %95 = arith.addf %94, %93 : vector<2x16xf32>
    %96 = arith.divf %94, %95 : vector<2x16xf32>
    %97 = vector.extract_strided_slice %84 {offsets = [0, 32], sizes = [2, 16], strides = [1, 1]} : vector<2x64xf32> to vector<2x16xf32>
    %98 = math.tanh %97 : vector<2x16xf32>
    %99 = vector.extract_strided_slice %84 {offsets = [0, 48], sizes = [2, 16], strides = [1, 1]} : vector<2x64xf32> to vector<2x16xf32>
    %100 = arith.negf %99 : vector<2x16xf32>
    %101 = math.exp %100 : vector<2x16xf32>
    %cst_35 = arith.constant 1.000000e+00 : f32
    %102 = vector.broadcast %cst_35 : f32 to vector<2x16xf32>
    %103 = arith.addf %102, %101 : vector<2x16xf32>
    %104 = arith.divf %102, %103 : vector<2x16xf32>
    %105 = arith.mulf %96, %37 : vector<2x16xf32>
    %106 = arith.mulf %90, %98 : vector<2x16xf32>
    %107 = arith.addf %105, %106 : vector<2x16xf32>
    %108 = math.tanh %107 : vector<2x16xf32>
    %109 = arith.mulf %104, %108 : vector<2x16xf32>
    %110 = arith.truncf %109 : vector<2x16xf32> to vector<2x16xbf16>
    %c0_36 = arith.constant 0 : index
    %c1_37 = arith.constant 1 : index
    %c0_38 = arith.constant 0 : index
    %111 = vector.load %arg5[%c0_36, %c1_37, %c0_38] : memref<2x8x16xbf16, #tpu.memory_space<vmem>>, vector<2x1x16xbf16>
    %112 = vector.shape_cast %111 : vector<2x1x16xbf16> to vector<2x16xbf16>
    %113 = vector.shape_cast %110 : vector<2x16xbf16> to vector<2x1x16xbf16>
    tpu.vector_store %arg5[%c0_36, %c1_37, %c0_38], %113 {strides = array<i32>} : memref<2x8x16xbf16, #tpu.memory_space<vmem>>, vector<2x1x16xbf16>,
    %c0_39 = arith.constant 0 : index
    %c6 = arith.constant 6 : index
    %c0_40 = arith.constant 0 : index
    %114 = vector.load %arg2[%c0_39, %c6, %c0_40] : memref<2x8x64xbf16, #tpu.memory_space<vmem>>, vector<2x1x64xbf16>
    %115 = vector.shape_cast %114 : vector<2x1x64xbf16> to vector<2x64xbf16>
    %116 = arith.extf %115 : vector<2x64xbf16> to vector<2x64xf32>
    %117 = arith.truncf %74 : vector<2x16xf32> to vector<2x16xbf16>
    %cst_41 = arith.constant dense<0.000000e+00> : vector<2x64xf32>
    %118 = tpu.matmul %117, %4, %cst_41 {dimension_numbers = #tpu.dot_dimension_numbers<[1], [0], [0], [1], [0, 0, 1, 1], [], []>} : vector<2x16xbf16>, vector<16x64xbf16>, vector<2x64xf32> -> vector<2x64xf32>
    %119 = arith.addf %116, %118 : vector<2x64xf32>
    %120 = vector.extract_strided_slice %119 {offsets = [0, 0], sizes = [2, 16], strides = [1, 1]} : vector<2x64xf32> to vector<2x16xf32>
    %121 = arith.negf %120 : vector<2x16xf32>
    %122 = math.exp %121 : vector<2x16xf32>
    %cst_42 = arith.constant 1.000000e+00 : f32
    %123 = vector.broadcast %cst_42 : f32 to vector<2x16xf32>
    %124 = arith.addf %123, %122 : vector<2x16xf32>
    %125 = arith.divf %123, %124 : vector<2x16xf32>
    %126 = vector.extract_strided_slice %119 {offsets = [0, 16], sizes = [2, 16], strides = [1, 1]} : vector<2x64xf32> to vector<2x16xf32>
    %127 = arith.negf %126 : vector<2x16xf32>
    %128 = math.exp %127 : vector<2x16xf32>
    %cst_43 = arith.constant 1.000000e+00 : f32
    %129 = vector.broadcast %cst_43 : f32 to vector<2x16xf32>
    %130 = arith.addf %129, %128 : vector<2x16xf32>
    %131 = arith.divf %129, %130 : vector<2x16xf32>
    %132 = vector.extract_strided_slice %119 {offsets = [0, 32], sizes = [2, 16], strides = [1, 1]} : vector<2x64xf32> to vector<2x16xf32>
    %133 = math.tanh %132 : vector<2x16xf32>
    %134 = vector.extract_strided_slice %119 {offsets = [0, 48], sizes = [2, 16], strides = [1, 1]} : vector<2x64xf32> to vector<2x16xf32>
    %135 = arith.negf %134 : vector<2x16xf32>
    %136 = math.exp %135 : vector<2x16xf32>
    %cst_44 = arith.constant 1.000000e+00 : f32
    %137 = vector.broadcast %cst_44 : f32 to vector<2x16xf32>
    %138 = arith.addf %137, %136 : vector<2x16xf32>
    %139 = arith.divf %137, %138 : vector<2x16xf32>
    %140 = arith.mulf %131, %72 : vector<2x16xf32>
    %141 = arith.mulf %125, %133 : vector<2x16xf32>
    %142 = arith.addf %140, %141 : vector<2x16xf32>
    %143 = math.tanh %142 : vector<2x16xf32>
    %144 = arith.mulf %139, %143 : vector<2x16xf32>
    %145 = arith.truncf %144 : vector<2x16xf32> to vector<2x16xbf16>
    %c0_45 = arith.constant 0 : index
    %c6_46 = arith.constant 6 : index
    %c0_47 = arith.constant 0 : index
    %146 = vector.load %arg6[%c0_45, %c6_46, %c0_47] : memref<2x8x16xbf16, #tpu.memory_space<vmem>>, vector<2x1x16xbf16>
    %147 = vector.shape_cast %146 : vector<2x1x16xbf16> to vector<2x16xbf16>
    %148 = vector.shape_cast %145 : vector<2x16xbf16> to vector<2x1x16xbf16>
    tpu.vector_store %arg6[%c0_45, %c6_46, %c0_47], %148 {strides = array<i32>} : memref<2x8x16xbf16, #tpu.memory_space<vmem>>, vector<2x1x16xbf16>,
    %c0_48 = arith.constant 0 : index
    %c2 = arith.constant 2 : index
    %c0_49 = arith.constant 0 : index
    %149 = vector.load %arg1[%c0_48, %c2, %c0_49] : memref<2x8x64xbf16, #tpu.memory_space<vmem>>, vector<2x1x64xbf16>
    %150 = vector.shape_cast %149 : vector<2x1x64xbf16> to vector<2x64xbf16>
    %151 = arith.extf %150 : vector<2x64xbf16> to vector<2x64xf32>
    %152 = arith.truncf %109 : vector<2x16xf32> to vector<2x16xbf16>
    %cst_50 = arith.constant dense<0.000000e+00> : vector<2x64xf32>
    %153 = tpu.matmul %152, %3, %cst_50 {dimension_numbers = #tpu.dot_dimension_numbers<[1], [0], [0], [1], [0, 0, 1, 1], [], []>} : vector<2x16xbf16>, vector<16x64xbf16>, vector<2x64xf32> -> vector<2x64xf32>
    %154 = arith.addf %151, %153 : vector<2x64xf32>
    %155 = vector.extract_strided_slice %154 {offsets = [0, 0], sizes = [2, 16], strides = [1, 1]} : vector<2x64xf32> to vector<2x16xf32>
    %156 = arith.negf %155 : vector<2x16xf32>
    %157 = math.exp %156 : vector<2x16xf32>
    %cst_51 = arith.constant 1.000000e+00 : f32
    %158 = vector.broadcast %cst_51 : f32 to vector<2x16xf32>
    %159 = arith.addf %158, %157 : vector<2x16xf32>
    %160 = arith.divf %158, %159 : vector<2x16xf32>
    %161 = vector.extract_strided_slice %154 {offsets = [0, 16], sizes = [2, 16], strides = [1, 1]} : vector<2x64xf32> to vector<2x16xf32>
    %162 = arith.negf %161 : vector<2x16xf32>
    %163 = math.exp %162 : vector<2x16xf32>
    %cst_52 = arith.constant 1.000000e+00 : f32
    %164 = vector.broadcast %cst_52 : f32 to vector<2x16xf32>
    %165 = arith.addf %164, %163 : vector<2x16xf32>
    %166 = arith.divf %164, %165 : vector<2x16xf32>
    %167 = vector.extract_strided_slice %154 {offsets = [0, 32], sizes = [2, 16], strides = [1, 1]} : vector<2x64xf32> to vector<2x16xf32>
    %168 = math.tanh %167 : vector<2x16xf32>
    %169 = vector.extract_strided_slice %154 {offsets = [0, 48], sizes = [2, 16], strides = [1, 1]} : vector<2x64xf32> to vector<2x16xf32>
    %170 = arith.negf %169 : vector<2x16xf32>
    %171 = math.exp %170 : vector<2x16xf32>
    %cst_53 = arith.constant 1.000000e+00 : f32
    %172 = vector.broadcast %cst_53 : f32 to vector<2x16xf32>
    %173 = arith.addf %172, %171 : vector<2x16xf32>
    %174 = arith.divf %172, %173 : vector<2x16xf32>
    %175 = arith.mulf %166, %107 : vector<2x16xf32>
    %176 = arith.mulf %160, %168 : vector<2x16xf32>
    %177 = arith.addf %175, %176 : vector<2x16xf32>
    %178 = math.tanh %177 : vector<2x16xf32>
    %179 = arith.mulf %174, %178 : vector<2x16xf32>
    %180 = arith.truncf %179 : vector<2x16xf32> to vector<2x16xbf16>
    %c0_54 = arith.constant 0 : index
    %c2_55 = arith.constant 2 : index
    %c0_56 = arith.constant 0 : index
    %181 = vector.load %arg5[%c0_54, %c2_55, %c0_56] : memref<2x8x16xbf16, #tpu.memory_space<vmem>>, vector<2x1x16xbf16>
    %182 = vector.shape_cast %181 : vector<2x1x16xbf16> to vector<2x16xbf16>
    %183 = vector.shape_cast %180 : vector<2x16xbf16> to vector<2x1x16xbf16>
    tpu.vector_store %arg5[%c0_54, %c2_55, %c0_56], %183 {strides = array<i32>} : memref<2x8x16xbf16, #tpu.memory_space<vmem>>, vector<2x1x16xbf16>,
    %c0_57 = arith.constant 0 : index
    %c5 = arith.constant 5 : index
    %c0_58 = arith.constant 0 : index
    %184 = vector.load %arg2[%c0_57, %c5, %c0_58] : memref<2x8x64xbf16, #tpu.memory_space<vmem>>, vector<2x1x64xbf16>
    %185 = vector.shape_cast %184 : vector<2x1x64xbf16> to vector<2x64xbf16>
    %186 = arith.extf %185 : vector<2x64xbf16> to vector<2x64xf32>
    %187 = arith.truncf %144 : vector<2x16xf32> to vector<2x16xbf16>
    %cst_59 = arith.constant dense<0.000000e+00> : vector<2x64xf32>
    %188 = tpu.matmul %187, %4, %cst_59 {dimension_numbers = #tpu.dot_dimension_numbers<[1], [0], [0], [1], [0, 0, 1, 1], [], []>} : vector<2x16xbf16>, vector<16x64xbf16>, vector<2x64xf32> -> vector<2x64xf32>
    %189 = arith.addf %186, %188 : vector<2x64xf32>
    %190 = vector.extract_strided_slice %189 {offsets = [0, 0], sizes = [2, 16], strides = [1, 1]} : vector<2x64xf32> to vector<2x16xf32>
    %191 = arith.negf %190 : vector<2x16xf32>
    %192 = math.exp %191 : vector<2x16xf32>
    %cst_60 = arith.constant 1.000000e+00 : f32
    %193 = vector.broadcast %cst_60 : f32 to vector<2x16xf32>
    %194 = arith.addf %193, %192 : vector<2x16xf32>
    %195 = arith.divf %193, %194 : vector<2x16xf32>
    %196 = vector.extract_strided_slice %189 {offsets = [0, 16], sizes = [2, 16], strides = [1, 1]} : vector<2x64xf32> to vector<2x16xf32>
    %197 = arith.negf %196 : vector<2x16xf32>
    %198 = math.exp %197 : vector<2x16xf32>
    %cst_61 = arith.constant 1.000000e+00 : f32
    %199 = vector.broadcast %cst_61 : f32 to vector<2x16xf32>
    %200 = arith.addf %199, %198 : vector<2x16xf32>
    %201 = arith.divf %199, %200 : vector<2x16xf32>
    %202 = vector.extract_strided_slice %189 {offsets = [0, 32], sizes = [2, 16], strides = [1, 1]} : vector<2x64xf32> to vector<2x16xf32>
    %203 = math.tanh %202 : vector<2x16xf32>
    %204 = vector.extract_strided_slice %189 {offsets = [0, 48], sizes = [2, 16], strides = [1, 1]} : vector<2x64xf32> to vector<2x16xf32>
    %205 = arith.negf %204 : vector<2x16xf32>
    %206 = math.exp %205 : vector<2x16xf32>
    %cst_62 = arith.constant 1.000000e+00 : f32
    %207 = vector.broadcast %cst_62 : f32 to vector<2x16xf32>
    %208 = arith.addf %207, %206 : vector<2x16xf32>
    %209 = arith.divf %207, %208 : vector<2x16xf32>
    %210 = arith.mulf %201, %142 : vector<2x16xf32>
    %211 = arith.mulf %195, %203 : vector<2x16xf32>
    %212 = arith.addf %210, %211 : vector<2x16xf32>
    %213 = math.tanh %212 : vector<2x16xf32>
    %214 = arith.mulf %209, %213 : vector<2x16xf32>
    %215 = arith.truncf %214 : vector<2x16xf32> to vector<2x16xbf16>
    %c0_63 = arith.constant 0 : index
    %c5_64 = arith.constant 5 : index
    %c0_65 = arith.constant 0 : index
    %216 = vector.load %arg6[%c0_63, %c5_64, %c0_65] : memref<2x8x16xbf16, #tpu.memory_space<vmem>>, vector<2x1x16xbf16>
    %217 = vector.shape_cast %216 : vector<2x1x16xbf16> to vector<2x16xbf16>
    %218 = vector.shape_cast %215 : vector<2x16xbf16> to vector<2x1x16xbf16>
    tpu.vector_store %arg6[%c0_63, %c5_64, %c0_65], %218 {strides = array<i32>} : memref<2x8x16xbf16, #tpu.memory_space<vmem>>, vector<2x1x16xbf16>,
    %c0_66 = arith.constant 0 : index
    %c3 = arith.constant 3 : index
    %c0_67 = arith.constant 0 : index
    %219 = vector.load %arg1[%c0_66, %c3, %c0_67] : memref<2x8x64xbf16, #tpu.memory_space<vmem>>, vector<2x1x64xbf16>
    %220 = vector.shape_cast %219 : vector<2x1x64xbf16> to vector<2x64xbf16>
    %221 = arith.extf %220 : vector<2x64xbf16> to vector<2x64xf32>
    %222 = arith.truncf %179 : vector<2x16xf32> to vector<2x16xbf16>
    %cst_68 = arith.constant dense<0.000000e+00> : vector<2x64xf32>
    %223 = tpu.matmul %222, %3, %cst_68 {dimension_numbers = #tpu.dot_dimension_numbers<[1], [0], [0], [1], [0, 0, 1, 1], [], []>} : vector<2x16xbf16>, vector<16x64xbf16>, vector<2x64xf32> -> vector<2x64xf32>
    %224 = arith.addf %221, %223 : vector<2x64xf32>
    %225 = vector.extract_strided_slice %224 {offsets = [0, 0], sizes = [2, 16], strides = [1, 1]} : vector<2x64xf32> to vector<2x16xf32>
    %226 = arith.negf %225 : vector<2x16xf32>
    %227 = math.exp %226 : vector<2x16xf32>
    %cst_69 = arith.constant 1.000000e+00 : f32
    %228 = vector.broadcast %cst_69 : f32 to vector<2x16xf32>
    %229 = arith.addf %228, %227 : vector<2x16xf32>
    %230 = arith.divf %228, %229 : vector<2x16xf32>
    %231 = vector.extract_strided_slice %224 {offsets = [0, 16], sizes = [2, 16], strides = [1, 1]} : vector<2x64xf32> to vector<2x16xf32>
    %232 = arith.negf %231 : vector<2x16xf32>
    %233 = math.exp %232 : vector<2x16xf32>
    %cst_70 = arith.constant 1.000000e+00 : f32
    %234 = vector.broadcast %cst_70 : f32 to vector<2x16xf32>
    %235 = arith.addf %234, %233 : vector<2x16xf32>
    %236 = arith.divf %234, %235 : vector<2x16xf32>
    %237 = vector.extract_strided_slice %224 {offsets = [0, 32], sizes = [2, 16], strides = [1, 1]} : vector<2x64xf32> to vector<2x16xf32>
    %238 = math.tanh %237 : vector<2x16xf32>
    %239 = vector.extract_strided_slice %224 {offsets = [0, 48], sizes = [2, 16], strides = [1, 1]} : vector<2x64xf32> to vector<2x16xf32>
    %240 = arith.negf %239 : vector<2x16xf32>
    %241 = math.exp %240 : vector<2x16xf32>
    %cst_71 = arith.constant 1.000000e+00 : f32
    %242 = vector.broadcast %cst_71 : f32 to vector<2x16xf32>
    %243 = arith.addf %242, %241 : vector<2x16xf32>
    %244 = arith.divf %242, %243 : vector<2x16xf32>
    %245 = arith.mulf %236, %177 : vector<2x16xf32>
    %246 = arith.mulf %230, %238 : vector<2x16xf32>
    %247 = arith.addf %245, %246 : vector<2x16xf32>
    %248 = math.tanh %247 : vector<2x16xf32>
    %249 = arith.mulf %244, %248 : vector<2x16xf32>
    %250 = arith.truncf %249 : vector<2x16xf32> to vector<2x16xbf16>
    %c0_72 = arith.constant 0 : index
    %c3_73 = arith.constant 3 : index
    %c0_74 = arith.constant 0 : index
    %251 = vector.load %arg5[%c0_72, %c3_73, %c0_74] : memref<2x8x16xbf16, #tpu.memory_space<vmem>>, vector<2x1x16xbf16>
    %252 = vector.shape_cast %251 : vector<2x1x16xbf16> to vector<2x16xbf16>
    %253 = vector.shape_cast %250 : vector<2x16xbf16> to vector<2x1x16xbf16>
    tpu.vector_store %arg5[%c0_72, %c3_73, %c0_74], %253 {strides = array<i32>} : memref<2x8x16xbf16, #tpu.memory_space<vmem>>, vector<2x1x16xbf16>,
    %c0_75 = arith.constant 0 : index
    %c4 = arith.constant 4 : index
    %c0_76 = arith.constant 0 : index
    %254 = vector.load %arg2[%c0_75, %c4, %c0_76] : memref<2x8x64xbf16, #tpu.memory_space<vmem>>, vector<2x1x64xbf16>
    %255 = vector.shape_cast %254 : vector<2x1x64xbf16> to vector<2x64xbf16>
    %256 = arith.extf %255 : vector<2x64xbf16> to vector<2x64xf32>
    %257 = arith.truncf %214 : vector<2x16xf32> to vector<2x16xbf16>
    %cst_77 = arith.constant dense<0.000000e+00> : vector<2x64xf32>
    %258 = tpu.matmul %257, %4, %cst_77 {dimension_numbers = #tpu.dot_dimension_numbers<[1], [0], [0], [1], [0, 0, 1, 1], [], []>} : vector<2x16xbf16>, vector<16x64xbf16>, vector<2x64xf32> -> vector<2x64xf32>
    %259 = arith.addf %256, %258 : vector<2x64xf32>
    %260 = vector.extract_strided_slice %259 {offsets = [0, 0], sizes = [2, 16], strides = [1, 1]} : vector<2x64xf32> to vector<2x16xf32>
    %261 = arith.negf %260 : vector<2x16xf32>
    %262 = math.exp %261 : vector<2x16xf32>
    %cst_78 = arith.constant 1.000000e+00 : f32
    %263 = vector.broadcast %cst_78 : f32 to vector<2x16xf32>
    %264 = arith.addf %263, %262 : vector<2x16xf32>
    %265 = arith.divf %263, %264 : vector<2x16xf32>
    %266 = vector.extract_strided_slice %259 {offsets = [0, 16], sizes = [2, 16], strides = [1, 1]} : vector<2x64xf32> to vector<2x16xf32>
    %267 = arith.negf %266 : vector<2x16xf32>
    %268 = math.exp %267 : vector<2x16xf32>
    %cst_79 = arith.constant 1.000000e+00 : f32
    %269 = vector.broadcast %cst_79 : f32 to vector<2x16xf32>
    %270 = arith.addf %269, %268 : vector<2x16xf32>
    %271 = arith.divf %269, %270 : vector<2x16xf32>
    %272 = vector.extract_strided_slice %259 {offsets = [0, 32], sizes = [2, 16], strides = [1, 1]} : vector<2x64xf32> to vector<2x16xf32>
    %273 = math.tanh %272 : vector<2x16xf32>
    %274 = vector.extract_strided_slice %259 {offsets = [0, 48], sizes = [2, 16], strides = [1, 1]} : vector<2x64xf32> to vector<2x16xf32>
    %275 = arith.negf %274 : vector<2x16xf32>
    %276 = math.exp %275 : vector<2x16xf32>
    %cst_80 = arith.constant 1.000000e+00 : f32
    %277 = vector.broadcast %cst_80 : f32 to vector<2x16xf32>
    %278 = arith.addf %277, %276 : vector<2x16xf32>
    %279 = arith.divf %277, %278 : vector<2x16xf32>
    %280 = arith.mulf %271, %212 : vector<2x16xf32>
    %281 = arith.mulf %265, %273 : vector<2x16xf32>
    %282 = arith.addf %280, %281 : vector<2x16xf32>
    %283 = math.tanh %282 : vector<2x16xf32>
    %284 = arith.mulf %279, %283 : vector<2x16xf32>
    %285 = arith.truncf %284 : vector<2x16xf32> to vector<2x16xbf16>
    %c0_81 = arith.constant 0 : index
    %c4_82 = arith.constant 4 : index
    %c0_83 = arith.constant 0 : index
    %286 = vector.load %arg6[%c0_81, %c4_82, %c0_83] : memref<2x8x16xbf16, #tpu.memory_space<vmem>>, vector<2x1x16xbf16>
    %287 = vector.shape_cast %286 : vector<2x1x16xbf16> to vector<2x16xbf16>
    %288 = vector.shape_cast %285 : vector<2x16xbf16> to vector<2x1x16xbf16>
    tpu.vector_store %arg6[%c0_81, %c4_82, %c0_83], %288 {strides = array<i32>} : memref<2x8x16xbf16, #tpu.memory_space<vmem>>, vector<2x1x16xbf16>,
    %c0_84 = arith.constant 0 : index
    %c4_85 = arith.constant 4 : index
    %c0_86 = arith.constant 0 : index
    %289 = vector.load %arg1[%c0_84, %c4_85, %c0_86] : memref<2x8x64xbf16, #tpu.memory_space<vmem>>, vector<2x1x64xbf16>
    %290 = vector.shape_cast %289 : vector<2x1x64xbf16> to vector<2x64xbf16>
    %291 = arith.extf %290 : vector<2x64xbf16> to vector<2x64xf32>
    %292 = arith.truncf %249 : vector<2x16xf32> to vector<2x16xbf16>
    %cst_87 = arith.constant dense<0.000000e+00> : vector<2x64xf32>
    %293 = tpu.matmul %292, %3, %cst_87 {dimension_numbers = #tpu.dot_dimension_numbers<[1], [0], [0], [1], [0, 0, 1, 1], [], []>} : vector<2x16xbf16>, vector<16x64xbf16>, vector<2x64xf32> -> vector<2x64xf32>
    %294 = arith.addf %291, %293 : vector<2x64xf32>
    %295 = vector.extract_strided_slice %294 {offsets = [0, 0], sizes = [2, 16], strides = [1, 1]} : vector<2x64xf32> to vector<2x16xf32>
    %296 = arith.negf %295 : vector<2x16xf32>
    %297 = math.exp %296 : vector<2x16xf32>
    %cst_88 = arith.constant 1.000000e+00 : f32
    %298 = vector.broadcast %cst_88 : f32 to vector<2x16xf32>
    %299 = arith.addf %298, %297 : vector<2x16xf32>
    %300 = arith.divf %298, %299 : vector<2x16xf32>
    %301 = vector.extract_strided_slice %294 {offsets = [0, 16], sizes = [2, 16], strides = [1, 1]} : vector<2x64xf32> to vector<2x16xf32>
    %302 = arith.negf %301 : vector<2x16xf32>
    %303 = math.exp %302 : vector<2x16xf32>
    %cst_89 = arith.constant 1.000000e+00 : f32
    %304 = vector.broadcast %cst_89 : f32 to vector<2x16xf32>
    %305 = arith.addf %304, %303 : vector<2x16xf32>
    %306 = arith.divf %304, %305 : vector<2x16xf32>
    %307 = vector.extract_strided_slice %294 {offsets = [0, 32], sizes = [2, 16], strides = [1, 1]} : vector<2x64xf32> to vector<2x16xf32>
    %308 = math.tanh %307 : vector<2x16xf32>
    %309 = vector.extract_strided_slice %294 {offsets = [0, 48], sizes = [2, 16], strides = [1, 1]} : vector<2x64xf32> to vector<2x16xf32>
    %310 = arith.negf %309 : vector<2x16xf32>
    %311 = math.exp %310 : vector<2x16xf32>
    %cst_90 = arith.constant 1.000000e+00 : f32
    %312 = vector.broadcast %cst_90 : f32 to vector<2x16xf32>
    %313 = arith.addf %312, %311 : vector<2x16xf32>
    %314 = arith.divf %312, %313 : vector<2x16xf32>
    %315 = arith.mulf %306, %247 : vector<2x16xf32>
    %316 = arith.mulf %300, %308 : vector<2x16xf32>
    %317 = arith.addf %315, %316 : vector<2x16xf32>
    %318 = math.tanh %317 : vector<2x16xf32>
    %319 = arith.mulf %314, %318 : vector<2x16xf32>
    %320 = arith.truncf %319 : vector<2x16xf32> to vector<2x16xbf16>
    %c0_91 = arith.constant 0 : index
    %c4_92 = arith.constant 4 : index
    %c0_93 = arith.constant 0 : index
    %321 = vector.load %arg5[%c0_91, %c4_92, %c0_93] : memref<2x8x16xbf16, #tpu.memory_space<vmem>>, vector<2x1x16xbf16>
    %322 = vector.shape_cast %321 : vector<2x1x16xbf16> to vector<2x16xbf16>
    %323 = vector.shape_cast %320 : vector<2x16xbf16> to vector<2x1x16xbf16>
    tpu.vector_store %arg5[%c0_91, %c4_92, %c0_93], %323 {strides = array<i32>} : memref<2x8x16xbf16, #tpu.memory_space<vmem>>, vector<2x1x16xbf16>,
    %c0_94 = arith.constant 0 : index
    %c3_95 = arith.constant 3 : index
    %c0_96 = arith.constant 0 : index
    %324 = vector.load %arg2[%c0_94, %c3_95, %c0_96] : memref<2x8x64xbf16, #tpu.memory_space<vmem>>, vector<2x1x64xbf16>
    %325 = vector.shape_cast %324 : vector<2x1x64xbf16> to vector<2x64xbf16>
    %326 = arith.extf %325 : vector<2x64xbf16> to vector<2x64xf32>
    %327 = arith.truncf %284 : vector<2x16xf32> to vector<2x16xbf16>
    %cst_97 = arith.constant dense<0.000000e+00> : vector<2x64xf32>
    %328 = tpu.matmul %327, %4, %cst_97 {dimension_numbers = #tpu.dot_dimension_numbers<[1], [0], [0], [1], [0, 0, 1, 1], [], []>} : vector<2x16xbf16>, vector<16x64xbf16>, vector<2x64xf32> -> vector<2x64xf32>
    %329 = arith.addf %326, %328 : vector<2x64xf32>
    %330 = vector.extract_strided_slice %329 {offsets = [0, 0], sizes = [2, 16], strides = [1, 1]} : vector<2x64xf32> to vector<2x16xf32>
    %331 = arith.negf %330 : vector<2x16xf32>
    %332 = math.exp %331 : vector<2x16xf32>
    %cst_98 = arith.constant 1.000000e+00 : f32
    %333 = vector.broadcast %cst_98 : f32 to vector<2x16xf32>
    %334 = arith.addf %333, %332 : vector<2x16xf32>
    %335 = arith.divf %333, %334 : vector<2x16xf32>
    %336 = vector.extract_strided_slice %329 {offsets = [0, 16], sizes = [2, 16], strides = [1, 1]} : vector<2x64xf32> to vector<2x16xf32>
    %337 = arith.negf %336 : vector<2x16xf32>
    %338 = math.exp %337 : vector<2x16xf32>
    %cst_99 = arith.constant 1.000000e+00 : f32
    %339 = vector.broadcast %cst_99 : f32 to vector<2x16xf32>
    %340 = arith.addf %339, %338 : vector<2x16xf32>
    %341 = arith.divf %339, %340 : vector<2x16xf32>
    %342 = vector.extract_strided_slice %329 {offsets = [0, 32], sizes = [2, 16], strides = [1, 1]} : vector<2x64xf32> to vector<2x16xf32>
    %343 = math.tanh %342 : vector<2x16xf32>
    %344 = vector.extract_strided_slice %329 {offsets = [0, 48], sizes = [2, 16], strides = [1, 1]} : vector<2x64xf32> to vector<2x16xf32>
    %345 = arith.negf %344 : vector<2x16xf32>
    %346 = math.exp %345 : vector<2x16xf32>
    %cst_100 = arith.constant 1.000000e+00 : f32
    %347 = vector.broadcast %cst_100 : f32 to vector<2x16xf32>
    %348 = arith.addf %347, %346 : vector<2x16xf32>
    %349 = arith.divf %347, %348 : vector<2x16xf32>
    %350 = arith.mulf %341, %282 : vector<2x16xf32>
    %351 = arith.mulf %335, %343 : vector<2x16xf32>
    %352 = arith.addf %350, %351 : vector<2x16xf32>
    %353 = math.tanh %352 : vector<2x16xf32>
    %354 = arith.mulf %349, %353 : vector<2x16xf32>
    %355 = arith.truncf %354 : vector<2x16xf32> to vector<2x16xbf16>
    %c0_101 = arith.constant 0 : index
    %c3_102 = arith.constant 3 : index
    %c0_103 = arith.constant 0 : index
    %356 = vector.load %arg6[%c0_101, %c3_102, %c0_103] : memref<2x8x16xbf16, #tpu.memory_space<vmem>>, vector<2x1x16xbf16>
    %357 = vector.shape_cast %356 : vector<2x1x16xbf16> to vector<2x16xbf16>
    %358 = vector.shape_cast %355 : vector<2x16xbf16> to vector<2x1x16xbf16>
    tpu.vector_store %arg6[%c0_101, %c3_102, %c0_103], %358 {strides = array<i32>} : memref<2x8x16xbf16, #tpu.memory_space<vmem>>, vector<2x1x16xbf16>,
    %c0_104 = arith.constant 0 : index
    %c5_105 = arith.constant 5 : index
    %c0_106 = arith.constant 0 : index
    %359 = vector.load %arg1[%c0_104, %c5_105, %c0_106] : memref<2x8x64xbf16, #tpu.memory_space<vmem>>, vector<2x1x64xbf16>
    %360 = vector.shape_cast %359 : vector<2x1x64xbf16> to vector<2x64xbf16>
    %361 = arith.extf %360 : vector<2x64xbf16> to vector<2x64xf32>
    %362 = arith.truncf %319 : vector<2x16xf32> to vector<2x16xbf16>
    %cst_107 = arith.constant dense<0.000000e+00> : vector<2x64xf32>
    %363 = tpu.matmul %362, %3, %cst_107 {dimension_numbers = #tpu.dot_dimension_numbers<[1], [0], [0], [1], [0, 0, 1, 1], [], []>} : vector<2x16xbf16>, vector<16x64xbf16>, vector<2x64xf32> -> vector<2x64xf32>
    %364 = arith.addf %361, %363 : vector<2x64xf32>
    %365 = vector.extract_strided_slice %364 {offsets = [0, 0], sizes = [2, 16], strides = [1, 1]} : vector<2x64xf32> to vector<2x16xf32>
    %366 = arith.negf %365 : vector<2x16xf32>
    %367 = math.exp %366 : vector<2x16xf32>
    %cst_108 = arith.constant 1.000000e+00 : f32
    %368 = vector.broadcast %cst_108 : f32 to vector<2x16xf32>
    %369 = arith.addf %368, %367 : vector<2x16xf32>
    %370 = arith.divf %368, %369 : vector<2x16xf32>
    %371 = vector.extract_strided_slice %364 {offsets = [0, 16], sizes = [2, 16], strides = [1, 1]} : vector<2x64xf32> to vector<2x16xf32>
    %372 = arith.negf %371 : vector<2x16xf32>
    %373 = math.exp %372 : vector<2x16xf32>
    %cst_109 = arith.constant 1.000000e+00 : f32
    %374 = vector.broadcast %cst_109 : f32 to vector<2x16xf32>
    %375 = arith.addf %374, %373 : vector<2x16xf32>
    %376 = arith.divf %374, %375 : vector<2x16xf32>
    %377 = vector.extract_strided_slice %364 {offsets = [0, 32], sizes = [2, 16], strides = [1, 1]} : vector<2x64xf32> to vector<2x16xf32>
    %378 = math.tanh %377 : vector<2x16xf32>
    %379 = vector.extract_strided_slice %364 {offsets = [0, 48], sizes = [2, 16], strides = [1, 1]} : vector<2x64xf32> to vector<2x16xf32>
    %380 = arith.negf %379 : vector<2x16xf32>
    %381 = math.exp %380 : vector<2x16xf32>
    %cst_110 = arith.constant 1.000000e+00 : f32
    %382 = vector.broadcast %cst_110 : f32 to vector<2x16xf32>
    %383 = arith.addf %382, %381 : vector<2x16xf32>
    %384 = arith.divf %382, %383 : vector<2x16xf32>
    %385 = arith.mulf %376, %317 : vector<2x16xf32>
    %386 = arith.mulf %370, %378 : vector<2x16xf32>
    %387 = arith.addf %385, %386 : vector<2x16xf32>
    %388 = math.tanh %387 : vector<2x16xf32>
    %389 = arith.mulf %384, %388 : vector<2x16xf32>
    %390 = arith.truncf %389 : vector<2x16xf32> to vector<2x16xbf16>
    %c0_111 = arith.constant 0 : index
    %c5_112 = arith.constant 5 : index
    %c0_113 = arith.constant 0 : index
    %391 = vector.load %arg5[%c0_111, %c5_112, %c0_113] : memref<2x8x16xbf16, #tpu.memory_space<vmem>>, vector<2x1x16xbf16>
    %392 = vector.shape_cast %391 : vector<2x1x16xbf16> to vector<2x16xbf16>
    %393 = vector.shape_cast %390 : vector<2x16xbf16> to vector<2x1x16xbf16>
    tpu.vector_store %arg5[%c0_111, %c5_112, %c0_113], %393 {strides = array<i32>} : memref<2x8x16xbf16, #tpu.memory_space<vmem>>, vector<2x1x16xbf16>,
    %c0_114 = arith.constant 0 : index
    %c2_115 = arith.constant 2 : index
    %c0_116 = arith.constant 0 : index
    %394 = vector.load %arg2[%c0_114, %c2_115, %c0_116] : memref<2x8x64xbf16, #tpu.memory_space<vmem>>, vector<2x1x64xbf16>
    %395 = vector.shape_cast %394 : vector<2x1x64xbf16> to vector<2x64xbf16>
    %396 = arith.extf %395 : vector<2x64xbf16> to vector<2x64xf32>
    %397 = arith.truncf %354 : vector<2x16xf32> to vector<2x16xbf16>
    %cst_117 = arith.constant dense<0.000000e+00> : vector<2x64xf32>
    %398 = tpu.matmul %397, %4, %cst_117 {dimension_numbers = #tpu.dot_dimension_numbers<[1], [0], [0], [1], [0, 0, 1, 1], [], []>} : vector<2x16xbf16>, vector<16x64xbf16>, vector<2x64xf32> -> vector<2x64xf32>
    %399 = arith.addf %396, %398 : vector<2x64xf32>
    %400 = vector.extract_strided_slice %399 {offsets = [0, 0], sizes = [2, 16], strides = [1, 1]} : vector<2x64xf32> to vector<2x16xf32>
    %401 = arith.negf %400 : vector<2x16xf32>
    %402 = math.exp %401 : vector<2x16xf32>
    %cst_118 = arith.constant 1.000000e+00 : f32
    %403 = vector.broadcast %cst_118 : f32 to vector<2x16xf32>
    %404 = arith.addf %403, %402 : vector<2x16xf32>
    %405 = arith.divf %403, %404 : vector<2x16xf32>
    %406 = vector.extract_strided_slice %399 {offsets = [0, 16], sizes = [2, 16], strides = [1, 1]} : vector<2x64xf32> to vector<2x16xf32>
    %407 = arith.negf %406 : vector<2x16xf32>
    %408 = math.exp %407 : vector<2x16xf32>
    %cst_119 = arith.constant 1.000000e+00 : f32
    %409 = vector.broadcast %cst_119 : f32 to vector<2x16xf32>
    %410 = arith.addf %409, %408 : vector<2x16xf32>
    %411 = arith.divf %409, %410 : vector<2x16xf32>
    %412 = vector.extract_strided_slice %399 {offsets = [0, 32], sizes = [2, 16], strides = [1, 1]} : vector<2x64xf32> to vector<2x16xf32>
    %413 = math.tanh %412 : vector<2x16xf32>
    %414 = vector.extract_strided_slice %399 {offsets = [0, 48], sizes = [2, 16], strides = [1, 1]} : vector<2x64xf32> to vector<2x16xf32>
    %415 = arith.negf %414 : vector<2x16xf32>
    %416 = math.exp %415 : vector<2x16xf32>
    %cst_120 = arith.constant 1.000000e+00 : f32
    %417 = vector.broadcast %cst_120 : f32 to vector<2x16xf32>
    %418 = arith.addf %417, %416 : vector<2x16xf32>
    %419 = arith.divf %417, %418 : vector<2x16xf32>
    %420 = arith.mulf %411, %352 : vector<2x16xf32>
    %421 = arith.mulf %405, %413 : vector<2x16xf32>
    %422 = arith.addf %420, %421 : vector<2x16xf32>
    %423 = math.tanh %422 : vector<2x16xf32>
    %424 = arith.mulf %419, %423 : vector<2x16xf32>
    %425 = arith.truncf %424 : vector<2x16xf32> to vector<2x16xbf16>
    %c0_121 = arith.constant 0 : index
    %c2_122 = arith.constant 2 : index
    %c0_123 = arith.constant 0 : index
    %426 = vector.load %arg6[%c0_121, %c2_122, %c0_123] : memref<2x8x16xbf16, #tpu.memory_space<vmem>>, vector<2x1x16xbf16>
    %427 = vector.shape_cast %426 : vector<2x1x16xbf16> to vector<2x16xbf16>
    %428 = vector.shape_cast %425 : vector<2x16xbf16> to vector<2x1x16xbf16>
    tpu.vector_store %arg6[%c0_121, %c2_122, %c0_123], %428 {strides = array<i32>} : memref<2x8x16xbf16, #tpu.memory_space<vmem>>, vector<2x1x16xbf16>,
    %c0_124 = arith.constant 0 : index
    %c6_125 = arith.constant 6 : index
    %c0_126 = arith.constant 0 : index
    %429 = vector.load %arg1[%c0_124, %c6_125, %c0_126] : memref<2x8x64xbf16, #tpu.memory_space<vmem>>, vector<2x1x64xbf16>
    %430 = vector.shape_cast %429 : vector<2x1x64xbf16> to vector<2x64xbf16>
    %431 = arith.extf %430 : vector<2x64xbf16> to vector<2x64xf32>
    %432 = arith.truncf %389 : vector<2x16xf32> to vector<2x16xbf16>
    %cst_127 = arith.constant dense<0.000000e+00> : vector<2x64xf32>
    %433 = tpu.matmul %432, %3, %cst_127 {dimension_numbers = #tpu.dot_dimension_numbers<[1], [0], [0], [1], [0, 0, 1, 1], [], []>} : vector<2x16xbf16>, vector<16x64xbf16>, vector<2x64xf32> -> vector<2x64xf32>
    %434 = arith.addf %431, %433 : vector<2x64xf32>
    %435 = vector.extract_strided_slice %434 {offsets = [0, 0], sizes = [2, 16], strides = [1, 1]} : vector<2x64xf32> to vector<2x16xf32>
    %436 = arith.negf %435 : vector<2x16xf32>
    %437 = math.exp %436 : vector<2x16xf32>
    %cst_128 = arith.constant 1.000000e+00 : f32
    %438 = vector.broadcast %cst_128 : f32 to vector<2x16xf32>
    %439 = arith.addf %438, %437 : vector<2x16xf32>
    %440 = arith.divf %438, %439 : vector<2x16xf32>
    %441 = vector.extract_strided_slice %434 {offsets = [0, 16], sizes = [2, 16], strides = [1, 1]} : vector<2x64xf32> to vector<2x16xf32>
    %442 = arith.negf %441 : vector<2x16xf32>
    %443 = math.exp %442 : vector<2x16xf32>
    %cst_129 = arith.constant 1.000000e+00 : f32
    %444 = vector.broadcast %cst_129 : f32 to vector<2x16xf32>
    %445 = arith.addf %444, %443 : vector<2x16xf32>
    %446 = arith.divf %444, %445 : vector<2x16xf32>
    %447 = vector.extract_strided_slice %434 {offsets = [0, 32], sizes = [2, 16], strides = [1, 1]} : vector<2x64xf32> to vector<2x16xf32>
    %448 = math.tanh %447 : vector<2x16xf32>
    %449 = vector.extract_strided_slice %434 {offsets = [0, 48], sizes = [2, 16], strides = [1, 1]} : vector<2x64xf32> to vector<2x16xf32>
    %450 = arith.negf %449 : vector<2x16xf32>
    %451 = math.exp %450 : vector<2x16xf32>
    %cst_130 = arith.constant 1.000000e+00 : f32
    %452 = vector.broadcast %cst_130 : f32 to vector<2x16xf32>
    %453 = arith.addf %452, %451 : vector<2x16xf32>
    %454 = arith.divf %452, %453 : vector<2x16xf32>
    %455 = arith.mulf %446, %387 : vector<2x16xf32>
    %456 = arith.mulf %440, %448 : vector<2x16xf32>
    %457 = arith.addf %455, %456 : vector<2x16xf32>
    %458 = math.tanh %457 : vector<2x16xf32>
    %459 = arith.mulf %454, %458 : vector<2x16xf32>
    %460 = arith.truncf %459 : vector<2x16xf32> to vector<2x16xbf16>
    %c0_131 = arith.constant 0 : index
    %c6_132 = arith.constant 6 : index
    %c0_133 = arith.constant 0 : index
    %461 = vector.load %arg5[%c0_131, %c6_132, %c0_133] : memref<2x8x16xbf16, #tpu.memory_space<vmem>>, vector<2x1x16xbf16>
    %462 = vector.shape_cast %461 : vector<2x1x16xbf16> to vector<2x16xbf16>
    %463 = vector.shape_cast %460 : vector<2x16xbf16> to vector<2x1x16xbf16>
    tpu.vector_store %arg5[%c0_131, %c6_132, %c0_133], %463 {strides = array<i32>} : memref<2x8x16xbf16, #tpu.memory_space<vmem>>, vector<2x1x16xbf16>,
    %c0_134 = arith.constant 0 : index
    %c1_135 = arith.constant 1 : index
    %c0_136 = arith.constant 0 : index
    %464 = vector.load %arg2[%c0_134, %c1_135, %c0_136] : memref<2x8x64xbf16, #tpu.memory_space<vmem>>, vector<2x1x64xbf16>
    %465 = vector.shape_cast %464 : vector<2x1x64xbf16> to vector<2x64xbf16>
    %466 = arith.extf %465 : vector<2x64xbf16> to vector<2x64xf32>
    %467 = arith.truncf %424 : vector<2x16xf32> to vector<2x16xbf16>
    %cst_137 = arith.constant dense<0.000000e+00> : vector<2x64xf32>
    %468 = tpu.matmul %467, %4, %cst_137 {dimension_numbers = #tpu.dot_dimension_numbers<[1], [0], [0], [1], [0, 0, 1, 1], [], []>} : vector<2x16xbf16>, vector<16x64xbf16>, vector<2x64xf32> -> vector<2x64xf32>
    %469 = arith.addf %466, %468 : vector<2x64xf32>
    %470 = vector.extract_strided_slice %469 {offsets = [0, 0], sizes = [2, 16], strides = [1, 1]} : vector<2x64xf32> to vector<2x16xf32>
    %471 = arith.negf %470 : vector<2x16xf32>
    %472 = math.exp %471 : vector<2x16xf32>
    %cst_138 = arith.constant 1.000000e+00 : f32
    %473 = vector.broadcast %cst_138 : f32 to vector<2x16xf32>
    %474 = arith.addf %473, %472 : vector<2x16xf32>
    %475 = arith.divf %473, %474 : vector<2x16xf32>
    %476 = vector.extract_strided_slice %469 {offsets = [0, 16], sizes = [2, 16], strides = [1, 1]} : vector<2x64xf32> to vector<2x16xf32>
    %477 = arith.negf %476 : vector<2x16xf32>
    %478 = math.exp %477 : vector<2x16xf32>
    %cst_139 = arith.constant 1.000000e+00 : f32
    %479 = vector.broadcast %cst_139 : f32 to vector<2x16xf32>
    %480 = arith.addf %479, %478 : vector<2x16xf32>
    %481 = arith.divf %479, %480 : vector<2x16xf32>
    %482 = vector.extract_strided_slice %469 {offsets = [0, 32], sizes = [2, 16], strides = [1, 1]} : vector<2x64xf32> to vector<2x16xf32>
    %483 = math.tanh %482 : vector<2x16xf32>
    %484 = vector.extract_strided_slice %469 {offsets = [0, 48], sizes = [2, 16], strides = [1, 1]} : vector<2x64xf32> to vector<2x16xf32>
    %485 = arith.negf %484 : vector<2x16xf32>
    %486 = math.exp %485 : vector<2x16xf32>
    %cst_140 = arith.constant 1.000000e+00 : f32
    %487 = vector.broadcast %cst_140 : f32 to vector<2x16xf32>
    %488 = arith.addf %487, %486 : vector<2x16xf32>
    %489 = arith.divf %487, %488 : vector<2x16xf32>
    %490 = arith.mulf %481, %422 : vector<2x16xf32>
    %491 = arith.mulf %475, %483 : vector<2x16xf32>
    %492 = arith.addf %490, %491 : vector<2x16xf32>
    %493 = math.tanh %492 : vector<2x16xf32>
    %494 = arith.mulf %489, %493 : vector<2x16xf32>
    %495 = arith.truncf %494 : vector<2x16xf32> to vector<2x16xbf16>
    %c0_141 = arith.constant 0 : index
    %c1_142 = arith.constant 1 : index
    %c0_143 = arith.constant 0 : index
    %496 = vector.load %arg6[%c0_141, %c1_142, %c0_143] : memref<2x8x16xbf16, #tpu.memory_space<vmem>>, vector<2x1x16xbf16>
    %497 = vector.shape_cast %496 : vector<2x1x16xbf16> to vector<2x16xbf16>
    %498 = vector.shape_cast %495 : vector<2x16xbf16> to vector<2x1x16xbf16>
    tpu.vector_store %arg6[%c0_141, %c1_142, %c0_143], %498 {strides = array<i32>} : memref<2x8x16xbf16, #tpu.memory_space<vmem>>, vector<2x1x16xbf16>,
    %c0_144 = arith.constant 0 : index
    %c7_145 = arith.constant 7 : index
    %c0_146 = arith.constant 0 : index
    %499 = vector.load %arg1[%c0_144, %c7_145, %c0_146] : memref<2x8x64xbf16, #tpu.memory_space<vmem>>, vector<2x1x64xbf16>
    %500 = vector.shape_cast %499 : vector<2x1x64xbf16> to vector<2x64xbf16>
    %501 = arith.extf %500 : vector<2x64xbf16> to vector<2x64xf32>
    %502 = arith.truncf %459 : vector<2x16xf32> to vector<2x16xbf16>
    %cst_147 = arith.constant dense<0.000000e+00> : vector<2x64xf32>
    %503 = tpu.matmul %502, %3, %cst_147 {dimension_numbers = #tpu.dot_dimension_numbers<[1], [0], [0], [1], [0, 0, 1, 1], [], []>} : vector<2x16xbf16>, vector<16x64xbf16>, vector<2x64xf32> -> vector<2x64xf32>
    %504 = arith.addf %501, %503 : vector<2x64xf32>
    %505 = vector.extract_strided_slice %504 {offsets = [0, 0], sizes = [2, 16], strides = [1, 1]} : vector<2x64xf32> to vector<2x16xf32>
    %506 = arith.negf %505 : vector<2x16xf32>
    %507 = math.exp %506 : vector<2x16xf32>
    %cst_148 = arith.constant 1.000000e+00 : f32
    %508 = vector.broadcast %cst_148 : f32 to vector<2x16xf32>
    %509 = arith.addf %508, %507 : vector<2x16xf32>
    %510 = arith.divf %508, %509 : vector<2x16xf32>
    %511 = vector.extract_strided_slice %504 {offsets = [0, 16], sizes = [2, 16], strides = [1, 1]} : vector<2x64xf32> to vector<2x16xf32>
    %512 = arith.negf %511 : vector<2x16xf32>
    %513 = math.exp %512 : vector<2x16xf32>
    %cst_149 = arith.constant 1.000000e+00 : f32
    %514 = vector.broadcast %cst_149 : f32 to vector<2x16xf32>
    %515 = arith.addf %514, %513 : vector<2x16xf32>
    %516 = arith.divf %514, %515 : vector<2x16xf32>
    %517 = vector.extract_strided_slice %504 {offsets = [0, 32], sizes = [2, 16], strides = [1, 1]} : vector<2x64xf32> to vector<2x16xf32>
    %518 = math.tanh %517 : vector<2x16xf32>
    %519 = vector.extract_strided_slice %504 {offsets = [0, 48], sizes = [2, 16], strides = [1, 1]} : vector<2x64xf32> to vector<2x16xf32>
    %520 = arith.negf %519 : vector<2x16xf32>
    %521 = math.exp %520 : vector<2x16xf32>
    %cst_150 = arith.constant 1.000000e+00 : f32
    %522 = vector.broadcast %cst_150 : f32 to vector<2x16xf32>
    %523 = arith.addf %522, %521 : vector<2x16xf32>
    %524 = arith.divf %522, %523 : vector<2x16xf32>
    %525 = arith.mulf %516, %457 : vector<2x16xf32>
    %526 = arith.mulf %510, %518 : vector<2x16xf32>
    %527 = arith.addf %525, %526 : vector<2x16xf32>
    %528 = math.tanh %527 : vector<2x16xf32>
    %529 = arith.mulf %524, %528 : vector<2x16xf32>
    %530 = arith.truncf %529 : vector<2x16xf32> to vector<2x16xbf16>
    %c0_151 = arith.constant 0 : index
    %c7_152 = arith.constant 7 : index
    %c0_153 = arith.constant 0 : index
    %531 = vector.load %arg5[%c0_151, %c7_152, %c0_153] : memref<2x8x16xbf16, #tpu.memory_space<vmem>>, vector<2x1x16xbf16>
    %532 = vector.shape_cast %531 : vector<2x1x16xbf16> to vector<2x16xbf16>
    %533 = vector.shape_cast %530 : vector<2x16xbf16> to vector<2x1x16xbf16>
    tpu.vector_store %arg5[%c0_151, %c7_152, %c0_153], %533 {strides = array<i32>} : memref<2x8x16xbf16, #tpu.memory_space<vmem>>, vector<2x1x16xbf16>,
    %c0_154 = arith.constant 0 : index
    %c0_155 = arith.constant 0 : index
    %c0_156 = arith.constant 0 : index
    %534 = vector.load %arg2[%c0_154, %c0_155, %c0_156] : memref<2x8x64xbf16, #tpu.memory_space<vmem>>, vector<2x1x64xbf16>
    %535 = vector.shape_cast %534 : vector<2x1x64xbf16> to vector<2x64xbf16>
    %536 = arith.extf %535 : vector<2x64xbf16> to vector<2x64xf32>
    %537 = arith.truncf %494 : vector<2x16xf32> to vector<2x16xbf16>
    %cst_157 = arith.constant dense<0.000000e+00> : vector<2x64xf32>
    %538 = tpu.matmul %537, %4, %cst_157 {dimension_numbers = #tpu.dot_dimension_numbers<[1], [0], [0], [1], [0, 0, 1, 1], [], []>} : vector<2x16xbf16>, vector<16x64xbf16>, vector<2x64xf32> -> vector<2x64xf32>
    %539 = arith.addf %536, %538 : vector<2x64xf32>
    %540 = vector.extract_strided_slice %539 {offsets = [0, 0], sizes = [2, 16], strides = [1, 1]} : vector<2x64xf32> to vector<2x16xf32>
    %541 = arith.negf %540 : vector<2x16xf32>
    %542 = math.exp %541 : vector<2x16xf32>
    %cst_158 = arith.constant 1.000000e+00 : f32
    %543 = vector.broadcast %cst_158 : f32 to vector<2x16xf32>
    %544 = arith.addf %543, %542 : vector<2x16xf32>
    %545 = arith.divf %543, %544 : vector<2x16xf32>
    %546 = vector.extract_strided_slice %539 {offsets = [0, 16], sizes = [2, 16], strides = [1, 1]} : vector<2x64xf32> to vector<2x16xf32>
    %547 = arith.negf %546 : vector<2x16xf32>
    %548 = math.exp %547 : vector<2x16xf32>
    %cst_159 = arith.constant 1.000000e+00 : f32
    %549 = vector.broadcast %cst_159 : f32 to vector<2x16xf32>
    %550 = arith.addf %549, %548 : vector<2x16xf32>
    %551 = arith.divf %549, %550 : vector<2x16xf32>
    %552 = vector.extract_strided_slice %539 {offsets = [0, 32], sizes = [2, 16], strides = [1, 1]} : vector<2x64xf32> to vector<2x16xf32>
    %553 = math.tanh %552 : vector<2x16xf32>
    %554 = vector.extract_strided_slice %539 {offsets = [0, 48], sizes = [2, 16], strides = [1, 1]} : vector<2x64xf32> to vector<2x16xf32>
    %555 = arith.negf %554 : vector<2x16xf32>
    %556 = math.exp %555 : vector<2x16xf32>
    %cst_160 = arith.constant 1.000000e+00 : f32
    %557 = vector.broadcast %cst_160 : f32 to vector<2x16xf32>
    %558 = arith.addf %557, %556 : vector<2x16xf32>
    %559 = arith.divf %557, %558 : vector<2x16xf32>
    %560 = arith.mulf %551, %492 : vector<2x16xf32>
    %561 = arith.mulf %545, %553 : vector<2x16xf32>
    %562 = arith.addf %560, %561 : vector<2x16xf32>
    %563 = math.tanh %562 : vector<2x16xf32>
    %564 = arith.mulf %559, %563 : vector<2x16xf32>
    %565 = arith.truncf %564 : vector<2x16xf32> to vector<2x16xbf16>
    %c0_161 = arith.constant 0 : index
    %c0_162 = arith.constant 0 : index
    %c0_163 = arith.constant 0 : index
    %566 = vector.load %arg6[%c0_161, %c0_162, %c0_163] : memref<2x8x16xbf16, #tpu.memory_space<vmem>>, vector<2x1x16xbf16>
    %567 = vector.shape_cast %566 : vector<2x1x16xbf16> to vector<2x16xbf16>
    %568 = vector.shape_cast %565 : vector<2x16xbf16> to vector<2x1x16xbf16>
    tpu.vector_store %arg6[%c0_161, %c0_162, %c0_163], %568 {strides = array<i32>} : memref<2x8x16xbf16, #tpu.memory_space<vmem>>, vector<2x1x16xbf16>,
    %c0_164 = arith.constant 0 : index
    %c0_165 = arith.constant 0 : index
    %569 = vector.load %arg7[%c0_164, %c0_165] : memref<2x16xf32, #tpu.memory_space<vmem>>, vector<2x16xf32>
    tpu.vector_store %arg7[%c0_164, %c0_165], %529 {strides = array<i32>} : memref<2x16xf32, #tpu.memory_space<vmem>>, vector<2x16xf32>,
    %c0_166 = arith.constant 0 : index
    %c0_167 = arith.constant 0 : index
    %570 = vector.load %arg8[%c0_166, %c0_167] : memref<2x16xf32, #tpu.memory_space<vmem>>, vector<2x16xf32>
    tpu.vector_store %arg8[%c0_166, %c0_167], %527 {strides = array<i32>} : memref<2x16xf32, #tpu.memory_space<vmem>>, vector<2x16xf32>,
    %c0_168 = arith.constant 0 : index
    %c0_169 = arith.constant 0 : index
    %571 = vector.load %arg9[%c0_168, %c0_169] : memref<2x16xf32, #tpu.memory_space<vmem>>, vector<2x16xf32>
    tpu.vector_store %arg9[%c0_168, %c0_169], %564 {strides = array<i32>} : memref<2x16xf32, #tpu.memory_space<vmem>>, vector<2x16xf32>,
    %c0_170 = arith.constant 0 : index
    %c0_171 = arith.constant 0 : index
    %572 = vector.load %arg10[%c0_170, %c0_171] : memref<2x16xf32, #tpu.memory_space<vmem>>, vector<2x16xf32>
    tpu.vector_store %arg10[%c0_170, %c0_171], %562 {strides = array<i32>} : memref<2x16xf32, #tpu.memory_space<vmem>>, vector<2x16xf32>,
    return
  }
  func.func @transform_0(%arg0: i32) -> (i32, i32, i32) {
    %c0_i32 = arith.constant 0 : i32
    %c0_i32_0 = arith.constant 0 : i32
    %c0_i32_1 = arith.constant 0 : i32
    return %c0_i32, %arg0, %c0_i32_0 : i32, i32, i32
  }
  func.func @transform_1(%arg0: i32) -> (i32, i32, i32) {
    %c0_i32 = arith.constant 0 : i32
    %0 = arith.subi %c0_i32, %arg0 : i32
    %c0_i32_0 = arith.constant 0 : i32
    %c0_i32_1 = arith.constant 0 : i32
    %c0_i32_2 = arith.constant 0 : i32
    return %c0_i32_0, %0, %c0_i32_1 : i32, i32, i32
  }
  func.func @transform_2(%arg0: i32) -> (i32, i32) {
    %c0_i32 = arith.constant 0 : i32
    %c0_i32_0 = arith.constant 0 : i32
    %c0_i32_1 = arith.constant 0 : i32
    return %c0_i32, %c0_i32_0 : i32, i32
  }
  func.func @transform_3(%arg0: i32) -> (i32, i32) {
    %c0_i32 = arith.constant 0 : i32
    %c0_i32_0 = arith.constant 0 : i32
    %c0_i32_1 = arith.constant 0 : i32
    return %c0_i32, %c0_i32_0 : i32, i32
  }
  func.func @transform_4(%arg0: i32) -> (i32, i32, i32) {
    %c0_i32 = arith.constant 0 : i32
    %c0_i32_0 = arith.constant 0 : i32
    %c0_i32_1 = arith.constant 0 : i32
    return %c0_i32, %arg0, %c0_i32_0 : i32, i32, i32
  }
  func.func @transform_5(%arg0: i32) -> (i32, i32, i32) {
    %c0_i32 = arith.constant 0 : i32
    %0 = arith.subi %c0_i32, %arg0 : i32
    %c0_i32_0 = arith.constant 0 : i32
    %c0_i32_1 = arith.constant 0 : i32
    %c0_i32_2 = arith.constant 0 : i32
    return %c0_i32_0, %0, %c0_i32_1 : i32, i32, i32
  }
}

module attributes {stable_mosaic.version = 11 : i64} {
  func.func @nll_kernel(%arg0: i32, %arg1: memref<16x128xf32, #tpu.memory_space<vmem>>, %arg2: memref<16x1xi32, #tpu.memory_space<vmem>>, %arg3: memref<16x1xf32, #tpu.memory_space<vmem>>, %arg4: memref<1x128xf32, #tpu.memory_space<vmem>>) attributes {dimension_semantics = [#tpu.dimension_semantics<arbitrary>], iteration_bounds = array<i64: 1>, scalar_prefetch = 0 : i64, scratch_operands = 0 : i64, tpu.core_type = #tpu.core_type<tc>, window_params = [{transform_indices = @transform_0, window_bounds = array<i64: 16, 128>}, {transform_indices = @transform_1, window_bounds = array<i64: 16, 1>}, {transform_indices = @transform_2, window_bounds = array<i64: 16, 1>}, {pipeline_mode = #tpu.pipeline_mode<synchronous>, transform_indices = @transform_3, window_bounds = array<i64: 1, 128>}]} {
    %c0_i32 = arith.constant 0 : i32
    %0 = arith.cmpi eq, %arg0, %c0_i32 : i32
    %1 = arith.extui %0 : i1 to i32
    %c0_i32_0 = arith.constant 0 : i32
    %2 = arith.cmpi ne, %1, %c0_i32_0 : i32
    scf.if %2 {
      %cst_20 = arith.constant 0.000000e+00 : f32
      %48 = vector.broadcast %cst_20 : f32 to vector<1x128xf32>
      %c0_21 = arith.constant 0 : index
      %c0_22 = arith.constant 0 : index
      %49 = vector.load %arg4[%c0_21, %c0_22] : memref<1x128xf32, #tpu.memory_space<vmem>>, vector<1x128xf32>
      tpu.vector_store %arg4[%c0_21, %c0_22], %48 {strides = array<i32>} : memref<1x128xf32, #tpu.memory_space<vmem>>, vector<1x128xf32>,
    } else {
    }
    %c0 = arith.constant 0 : index
    %c0_1 = arith.constant 0 : index
    %3 = vector.load %arg1[%c0, %c0_1] : memref<16x128xf32, #tpu.memory_space<vmem>>, vector<16x128xf32>
    %cst = arith.constant dense<0xFF800000> : vector<16xf32>
    %4 = vector.multi_reduction <maximumf>, %3, %cst [1] : vector<16x128xf32> to vector<16xf32>
    %5 = vector.shape_cast %4 : vector<16xf32> to vector<16x1xf32>
    %6 = vector.broadcast %5 : vector<16x1xf32> to vector<16x128xf32>
    %7 = arith.subf %3, %6 : vector<16x128xf32>
    %8 = math.exp %7 : vector<16x128xf32>
    %cst_2 = arith.constant dense<0.000000e+00> : vector<16xf32>
    %9 = vector.multi_reduction <add>, %8, %cst_2 [1] : vector<16x128xf32> to vector<16xf32>
    %10 = vector.shape_cast %9 : vector<16xf32> to vector<16x1xf32>
    %11 = math.log %10 : vector<16x1xf32>
    %12 = arith.addf %11, %5 : vector<16x1xf32>
    %13 = tpu.iota {dimensions = array<i32: 1>} : vector<16x128xi32>
    %c0_3 = arith.constant 0 : index
    %c0_4 = arith.constant 0 : index
    %14 = vector.load %arg2[%c0_3, %c0_4] : memref<16x1xi32, #tpu.memory_space<vmem>>, vector<16x1xi32>
    %15 = vector.broadcast %14 : vector<16x1xi32> to vector<16x128xi32>
    %16 = arith.cmpi eq, %13, %15 : vector<16x128xi32>
    %cst_5 = arith.constant 0.000000e+00 : f32
    %17 = vector.broadcast %cst_5 : f32 to vector<16x128xf32>
    %18 = arith.select %16, %3, %17 : vector<16x128xi1>, vector<16x128xf32>
    %cst_6 = arith.constant dense<0.000000e+00> : vector<16xf32>
    %19 = vector.multi_reduction <add>, %18, %cst_6 [1] : vector<16x128xf32> to vector<16xf32>
    %20 = vector.shape_cast %19 : vector<16xf32> to vector<16x1xf32>
    %21 = arith.subf %12, %20 : vector<16x1xf32>
    %c0_7 = arith.constant 0 : index
    %c0_8 = arith.constant 0 : index
    %22 = vector.load %arg3[%c0_7, %c0_8] : memref<16x1xf32, #tpu.memory_space<vmem>>, vector<16x1xf32>
    %23 = arith.mulf %21, %22 : vector<16x1xf32>
    %24 = vector.shape_cast %23 : vector<16x1xf32> to vector<1x16x1xf32>
    %cst_9 = arith.constant dense<0.000000e+00> : vector<1xf32>
    %25 = vector.multi_reduction <add>, %24, %cst_9 [1, 2] : vector<1x16x1xf32> to vector<1xf32>
    %26 = vector.shape_cast %25 : vector<1xf32> to vector<1x1x1xf32>
    %27 = vector.extract %26[0, 0, 0] : f32 from vector<1x1x1xf32>
    %c0_10 = arith.constant 0 : index
    %c0_11 = arith.constant 0 : index
    %28 = vector.load %arg3[%c0_10, %c0_11] : memref<16x1xf32, #tpu.memory_space<vmem>>, vector<16x1xf32>
    %29 = vector.shape_cast %28 : vector<16x1xf32> to vector<1x16x1xf32>
    %cst_12 = arith.constant dense<0.000000e+00> : vector<1xf32>
    %30 = vector.multi_reduction <add>, %29, %cst_12 [1, 2] : vector<1x16x1xf32> to vector<1xf32>
    %31 = vector.shape_cast %30 : vector<1xf32> to vector<1x1x1xf32>
    %32 = vector.extract %31[0, 0, 0] : f32 from vector<1x1x1xf32>
    %33 = tpu.iota {dimensions = array<i32: 1>} : vector<1x128xi32>
    %c0_13 = arith.constant 0 : index
    %c0_14 = arith.constant 0 : index
    %34 = vector.load %arg4[%c0_13, %c0_14] : memref<1x128xf32, #tpu.memory_space<vmem>>, vector<1x128xf32>
    %c0_i32_15 = arith.constant 0 : i32
    %35 = vector.broadcast %c0_i32_15 : i32 to vector<1x128xi32>
    %36 = arith.cmpi eq, %33, %35 : vector<1x128xi32>
    %cst_16 = arith.constant 0.000000e+00 : f32
    %37 = vector.broadcast %27 : f32 to vector<1x128xf32>
    %38 = vector.broadcast %cst_16 : f32 to vector<1x128xf32>
    %39 = arith.select %36, %37, %38 : vector<1x128xi1>, vector<1x128xf32>
    %c1_i32 = arith.constant 1 : i32
    %40 = vector.broadcast %c1_i32 : i32 to vector<1x128xi32>
    %41 = arith.cmpi eq, %33, %40 : vector<1x128xi32>
    %cst_17 = arith.constant 0.000000e+00 : f32
    %42 = vector.broadcast %32 : f32 to vector<1x128xf32>
    %43 = vector.broadcast %cst_17 : f32 to vector<1x128xf32>
    %44 = arith.select %41, %42, %43 : vector<1x128xi1>, vector<1x128xf32>
    %45 = arith.addf %39, %44 : vector<1x128xf32>
    %46 = arith.addf %34, %45 : vector<1x128xf32>
    %c0_18 = arith.constant 0 : index
    %c0_19 = arith.constant 0 : index
    %47 = vector.load %arg4[%c0_18, %c0_19] : memref<1x128xf32, #tpu.memory_space<vmem>>, vector<1x128xf32>
    tpu.vector_store %arg4[%c0_18, %c0_19], %46 {strides = array<i32>} : memref<1x128xf32, #tpu.memory_space<vmem>>, vector<1x128xf32>,
    return
  }
  func.func @transform_0(%arg0: i32) -> (i32, i32) {
    %c0_i32 = arith.constant 0 : i32
    %c0_i32_0 = arith.constant 0 : i32
    return %arg0, %c0_i32 : i32, i32
  }
  func.func @transform_1(%arg0: i32) -> (i32, i32) {
    %c0_i32 = arith.constant 0 : i32
    %c0_i32_0 = arith.constant 0 : i32
    return %arg0, %c0_i32 : i32, i32
  }
  func.func @transform_2(%arg0: i32) -> (i32, i32) {
    %c0_i32 = arith.constant 0 : i32
    %c0_i32_0 = arith.constant 0 : i32
    return %arg0, %c0_i32 : i32, i32
  }
  func.func @transform_3(%arg0: i32) -> (i32, i32) {
    %c0_i32 = arith.constant 0 : i32
    %c0_i32_0 = arith.constant 0 : i32
    %c0_i32_1 = arith.constant 0 : i32
    return %c0_i32, %c0_i32_0 : i32, i32
  }
}

</mosaic_0001>

<llo_original>
// kernel: bert_lstm_forward.23
$region0: #{bert_lstm_forward.23}
  #allocation0 [shape = 'u32[]', space=smem, size = 0x4, offset = 0x4, fixed_abs, tag = 'smem constant byte address 0x4 - core index']
  #allocation1 [shape = 'u32[144,128]{1,0:T(1,128)}', space=vmem, size = 0x12000, scoped, tag = 'internal scratch']
  %s0 = inlined_call_operand.vmem [shape: f32[16,32], index: 0, kind: input, shape index: {}]
  %s1 = inlined_call_operand.vmem [shape: f32[1,32], index: 1, kind: input, shape index: {}]
  %s2 = inlined_call_operand.vmem [shape: f32[1,32], index: 2, kind: input, shape index: {}]
  %s3 = inlined_call_operand.vmem [shape: bf16[16,32], index: 3, kind: output, shape index: {}]
  %s4 = sld [smem:[#allocation0]]
  $region22: #{bert_lstm_forward.23} parent=0
    _
  %s6 = ssub.s32 1, %s4
  %s7 = scalar_select 0, %s6, %s4
  // Predicated region
  $region2: #{bert_lstm_forward.23} parent=0 // pred_check
    _
  $region3: #{bert_lstm_forward.23} parent=0 // pred_check_branch
    %9 = sbr.rel (0) target = $region5
  $region4: #{bert_lstm_forward.23} parent=0 // pred_region
    _
  $region5: #{bert_lstm_forward.23} parent=0 // pred_fallthru
    _
  // Predicated region
  $region6: #{bert_lstm_forward.23} parent=0 // pred_check
    _
  $region7: #{bert_lstm_forward.23} parent=0 // pred_check_branch
    %11 = sbr.rel (0) target = $region9
  $region8: #{bert_lstm_forward.23} parent=0 // pred_region
    _
  $region9: #{bert_lstm_forward.23} parent=0 // pred_fallthru
    _
  // Predicated region
  $region10: #{bert_lstm_forward.23} parent=0 // pred_check
    _
  $region11: #{bert_lstm_forward.23} parent=0 // pred_check_branch
    %13 = sbr.rel (0) target = $region13
  $region12: #{bert_lstm_forward.23} parent=0 // pred_region
    _
  $region13: #{bert_lstm_forward.23} parent=0 // pred_fallthru
    _
  %v14 = vld [vmem:[%s0] sm:$0xff]
  %v15 = vld [vmem:[%s0 + $0x8] sm:$0xff]
  %vm16 = vcmask 261120
  %v17 = vsel %vm16, %v14, 0.0
  %18 = vadd.xlane.f32.xlu0 %v17
  %v19 = vpop.xlane.xlu0 %18
  %v20 = vsel %vm16, %v15, 0.0
  %21 = vadd.xlane.f32.xlu0 %v20
  %v22 = vpop.xlane.xlu0 %21
  %v23 = vrcp.pop 32.0
  %v24 = vmul.f32 %v19, %v23
  %v25 = vmul.f32 %v22, %v23
  %v26 = vsub.f32 %v14, %v24
  %v27 = vsub.f32 %v15, %v25
  %v28 = vmul.f32 %v26, %v26
  %v29 = vmul.f32 %v27, %v27
  %v30 = vsel %vm16, %v28, 0.0
  %31 = vadd.xlane.f32.xlu0 %v30
  %v32 = vpop.xlane.xlu0 %31
  %v33 = vsel %vm16, %v29, 0.0
  %34 = vadd.xlane.f32.xlu0 %v33
  %v35 = vpop.xlane.xlu0 %34
  %v36 = vmul.f32 %v32, %v23
  %v37 = vmul.f32 %v35, %v23
  %v38 = vadd.f32 %v36, 1e-12
  %v39 = vadd.f32 %v37, 1e-12
  %v40 = vrsqrt.pop %v38
  %v41 = vrsqrt.pop %v39
  %v42 = vmul.f32 %v26, %v40
  %v43 = vmul.f32 %v27, %v41
  %v44 = vld [vmem:[%s1] sm:$0x1]
  %v46 = vlaneseq
  %v47 = vshrl.u32 %v46, 7
  %v48 = vsub.s32 0, %v47
  %v49 = vrot.slane %v44, %v48
  %v51 = vmul.f32 %v42, %v49
  %v52 = vmul.f32 %v43, %v49
  %v53 = vld [vmem:[%s2] sm:$0x1]
  %v55 = vlaneseq
  %v56 = vshrl.u32 %v55, 7
  %v57 = vsub.s32 0, %v56
  %v58 = vrot.slane %v53, %v57
  %v60 = vadd.f32 %v51, %v58
  %v61 = vadd.f32 %v52, %v58
  %v62 = vpack.c.bf16 %v61, %v60
  %v64 = vunpack.c.l.b16 %v62
  %v65 = vunpack.c.h.b16 %v62
  %v66 = vpack.c.b16 %v64, %v64
  %v67 = vpack.c.b16 %v65, %v65
  %vm70 = vcmask 257024
  %71 = vst.msk [vmem:[%s3] sm:$0xf] %vm70, %v66
  %72 = vst.msk [vmem:[%s3 + $0x4] sm:$0xf] %vm70, %v67
  // Predicated region
  $region14: #{bert_lstm_forward.23} parent=0 // pred_check
    _
  $region15: #{bert_lstm_forward.23} parent=0 // pred_check_branch
    %74 = sbr.rel (0) target = $region17
  $region16: #{bert_lstm_forward.23} parent=0 // pred_region
    _
  $region17: #{bert_lstm_forward.23} parent=0 // pred_fallthru
    _
  // Predicated region
  $region18: #{bert_lstm_forward.23} parent=0 // pred_check
    _
  $region19: #{bert_lstm_forward.23} parent=0 // pred_check_branch
    %76 = sbr.rel (0) target = $region21
  $region20: #{bert_lstm_forward.23} parent=0 // pred_region
    _
  $region21: #{bert_lstm_forward.23} parent=0 // pred_fallthru
    _

// kernel: bert_lstm_forward.25
$region0: #{bert_lstm_forward.25}
  #allocation0 [shape = 'u32[]', space=smem, size = 0x4, offset = 0x4, fixed_abs, tag = 'smem constant byte address 0x4 - core index']
  #allocation1 [shape = 'u32[144,128]{1,0:T(1,128)}', space=vmem, size = 0x12000, scoped, tag = 'internal scratch']
  %s0 = inlined_call_operand.vmem [shape: f32[2,1,8], index: 0, kind: input, shape index: {}]
  %s1 = inlined_call_operand.vmem [shape: bf16[2,8,96], index: 1, kind: input, shape index: {}]
  %s2 = inlined_call_operand.vmem [shape: bf16[2,8,32], index: 2, kind: output, shape index: {}]
  %s3 = sld [smem:[#allocation0]]
  $region41: #{bert_lstm_forward.25} parent=0
    _
  %s5 = ssub.s32 1, %s3
  %s6 = scalar_select 0, %s5, %s3
  loop: start=0, step=1, limit=4
  $region2: #{bert_lstm_forward.25} parent=0 // loop_pre_header
    _
  $region3: #{bert_lstm_forward.25} parent=0 // loop_header
    %s8 = sphi 0, %s12
    %p9 = scmp.ge.s32.totalorder %s8, 4
    %s18 = sphi 0, %s20
    %s21 = sphi 0, %s18
    %s22 = sphi 0, %s21
    %s38 = sphi 0, %s22
    %s44 = sphi 0, %s46
    %s47 = sphi 0, %s44
    %s48 = sphi 0, %s47
    %s64 = sphi 0, %s48
    %s70 = sphi 0, %s72
    %s73 = sphi 0, %s70
    %s74 = sphi 0, %s73
    %s90 = sphi 0, %s74
  $region4: #{bert_lstm_forward.25} parent=0 // loop_header_branch
    %11 = sbr.rel (%p9) target = $region8
  $region5: #{bert_lstm_forward.25} parent=0 // loop_body
    %s13 = ssub.s32 %s8, 1
    %s14 = ssub.s32 %s8, 2
    %s15 = sadd.s32 %s8, 1
    %s16 = ssub.s32 %s8, %s15
    %p17 = scmp.eq.s32.totalorder %s16, 0
    %s19 = sadd.s32 %s18, 1
    %s20 = scalar_select %p17, %s18, %s19
    %p23 = pneg %p17
    %p24 = scmp.eq.s32.totalorder %s8, 1
    %p25 = por %p23, %p24
    %p26 = scmp.ne.s32.totalorder %s18, %s21
    %p27 = scmp.eq.s32.totalorder %s8, 0
    %p28 = por %p26, %p27
    %p29 = scmp.ne.s32.totalorder %s18, %s21
    %p30 = scmp.eq.s32.totalorder %s13, 1
    %p31 = por %p29, %p30
    %p32 = scmp.ne.s32.totalorder %s21, %s22
    %p33 = scmp.eq.s32.totalorder %s13, 0
    %p34 = por %p32, %p33
    %p35 = scmp.ne.s32.totalorder %s21, %s22
    %p36 = scmp.eq.s32.totalorder %s14, 1
    %p37 = por %p35, %p36
    %p39 = scmp.ne.s32.totalorder %s22, %s38
    %p40 = scmp.eq.s32.totalorder %s14, 0
    %p41 = por %p39, %p40
    %s42 = ssub.s32 %s8, %s15
    %p43 = scmp.eq.s32.totalorder %s42, 0
    %s45 = sadd.s32 %s44, 1
    %s46 = scalar_select %p43, %s44, %s45
    %p49 = pneg %p43
    %p50 = scmp.eq.s32.totalorder %s8, 1
    %p51 = por %p49, %p50
    %p52 = scmp.ne.s32.totalorder %s44, %s47
    %p53 = scmp.eq.s32.totalorder %s8, 0
    %p54 = por %p52, %p53
    %p55 = scmp.ne.s32.totalorder %s44, %s47
    %p56 = scmp.eq.s32.totalorder %s13, 1
    %p57 = por %p55, %p56
    %p58 = scmp.ne.s32.totalorder %s47, %s48
    %p59 = scmp.eq.s32.totalorder %s13, 0
    %p60 = por %p58, %p59
    %p61 = scmp.ne.s32.totalorder %s47, %s48
    %p62 = scmp.eq.s32.totalorder %s14, 1
    %p63 = por %p61, %p62
    %p65 = scmp.ne.s32.totalorder %s48, %s64
    %p66 = scmp.eq.s32.totalorder %s14, 0
    %p67 = por %p65, %p66
    %s68 = ssub.s32 %s8, %s15
    %p69 = scmp.eq.s32.totalorder %s68, 0
    %s71 = sadd.s32 %s70, 1
    %s72 = scalar_select %p69, %s70, %s71
    %p75 = pneg %p69
    %p76 = scmp.eq.s32.totalorder %s8, 1
    %p77 = por %p75, %p76
    %p78 = scmp.ne.s32.totalorder %s70, %s73
    %p79 = scmp.eq.s32.totalorder %s8, 0
    %p80 = por %p78, %p79
    %p81 = scmp.ne.s32.totalorder %s70, %s73
    %p82 = scmp.eq.s32.totalorder %s13, 1
    %p83 = por %p81, %p82
    %p84 = scmp.ne.s32.totalorder %s73, %s74
    %p85 = scmp.eq.s32.totalorder %s13, 0
    %p86 = por %p84, %p85
    %p87 = scmp.ne.s32.totalorder %s73, %s74
    %p88 = scmp.eq.s32.totalorder %s14, 1
    %p89 = por %p87, %p88
    %p91 = scmp.ne.s32.totalorder %s74, %s90
    %p92 = scmp.eq.s32.totalorder %s14, 0
    %p93 = por %p91, %p92
    %p94 = scmp.le.s32.totalorder 1, %s8
    %p95 = scmp.lt.s32.totalorder %s8, 3
    %p96 = pnand %p94, %p95
    %p97 = pneg %p96
    // Predicated region
    $region9: #{bert_lstm_forward.25} parent=5 // pred_check
      _
    $region10: #{bert_lstm_forward.25} parent=5 // pred_check_branch
      %99 = sbr.rel (%p96) target = $region12
    $region11: #{bert_lstm_forward.25} parent=5 // pred_region
      %s100 = ssub.s32 %s8, 1
    $region12: #{bert_lstm_forward.25} parent=5 // pred_fallthru
      _
    %p101 = scmp.lt.s32.totalorder %s8, 2
    // Predicated region
    $region13: #{bert_lstm_forward.25} parent=5 // pred_check
      %p102 = pneg %p101
    $region14: #{bert_lstm_forward.25} parent=5 // pred_check_branch
      %104 = sbr.rel (%p102) target = $region16
    $region15: #{bert_lstm_forward.25} parent=5 // pred_region
      // Predicated region
      $region17: #{bert_lstm_forward.25} parent=15 // pred_check
        %p105 = pneg %p28
      $region18: #{bert_lstm_forward.25} parent=15 // pred_check_branch
        %107 = sbr.rel (%p105) target = $region20
      $region19: #{bert_lstm_forward.25} parent=15 // pred_region
        %p108 = scmp.lt.s32.totalorder %s8, 1
        %s109 = scalar_select %p108, %s8, 1
        %s110 = scalar_lea.vmem %s0, %s109
      $region20: #{bert_lstm_forward.25} parent=15 // pred_fallthru
        _
      // Predicated region
      $region21: #{bert_lstm_forward.25} parent=15 // pred_check
        %p111 = pneg %p54
      $region22: #{bert_lstm_forward.25} parent=15 // pred_check_branch
        %113 = sbr.rel (%p111) target = $region24
      $region23: #{bert_lstm_forward.25} parent=15 // pred_region
        %p114 = scmp.lt.s32.totalorder %s8, 1
        %s115 = scalar_select %p114, %s8, 1
        %s116 = smul.addr %s115, 4
        %s117 = scalar_lea.vmem %s1, %s116
      $region24: #{bert_lstm_forward.25} parent=15 // pred_fallthru
        _
    $region16: #{bert_lstm_forward.25} parent=5 // pred_fallthru
      _
    %p118 = scmp.le.s32.totalorder 1, %s8
    %p119 = scmp.lt.s32.totalorder %s8, 3
    %p120 = pnand %p118, %p119
    %p121 = pneg %p120
    // Predicated region
    $region25: #{bert_lstm_forward.25} parent=5 // pred_check
      _
    $region26: #{bert_lstm_forward.25} parent=5 // pred_check_branch
      %123 = sbr.rel (%p120) target = $region28
    $region27: #{bert_lstm_forward.25} parent=5 // pred_region
      %s124 = ssub.s32 %s8, 1
      %p125 = scmp.lt.s32.totalorder %s13, 1
      %s126 = scalar_select %p125, %s13, 1
      %s127 = scalar_lea.vmem %s0, %s126
      %p128 = pneg %p34
      %p129 = pneg %p31
      %p130 = scmp.lt.s32.totalorder %s13, 1
      %s131 = scalar_select %p130, %s13, 1
      %s132 = smul.addr %s131, 4
      %s133 = scalar_lea.vmem %s1, %s132
      %p134 = pneg %p60
      %p135 = pneg %p57
      %p136 = pneg %p86
      %p137 = pneg %p83
      %p138 = scmp.lt.s32.totalorder %s13, 1
      %s139 = scalar_select %p138, %s13, 1
      %s140 = smul.addr %s139, 4
      %s141 = scalar_lea.vmem %s2, %s140
      %p142 = scmp.lt.s32.totalorder %s13, 1
      %s143 = scalar_select %p142, %s13, 1
      %s144 = scalar_lea.vmem %s0, %s143
      %p145 = scmp.lt.s32.totalorder %s13, 1
      %s146 = scalar_select %p145, %s13, 1
      %s147 = smul.addr %s146, 4
      %s148 = scalar_lea.vmem %s1, %s147
      %p149 = scmp.lt.s32.totalorder %s13, 1
      %s150 = scalar_select %p149, %s13, 1
      %s151 = smul.addr %s150, 4
      %s152 = scalar_lea.vmem %s2, %s151
      %v154 = vld [vmem:[%s148] sm:$0xf]
      %v155 = vld [vmem:[%s144] sm:$0x1]
      %v157 = vunpack.c.l.b16 %v154
      %v158 = vpack.c.b16 %v157, %v157
      %159 = vrot.lane.b32.xlu0 %v158, 96
      %v160 = vpop.permute.xlu0 %159
      %vm161 = vcmask 130048
      %v163 = vsel %vm161, %v154, 0
      %v166 = vsel %vm161, %v160, 0
      %168 = vmatprep.subr.bf16.mxu0 0
      %169 = vmatpush1.bf16.xpose.msra.mxu0 0
      %170 = vmatprep.subr.bf16.mxu0 0
      %171 = vmatpush1.bf16.xpose.msra.mxu0 0
      %172 = vmatprep.subr.bf16.mxu0 0
      %173 = vmatpush1.bf16.xpose.msra.mxu0 0
      %174 = vmatprep.subr.bf16.mxu0 0
      %175 = vmatpush1.bf16.xpose.msra.mxu0 0
      %176 = vmatprep.subr.bf16.mxu0 0
      %177 = vmatpush1.bf16.xpose.msra.mxu0 0
      %178 = vmatprep.subr.bf16.mxu0 0
      %179 = vmatpush1.bf16.xpose.msra.mxu0 0
      %180 = vmatprep.subr.bf16.mxu0 0
      %181 = vmatpush1.bf16.xpose.msra.mxu0 0
      %182 = vmatprep.subr.bf16.mxu0 0
      %183 = vmatpush1.bf16.xpose.msra.mxu0 %v166
      %184 = vmatprep.subr.bf16.mxu0 0
      %185 = vmatpush2.bf16.xpose.msra.mxu0 0
      %186 = vmatprep.subr.bf16.mxu0 0
      %187 = vmatpush2.bf16.xpose.msra.mxu0 0
      %188 = vmatprep.subr.bf16.mxu0 0
      %189 = vmatpush2.bf16.xpose.msra.mxu0 0
      %190 = vmatprep.subr.bf16.mxu0 0
      %191 = vmatpush2.bf16.xpose.msra.mxu0 0
      %192 = vmatprep.subr.bf16.mxu0 0
      %193 = vmatpush2.bf16.xpose.msra.mxu0 0
      %194 = vmatprep.subr.bf16.mxu0 0
      %195 = vmatpush2.bf16.xpose.msra.mxu0 0
      %196 = vmatprep.subr.bf16.mxu0 0
      %197 = vmatpush2.bf16.xpose.msra.mxu0 0
      %198 = vmatprep.subr.bf16.mxu0 0
      %199 = vmatpush2.bf16.xpose.msra.mxu0 0
      %200 = vmatprep.mubr.bf16.mxu0 0
      %201 = vmatmul.mubr.bf16.gmra.mxu0 %v163
      %v202 = vpop.f32.mrf.mxu0
      %v203 = vadd.f32 0.0, %v202
      %v204 = vpop.f32.mrf.mxu0
      %v205 = vpop.f32.mrf.mxu0
      %v206 = vpop.f32.mrf.mxu0
      %207 = vdwg.mxu0
      %v208 = vmul.f32 %v203, 0.25
      %v210 = vlaneseq
      %v211 = vshrl.u32 %v210, 7
      %v212 = vsub.s32 0, %v211
      %v213 = vrot.slane %v155, %v212
      %v215 = vadd.f32 %v208, %v213
      %vm216 = vcmask 64512
      %v217 = vsel %vm216, %v215, -inf
      %218 = vmax.xlane.f32.xlu0 %v217
      %v219 = vpop.xlane.xlu0 %218
      %v220 = vsub.f32 %v215, %v219
      %v221 = vmul.f32 %v220, 1.442695
      %v222 = vpow.pop %v221
      %v223 = vsel %vm216, %v222, 0.0
      %224 = vadd.xlane.f32.xlu0 %v223
      %v225 = vpop.xlane.xlu0 %224
      %v226 = vrcp.pop %v225
      %v227 = vmul.f32 %v222, %v226
      %v228 = vpack.c.bf16 %v227, %v227
      %229 = vrot.lane.b32.xlu0 %v158, 64
      %v230 = vpop.permute.xlu0 %229
      %v232 = vsel %vm216, %v228, 0
      %vm234 = vcmask 1043456
      %v236 = vsel %vm234, %v230, 0
      %238 = vmatprep.subr.bf16.mxu0 0
      %239 = vmatpush1.bf16.msra.mxu0 0
      %240 = vmatprep.subr.bf16.mxu0 0
      %241 = vmatpush1.bf16.msra.mxu0 0
      %242 = vmatprep.subr.bf16.mxu0 0
      %243 = vmatpush1.bf16.msra.mxu0 0
      %244 = vmatprep.subr.bf16.mxu0 0
      %245 = vmatpush1.bf16.msra.mxu0 0
      %246 = vmatprep.subr.bf16.mxu0 0
      %247 = vmatpush1.bf16.msra.mxu0 0
      %248 = vmatprep.subr.bf16.mxu0 0
      %249 = vmatpush1.bf16.msra.mxu0 0
      %250 = vmatprep.subr.bf16.mxu0 0
      %251 = vmatpush1.bf16.msra.mxu0 0
      %252 = vmatprep.subr.bf16.mxu0 0
      %253 = vmatpush1.bf16.msra.mxu0 %v236
      %254 = vmatprep.subr.bf16.mxu0 0
      %255 = vmatpush2.bf16.msra.mxu0 0
      %256 = vmatprep.subr.bf16.mxu0 0
      %257 = vmatpush2.bf16.msra.mxu0 0
      %258 = vmatprep.subr.bf16.mxu0 0
      %259 = vmatpush2.bf16.msra.mxu0 0
      %260 = vmatprep.subr.bf16.mxu0 0
      %261 = vmatpush2.bf16.msra.mxu0 0
      %262 = vmatprep.subr.bf16.mxu0 0
      %263 = vmatpush2.bf16.msra.mxu0 0
      %264 = vmatprep.subr.bf16.mxu0 0
      %265 = vmatpush2.bf16.msra.mxu0 0
      %266 = vmatprep.subr.bf16.mxu0 0
      %267 = vmatpush2.bf16.msra.mxu0 0
      %268 = vmatprep.subr.bf16.mxu0 0
      %269 = vmatpush2.bf16.msra.mxu0 0
      %270 = vmatprep.mubr.bf16.mxu0 0
      %271 = vmatmul.mubr.bf16.gmra.mxu0 %v232
      %v272 = vpop.f32.mrf.mxu0
      %v273 = vadd.f32 0.0, %v272
      %v274 = vpop.f32.mrf.mxu0
      %v275 = vpop.f32.mrf.mxu0
      %v276 = vpop.f32.mrf.mxu0
      %277 = vdwg.mxu0
      %278 = vrot.lane.b32.xlu0 %v158, 112
      %v279 = vpop.permute.xlu0 %278
      %280 = vrot.lane.b32.xlu0 %v158, 80
      %v281 = vpop.permute.xlu0 %280
      %v283 = vsel %vm161, %v279, 0
      %v286 = vsel %vm161, %v281, 0
      %288 = vmatprep.subr.bf16.mxu0 0
      %289 = vmatpush1.bf16.xpose.msra.mxu0 0
      %290 = vmatprep.subr.bf16.mxu0 0
      %291 = vmatpush1.bf16.xpose.msra.mxu0 0
      %292 = vmatprep.subr.bf16.mxu0 0
      %293 = vmatpush1.bf16.xpose.msra.mxu0 0
      %294 = vmatprep.subr.bf16.mxu0 0
      %295 = vmatpush1.bf16.xpose.msra.mxu0 0
      %296 = vmatprep.subr.bf16.mxu0 0
      %297 = vmatpush1.bf16.xpose.msra.mxu0 0
      %298 = vmatprep.subr.bf16.mxu0 0
      %299 = vmatpush1.bf16.xpose.msra.mxu0 0
      %300 = vmatprep.subr.bf16.mxu0 0
      %301 = vmatpush1.bf16.xpose.msra.mxu0 0
      %302 = vmatprep.subr.bf16.mxu0 0
      %303 = vmatpush1.bf16.xpose.msra.mxu0 %v286
      %304 = vmatprep.subr.bf16.mxu0 0
      %305 = vmatpush2.bf16.xpose.msra.mxu0 0
      %306 = vmatprep.subr.bf16.mxu0 0
      %307 = vmatpush2.bf16.xpose.msra.mxu0 0
      %308 = vmatprep.subr.bf16.mxu0 0
      %309 = vmatpush2.bf16.xpose.msra.mxu0 0
      %310 = vmatprep.subr.bf16.mxu0 0
      %311 = vmatpush2.bf16.xpose.msra.mxu0 0
      %312 = vmatprep.subr.bf16.mxu0 0
      %313 = vmatpush2.bf16.xpose.msra.mxu0 0
      %314 = vmatprep.subr.bf16.mxu0 0
      %315 = vmatpush2.bf16.xpose.msra.mxu0 0
      %316 = vmatprep.subr.bf16.mxu0 0
      %317 = vmatpush2.bf16.xpose.msra.mxu0 0
      %318 = vmatprep.subr.bf16.mxu0 0
      %319 = vmatpush2.bf16.xpose.msra.mxu0 0
      %320 = vmatprep.mubr.bf16.mxu0 0
      %321 = vmatmul.mubr.bf16.gmra.mxu0 %v283
      %v322 = vpop.f32.mrf.mxu0
      %v323 = vadd.f32 0.0, %v322
      %v324 = vpop.f32.mrf.mxu0
      %v325 = vpop.f32.mrf.mxu0
      %v326 = vpop.f32.mrf.mxu0
      %327 = vdwg.mxu0
      %v328 = vmul.f32 %v323, 0.25
      %v329 = vadd.f32 %v328, %v213
      %v330 = vsel %vm216, %v329, -inf
      %331 = vmax.xlane.f32.xlu0 %v330
      %v332 = vpop.xlane.xlu0 %331
      %v333 = vsub.f32 %v329, %v332
      %v334 = vmul.f32 %v333, 1.442695
      %v335 = vpow.pop %v334
      %v336 = vsel %vm216, %v335, 0.0
      %337 = vadd.xlane.f32.xlu0 %v336
      %v338 = vpop.xlane.xlu0 %337
      %v339 = vrcp.pop %v338
      %v340 = vmul.f32 %v335, %v339
      %v341 = vpack.c.bf16 %v340, %v340
      %342 = vrot.lane.b32.xlu0 %v158, 48
      %v343 = vpop.permute.xlu0 %342
      %v345 = vsel %vm216, %v341, 0
      %v348 = vsel %vm234, %v343, 0
      %350 = vmatprep.subr.bf16.mxu0 0
      %351 = vmatpush1.bf16.msra.mxu0 0
      %352 = vmatprep.subr.bf16.mxu0 0
      %353 = vmatpush1.bf16.msra.mxu0 0
      %354 = vmatprep.subr.bf16.mxu0 0
      %355 = vmatpush1.bf16.msra.mxu0 0
      %356 = vmatprep.subr.bf16.mxu0 0
      %357 = vmatpush1.bf16.msra.mxu0 0
      %358 = vmatprep.subr.bf16.mxu0 0
      %359 = vmatpush1.bf16.msra.mxu0 0
      %360 = vmatprep.subr.bf16.mxu0 0
      %361 = vmatpush1.bf16.msra.mxu0 0
      %362 = vmatprep.subr.bf16.mxu0 0
      %363 = vmatpush1.bf16.msra.mxu0 0
      %364 = vmatprep.subr.bf16.mxu0 0
      %365 = vmatpush1.bf16.msra.mxu0 %v348
      %366 = vmatprep.subr.bf16.mxu0 0
      %367 = vmatpush2.bf16.msra.mxu0 0
      %368 = vmatprep.subr.bf16.mxu0 0
      %369 = vmatpush2.bf16.msra.mxu0 0
      %370 = vmatprep.subr.bf16.mxu0 0
      %371 = vmatpush2.bf16.msra.mxu0 0
      %372 = vmatprep.subr.bf16.mxu0 0
      %373 = vmatpush2.bf16.msra.mxu0 0
      %374 = vmatprep.subr.bf16.mxu0 0
      %375 = vmatpush2.bf16.msra.mxu0 0
      %376 = vmatprep.subr.bf16.mxu0 0
      %377 = vmatpush2.bf16.msra.mxu0 0
      %378 = vmatprep.subr.bf16.mxu0 0
      %379 = vmatpush2.bf16.msra.mxu0 0
      %380 = vmatprep.subr.bf16.mxu0 0
      %381 = vmatpush2.bf16.msra.mxu0 0
      %382 = vmatprep.mubr.bf16.mxu0 0
      %383 = vmatmul.mubr.bf16.gmra.mxu0 %v345
      %v384 = vpop.f32.mrf.mxu0
      %v385 = vadd.f32 0.0, %v384
      %v386 = vpop.f32.mrf.mxu0
      %v387 = vpop.f32.mrf.mxu0
      %v388 = vpop.f32.mrf.mxu0
      %389 = vdwg.mxu0
      %391 = vrot.lane.b32.xlu0 %v385, 16
      %v392 = vpop.permute.xlu0 %391
      %v394 = vsel %vm161, %v273, %v392
      %v395 = vpack.c.bf16 %v394, %v394
      %vm396 = vcmask 257024
      %397 = vst.msk [vmem:[%s152] sm:$0xf] %vm396, %v395
      %p398 = scmp.lt.s32.totalorder %s13, 1
      %s399 = scalar_select %p398, %s13, 1
      %s400 = smul.addr %s399, 4
      %s401 = scalar_lea.vmem %s2, %s400
      // Predicated region
      $region29: #{bert_lstm_forward.25} parent=27 // pred_check
        %p402 = pneg %p83
      $region30: #{bert_lstm_forward.25} parent=27 // pred_check_branch
        %404 = sbr.rel (%p402) target = $region32
      $region31: #{bert_lstm_forward.25} parent=27 // pred_region
        _
      $region32: #{bert_lstm_forward.25} parent=27 // pred_fallthru
        _
    $region28: #{bert_lstm_forward.25} parent=5 // pred_fallthru
      _
    %p405 = scmp.le.s32.totalorder 2, %s8
    // Predicated region
    $region33: #{bert_lstm_forward.25} parent=5 // pred_check
      %p406 = pneg %p405
    $region34: #{bert_lstm_forward.25} parent=5 // pred_check_branch
      %408 = sbr.rel (%p406) target = $region36
    $region35: #{bert_lstm_forward.25} parent=5 // pred_region
      %s409 = ssub.s32 %s8, 2
      // Predicated region
      $region37: #{bert_lstm_forward.25} parent=35 // pred_check
        %p410 = pneg %p89
      $region38: #{bert_lstm_forward.25} parent=35 // pred_check_branch
        %412 = sbr.rel (%p410) target = $region40
      $region39: #{bert_lstm_forward.25} parent=35 // pred_region
        %p413 = scmp.lt.s32.totalorder %s14, 1
        %s414 = scalar_select %p413, %s14, 1
        %s415 = smul.addr %s414, 4
        %s416 = scalar_lea.vmem %s2, %s415
      $region40: #{bert_lstm_forward.25} parent=35 // pred_fallthru
        _
    $region36: #{bert_lstm_forward.25} parent=5 // pred_fallthru
      _
  $region6: #{bert_lstm_forward.25} parent=0 // loop_footer
    %s12 = sadd.s32 1, %s8
  $region7: #{bert_lstm_forward.25} parent=0 // loop_footer_branch
    %7 = sbr.rel target = $region3
  $region8: #{bert_lstm_forward.25} parent=0 // loop_exit
    _

// kernel: bert_lstm_forward.26
$region0: #{bert_lstm_forward.26}
  #allocation0 [shape = 'u32[]', space=smem, size = 0x4, offset = 0x4, fixed_abs, tag = 'smem constant byte address 0x4 - core index']
  #allocation1 [shape = 'u32[144,128]{1,0:T(1,128)}', space=vmem, size = 0x12000, scoped, tag = 'internal scratch']
  #allocation2 [shape = 'f32[16,32]{1,0:T(8,128)}', space=vmem, size = 0x2000, scoped, tag = 'scratch operand']
  %s0 = inlined_call_operand.vmem [shape: bf16[16,32], index: 0, kind: input, shape index: {}]
  %s1 = inlined_call_operand.vmem [shape: bf16[32,32], index: 1, kind: input, shape index: {}]
  %s2 = inlined_call_operand.vmem [shape: f32[1,32], index: 2, kind: input, shape index: {}]
  %s3 = inlined_call_operand.vmem [shape: bf16[16,32], index: 3, kind: output, shape index: {}]
  %s4 = sld [smem:[#allocation0]]
  $region30: #{bert_lstm_forward.26} parent=0
    _
  %s6 = ssub.s32 1, %s4
  %s7 = scalar_select 0, %s6, %s4
  // Predicated region
  $region2: #{bert_lstm_forward.26} parent=0 // pred_check
    _
  $region3: #{bert_lstm_forward.26} parent=0 // pred_check_branch
    %9 = sbr.rel (0) target = $region5
  $region4: #{bert_lstm_forward.26} parent=0 // pred_region
    _
  $region5: #{bert_lstm_forward.26} parent=0 // pred_fallthru
    _
  // Predicated region
  $region6: #{bert_lstm_forward.26} parent=0 // pred_check
    _
  $region7: #{bert_lstm_forward.26} parent=0 // pred_check_branch
    %11 = sbr.rel (0) target = $region9
  $region8: #{bert_lstm_forward.26} parent=0 // pred_region
    _
  $region9: #{bert_lstm_forward.26} parent=0 // pred_fallthru
    _
  // Predicated region
  $region10: #{bert_lstm_forward.26} parent=0 // pred_check
    _
  $region11: #{bert_lstm_forward.26} parent=0 // pred_check_branch
    %13 = sbr.rel (0) target = $region13
  $region12: #{bert_lstm_forward.26} parent=0 // pred_region
    _
  $region13: #{bert_lstm_forward.26} parent=0 // pred_fallthru
    _
  %p15 = scmp.eq.s32.totalorder 0, 0
  // Predicated region
  $region14: #{bert_lstm_forward.26} parent=0 // pred_check
    %p16 = pneg %p15
  $region15: #{bert_lstm_forward.26} parent=0 // pred_check_branch
    %18 = sbr.rel (%p16) target = $region17
  $region16: #{bert_lstm_forward.26} parent=0 // pred_region
    %vm19 = vcmask 261120
    %20 = vst.msk [vmem:[#allocation2] sm:$0xff] %vm19, 0.0
    %21 = vst.msk [vmem:[#allocation2 + $0x8] sm:$0xff] %vm19, 0.0
  $region17: #{bert_lstm_forward.26} parent=0 // pred_fallthru
    _
  %v22 = vld [vmem:[#allocation2] sm:$0xff]
  %v23 = vld [vmem:[#allocation2 + $0x8] sm:$0xff]
  %v24 = vld [vmem:[%s0] sm:$0xf]
  %v25 = vld [vmem:[%s0 + $0x4] sm:$0xf]
  %v26 = vld [vmem:[%s1] sm:$0xf]
  %v27 = vld [vmem:[%s1 + $0x4] sm:$0xf]
  %v28 = vld [vmem:[%s1 + $0x8] sm:$0xf]
  %v29 = vld [vmem:[%s1 + $0xc] sm:$0xf]
  %v32 = vunpack.c.l.b16 %v24
  %v33 = vunpack.c.l.b16 %v25
  %v34 = vpack.c.b16 %v33, %v32
  %v39 = vunpack.c.l.b16 %v26
  %v40 = vunpack.c.l.b16 %v27
  %v41 = vunpack.c.l.b16 %v28
  %v42 = vunpack.c.l.b16 %v29
  %v43 = vpack.c.b16 %v40, %v39
  %v44 = vpack.c.b16 %v42, %v41
  %vm47 = vcmask 261120
  %v49 = vsel %vm47, %v34, 0
  %51 = vmatprep.subr.bf16.mxu0 0
  %52 = vmatpush1.bf16.msra.mxu0 0
  %53 = vmatprep.subr.bf16.mxu0 0
  %54 = vmatpush1.bf16.msra.mxu0 0
  %55 = vmatprep.subr.bf16.mxu0 0
  %56 = vmatpush1.bf16.msra.mxu0 0
  %57 = vmatprep.subr.bf16.mxu0 0
  %58 = vmatpush1.bf16.msra.mxu0 0
  %59 = vmatprep.subr.bf16.mxu0 0
  %60 = vmatpush1.bf16.msra.mxu0 0
  %61 = vmatprep.subr.bf16.mxu0 0
  %62 = vmatpush1.bf16.msra.mxu0 0
  %63 = vmatprep.subr.bf16.mxu0 0
  %64 = vmatpush1.bf16.msra.mxu0 %v44
  %65 = vmatprep.subr.bf16.mxu0 0
  %66 = vmatpush1.bf16.msra.mxu0 %v43
  %67 = vmatprep.subr.bf16.mxu0 0
  %68 = vmatpush2.bf16.msra.mxu0 0
  %69 = vmatprep.subr.bf16.mxu0 0
  %70 = vmatpush2.bf16.msra.mxu0 0
  %71 = vmatprep.subr.bf16.mxu0 0
  %72 = vmatpush2.bf16.msra.mxu0 0
  %73 = vmatprep.subr.bf16.mxu0 0
  %74 = vmatpush2.bf16.msra.mxu0 0
  %75 = vmatprep.subr.bf16.mxu0 0
  %76 = vmatpush2.bf16.msra.mxu0 0
  %77 = vmatprep.subr.bf16.mxu0 0
  %78 = vmatpush2.bf16.msra.mxu0 0
  %79 = vmatprep.subr.bf16.mxu0 0
  %80 = vmatpush2.bf16.msra.mxu0 0
  %81 = vmatprep.subr.bf16.mxu0 0
  %82 = vmatpush2.bf16.msra.mxu0 0
  %83 = vmatprep.mubr.bf16.mxu0 0
  %84 = vmatmul.mubr.bf16.gmra.mxu0 %v49
  %v85 = vpop.f32.mrf.mxu0
  %v86 = vadd.f32 0.0, %v85
  %v87 = vpop.f32.mrf.mxu0
  %v88 = vpop.f32.mrf.mxu0
  %v89 = vadd.f32 0.0, %v88
  %v90 = vpop.f32.mrf.mxu0
  %91 = vdwg.mxu0
  %v92 = vadd.f32 %v22, %v86
  %v93 = vadd.f32 %v23, %v89
  %94 = vst.msk [vmem:[#allocation2] sm:$0xff] %vm47, %v92
  %95 = vst.msk [vmem:[#allocation2 + $0x8] sm:$0xff] %vm47, %v93
  // Predicated region
  $region18: #{bert_lstm_forward.26} parent=0 // pred_check
    %p96 = pneg %p15
  $region19: #{bert_lstm_forward.26} parent=0 // pred_check_branch
    %98 = sbr.rel (%p96) target = $region21
  $region20: #{bert_lstm_forward.26} parent=0 // pred_region
    %v99 = vld [vmem:[#allocation2] sm:$0xff]
    %v100 = vld [vmem:[#allocation2 + $0x8] sm:$0xff]
    %v101 = vld [vmem:[%s2] sm:$0x1]
    %v103 = vlaneseq
    %v104 = vshrl.u32 %v103, 7
    %v105 = vsub.s32 0, %v104
    %v106 = vrot.slane %v101, %v105
    %v108 = vadd.f32 %v99, %v106
    %v109 = vadd.f32 %v100, %v106
    %v110 = vpack.c.bf16 %v109, %v108
    %v112 = vunpack.c.l.b16 %v110
    %v113 = vunpack.c.h.b16 %v110
    %v114 = vpack.c.b16 %v112, %v112
    %v115 = vpack.c.b16 %v113, %v113
    %vm118 = vcmask 257024
    %119 = vst.msk [vmem:[%s3] sm:$0xf] %vm118, %v114
    %120 = vst.msk [vmem:[%s3 + $0x4] sm:$0xf] %vm118, %v115
  $region21: #{bert_lstm_forward.26} parent=0 // pred_fallthru
    _
  // Predicated region
  $region22: #{bert_lstm_forward.26} parent=0 // pred_check
    _
  $region23: #{bert_lstm_forward.26} parent=0 // pred_check_branch
    %122 = sbr.rel (0) target = $region25
  $region24: #{bert_lstm_forward.26} parent=0 // pred_region
    _
  $region25: #{bert_lstm_forward.26} parent=0 // pred_fallthru
    _
  // Predicated region
  $region26: #{bert_lstm_forward.26} parent=0 // pred_check
    _
  $region27: #{bert_lstm_forward.26} parent=0 // pred_check_branch
    %124 = sbr.rel (0) target = $region29
  $region28: #{bert_lstm_forward.26} parent=0 // pred_region
    _
  $region29: #{bert_lstm_forward.26} parent=0 // pred_fallthru
    _

// kernel: bert_lstm_forward.24
$region0: #{bert_lstm_forward.24}
  #allocation0 [shape = 'u32[]', space=smem, size = 0x4, offset = 0x4, fixed_abs, tag = 'smem constant byte address 0x4 - core index']
  #allocation1 [shape = 'u32[144,128]{1,0:T(1,128)}', space=vmem, size = 0x12000, scoped, tag = 'internal scratch']
  #allocation2 [shape = 'f32[16,96]{1,0:T(8,128)}', space=vmem, size = 0x2000, scoped, tag = 'scratch operand']
  %s0 = inlined_call_operand.vmem [shape: bf16[16,32], index: 0, kind: input, shape index: {}]
  %s1 = inlined_call_operand.vmem [shape: bf16[32,96], index: 1, kind: input, shape index: {}]
  %s2 = inlined_call_operand.vmem [shape: f32[1,96], index: 2, kind: input, shape index: {}]
  %s3 = inlined_call_operand.vmem [shape: bf16[16,96], index: 3, kind: output, shape index: {}]
  %s4 = sld [smem:[#allocation0]]
  $region30: #{bert_lstm_forward.24} parent=0
    _
  %s6 = ssub.s32 1, %s4
  %s7 = scalar_select 0, %s6, %s4
  // Predicated region
  $region2: #{bert_lstm_forward.24} parent=0 // pred_check
    _
  $region3: #{bert_lstm_forward.24} parent=0 // pred_check_branch
    %9 = sbr.rel (0) target = $region5
  $region4: #{bert_lstm_forward.24} parent=0 // pred_region
    _
  $region5: #{bert_lstm_forward.24} parent=0 // pred_fallthru
    _
  // Predicated region
  $region6: #{bert_lstm_forward.24} parent=0 // pred_check
    _
  $region7: #{bert_lstm_forward.24} parent=0 // pred_check_branch
    %11 = sbr.rel (0) target = $region9
  $region8: #{bert_lstm_forward.24} parent=0 // pred_region
    _
  $region9: #{bert_lstm_forward.24} parent=0 // pred_fallthru
    _
  // Predicated region
  $region10: #{bert_lstm_forward.24} parent=0 // pred_check
    _
  $region11: #{bert_lstm_forward.24} parent=0 // pred_check_branch
    %13 = sbr.rel (0) target = $region13
  $region12: #{bert_lstm_forward.24} parent=0 // pred_region
    _
  $region13: #{bert_lstm_forward.24} parent=0 // pred_fallthru
    _
  %p15 = scmp.eq.s32.totalorder 0, 0
  // Predicated region
  $region14: #{bert_lstm_forward.24} parent=0 // pred_check
    %p16 = pneg %p15
  $region15: #{bert_lstm_forward.24} parent=0 // pred_check_branch
    %18 = sbr.rel (%p16) target = $region17
  $region16: #{bert_lstm_forward.24} parent=0 // pred_region
    %vm19 = vcmask 785408
    %20 = vst.msk [vmem:[#allocation2] sm:$0xff] %vm19, 0.0
    %21 = vst.msk [vmem:[#allocation2 + $0x8] sm:$0xff] %vm19, 0.0
  $region17: #{bert_lstm_forward.24} parent=0 // pred_fallthru
    _
  %v22 = vld [vmem:[#allocation2] sm:$0xff]
  %v23 = vld [vmem:[#allocation2 + $0x8] sm:$0xff]
  %v24 = vld [vmem:[%s0] sm:$0xf]
  %v25 = vld [vmem:[%s0 + $0x4] sm:$0xf]
  %v26 = vld [vmem:[%s1] sm:$0xf]
  %v27 = vld [vmem:[%s1 + $0x4] sm:$0xf]
  %v28 = vld [vmem:[%s1 + $0x8] sm:$0xf]
  %v29 = vld [vmem:[%s1 + $0xc] sm:$0xf]
  %v32 = vunpack.c.l.b16 %v24
  %v33 = vunpack.c.l.b16 %v25
  %v34 = vpack.c.b16 %v33, %v32
  %v39 = vunpack.c.l.b16 %v26
  %v40 = vunpack.c.l.b16 %v27
  %v41 = vunpack.c.l.b16 %v28
  %v42 = vunpack.c.l.b16 %v29
  %v43 = vpack.c.b16 %v40, %v39
  %v44 = vpack.c.b16 %v42, %v41
  %vm47 = vcmask 261120
  %v49 = vsel %vm47, %v34, 0
  %51 = vmatprep.subr.bf16.mxu0 0
  %52 = vmatpush1.bf16.msra.mxu0 0
  %53 = vmatprep.subr.bf16.mxu0 0
  %54 = vmatpush1.bf16.msra.mxu0 0
  %55 = vmatprep.subr.bf16.mxu0 0
  %56 = vmatpush1.bf16.msra.mxu0 0
  %57 = vmatprep.subr.bf16.mxu0 0
  %58 = vmatpush1.bf16.msra.mxu0 0
  %59 = vmatprep.subr.bf16.mxu0 0
  %60 = vmatpush1.bf16.msra.mxu0 0
  %61 = vmatprep.subr.bf16.mxu0 0
  %62 = vmatpush1.bf16.msra.mxu0 0
  %63 = vmatprep.subr.bf16.mxu0 0
  %64 = vmatpush1.bf16.msra.mxu0 %v44
  %65 = vmatprep.subr.bf16.mxu0 0
  %66 = vmatpush1.bf16.msra.mxu0 %v43
  %67 = vmatprep.subr.bf16.mxu0 0
  %68 = vmatpush2.bf16.msra.mxu0 0
  %69 = vmatprep.subr.bf16.mxu0 0
  %70 = vmatpush2.bf16.msra.mxu0 0
  %71 = vmatprep.subr.bf16.mxu0 0
  %72 = vmatpush2.bf16.msra.mxu0 0
  %73 = vmatprep.subr.bf16.mxu0 0
  %74 = vmatpush2.bf16.msra.mxu0 0
  %75 = vmatprep.subr.bf16.mxu0 0
  %76 = vmatpush2.bf16.msra.mxu0 0
  %77 = vmatprep.subr.bf16.mxu0 0
  %78 = vmatpush2.bf16.msra.mxu0 0
  %79 = vmatprep.subr.bf16.mxu0 0
  %80 = vmatpush2.bf16.msra.mxu0 0
  %81 = vmatprep.subr.bf16.mxu0 0
  %82 = vmatpush2.bf16.msra.mxu0 0
  %83 = vmatprep.mubr.bf16.mxu0 0
  %84 = vmatmul.mubr.bf16.gmra.mxu0 %v49
  %v85 = vpop.f32.mrf.mxu0
  %v86 = vadd.f32 0.0, %v85
  %v87 = vpop.f32.mrf.mxu0
  %v88 = vpop.f32.mrf.mxu0
  %v89 = vadd.f32 0.0, %v88
  %v90 = vpop.f32.mrf.mxu0
  %91 = vdwg.mxu0
  %v92 = vadd.f32 %v22, %v86
  %v93 = vadd.f32 %v23, %v89
  %vm94 = vcmask 785408
  %95 = vst.msk [vmem:[#allocation2] sm:$0xff] %vm94, %v92
  %96 = vst.msk [vmem:[#allocation2 + $0x8] sm:$0xff] %vm94, %v93
  // Predicated region
  $region18: #{bert_lstm_forward.24} parent=0 // pred_check
    %p97 = pneg %p15
  $region19: #{bert_lstm_forward.24} parent=0 // pred_check_branch
    %99 = sbr.rel (%p97) target = $region21
  $region20: #{bert_lstm_forward.24} parent=0 // pred_region
    %v100 = vld [vmem:[#allocation2] sm:$0xff]
    %v101 = vld [vmem:[#allocation2 + $0x8] sm:$0xff]
    %v102 = vld [vmem:[%s2] sm:$0x1]
    %v104 = vlaneseq
    %v105 = vshrl.u32 %v104, 7
    %v106 = vsub.s32 0, %v105
    %v107 = vrot.slane %v102, %v106
    %v109 = vadd.f32 %v100, %v107
    %v110 = vadd.f32 %v101, %v107
    %v111 = vpack.c.bf16 %v110, %v109
    %v113 = vunpack.c.l.b16 %v111
    %v114 = vunpack.c.h.b16 %v111
    %v115 = vpack.c.b16 %v113, %v113
    %v116 = vpack.c.b16 %v114, %v114
    %vm119 = vcmask 781312
    %120 = vst.msk [vmem:[%s3] sm:$0xf] %vm119, %v115
    %121 = vst.msk [vmem:[%s3 + $0x4] sm:$0xf] %vm119, %v116
  $region21: #{bert_lstm_forward.24} parent=0 // pred_fallthru
    _
  // Predicated region
  $region22: #{bert_lstm_forward.24} parent=0 // pred_check
    _
  $region23: #{bert_lstm_forward.24} parent=0 // pred_check_branch
    %123 = sbr.rel (0) target = $region25
  $region24: #{bert_lstm_forward.24} parent=0 // pred_region
    _
  $region25: #{bert_lstm_forward.24} parent=0 // pred_fallthru
    _
  // Predicated region
  $region26: #{bert_lstm_forward.24} parent=0 // pred_check
    _
  $region27: #{bert_lstm_forward.24} parent=0 // pred_check_branch
    %125 = sbr.rel (0) target = $region29
  $region28: #{bert_lstm_forward.24} parent=0 // pred_region
    _
  $region29: #{bert_lstm_forward.24} parent=0 // pred_fallthru
    _

// kernel: bert_lstm_forward.27
$region0: #{bert_lstm_forward.27}
  #allocation0 [shape = 'u32[]', space=smem, size = 0x4, offset = 0x4, fixed_abs, tag = 'smem constant byte address 0x4 - core index']
  #allocation1 [shape = 'u32[144,128]{1,0:T(1,128)}', space=vmem, size = 0x12000, scoped, tag = 'internal scratch']
  %s0 = inlined_call_operand.vmem [shape: bf16[16,32], index: 0, kind: input, shape index: {}]
  %s1 = inlined_call_operand.vmem [shape: bf16[16,32], index: 1, kind: input, shape index: {}]
  %s2 = inlined_call_operand.vmem [shape: f32[1,32], index: 2, kind: input, shape index: {}]
  %s3 = inlined_call_operand.vmem [shape: f32[1,32], index: 3, kind: input, shape index: {}]
  %s4 = inlined_call_operand.vmem [shape: bf16[16,32], index: 4, kind: output, shape index: {}]
  %s5 = sld [smem:[#allocation0]]
  $region26: #{bert_lstm_forward.27} parent=0
    _
  %s7 = ssub.s32 1, %s5
  %s8 = scalar_select 0, %s7, %s5
  // Predicated region
  $region2: #{bert_lstm_forward.27} parent=0 // pred_check
    _
  $region3: #{bert_lstm_forward.27} parent=0 // pred_check_branch
    %10 = sbr.rel (0) target = $region5
  $region4: #{bert_lstm_forward.27} parent=0 // pred_region
    _
  $region5: #{bert_lstm_forward.27} parent=0 // pred_fallthru
    _
  // Predicated region
  $region6: #{bert_lstm_forward.27} parent=0 // pred_check
    _
  $region7: #{bert_lstm_forward.27} parent=0 // pred_check_branch
    %12 = sbr.rel (0) target = $region9
  $region8: #{bert_lstm_forward.27} parent=0 // pred_region
    _
  $region9: #{bert_lstm_forward.27} parent=0 // pred_fallthru
    _
  // Predicated region
  $region10: #{bert_lstm_forward.27} parent=0 // pred_check
    _
  $region11: #{bert_lstm_forward.27} parent=0 // pred_check_branch
    %14 = sbr.rel (0) target = $region13
  $region12: #{bert_lstm_forward.27} parent=0 // pred_region
    _
  $region13: #{bert_lstm_forward.27} parent=0 // pred_fallthru
    _
  // Predicated region
  $region14: #{bert_lstm_forward.27} parent=0 // pred_check
    _
  $region15: #{bert_lstm_forward.27} parent=0 // pred_check_branch
    %16 = sbr.rel (0) target = $region17
  $region16: #{bert_lstm_forward.27} parent=0 // pred_region
    _
  $region17: #{bert_lstm_forward.27} parent=0 // pred_fallthru
    _
  %v17 = vld [vmem:[%s0] sm:$0xf]
  %v18 = vld [vmem:[%s0 + $0x4] sm:$0xf]
  %v19 = vunpack.c.l.bf16 %v17
  %v20 = vunpack.c.l.bf16 %v18
  %v21 = vld [vmem:[%s1] sm:$0xf]
  %v22 = vld [vmem:[%s1 + $0x4] sm:$0xf]
  %v23 = vunpack.c.l.bf16 %v21
  %v24 = vunpack.c.l.bf16 %v22
  %v25 = vadd.f32 %v19, %v23
  %v26 = vadd.f32 %v20, %v24
  %vm27 = vcmask 261120
  %v28 = vsel %vm27, %v25, 0.0
  %29 = vadd.xlane.f32.xlu0 %v28
  %v30 = vpop.xlane.xlu0 %29
  %v31 = vsel %vm27, %v26, 0.0
  %32 = vadd.xlane.f32.xlu0 %v31
  %v33 = vpop.xlane.xlu0 %32
  %v34 = vrcp.pop 32.0
  %v35 = vmul.f32 %v30, %v34
  %v36 = vmul.f32 %v33, %v34
  %v37 = vsub.f32 %v25, %v35
  %v38 = vsub.f32 %v26, %v36
  %v39 = vmul.f32 %v37, %v37
  %v40 = vmul.f32 %v38, %v38
  %v41 = vsel %vm27, %v39, 0.0
  %42 = vadd.xlane.f32.xlu0 %v41
  %v43 = vpop.xlane.xlu0 %42
  %v44 = vsel %vm27, %v40, 0.0
  %45 = vadd.xlane.f32.xlu0 %v44
  %v46 = vpop.xlane.xlu0 %45
  %v47 = vmul.f32 %v43, %v34
  %v48 = vmul.f32 %v46, %v34
  %v49 = vadd.f32 %v47, 1e-12
  %v50 = vadd.f32 %v48, 1e-12
  %v51 = vrsqrt.pop %v49
  %v52 = vrsqrt.pop %v50
  %v53 = vmul.f32 %v37, %v51
  %v54 = vmul.f32 %v38, %v52
  %v55 = vld [vmem:[%s2] sm:$0x1]
  %v57 = vlaneseq
  %v58 = vshrl.u32 %v57, 7
  %v59 = vsub.s32 0, %v58
  %v60 = vrot.slane %v55, %v59
  %v62 = vmul.f32 %v53, %v60
  %v63 = vmul.f32 %v54, %v60
  %v64 = vld [vmem:[%s3] sm:$0x1]
  %v66 = vlaneseq
  %v67 = vshrl.u32 %v66, 7
  %v68 = vsub.s32 0, %v67
  %v69 = vrot.slane %v64, %v68
  %v71 = vadd.f32 %v62, %v69
  %v72 = vadd.f32 %v63, %v69
  %v73 = vpack.c.bf16 %v72, %v71
  %v75 = vunpack.c.l.b16 %v73
  %v76 = vunpack.c.h.b16 %v73
  %v77 = vpack.c.b16 %v75, %v75
  %v78 = vpack.c.b16 %v76, %v76
  %vm81 = vcmask 257024
  %82 = vst.msk [vmem:[%s4] sm:$0xf] %vm81, %v77
  %83 = vst.msk [vmem:[%s4 + $0x4] sm:$0xf] %vm81, %v78
  // Predicated region
  $region18: #{bert_lstm_forward.27} parent=0 // pred_check
    _
  $region19: #{bert_lstm_forward.27} parent=0 // pred_check_branch
    %85 = sbr.rel (0) target = $region21
  $region20: #{bert_lstm_forward.27} parent=0 // pred_region
    _
  $region21: #{bert_lstm_forward.27} parent=0 // pred_fallthru
    _
  // Predicated region
  $region22: #{bert_lstm_forward.27} parent=0 // pred_check
    _
  $region23: #{bert_lstm_forward.27} parent=0 // pred_check_branch
    %87 = sbr.rel (0) target = $region25
  $region24: #{bert_lstm_forward.27} parent=0 // pred_region
    _
  $region25: #{bert_lstm_forward.27} parent=0 // pred_fallthru
    _

// kernel: bert_lstm_forward.28
$region0: #{bert_lstm_forward.28}
  #allocation0 [shape = 'u32[]', space=smem, size = 0x4, offset = 0x4, fixed_abs, tag = 'smem constant byte address 0x4 - core index']
  #allocation1 [shape = 'u32[144,128]{1,0:T(1,128)}', space=vmem, size = 0x12000, scoped, tag = 'internal scratch']
  #allocation2 [shape = 'f32[16,64]{1,0:T(8,128)}', space=vmem, size = 0x2000, scoped, tag = 'scratch operand']
  %s0 = inlined_call_operand.vmem [shape: bf16[16,32], index: 0, kind: input, shape index: {}]
  %s1 = inlined_call_operand.vmem [shape: bf16[32,64], index: 1, kind: input, shape index: {}]
  %s2 = inlined_call_operand.vmem [shape: f32[1,64], index: 2, kind: input, shape index: {}]
  %s3 = inlined_call_operand.vmem [shape: bf16[16,64], index: 3, kind: output, shape index: {}]
  %s4 = sld [smem:[#allocation0]]
  $region30: #{bert_lstm_forward.28} parent=0
    _
  %s6 = ssub.s32 1, %s4
  %s7 = scalar_select 0, %s6, %s4
  // Predicated region
  $region2: #{bert_lstm_forward.28} parent=0 // pred_check
    _
  $region3: #{bert_lstm_forward.28} parent=0 // pred_check_branch
    %9 = sbr.rel (0) target = $region5
  $region4: #{bert_lstm_forward.28} parent=0 // pred_region
    _
  $region5: #{bert_lstm_forward.28} parent=0 // pred_fallthru
    _
  // Predicated region
  $region6: #{bert_lstm_forward.28} parent=0 // pred_check
    _
  $region7: #{bert_lstm_forward.28} parent=0 // pred_check_branch
    %11 = sbr.rel (0) target = $region9
  $region8: #{bert_lstm_forward.28} parent=0 // pred_region
    _
  $region9: #{bert_lstm_forward.28} parent=0 // pred_fallthru
    _
  // Predicated region
  $region10: #{bert_lstm_forward.28} parent=0 // pred_check
    _
  $region11: #{bert_lstm_forward.28} parent=0 // pred_check_branch
    %13 = sbr.rel (0) target = $region13
  $region12: #{bert_lstm_forward.28} parent=0 // pred_region
    _
  $region13: #{bert_lstm_forward.28} parent=0 // pred_fallthru
    _
  %p15 = scmp.eq.s32.totalorder 0, 0
  // Predicated region
  $region14: #{bert_lstm_forward.28} parent=0 // pred_check
    %p16 = pneg %p15
  $region15: #{bert_lstm_forward.28} parent=0 // pred_check_branch
    %18 = sbr.rel (%p16) target = $region17
  $region16: #{bert_lstm_forward.28} parent=0 // pred_region
    %vm19 = vcmask 523264
    %20 = vst.msk [vmem:[#allocation2] sm:$0xff] %vm19, 0.0
    %21 = vst.msk [vmem:[#allocation2 + $0x8] sm:$0xff] %vm19, 0.0
  $region17: #{bert_lstm_forward.28} parent=0 // pred_fallthru
    _
  %v22 = vld [vmem:[#allocation2] sm:$0xff]
  %v23 = vld [vmem:[#allocation2 + $0x8] sm:$0xff]
  %v24 = vld [vmem:[%s0] sm:$0xf]
  %v25 = vld [vmem:[%s0 + $0x4] sm:$0xf]
  %v26 = vld [vmem:[%s1] sm:$0xf]
  %v27 = vld [vmem:[%s1 + $0x4] sm:$0xf]
  %v28 = vld [vmem:[%s1 + $0x8] sm:$0xf]
  %v29 = vld [vmem:[%s1 + $0xc] sm:$0xf]
  %v32 = vunpack.c.l.b16 %v24
  %v33 = vunpack.c.l.b16 %v25
  %v34 = vpack.c.b16 %v33, %v32
  %v39 = vunpack.c.l.b16 %v26
  %v40 = vunpack.c.l.b16 %v27
  %v41 = vunpack.c.l.b16 %v28
  %v42 = vunpack.c.l.b16 %v29
  %v43 = vpack.c.b16 %v40, %v39
  %v44 = vpack.c.b16 %v42, %v41
  %vm47 = vcmask 261120
  %v49 = vsel %vm47, %v34, 0
  %51 = vmatprep.subr.bf16.mxu0 0
  %52 = vmatpush1.bf16.msra.mxu0 0
  %53 = vmatprep.subr.bf16.mxu0 0
  %54 = vmatpush1.bf16.msra.mxu0 0
  %55 = vmatprep.subr.bf16.mxu0 0
  %56 = vmatpush1.bf16.msra.mxu0 0
  %57 = vmatprep.subr.bf16.mxu0 0
  %58 = vmatpush1.bf16.msra.mxu0 0
  %59 = vmatprep.subr.bf16.mxu0 0
  %60 = vmatpush1.bf16.msra.mxu0 0
  %61 = vmatprep.subr.bf16.mxu0 0
  %62 = vmatpush1.bf16.msra.mxu0 0
  %63 = vmatprep.subr.bf16.mxu0 0
  %64 = vmatpush1.bf16.msra.mxu0 %v44
  %65 = vmatprep.subr.bf16.mxu0 0
  %66 = vmatpush1.bf16.msra.mxu0 %v43
  %67 = vmatprep.subr.bf16.mxu0 0
  %68 = vmatpush2.bf16.msra.mxu0 0
  %69 = vmatprep.subr.bf16.mxu0 0
  %70 = vmatpush2.bf16.msra.mxu0 0
  %71 = vmatprep.subr.bf16.mxu0 0
  %72 = vmatpush2.bf16.msra.mxu0 0
  %73 = vmatprep.subr.bf16.mxu0 0
  %74 = vmatpush2.bf16.msra.mxu0 0
  %75 = vmatprep.subr.bf16.mxu0 0
  %76 = vmatpush2.bf16.msra.mxu0 0
  %77 = vmatprep.subr.bf16.mxu0 0
  %78 = vmatpush2.bf16.msra.mxu0 0
  %79 = vmatprep.subr.bf16.mxu0 0
  %80 = vmatpush2.bf16.msra.mxu0 0
  %81 = vmatprep.subr.bf16.mxu0 0
  %82 = vmatpush2.bf16.msra.mxu0 0
  %83 = vmatprep.mubr.bf16.mxu0 0
  %84 = vmatmul.mubr.bf16.gmra.mxu0 %v49
  %v85 = vpop.f32.mrf.mxu0
  %v86 = vadd.f32 0.0, %v85
  %v87 = vpop.f32.mrf.mxu0
  %v88 = vpop.f32.mrf.mxu0
  %v89 = vadd.f32 0.0, %v88
  %v90 = vpop.f32.mrf.mxu0
  %91 = vdwg.mxu0
  %v92 = vadd.f32 %v22, %v86
  %v93 = vadd.f32 %v23, %v89
  %vm94 = vcmask 523264
  %95 = vst.msk [vmem:[#allocation2] sm:$0xff] %vm94, %v92
  %96 = vst.msk [vmem:[#allocation2 + $0x8] sm:$0xff] %vm94, %v93
  // Predicated region
  $region18: #{bert_lstm_forward.28} parent=0 // pred_check
    %p97 = pneg %p15
  $region19: #{bert_lstm_forward.28} parent=0 // pred_check_branch
    %99 = sbr.rel (%p97) target = $region21
  $region20: #{bert_lstm_forward.28} parent=0 // pred_region
    %v100 = vld [vmem:[#allocation2] sm:$0xff]
    %v101 = vld [vmem:[#allocation2 + $0x8] sm:$0xff]
    %v102 = vld [vmem:[%s2] sm:$0x1]
    %v104 = vlaneseq
    %v105 = vshrl.u32 %v104, 7
    %v106 = vsub.s32 0, %v105
    %v107 = vrot.slane %v102, %v106
    %v109 = vadd.f32 %v100, %v107
    %v110 = vadd.f32 %v101, %v107
    %v111 = vmul.f32 %v109, %v109
    %v112 = vmul.f32 %v110, %v110
    %v113 = vmul.f32 %v109, %v111
    %v114 = vmul.f32 %v110, %v112
    %v115 = vmul.f32 %v113, 0.044715
    %v116 = vmul.f32 %v114, 0.044715
    %v117 = vadd.f32 %v109, %v115
    %v118 = vadd.f32 %v110, %v116
    %v119 = vmul.f32 %v117, 0.7978846
    %v120 = vmul.f32 %v118, 0.7978846
    %v121 = vtanh.pop %v119
    %v122 = vtanh.pop %v120
    %v123 = vadd.f32 %v121, 1.0
    %v124 = vadd.f32 %v122, 1.0
    %v125 = vmul.f32 %v123, 0.5
    %v126 = vmul.f32 %v124, 0.5
    %v127 = vmul.f32 %v109, %v125
    %v128 = vmul.f32 %v110, %v126
    %v129 = vpack.c.bf16 %v128, %v127
    %v131 = vunpack.c.l.b16 %v129
    %v132 = vunpack.c.h.b16 %v129
    %v133 = vpack.c.b16 %v131, %v131
    %v134 = vpack.c.b16 %v132, %v132
    %vm137 = vcmask 519168
    %138 = vst.msk [vmem:[%s3] sm:$0xf] %vm137, %v133
    %139 = vst.msk [vmem:[%s3 + $0x4] sm:$0xf] %vm137, %v134
  $region21: #{bert_lstm_forward.28} parent=0 // pred_fallthru
    _
  // Predicated region
  $region22: #{bert_lstm_forward.28} parent=0 // pred_check
    _
  $region23: #{bert_lstm_forward.28} parent=0 // pred_check_branch
    %141 = sbr.rel (0) target = $region25
  $region24: #{bert_lstm_forward.28} parent=0 // pred_region
    _
  $region25: #{bert_lstm_forward.28} parent=0 // pred_fallthru
    _
  // Predicated region
  $region26: #{bert_lstm_forward.28} parent=0 // pred_check
    _
  $region27: #{bert_lstm_forward.28} parent=0 // pred_check_branch
    %143 = sbr.rel (0) target = $region29
  $region28: #{bert_lstm_forward.28} parent=0 // pred_region
    _
  $region29: #{bert_lstm_forward.28} parent=0 // pred_fallthru
    _

// kernel: bert_lstm_forward.38
$region0: #{bert_lstm_forward.38}
  #allocation0 [shape = 'u32[]', space=smem, size = 0x4, offset = 0x4, fixed_abs, tag = 'smem constant byte address 0x4 - core index']
  #allocation1 [shape = 'u32[144,128]{1,0:T(1,128)}', space=vmem, size = 0x12000, scoped, tag = 'internal scratch']
  #allocation2 [shape = 'f32[16,64]{1,0:T(8,128)}', space=vmem, size = 0x2000, scoped, tag = 'scratch operand']
  %s0 = inlined_call_operand.vmem [shape: bf16[16,32], index: 0, kind: input, shape index: {}]
  %s1 = inlined_call_operand.vmem [shape: bf16[32,64], index: 1, kind: input, shape index: {}]
  %s2 = inlined_call_operand.vmem [shape: f32[1,64], index: 2, kind: input, shape index: {}]
  %s3 = inlined_call_operand.vmem [shape: bf16[16,64], index: 3, kind: output, shape index: {}]
  %s4 = sld [smem:[#allocation0]]
  $region30: #{bert_lstm_forward.38} parent=0
    _
  %s6 = ssub.s32 1, %s4
  %s7 = scalar_select 0, %s6, %s4
  // Predicated region
  $region2: #{bert_lstm_forward.38} parent=0 // pred_check
    _
  $region3: #{bert_lstm_forward.38} parent=0 // pred_check_branch
    %9 = sbr.rel (0) target = $region5
  $region4: #{bert_lstm_forward.38} parent=0 // pred_region
    _
  $region5: #{bert_lstm_forward.38} parent=0 // pred_fallthru
    _
  // Predicated region
  $region6: #{bert_lstm_forward.38} parent=0 // pred_check
    _
  $region7: #{bert_lstm_forward.38} parent=0 // pred_check_branch
    %11 = sbr.rel (0) target = $region9
  $region8: #{bert_lstm_forward.38} parent=0 // pred_region
    _
  $region9: #{bert_lstm_forward.38} parent=0 // pred_fallthru
    _
  // Predicated region
  $region10: #{bert_lstm_forward.38} parent=0 // pred_check
    _
  $region11: #{bert_lstm_forward.38} parent=0 // pred_check_branch
    %13 = sbr.rel (0) target = $region13
  $region12: #{bert_lstm_forward.38} parent=0 // pred_region
    _
  $region13: #{bert_lstm_forward.38} parent=0 // pred_fallthru
    _
  %p15 = scmp.eq.s32.totalorder 0, 0
  // Predicated region
  $region14: #{bert_lstm_forward.38} parent=0 // pred_check
    %p16 = pneg %p15
  $region15: #{bert_lstm_forward.38} parent=0 // pred_check_branch
    %18 = sbr.rel (%p16) target = $region17
  $region16: #{bert_lstm_forward.38} parent=0 // pred_region
    %vm19 = vcmask 523264
    %20 = vst.msk [vmem:[#allocation2] sm:$0xff] %vm19, 0.0
    %21 = vst.msk [vmem:[#allocation2 + $0x8] sm:$0xff] %vm19, 0.0
  $region17: #{bert_lstm_forward.38} parent=0 // pred_fallthru
    _
  %v22 = vld [vmem:[#allocation2] sm:$0xff]
  %v23 = vld [vmem:[#allocation2 + $0x8] sm:$0xff]
  %v24 = vld [vmem:[%s0] sm:$0xf]
  %v25 = vld [vmem:[%s0 + $0x4] sm:$0xf]
  %v26 = vld [vmem:[%s1] sm:$0xf]
  %v27 = vld [vmem:[%s1 + $0x4] sm:$0xf]
  %v28 = vld [vmem:[%s1 + $0x8] sm:$0xf]
  %v29 = vld [vmem:[%s1 + $0xc] sm:$0xf]
  %v32 = vunpack.c.l.b16 %v24
  %v33 = vunpack.c.l.b16 %v25
  %v34 = vpack.c.b16 %v33, %v32
  %v39 = vunpack.c.l.b16 %v26
  %v40 = vunpack.c.l.b16 %v27
  %v41 = vunpack.c.l.b16 %v28
  %v42 = vunpack.c.l.b16 %v29
  %v43 = vpack.c.b16 %v40, %v39
  %v44 = vpack.c.b16 %v42, %v41
  %vm47 = vcmask 261120
  %v49 = vsel %vm47, %v34, 0
  %51 = vmatprep.subr.bf16.mxu0 0
  %52 = vmatpush1.bf16.msra.mxu0 0
  %53 = vmatprep.subr.bf16.mxu0 0
  %54 = vmatpush1.bf16.msra.mxu0 0
  %55 = vmatprep.subr.bf16.mxu0 0
  %56 = vmatpush1.bf16.msra.mxu0 0
  %57 = vmatprep.subr.bf16.mxu0 0
  %58 = vmatpush1.bf16.msra.mxu0 0
  %59 = vmatprep.subr.bf16.mxu0 0
  %60 = vmatpush1.bf16.msra.mxu0 0
  %61 = vmatprep.subr.bf16.mxu0 0
  %62 = vmatpush1.bf16.msra.mxu0 0
  %63 = vmatprep.subr.bf16.mxu0 0
  %64 = vmatpush1.bf16.msra.mxu0 %v44
  %65 = vmatprep.subr.bf16.mxu0 0
  %66 = vmatpush1.bf16.msra.mxu0 %v43
  %67 = vmatprep.subr.bf16.mxu0 0
  %68 = vmatpush2.bf16.msra.mxu0 0
  %69 = vmatprep.subr.bf16.mxu0 0
  %70 = vmatpush2.bf16.msra.mxu0 0
  %71 = vmatprep.subr.bf16.mxu0 0
  %72 = vmatpush2.bf16.msra.mxu0 0
  %73 = vmatprep.subr.bf16.mxu0 0
  %74 = vmatpush2.bf16.msra.mxu0 0
  %75 = vmatprep.subr.bf16.mxu0 0
  %76 = vmatpush2.bf16.msra.mxu0 0
  %77 = vmatprep.subr.bf16.mxu0 0
  %78 = vmatpush2.bf16.msra.mxu0 0
  %79 = vmatprep.subr.bf16.mxu0 0
  %80 = vmatpush2.bf16.msra.mxu0 0
  %81 = vmatprep.subr.bf16.mxu0 0
  %82 = vmatpush2.bf16.msra.mxu0 0
  %83 = vmatprep.mubr.bf16.mxu0 0
  %84 = vmatmul.mubr.bf16.gmra.mxu0 %v49
  %v85 = vpop.f32.mrf.mxu0
  %v86 = vadd.f32 0.0, %v85
  %v87 = vpop.f32.mrf.mxu0
  %v88 = vpop.f32.mrf.mxu0
  %v89 = vadd.f32 0.0, %v88
  %v90 = vpop.f32.mrf.mxu0
  %91 = vdwg.mxu0
  %v92 = vadd.f32 %v22, %v86
  %v93 = vadd.f32 %v23, %v89
  %vm94 = vcmask 523264
  %95 = vst.msk [vmem:[#allocation2] sm:$0xff] %vm94, %v92
  %96 = vst.msk [vmem:[#allocation2 + $0x8] sm:$0xff] %vm94, %v93
  // Predicated region
  $region18: #{bert_lstm_forward.38} parent=0 // pred_check
    %p97 = pneg %p15
  $region19: #{bert_lstm_forward.38} parent=0 // pred_check_branch
    %99 = sbr.rel (%p97) target = $region21
  $region20: #{bert_lstm_forward.38} parent=0 // pred_region
    %v100 = vld [vmem:[#allocation2] sm:$0xff]
    %v101 = vld [vmem:[#allocation2 + $0x8] sm:$0xff]
    %v102 = vld [vmem:[%s2] sm:$0x1]
    %v104 = vlaneseq
    %v105 = vshrl.u32 %v104, 7
    %v106 = vsub.s32 0, %v105
    %v107 = vrot.slane %v102, %v106
    %v109 = vadd.f32 %v100, %v107
    %v110 = vadd.f32 %v101, %v107
    %v111 = vpack.c.bf16 %v110, %v109
    %v113 = vunpack.c.l.b16 %v111
    %v114 = vunpack.c.h.b16 %v111
    %v115 = vpack.c.b16 %v113, %v113
    %v116 = vpack.c.b16 %v114, %v114
    %vm119 = vcmask 519168
    %120 = vst.msk [vmem:[%s3] sm:$0xf] %vm119, %v115
    %121 = vst.msk [vmem:[%s3 + $0x4] sm:$0xf] %vm119, %v116
  $region21: #{bert_lstm_forward.38} parent=0 // pred_fallthru
    _
  // Predicated region
  $region22: #{bert_lstm_forward.38} parent=0 // pred_check
    _
  $region23: #{bert_lstm_forward.38} parent=0 // pred_check_branch
    %123 = sbr.rel (0) target = $region25
  $region24: #{bert_lstm_forward.38} parent=0 // pred_region
    _
  $region25: #{bert_lstm_forward.38} parent=0 // pred_fallthru
    _
  // Predicated region
  $region26: #{bert_lstm_forward.38} parent=0 // pred_check
    _
  $region27: #{bert_lstm_forward.38} parent=0 // pred_check_branch
    %125 = sbr.rel (0) target = $region29
  $region28: #{bert_lstm_forward.38} parent=0 // pred_region
    _
  $region29: #{bert_lstm_forward.38} parent=0 // pred_fallthru
    _

// kernel: bert_lstm_forward.29
$region0: #{bert_lstm_forward.29}
  #allocation0 [shape = 'u32[]', space=smem, size = 0x4, offset = 0x4, fixed_abs, tag = 'smem constant byte address 0x4 - core index']
  #allocation1 [shape = 'u32[144,128]{1,0:T(1,128)}', space=vmem, size = 0x12000, scoped, tag = 'internal scratch']
  #allocation2 [shape = 'f32[16,32]{1,0:T(8,128)}', space=vmem, size = 0x2000, scoped, tag = 'scratch operand']
  %s0 = inlined_call_operand.vmem [shape: bf16[16,64], index: 0, kind: input, shape index: {}]
  %s1 = inlined_call_operand.vmem [shape: bf16[64,32], index: 1, kind: input, shape index: {}]
  %s2 = inlined_call_operand.vmem [shape: f32[1,32], index: 2, kind: input, shape index: {}]
  %s3 = inlined_call_operand.vmem [shape: bf16[16,32], index: 3, kind: output, shape index: {}]
  %s4 = sld [smem:[#allocation0]]
  $region30: #{bert_lstm_forward.29} parent=0
    _
  %s6 = ssub.s32 1, %s4
  %s7 = scalar_select 0, %s6, %s4
  // Predicated region
  $region2: #{bert_lstm_forward.29} parent=0 // pred_check
    _
  $region3: #{bert_lstm_forward.29} parent=0 // pred_check_branch
    %9 = sbr.rel (0) target = $region5
  $region4: #{bert_lstm_forward.29} parent=0 // pred_region
    _
  $region5: #{bert_lstm_forward.29} parent=0 // pred_fallthru
    _
  // Predicated region
  $region6: #{bert_lstm_forward.29} parent=0 // pred_check
    _
  $region7: #{bert_lstm_forward.29} parent=0 // pred_check_branch
    %11 = sbr.rel (0) target = $region9
  $region8: #{bert_lstm_forward.29} parent=0 // pred_region
    _
  $region9: #{bert_lstm_forward.29} parent=0 // pred_fallthru
    _
  // Predicated region
  $region10: #{bert_lstm_forward.29} parent=0 // pred_check
    _
  $region11: #{bert_lstm_forward.29} parent=0 // pred_check_branch
    %13 = sbr.rel (0) target = $region13
  $region12: #{bert_lstm_forward.29} parent=0 // pred_region
    _
  $region13: #{bert_lstm_forward.29} parent=0 // pred_fallthru
    _
  %p15 = scmp.eq.s32.totalorder 0, 0
  // Predicated region
  $region14: #{bert_lstm_forward.29} parent=0 // pred_check
    %p16 = pneg %p15
  $region15: #{bert_lstm_forward.29} parent=0 // pred_check_branch
    %18 = sbr.rel (%p16) target = $region17
  $region16: #{bert_lstm_forward.29} parent=0 // pred_region
    %vm19 = vcmask 261120
    %20 = vst.msk [vmem:[#allocation2] sm:$0xff] %vm19, 0.0
    %21 = vst.msk [vmem:[#allocation2 + $0x8] sm:$0xff] %vm19, 0.0
  $region17: #{bert_lstm_forward.29} parent=0 // pred_fallthru
    _
  %v22 = vld [vmem:[#allocation2] sm:$0xff]
  %v23 = vld [vmem:[#allocation2 + $0x8] sm:$0xff]
  %v24 = vld [vmem:[%s0] sm:$0xf]
  %v25 = vld [vmem:[%s0 + $0x4] sm:$0xf]
  %v26 = vld [vmem:[%s1] sm:$0xf]
  %v27 = vld [vmem:[%s1 + $0x4] sm:$0xf]
  %v28 = vld [vmem:[%s1 + $0x8] sm:$0xf]
  %v29 = vld [vmem:[%s1 + $0xc] sm:$0xf]
  %v30 = vld [vmem:[%s1 + $0x10] sm:$0xf]
  %v31 = vld [vmem:[%s1 + $0x14] sm:$0xf]
  %v32 = vld [vmem:[%s1 + $0x18] sm:$0xf]
  %v33 = vld [vmem:[%s1 + $0x1c] sm:$0xf]
  %v36 = vunpack.c.l.b16 %v24
  %v37 = vunpack.c.l.b16 %v25
  %v38 = vpack.c.b16 %v37, %v36
  %v47 = vunpack.c.l.b16 %v26
  %v48 = vunpack.c.l.b16 %v27
  %v49 = vunpack.c.l.b16 %v28
  %v50 = vunpack.c.l.b16 %v29
  %v51 = vunpack.c.l.b16 %v30
  %v52 = vunpack.c.l.b16 %v31
  %v53 = vunpack.c.l.b16 %v32
  %v54 = vunpack.c.l.b16 %v33
  %v55 = vpack.c.b16 %v48, %v47
  %v56 = vpack.c.b16 %v50, %v49
  %v57 = vpack.c.b16 %v52, %v51
  %v58 = vpack.c.b16 %v54, %v53
  %vm63 = vcmask 523264
  %v65 = vsel %vm63, %v38, 0
  %67 = vmatprep.subr.bf16.mxu0 0
  %68 = vmatpush1.bf16.msra.mxu0 0
  %69 = vmatprep.subr.bf16.mxu0 0
  %70 = vmatpush1.bf16.msra.mxu0 0
  %71 = vmatprep.subr.bf16.mxu0 0
  %72 = vmatpush1.bf16.msra.mxu0 0
  %73 = vmatprep.subr.bf16.mxu0 0
  %74 = vmatpush1.bf16.msra.mxu0 0
  %75 = vmatprep.subr.bf16.mxu0 0
  %76 = vmatpush1.bf16.msra.mxu0 %v58
  %77 = vmatprep.subr.bf16.mxu0 0
  %78 = vmatpush1.bf16.msra.mxu0 %v57
  %79 = vmatprep.subr.bf16.mxu0 0
  %80 = vmatpush1.bf16.msra.mxu0 %v56
  %81 = vmatprep.subr.bf16.mxu0 0
  %82 = vmatpush1.bf16.msra.mxu0 %v55
  %83 = vmatprep.subr.bf16.mxu0 0
  %84 = vmatpush2.bf16.msra.mxu0 0
  %85 = vmatprep.subr.bf16.mxu0 0
  %86 = vmatpush2.bf16.msra.mxu0 0
  %87 = vmatprep.subr.bf16.mxu0 0
  %88 = vmatpush2.bf16.msra.mxu0 0
  %89 = vmatprep.subr.bf16.mxu0 0
  %90 = vmatpush2.bf16.msra.mxu0 0
  %91 = vmatprep.subr.bf16.mxu0 0
  %92 = vmatpush2.bf16.msra.mxu0 0
  %93 = vmatprep.subr.bf16.mxu0 0
  %94 = vmatpush2.bf16.msra.mxu0 0
  %95 = vmatprep.subr.bf16.mxu0 0
  %96 = vmatpush2.bf16.msra.mxu0 0
  %97 = vmatprep.subr.bf16.mxu0 0
  %98 = vmatpush2.bf16.msra.mxu0 0
  %99 = vmatprep.mubr.bf16.mxu0 0
  %100 = vmatmul.mubr.bf16.gmra.mxu0 %v65
  %v101 = vpop.f32.mrf.mxu0
  %v102 = vadd.f32 0.0, %v101
  %v103 = vpop.f32.mrf.mxu0
  %v104 = vpop.f32.mrf.mxu0
  %v105 = vadd.f32 0.0, %v104
  %v106 = vpop.f32.mrf.mxu0
  %107 = vdwg.mxu0
  %v108 = vadd.f32 %v22, %v102
  %v109 = vadd.f32 %v23, %v105
  %vm110 = vcmask 261120
  %111 = vst.msk [vmem:[#allocation2] sm:$0xff] %vm110, %v108
  %112 = vst.msk [vmem:[#allocation2 + $0x8] sm:$0xff] %vm110, %v109
  // Predicated region
  $region18: #{bert_lstm_forward.29} parent=0 // pred_check
    %p113 = pneg %p15
  $region19: #{bert_lstm_forward.29} parent=0 // pred_check_branch
    %115 = sbr.rel (%p113) target = $region21
  $region20: #{bert_lstm_forward.29} parent=0 // pred_region
    %v116 = vld [vmem:[#allocation2] sm:$0xff]
    %v117 = vld [vmem:[#allocation2 + $0x8] sm:$0xff]
    %v118 = vld [vmem:[%s2] sm:$0x1]
    %v120 = vlaneseq
    %v121 = vshrl.u32 %v120, 7
    %v122 = vsub.s32 0, %v121
    %v123 = vrot.slane %v118, %v122
    %v125 = vadd.f32 %v116, %v123
    %v126 = vadd.f32 %v117, %v123
    %v127 = vpack.c.bf16 %v126, %v125
    %v129 = vunpack.c.l.b16 %v127
    %v130 = vunpack.c.h.b16 %v127
    %v131 = vpack.c.b16 %v129, %v129
    %v132 = vpack.c.b16 %v130, %v130
    %vm135 = vcmask 257024
    %136 = vst.msk [vmem:[%s3] sm:$0xf] %vm135, %v131
    %137 = vst.msk [vmem:[%s3 + $0x4] sm:$0xf] %vm135, %v132
  $region21: #{bert_lstm_forward.29} parent=0 // pred_fallthru
    _
  // Predicated region
  $region22: #{bert_lstm_forward.29} parent=0 // pred_check
    _
  $region23: #{bert_lstm_forward.29} parent=0 // pred_check_branch
    %139 = sbr.rel (0) target = $region25
  $region24: #{bert_lstm_forward.29} parent=0 // pred_region
    _
  $region25: #{bert_lstm_forward.29} parent=0 // pred_fallthru
    _
  // Predicated region
  $region26: #{bert_lstm_forward.29} parent=0 // pred_check
    _
  $region27: #{bert_lstm_forward.29} parent=0 // pred_check_branch
    %141 = sbr.rel (0) target = $region29
  $region28: #{bert_lstm_forward.29} parent=0 // pred_region
    _
  $region29: #{bert_lstm_forward.29} parent=0 // pred_fallthru
    _

// kernel: bert_lstm_forward.44
$region0: #{bert_lstm_forward.44}
  #allocation0 [shape = 'u32[]', space=smem, size = 0x4, offset = 0x4, fixed_abs, tag = 'smem constant byte address 0x4 - core index']
  #allocation1 [shape = 'u32[144,128]{1,0:T(1,128)}', space=vmem, size = 0x12000, scoped, tag = 'internal scratch']
  #allocation2 [shape = 'f32[16,128]{1,0:T(8,128)}', space=vmem, size = 0x2000, scoped, tag = 'scratch operand']
  %s0 = inlined_call_operand.vmem [shape: bf16[16,16], index: 0, kind: input, shape index: {}]
  %s1 = inlined_call_operand.vmem [shape: bf16[16,16], index: 1, kind: input, shape index: {}]
  %s2 = inlined_call_operand.vmem [shape: bf16[16,128], index: 2, kind: input, shape index: {}]
  %s3 = inlined_call_operand.vmem [shape: bf16[16,128], index: 3, kind: input, shape index: {}]
  %s4 = inlined_call_operand.vmem [shape: f32[1,128], index: 4, kind: input, shape index: {}]
  %s5 = inlined_call_operand.vmem [shape: f32[16,128], index: 5, kind: output, shape index: {}]
  %s6 = sld [smem:[#allocation0]]
  $region38: #{bert_lstm_forward.44} parent=0
    _
  %s8 = ssub.s32 1, %s6
  %s9 = scalar_select 0, %s8, %s6
  // Predicated region
  $region2: #{bert_lstm_forward.44} parent=0 // pred_check
    _
  $region3: #{bert_lstm_forward.44} parent=0 // pred_check_branch
    %11 = sbr.rel (0) target = $region5
  $region4: #{bert_lstm_forward.44} parent=0 // pred_region
    _
  $region5: #{bert_lstm_forward.44} parent=0 // pred_fallthru
    _
  // Predicated region
  $region6: #{bert_lstm_forward.44} parent=0 // pred_check
    _
  $region7: #{bert_lstm_forward.44} parent=0 // pred_check_branch
    %13 = sbr.rel (0) target = $region9
  $region8: #{bert_lstm_forward.44} parent=0 // pred_region
    _
  $region9: #{bert_lstm_forward.44} parent=0 // pred_fallthru
    _
  // Predicated region
  $region10: #{bert_lstm_forward.44} parent=0 // pred_check
    _
  $region11: #{bert_lstm_forward.44} parent=0 // pred_check_branch
    %15 = sbr.rel (0) target = $region13
  $region12: #{bert_lstm_forward.44} parent=0 // pred_region
    _
  $region13: #{bert_lstm_forward.44} parent=0 // pred_fallthru
    _
  // Predicated region
  $region14: #{bert_lstm_forward.44} parent=0 // pred_check
    _
  $region15: #{bert_lstm_forward.44} parent=0 // pred_check_branch
    %17 = sbr.rel (0) target = $region17
  $region16: #{bert_lstm_forward.44} parent=0 // pred_region
    _
  $region17: #{bert_lstm_forward.44} parent=0 // pred_fallthru
    _
  // Predicated region
  $region18: #{bert_lstm_forward.44} parent=0 // pred_check
    _
  $region19: #{bert_lstm_forward.44} parent=0 // pred_check_branch
    %19 = sbr.rel (0) target = $region21
  $region20: #{bert_lstm_forward.44} parent=0 // pred_region
    _
  $region21: #{bert_lstm_forward.44} parent=0 // pred_fallthru
    _
  %p21 = scmp.eq.s32.totalorder 0, 0
  // Predicated region
  $region22: #{bert_lstm_forward.44} parent=0 // pred_check
    %p22 = pneg %p21
  $region23: #{bert_lstm_forward.44} parent=0 // pred_check_branch
    %24 = sbr.rel (%p22) target = $region25
  $region24: #{bert_lstm_forward.44} parent=0 // pred_region
    %25 = vst [vmem:[#allocation2] sm:$0xff] 0.0
    %26 = vst [vmem:[#allocation2 + $0x8] sm:$0xff] 0.0
  $region25: #{bert_lstm_forward.44} parent=0 // pred_fallthru
    _
  %v27 = vld [vmem:[#allocation2] sm:$0xff]
  %v28 = vld [vmem:[#allocation2 + $0x8] sm:$0xff]
  %v29 = vld [vmem:[%s0] sm:$0xf]
  %v30 = vld [vmem:[%s0 + $0x4] sm:$0xf]
  %v31 = vld [vmem:[%s2] sm:$0xf]
  %v32 = vld [vmem:[%s2 + $0x4] sm:$0xf]
  %v33 = vld [vmem:[%s1] sm:$0xf]
  %v34 = vld [vmem:[%s1 + $0x4] sm:$0xf]
  %v35 = vld [vmem:[%s3] sm:$0xf]
  %v36 = vld [vmem:[%s3 + $0x4] sm:$0xf]
  %v39 = vunpack.c.l.b16 %v33
  %v40 = vunpack.c.l.b16 %v34
  %v41 = vpack.c.b16 %v40, %v39
  %v44 = vunpack.c.l.b16 %v35
  %v45 = vunpack.c.l.b16 %v36
  %v46 = vpack.c.b16 %v45, %v44
  %vm48 = vcmask 130048
  %v50 = vsel %vm48, %v41, 0
  %52 = vmatprep.subr.bf16.mxu0 0
  %53 = vmatpush1.bf16.msra.mxu0 0
  %54 = vmatprep.subr.bf16.mxu0 0
  %55 = vmatpush1.bf16.msra.mxu0 0
  %56 = vmatprep.subr.bf16.mxu0 0
  %57 = vmatpush1.bf16.msra.mxu0 0
  %58 = vmatprep.subr.bf16.mxu0 0
  %59 = vmatpush1.bf16.msra.mxu0 0
  %60 = vmatprep.subr.bf16.mxu0 0
  %61 = vmatpush1.bf16.msra.mxu0 0
  %62 = vmatprep.subr.bf16.mxu0 0
  %63 = vmatpush1.bf16.msra.mxu0 0
  %64 = vmatprep.subr.bf16.mxu0 0
  %65 = vmatpush1.bf16.msra.mxu0 0
  %66 = vmatprep.subr.bf16.mxu0 0
  %67 = vmatpush1.bf16.msra.mxu0 %v46
  %68 = vmatprep.subr.bf16.mxu0 0
  %69 = vmatpush2.bf16.msra.mxu0 0
  %70 = vmatprep.subr.bf16.mxu0 0
  %71 = vmatpush2.bf16.msra.mxu0 0
  %72 = vmatprep.subr.bf16.mxu0 0
  %73 = vmatpush2.bf16.msra.mxu0 0
  %74 = vmatprep.subr.bf16.mxu0 0
  %75 = vmatpush2.bf16.msra.mxu0 0
  %76 = vmatprep.subr.bf16.mxu0 0
  %77 = vmatpush2.bf16.msra.mxu0 0
  %78 = vmatprep.subr.bf16.mxu0 0
  %79 = vmatpush2.bf16.msra.mxu0 0
  %80 = vmatprep.subr.bf16.mxu0 0
  %81 = vmatpush2.bf16.msra.mxu0 0
  %82 = vmatprep.subr.bf16.mxu0 0
  %83 = vmatpush2.bf16.msra.mxu0 0
  %84 = vmatprep.mubr.bf16.mxu0 0
  %85 = vmatmul.mubr.bf16.gmra.mxu0 %v50
  %v86 = vpop.f32.mrf.mxu0
  %v87 = vadd.f32 0.0, %v86
  %v88 = vpop.f32.mrf.mxu0
  %v89 = vpop.f32.mrf.mxu0
  %v90 = vadd.f32 0.0, %v89
  %v91 = vpop.f32.mrf.mxu0
  %92 = vdwg.mxu0
  %v95 = vunpack.c.l.b16 %v29
  %v96 = vunpack.c.l.b16 %v30
  %v97 = vpack.c.b16 %v96, %v95
  %v100 = vunpack.c.l.b16 %v31
  %v101 = vunpack.c.l.b16 %v32
  %v102 = vpack.c.b16 %v101, %v100
  %v105 = vsel %vm48, %v97, 0
  %107 = vmatprep.subr.bf16.mxu0 0
  %108 = vmatpush1.bf16.msra.mxu0 0
  %109 = vmatprep.subr.bf16.mxu0 0
  %110 = vmatpush1.bf16.msra.mxu0 0
  %111 = vmatprep.subr.bf16.mxu0 0
  %112 = vmatpush1.bf16.msra.mxu0 0
  %113 = vmatprep.subr.bf16.mxu0 0
  %114 = vmatpush1.bf16.msra.mxu0 0
  %115 = vmatprep.subr.bf16.mxu0 0
  %116 = vmatpush1.bf16.msra.mxu0 0
  %117 = vmatprep.subr.bf16.mxu0 0
  %118 = vmatpush1.bf16.msra.mxu0 0
  %119 = vmatprep.subr.bf16.mxu0 0
  %120 = vmatpush1.bf16.msra.mxu0 0
  %121 = vmatprep.subr.bf16.mxu0 0
  %122 = vmatpush1.bf16.msra.mxu0 %v102
  %123 = vmatprep.subr.bf16.mxu0 0
  %124 = vmatpush2.bf16.msra.mxu0 0
  %125 = vmatprep.subr.bf16.mxu0 0
  %126 = vmatpush2.bf16.msra.mxu0 0
  %127 = vmatprep.subr.bf16.mxu0 0
  %128 = vmatpush2.bf16.msra.mxu0 0
  %129 = vmatprep.subr.bf16.mxu0 0
  %130 = vmatpush2.bf16.msra.mxu0 0
  %131 = vmatprep.subr.bf16.mxu0 0
  %132 = vmatpush2.bf16.msra.mxu0 0
  %133 = vmatprep.subr.bf16.mxu0 0
  %134 = vmatpush2.bf16.msra.mxu0 0
  %135 = vmatprep.subr.bf16.mxu0 0
  %136 = vmatpush2.bf16.msra.mxu0 0
  %137 = vmatprep.subr.bf16.mxu0 0
  %138 = vmatpush2.bf16.msra.mxu0 0
  %139 = vmatprep.mubr.bf16.mxu0 0
  %140 = vmatmul.mubr.bf16.gmra.mxu0 %v105
  %v141 = vpop.f32.mrf.mxu0
  %v142 = vadd.f32 %v87, %v141
  %v143 = vpop.f32.mrf.mxu0
  %v144 = vpop.f32.mrf.mxu0
  %v145 = vadd.f32 %v90, %v144
  %v146 = vpop.f32.mrf.mxu0
  %147 = vdwg.mxu0
  %v148 = vadd.f32 %v27, %v142
  %v149 = vadd.f32 %v28, %v145
  %150 = vst [vmem:[#allocation2] sm:$0xff] %v148
  %151 = vst [vmem:[#allocation2 + $0x8] sm:$0xff] %v149
  // Predicated region
  $region26: #{bert_lstm_forward.44} parent=0 // pred_check
    %p152 = pneg %p21
  $region27: #{bert_lstm_forward.44} parent=0 // pred_check_branch
    %154 = sbr.rel (%p152) target = $region29
  $region28: #{bert_lstm_forward.44} parent=0 // pred_region
    %v155 = vld [vmem:[#allocation2] sm:$0xff]
    %v156 = vld [vmem:[#allocation2 + $0x8] sm:$0xff]
    %v157 = vld [vmem:[%s4] sm:$0x1]
    %v159 = vlaneseq
    %v160 = vshrl.u32 %v159, 7
    %v161 = vsub.s32 0, %v160
    %v162 = vrot.slane %v157, %v161
    %v164 = vadd.f32 %v155, %v162
    %v165 = vadd.f32 %v156, %v162
    %166 = vst [vmem:[%s5] sm:$0xff] %v164
    %167 = vst [vmem:[%s5 + $0x8] sm:$0xff] %v165
  $region29: #{bert_lstm_forward.44} parent=0 // pred_fallthru
    _
  // Predicated region
  $region30: #{bert_lstm_forward.44} parent=0 // pred_check
    _
  $region31: #{bert_lstm_forward.44} parent=0 // pred_check_branch
    %169 = sbr.rel (0) target = $region33
  $region32: #{bert_lstm_forward.44} parent=0 // pred_region
    _
  $region33: #{bert_lstm_forward.44} parent=0 // pred_fallthru
    _
  // Predicated region
  $region34: #{bert_lstm_forward.44} parent=0 // pred_check
    _
  $region35: #{bert_lstm_forward.44} parent=0 // pred_check_branch
    %171 = sbr.rel (0) target = $region37
  $region36: #{bert_lstm_forward.44} parent=0 // pred_region
    _
  $region37: #{bert_lstm_forward.44} parent=0 // pred_fallthru
    _

// kernel: bert_lstm_forward.42
$region0: #{bert_lstm_forward.42}
  #allocation0 [shape = 'u32[]', space=smem, size = 0x4, offset = 0x4, fixed_abs, tag = 'smem constant byte address 0x4 - core index']
  #allocation1 [shape = 'u32[144,128]{1,0:T(1,128)}', space=vmem, size = 0x12000, scoped, tag = 'internal scratch']
  #allocation2 [shape = 'f32[16,64]{1,0:T(8,128)}', space=vmem, size = 0x2000, scoped, tag = 'scratch operand']
  %s0 = inlined_call_operand.vmem [shape: bf16[16,16], index: 0, kind: input, shape index: {}]
  %s1 = inlined_call_operand.vmem [shape: bf16[16,16], index: 1, kind: input, shape index: {}]
  %s2 = inlined_call_operand.vmem [shape: bf16[16,64], index: 2, kind: input, shape index: {}]
  %s3 = inlined_call_operand.vmem [shape: bf16[16,64], index: 3, kind: input, shape index: {}]
  %s4 = inlined_call_operand.vmem [shape: f32[1,64], index: 4, kind: input, shape index: {}]
  %s5 = inlined_call_operand.vmem [shape: bf16[16,64], index: 5, kind: output, shape index: {}]
  %s6 = sld [smem:[#allocation0]]
  $region38: #{bert_lstm_forward.42} parent=0
    _
  %s8 = ssub.s32 1, %s6
  %s9 = scalar_select 0, %s8, %s6
  // Predicated region
  $region2: #{bert_lstm_forward.42} parent=0 // pred_check
    _
  $region3: #{bert_lstm_forward.42} parent=0 // pred_check_branch
    %11 = sbr.rel (0) target = $region5
  $region4: #{bert_lstm_forward.42} parent=0 // pred_region
    _
  $region5: #{bert_lstm_forward.42} parent=0 // pred_fallthru
    _
  // Predicated region
  $region6: #{bert_lstm_forward.42} parent=0 // pred_check
    _
  $region7: #{bert_lstm_forward.42} parent=0 // pred_check_branch
    %13 = sbr.rel (0) target = $region9
  $region8: #{bert_lstm_forward.42} parent=0 // pred_region
    _
  $region9: #{bert_lstm_forward.42} parent=0 // pred_fallthru
    _
  // Predicated region
  $region10: #{bert_lstm_forward.42} parent=0 // pred_check
    _
  $region11: #{bert_lstm_forward.42} parent=0 // pred_check_branch
    %15 = sbr.rel (0) target = $region13
  $region12: #{bert_lstm_forward.42} parent=0 // pred_region
    _
  $region13: #{bert_lstm_forward.42} parent=0 // pred_fallthru
    _
  // Predicated region
  $region14: #{bert_lstm_forward.42} parent=0 // pred_check
    _
  $region15: #{bert_lstm_forward.42} parent=0 // pred_check_branch
    %17 = sbr.rel (0) target = $region17
  $region16: #{bert_lstm_forward.42} parent=0 // pred_region
    _
  $region17: #{bert_lstm_forward.42} parent=0 // pred_fallthru
    _
  // Predicated region
  $region18: #{bert_lstm_forward.42} parent=0 // pred_check
    _
  $region19: #{bert_lstm_forward.42} parent=0 // pred_check_branch
    %19 = sbr.rel (0) target = $region21
  $region20: #{bert_lstm_forward.42} parent=0 // pred_region
    _
  $region21: #{bert_lstm_forward.42} parent=0 // pred_fallthru
    _
  %p21 = scmp.eq.s32.totalorder 0, 0
  // Predicated region
  $region22: #{bert_lstm_forward.42} parent=0 // pred_check
    %p22 = pneg %p21
  $region23: #{bert_lstm_forward.42} parent=0 // pred_check_branch
    %24 = sbr.rel (%p22) target = $region25
  $region24: #{bert_lstm_forward.42} parent=0 // pred_region
    %vm25 = vcmask 523264
    %26 = vst.msk [vmem:[#allocation2] sm:$0xff] %vm25, 0.0
    %27 = vst.msk [vmem:[#allocation2 + $0x8] sm:$0xff] %vm25, 0.0
  $region25: #{bert_lstm_forward.42} parent=0 // pred_fallthru
    _
  %v28 = vld [vmem:[#allocation2] sm:$0xff]
  %v29 = vld [vmem:[#allocation2 + $0x8] sm:$0xff]
  %v30 = vld [vmem:[%s0] sm:$0xf]
  %v31 = vld [vmem:[%s0 + $0x4] sm:$0xf]
  %v32 = vld [vmem:[%s2] sm:$0xf]
  %v33 = vld [vmem:[%s2 + $0x4] sm:$0xf]
  %v34 = vld [vmem:[%s1] sm:$0xf]
  %v35 = vld [vmem:[%s1 + $0x4] sm:$0xf]
  %v36 = vld [vmem:[%s3] sm:$0xf]
  %v37 = vld [vmem:[%s3 + $0x4] sm:$0xf]
  %v40 = vunpack.c.l.b16 %v34
  %v41 = vunpack.c.l.b16 %v35
  %v42 = vpack.c.b16 %v41, %v40
  %v45 = vunpack.c.l.b16 %v36
  %v46 = vunpack.c.l.b16 %v37
  %v47 = vpack.c.b16 %v46, %v45
  %vm49 = vcmask 130048
  %v51 = vsel %vm49, %v42, 0
  %53 = vmatprep.subr.bf16.mxu0 0
  %54 = vmatpush1.bf16.msra.mxu0 0
  %55 = vmatprep.subr.bf16.mxu0 0
  %56 = vmatpush1.bf16.msra.mxu0 0
  %57 = vmatprep.subr.bf16.mxu0 0
  %58 = vmatpush1.bf16.msra.mxu0 0
  %59 = vmatprep.subr.bf16.mxu0 0
  %60 = vmatpush1.bf16.msra.mxu0 0
  %61 = vmatprep.subr.bf16.mxu0 0
  %62 = vmatpush1.bf16.msra.mxu0 0
  %63 = vmatprep.subr.bf16.mxu0 0
  %64 = vmatpush1.bf16.msra.mxu0 0
  %65 = vmatprep.subr.bf16.mxu0 0
  %66 = vmatpush1.bf16.msra.mxu0 0
  %67 = vmatprep.subr.bf16.mxu0 0
  %68 = vmatpush1.bf16.msra.mxu0 %v47
  %69 = vmatprep.subr.bf16.mxu0 0
  %70 = vmatpush2.bf16.msra.mxu0 0
  %71 = vmatprep.subr.bf16.mxu0 0
  %72 = vmatpush2.bf16.msra.mxu0 0
  %73 = vmatprep.subr.bf16.mxu0 0
  %74 = vmatpush2.bf16.msra.mxu0 0
  %75 = vmatprep.subr.bf16.mxu0 0
  %76 = vmatpush2.bf16.msra.mxu0 0
  %77 = vmatprep.subr.bf16.mxu0 0
  %78 = vmatpush2.bf16.msra.mxu0 0
  %79 = vmatprep.subr.bf16.mxu0 0
  %80 = vmatpush2.bf16.msra.mxu0 0
  %81 = vmatprep.subr.bf16.mxu0 0
  %82 = vmatpush2.bf16.msra.mxu0 0
  %83 = vmatprep.subr.bf16.mxu0 0
  %84 = vmatpush2.bf16.msra.mxu0 0
  %85 = vmatprep.mubr.bf16.mxu0 0
  %86 = vmatmul.mubr.bf16.gmra.mxu0 %v51
  %v87 = vpop.f32.mrf.mxu0
  %v88 = vadd.f32 0.0, %v87
  %v89 = vpop.f32.mrf.mxu0
  %v90 = vpop.f32.mrf.mxu0
  %v91 = vadd.f32 0.0, %v90
  %v92 = vpop.f32.mrf.mxu0
  %93 = vdwg.mxu0
  %v96 = vunpack.c.l.b16 %v30
  %v97 = vunpack.c.l.b16 %v31
  %v98 = vpack.c.b16 %v97, %v96
  %v101 = vunpack.c.l.b16 %v32
  %v102 = vunpack.c.l.b16 %v33
  %v103 = vpack.c.b16 %v102, %v101
  %v106 = vsel %vm49, %v98, 0
  %108 = vmatprep.subr.bf16.mxu0 0
  %109 = vmatpush1.bf16.msra.mxu0 0
  %110 = vmatprep.subr.bf16.mxu0 0
  %111 = vmatpush1.bf16.msra.mxu0 0
  %112 = vmatprep.subr.bf16.mxu0 0
  %113 = vmatpush1.bf16.msra.mxu0 0
  %114 = vmatprep.subr.bf16.mxu0 0
  %115 = vmatpush1.bf16.msra.mxu0 0
  %116 = vmatprep.subr.bf16.mxu0 0
  %117 = vmatpush1.bf16.msra.mxu0 0
  %118 = vmatprep.subr.bf16.mxu0 0
  %119 = vmatpush1.bf16.msra.mxu0 0
  %120 = vmatprep.subr.bf16.mxu0 0
  %121 = vmatpush1.bf16.msra.mxu0 0
  %122 = vmatprep.subr.bf16.mxu0 0
  %123 = vmatpush1.bf16.msra.mxu0 %v103
  %124 = vmatprep.subr.bf16.mxu0 0
  %125 = vmatpush2.bf16.msra.mxu0 0
  %126 = vmatprep.subr.bf16.mxu0 0
  %127 = vmatpush2.bf16.msra.mxu0 0
  %128 = vmatprep.subr.bf16.mxu0 0
  %129 = vmatpush2.bf16.msra.mxu0 0
  %130 = vmatprep.subr.bf16.mxu0 0
  %131 = vmatpush2.bf16.msra.mxu0 0
  %132 = vmatprep.subr.bf16.mxu0 0
  %133 = vmatpush2.bf16.msra.mxu0 0
  %134 = vmatprep.subr.bf16.mxu0 0
  %135 = vmatpush2.bf16.msra.mxu0 0
  %136 = vmatprep.subr.bf16.mxu0 0
  %137 = vmatpush2.bf16.msra.mxu0 0
  %138 = vmatprep.subr.bf16.mxu0 0
  %139 = vmatpush2.bf16.msra.mxu0 0
  %140 = vmatprep.mubr.bf16.mxu0 0
  %141 = vmatmul.mubr.bf16.gmra.mxu0 %v106
  %v142 = vpop.f32.mrf.mxu0
  %v143 = vadd.f32 %v88, %v142
  %v144 = vpop.f32.mrf.mxu0
  %v145 = vpop.f32.mrf.mxu0
  %v146 = vadd.f32 %v91, %v145
  %v147 = vpop.f32.mrf.mxu0
  %148 = vdwg.mxu0
  %v149 = vadd.f32 %v28, %v143
  %v150 = vadd.f32 %v29, %v146
  %vm151 = vcmask 523264
  %152 = vst.msk [vmem:[#allocation2] sm:$0xff] %vm151, %v149
  %153 = vst.msk [vmem:[#allocation2 + $0x8] sm:$0xff] %vm151, %v150
  // Predicated region
  $region26: #{bert_lstm_forward.42} parent=0 // pred_check
    %p154 = pneg %p21
  $region27: #{bert_lstm_forward.42} parent=0 // pred_check_branch
    %156 = sbr.rel (%p154) target = $region29
  $region28: #{bert_lstm_forward.42} parent=0 // pred_region
    %v157 = vld [vmem:[#allocation2] sm:$0xff]
    %v158 = vld [vmem:[#allocation2 + $0x8] sm:$0xff]
    %v159 = vld [vmem:[%s4] sm:$0x1]
    %v161 = vlaneseq
    %v162 = vshrl.u32 %v161, 7
    %v163 = vsub.s32 0, %v162
    %v164 = vrot.slane %v159, %v163
    %v166 = vadd.f32 %v157, %v164
    %v167 = vadd.f32 %v158, %v164
    %v168 = vpack.c.bf16 %v167, %v166
    %v170 = vunpack.c.l.b16 %v168
    %v171 = vunpack.c.h.b16 %v168
    %v172 = vpack.c.b16 %v170, %v170
    %v173 = vpack.c.b16 %v171, %v171
    %vm176 = vcmask 519168
    %177 = vst.msk [vmem:[%s5] sm:$0xf] %vm176, %v172
    %178 = vst.msk [vmem:[%s5 + $0x4] sm:$0xf] %vm176, %v173
  $region29: #{bert_lstm_forward.42} parent=0 // pred_fallthru
    _
  // Predicated region
  $region30: #{bert_lstm_forward.42} parent=0 // pred_check
    _
  $region31: #{bert_lstm_forward.42} parent=0 // pred_check_branch
    %180 = sbr.rel (0) target = $region33
  $region32: #{bert_lstm_forward.42} parent=0 // pred_region
    _
  $region33: #{bert_lstm_forward.42} parent=0 // pred_fallthru
    _
  // Predicated region
  $region34: #{bert_lstm_forward.42} parent=0 // pred_check
    _
  $region35: #{bert_lstm_forward.42} parent=0 // pred_check_branch
    %182 = sbr.rel (0) target = $region37
  $region36: #{bert_lstm_forward.42} parent=0 // pred_region
    _
  $region37: #{bert_lstm_forward.42} parent=0 // pred_fallthru
    _

// kernel: bert_lstm_forward.45
$region0: #{bert_lstm_forward.45}
  #allocation0 [shape = 'u32[]', space=smem, size = 0x4, offset = 0x4, fixed_abs, tag = 'smem constant byte address 0x4 - core index']
  #allocation1 [shape = 'u32[144,128]{1,0:T(1,128)}', space=vmem, size = 0x12000, scoped, tag = 'internal scratch']
  %s0 = inlined_call_operand.vmem [shape: f32[16,128], index: 0, kind: input, shape index: {}]
  %s1 = inlined_call_operand.vmem [shape: s32[16,1], index: 1, kind: input, shape index: {}]
  %s2 = inlined_call_operand.vmem [shape: f32[16,1], index: 2, kind: input, shape index: {}]
  %s3 = inlined_call_operand.vmem [shape: f32[1,128], index: 3, kind: output, shape index: {}]
  %s4 = sld [smem:[#allocation0]]
  $region26: #{bert_lstm_forward.45} parent=0
    _
  %s6 = ssub.s32 1, %s4
  %s7 = scalar_select 0, %s6, %s4
  // Predicated region
  $region2: #{bert_lstm_forward.45} parent=0 // pred_check
    _
  $region3: #{bert_lstm_forward.45} parent=0 // pred_check_branch
    %9 = sbr.rel (0) target = $region5
  $region4: #{bert_lstm_forward.45} parent=0 // pred_region
    _
  $region5: #{bert_lstm_forward.45} parent=0 // pred_fallthru
    _
  // Predicated region
  $region6: #{bert_lstm_forward.45} parent=0 // pred_check
    _
  $region7: #{bert_lstm_forward.45} parent=0 // pred_check_branch
    %11 = sbr.rel (0) target = $region9
  $region8: #{bert_lstm_forward.45} parent=0 // pred_region
    _
  $region9: #{bert_lstm_forward.45} parent=0 // pred_fallthru
    _
  // Predicated region
  $region10: #{bert_lstm_forward.45} parent=0 // pred_check
    _
  $region11: #{bert_lstm_forward.45} parent=0 // pred_check_branch
    %13 = sbr.rel (0) target = $region13
  $region12: #{bert_lstm_forward.45} parent=0 // pred_region
    _
  $region13: #{bert_lstm_forward.45} parent=0 // pred_fallthru
    _
  %p14 = scmp.eq.s32.totalorder 0, 0
  // Predicated region
  $region14: #{bert_lstm_forward.45} parent=0 // pred_check
    %p15 = pneg %p14
  $region15: #{bert_lstm_forward.45} parent=0 // pred_check_branch
    %17 = sbr.rel (%p15) target = $region17
  $region16: #{bert_lstm_forward.45} parent=0 // pred_region
    %18 = vst [vmem:[%s3] sm:$0x1] 0.0
  $region17: #{bert_lstm_forward.45} parent=0 // pred_fallthru
    _
  %v19 = vld [vmem:[%s0] sm:$0xff]
  %v20 = vld [vmem:[%s0 + $0x8] sm:$0xff]
  %21 = vmax.xlane.f32.xlu0 %v19
  %v22 = vpop.xlane.xlu0 %21
  %23 = vmax.xlane.f32.xlu0 %v20
  %v24 = vpop.xlane.xlu0 %23
  %v25 = vsub.f32 %v19, %v22
  %v26 = vsub.f32 %v20, %v24
  %v27 = vmul.f32 %v25, 1.442695
  %v28 = vpow.pop %v27
  %v29 = vmul.f32 %v26, 1.442695
  %v30 = vpow.pop %v29
  %31 = vadd.xlane.f32.xlu0 %v28
  %v32 = vpop.xlane.xlu0 %31
  %33 = vadd.xlane.f32.xlu0 %v30
  %v34 = vpop.xlane.xlu0 %33
  %v35 = vlog2.pop %v32
  %v36 = vmul.f32 %v35, 0.6931472
  %v37 = vlog2.pop %v34
  %v38 = vmul.f32 %v37, 0.6931472
  %v39 = vadd.f32 %v36, %v22
  %v40 = vadd.f32 %v38, %v24
  %v41 = vlaneseq
  %v42 = vand.u32 %v41, 127
  %v43 = vld [vmem:[%s1] sm:$0xff]
  %v44 = vld [vmem:[%s1 + $0x8] sm:$0xff]
  %45 = vset.pattern.permute.xlu0 0
  %46 = vperm.xlu0 %45, %v43
  %v47 = vpop.permute.xlu0 %46
  %48 = vset.pattern.permute.xlu0 0
  %49 = vperm.xlu0 %48, %v44
  %v50 = vpop.permute.xlu0 %49
  %vm51 = vcmp.eq.s32.totalorder %v42, %v47
  %vm52 = vcmp.eq.s32.totalorder %v42, %v50
  %v53 = vsel %vm51, %v19, 0.0
  %v54 = vsel %vm52, %v20, 0.0
  %55 = vadd.xlane.f32.xlu0 %v53
  %v56 = vpop.xlane.xlu0 %55
  %57 = vadd.xlane.f32.xlu0 %v54
  %v58 = vpop.xlane.xlu0 %57
  %v59 = vsub.f32 %v39, %v56
  %v60 = vsub.f32 %v40, %v58
  %v61 = vld [vmem:[%s2] sm:$0xff]
  %v62 = vld [vmem:[%s2 + $0x8] sm:$0xff]
  %v63 = vmul.f32 %v59, %v61
  %v64 = vmul.f32 %v60, %v62
  %vm65 = vcmask 7168
  %v66 = vsel %vm65, %v63, 0.0
  %v67 = vsel %vm65, %v64, 0.0
  %v68 = vadd.f32 %v66, %v67
  %69 = vadd.xlane.f32.xlu0 %v68
  %v70 = vpop.xlane.xlu0 %69
  %v71 = vrot.slane %v70, 4
  %v72 = vadd.f32 %v70, %v71
  %v73 = vrot.slane %v72, 2
  %v74 = vadd.f32 %v72, %v73
  %v75 = vrot.slane %v74, 1
  %v76 = vadd.f32 %v74, %v75
  %s77 = vtos %v76
  %v78 = vsel %vm65, %v61, 0.0
  %v79 = vsel %vm65, %v62, 0.0
  %v80 = vadd.f32 %v78, %v79
  %81 = vadd.xlane.f32.xlu0 %v80
  %v82 = vpop.xlane.xlu0 %81
  %v83 = vrot.slane %v82, 4
  %v84 = vadd.f32 %v82, %v83
  %v85 = vrot.slane %v84, 2
  %v86 = vadd.f32 %v84, %v85
  %v87 = vrot.slane %v86, 1
  %v88 = vadd.f32 %v86, %v87
  %s89 = vtos %v88
  %v90 = vld [vmem:[%s3] sm:$0x1]
  %vm91 = vcmp.eq.s32.totalorder %v42, 0
  %v92 = vstv %s77
  %v93 = vsel %vm91, %v92, 0.0
  %vm94 = vcmp.eq.s32.totalorder %v42, 1
  %v95 = vstv %s89
  %v96 = vsel %vm94, %v95, 0.0
  %v97 = vadd.f32 %v93, %v96
  %v98 = vadd.f32 %v90, %v97
  %99 = vst [vmem:[%s3] sm:$0x1] %v98
  // Predicated region
  $region18: #{bert_lstm_forward.45} parent=0 // pred_check
    _
  $region19: #{bert_lstm_forward.45} parent=0 // pred_check_branch
    %101 = sbr.rel (0) target = $region21
  $region20: #{bert_lstm_forward.45} parent=0 // pred_region
    _
  $region21: #{bert_lstm_forward.45} parent=0 // pred_fallthru
    _
  // Predicated region
  $region22: #{bert_lstm_forward.45} parent=0 // pred_check
    _
  $region23: #{bert_lstm_forward.45} parent=0 // pred_check_branch
    %103 = sbr.rel (0) target = $region25
  $region24: #{bert_lstm_forward.45} parent=0 // pred_region
    _
  $region25: #{bert_lstm_forward.45} parent=0 // pred_fallthru
    _

// kernel: bert_lstm_forward.40
$region0: #{bert_lstm_forward.40}
  #allocation0 [shape = 'u32[]', space=smem, size = 0x4, offset = 0x4, fixed_abs, tag = 'smem constant byte address 0x4 - core index']
  #allocation1 [shape = 'u32[144,128]{1,0:T(1,128)}', space=vmem, size = 0x12000, scoped, tag = 'internal scratch']
  #allocation2 [shape = 'f32[2,16]{1,0:T(2,128)}', space=vmem, size = 0x400, scoped, tag = 'scratch operand']
  #allocation3 [shape = 'f32[2,16]{1,0:T(2,128)}', space=vmem, size = 0x400, scoped, tag = 'scratch operand']
  #allocation4 [shape = 'f32[2,16]{1,0:T(2,128)}', space=vmem, size = 0x400, scoped, tag = 'scratch operand']
  #allocation5 [shape = 'f32[2,16]{1,0:T(2,128)}', space=vmem, size = 0x400, scoped, tag = 'scratch operand']
  %s0 = inlined_call_operand.vmem [shape: bf16[2,8,64], index: 0, kind: input, shape index: {}]
  %s1 = inlined_call_operand.vmem [shape: bf16[2,8,64], index: 1, kind: input, shape index: {}]
  %s2 = inlined_call_operand.vmem [shape: bf16[16,64], index: 2, kind: input, shape index: {}]
  %s3 = inlined_call_operand.vmem [shape: bf16[16,64], index: 3, kind: input, shape index: {}]
  %s4 = inlined_call_operand.vmem [shape: bf16[2,8,16], index: 4, kind: output, shape index: {0}]
  %s5 = inlined_call_operand.vmem [shape: bf16[2,8,16], index: 5, kind: output, shape index: {1}]
  %6 = xla_tuple %s4, %s5
  %s7 = sld [smem:[#allocation0]]
  $region38: #{bert_lstm_forward.40} parent=0
    _
  %s9 = ssub.s32 1, %s7
  %s10 = scalar_select 0, %s9, %s7
  // Predicated region
  $region2: #{bert_lstm_forward.40} parent=0 // pred_check
    _
  $region3: #{bert_lstm_forward.40} parent=0 // pred_check_branch
    %12 = sbr.rel (0) target = $region5
  $region4: #{bert_lstm_forward.40} parent=0 // pred_region
    _
  $region5: #{bert_lstm_forward.40} parent=0 // pred_fallthru
    _
  // Predicated region
  $region6: #{bert_lstm_forward.40} parent=0 // pred_check
    _
  $region7: #{bert_lstm_forward.40} parent=0 // pred_check_branch
    %14 = sbr.rel (0) target = $region9
  $region8: #{bert_lstm_forward.40} parent=0 // pred_region
    %s15 = ssub.s32 0, 0
    %p16 = scmp.lt.s32.totalorder %s15, 0
    %s17 = scalar_select %p16, %s15, 0
    %s18 = smul.addr %s17, 4
    %s19 = scalar_lea.vmem %s1, %s18
    %s20 = ssub.s32 0, 0
  $region9: #{bert_lstm_forward.40} parent=0 // pred_fallthru
    _
  // Predicated region
  $region10: #{bert_lstm_forward.40} parent=0 // pred_check
    _
  $region11: #{bert_lstm_forward.40} parent=0 // pred_check_branch
    %22 = sbr.rel (0) target = $region13
  $region12: #{bert_lstm_forward.40} parent=0 // pred_region
    _
  $region13: #{bert_lstm_forward.40} parent=0 // pred_fallthru
    _
  // Predicated region
  $region14: #{bert_lstm_forward.40} parent=0 // pred_check
    _
  $region15: #{bert_lstm_forward.40} parent=0 // pred_check_branch
    %24 = sbr.rel (0) target = $region17
  $region16: #{bert_lstm_forward.40} parent=0 // pred_region
    _
  $region17: #{bert_lstm_forward.40} parent=0 // pred_fallthru
    _
  %s25 = ssub.s32 0, 0
  %p26 = scmp.lt.s32.totalorder %s25, 0
  %s27 = scalar_select %p26, %s25, 0
  %s28 = smul.addr %s27, 4
  %s29 = scalar_lea.vmem %s1, %s28
  %s30 = ssub.s32 0, 0
  %p31 = scmp.lt.s32.totalorder %s30, 0
  %s32 = scalar_select %p31, %s30, 0
  %s33 = smul.addr %s32, 4
  %s34 = scalar_lea.vmem %s5, %s33
  %s35 = ssub.s32 0, 0
  %p36 = scmp.lt.s32.totalorder %s35, 0
  %s37 = scalar_select %p36, %s35, 0
  %s38 = smul.addr %s37, 4
  %s39 = scalar_lea.vmem %s1, %s38
  %s40 = ssub.s32 0, 0
  %s41 = ssub.s32 0, 0
  %p42 = scmp.lt.s32.totalorder %s41, 0
  %s43 = scalar_select %p42, %s41, 0
  %s44 = smul.addr %s43, 4
  %s45 = scalar_lea.vmem %s5, %s44
  %s46 = ssub.s32 0, 0
  %p48 = scmp.eq.s32.totalorder 0, 0
  // Predicated region
  $region18: #{bert_lstm_forward.40} parent=0 // pred_check
    %p49 = pneg %p48
  $region19: #{bert_lstm_forward.40} parent=0 // pred_check_branch
    %51 = sbr.rel (%p49) target = $region21
  $region20: #{bert_lstm_forward.40} parent=0 // pred_region
    %vm52 = vcmask 123904
    %53 = vst.msk [vmem:[#allocation2] sm:$0x3] %vm52, 0.0
    %54 = vst.msk [vmem:[#allocation3] sm:$0x3] %vm52, 0.0
    %55 = vst.msk [vmem:[#allocation4] sm:$0x3] %vm52, 0.0
    %56 = vst.msk [vmem:[#allocation5] sm:$0x3] %vm52, 0.0
  $region21: #{bert_lstm_forward.40} parent=0 // pred_fallthru
    _
  %v57 = vld [vmem:[%s2] sm:$0xf]
  %v58 = vld [vmem:[%s2 + $0x4] sm:$0xf]
  %v59 = vld [vmem:[%s3] sm:$0xf]
  %v60 = vld [vmem:[%s3 + $0x4] sm:$0xf]
  %v61 = vld [vmem:[#allocation2] sm:$0x3]
  %v62 = vld [vmem:[#allocation3] sm:$0x3]
  %v63 = vld [vmem:[#allocation4] sm:$0x3]
  %v64 = vld [vmem:[#allocation5] sm:$0x3]
  %v65 = vld [vmem:[%s0] sm:$0x1]
  %v66 = vld [vmem:[%s0 + $0x4] sm:$0x1]
  %v67 = vunpack.c.l.bf16 %v65
  %v68 = vunpack.c.l.bf16 %v66
  %v69 = vpack.c.bf16 %v61, %v61
  %v72 = vunpack.c.l.b16 %v57
  %v73 = vunpack.c.l.b16 %v58
  %v74 = vpack.c.b16 %v73, %v72
  %vm76 = vcmask 130048
  %v78 = vsel %vm76, %v69, 0
  %80 = vmatprep.subr.bf16.mxu0 0
  %81 = vmatpush1.bf16.msra.mxu0 0
  %82 = vmatprep.subr.bf16.mxu0 0
  %83 = vmatpush1.bf16.msra.mxu0 0
  %84 = vmatprep.subr.bf16.mxu0 0
  %85 = vmatpush1.bf16.msra.mxu0 0
  %86 = vmatprep.subr.bf16.mxu0 0
  %87 = vmatpush1.bf16.msra.mxu0 0
  %88 = vmatprep.subr.bf16.mxu0 0
  %89 = vmatpush1.bf16.msra.mxu0 0
  %90 = vmatprep.subr.bf16.mxu0 0
  %91 = vmatpush1.bf16.msra.mxu0 0
  %92 = vmatprep.subr.bf16.mxu0 0
  %93 = vmatpush1.bf16.msra.mxu0 0
  %94 = vmatprep.subr.bf16.mxu0 0
  %95 = vmatpush1.bf16.msra.mxu0 %v74
  %96 = vmatprep.subr.bf16.mxu0 0
  %97 = vmatpush2.bf16.msra.mxu0 0
  %98 = vmatprep.subr.bf16.mxu0 0
  %99 = vmatpush2.bf16.msra.mxu0 0
  %100 = vmatprep.subr.bf16.mxu0 0
  %101 = vmatpush2.bf16.msra.mxu0 0
  %102 = vmatprep.subr.bf16.mxu0 0
  %103 = vmatpush2.bf16.msra.mxu0 0
  %104 = vmatprep.subr.bf16.mxu0 0
  %105 = vmatpush2.bf16.msra.mxu0 0
  %106 = vmatprep.subr.bf16.mxu0 0
  %107 = vmatpush2.bf16.msra.mxu0 0
  %108 = vmatprep.subr.bf16.mxu0 0
  %109 = vmatpush2.bf16.msra.mxu0 0
  %110 = vmatprep.subr.bf16.mxu0 0
  %111 = vmatpush2.bf16.msra.mxu0 0
  %112 = vmatprep.mubr.bf16.mxu0 0
  %113 = vmatmul.mubr.bf16.gmra.mxu0 %v78
  %v114 = vpop.f32.mrf.mxu0
  %v115 = vadd.f32 0.0, %v114
  %v116 = vpop.f32.mrf.mxu0
  %v117 = vpop.f32.mrf.mxu0
  %v118 = vpop.f32.mrf.mxu0
  %119 = vdwg.mxu0
  %v121 = vrot.slane %v115, 1
  %v124 = vadd.f32 %v67, %v115
  %v125 = vadd.f32 %v68, %v121
  %v126 = vxor.u32 %v124, 2147483648
  %v127 = vxor.u32 %v125, 2147483648
  %v128 = vmul.f32 %v126, 1.442695
  %v129 = vpow.pop %v128
  %v130 = vmul.f32 %v127, 1.442695
  %v131 = vpow.pop %v130
  %v132 = vadd.f32 %v129, 1.0
  %v133 = vadd.f32 %v131, 1.0
  %v134 = vrcp.pop %v132
  %v135 = vmul.f32 1.0, %v134
  %v136 = vrcp.pop %v133
  %v137 = vmul.f32 1.0, %v136
  %v138 = vtanh.pop %v124
  %v139 = vtanh.pop %v125
  %v141 = vrot.slane %v62, 1
  %142 = vrot.lane.b32.xlu0 %v62, 16
  %v143 = vpop.permute.xlu0 %142
  %144 = vrot.lane.b32.xlu0 %v141, 16
  %v145 = vpop.permute.xlu0 %144
  %v148 = vmul.f32 %v135, %v143
  %v149 = vmul.f32 %v137, %v145
  %152 = vrot.lane.b32.xlu0 %v138, 96
  %v153 = vpop.permute.xlu0 %152
  %154 = vrot.lane.b32.xlu0 %v139, 96
  %v155 = vpop.permute.xlu0 %154
  %v158 = vmul.f32 %v135, %v153
  %v159 = vmul.f32 %v137, %v155
  %162 = vrot.lane.b32.xlu0 %v158, 16
  %v163 = vpop.permute.xlu0 %162
  %164 = vrot.lane.b32.xlu0 %v159, 16
  %v165 = vpop.permute.xlu0 %164
  %v168 = vadd.f32 %v148, %v163
  %v169 = vadd.f32 %v149, %v165
  %v170 = vtanh.pop %v168
  %v171 = vtanh.pop %v169
  %174 = vrot.lane.b32.xlu0 %v170, 32
  %v175 = vpop.permute.xlu0 %174
  %176 = vrot.lane.b32.xlu0 %v171, 32
  %v177 = vpop.permute.xlu0 %176
  %v180 = vmul.f32 %v135, %v175
  %v181 = vmul.f32 %v137, %v177
  %v182 = vpack.c.bf16 %v180, %v180
  %v183 = vpack.c.bf16 %v181, %v181
  %v186 = vunpack.c.l.b16 %v182
  %v187 = vunpack.c.l.b16 %v183
  %v188 = vpack.c.b16 %v186, %v186
  %v189 = vpack.c.b16 %v187, %v187
  %190 = vrot.lane.b32.xlu0 %v188, 80
  %v191 = vpop.permute.xlu0 %190
  %192 = vrot.lane.b32.xlu0 %v189, 80
  %v193 = vpop.permute.xlu0 %192
  %vm196 = vcmask 122880
  %vm197 = vsmask.f32 256
  %vm198 = vmand %vm196, %vm197
  %v199 = vld [vmem:[%s4] sm:$0x1]
  %v200 = vsel %vm198, %v191, %v199
  %201 = vst [vmem:[%s4] sm:$0x1] %v200
  %v202 = vld [vmem:[%s4 + $0x4] sm:$0x1]
  %v203 = vsel %vm198, %v193, %v202
  %204 = vst [vmem:[%s4 + $0x4] sm:$0x1] %v203
  %v205 = vld [vmem:[%s39] sm:$0x8]
  %v206 = vld [vmem:[%s39 + $0x4] sm:$0x8]
  %v207 = vunpack.c.l.bf16 %v205
  %v208 = vunpack.c.l.bf16 %v206
  %v209 = vpack.c.bf16 %v63, %v63
  %v212 = vunpack.c.l.b16 %v59
  %v213 = vunpack.c.l.b16 %v60
  %v214 = vpack.c.b16 %v213, %v212
  %v217 = vsel %vm76, %v209, 0
  %219 = vmatprep.subr.bf16.mxu0 0
  %220 = vmatpush1.bf16.msra.mxu0 0
  %221 = vmatprep.subr.bf16.mxu0 0
  %222 = vmatpush1.bf16.msra.mxu0 0
  %223 = vmatprep.subr.bf16.mxu0 0
  %224 = vmatpush1.bf16.msra.mxu0 0
  %225 = vmatprep.subr.bf16.mxu0 0
  %226 = vmatpush1.bf16.msra.mxu0 0
  %227 = vmatprep.subr.bf16.mxu0 0
  %228 = vmatpush1.bf16.msra.mxu0 0
  %229 = vmatprep.subr.bf16.mxu0 0
  %230 = vmatpush1.bf16.msra.mxu0 0
  %231 = vmatprep.subr.bf16.mxu0 0
  %232 = vmatpush1.bf16.msra.mxu0 0
  %233 = vmatprep.subr.bf16.mxu0 0
  %234 = vmatpush1.bf16.msra.mxu0 %v214
  %235 = vmatprep.subr.bf16.mxu0 0
  %236 = vmatpush2.bf16.msra.mxu0 0
  %237 = vmatprep.subr.bf16.mxu0 0
  %238 = vmatpush2.bf16.msra.mxu0 0
  %239 = vmatprep.subr.bf16.mxu0 0
  %240 = vmatpush2.bf16.msra.mxu0 0
  %241 = vmatprep.subr.bf16.mxu0 0
  %242 = vmatpush2.bf16.msra.mxu0 0
  %243 = vmatprep.subr.bf16.mxu0 0
  %244 = vmatpush2.bf16.msra.mxu0 0
  %245 = vmatprep.subr.bf16.mxu0 0
  %246 = vmatpush2.bf16.msra.mxu0 0
  %247 = vmatprep.subr.bf16.mxu0 0
  %248 = vmatpush2.bf16.msra.mxu0 0
  %249 = vmatprep.subr.bf16.mxu0 0
  %250 = vmatpush2.bf16.msra.mxu0 0
  %251 = vmatprep.mubr.bf16.mxu0 0
  %252 = vmatmul.mubr.bf16.gmra.mxu0 %v217
  %v253 = vpop.f32.mrf.mxu0
  %v254 = vadd.f32 0.0, %v253
  %v255 = vpop.f32.mrf.mxu0
  %v256 = vpop.f32.mrf.mxu0
  %v257 = vpop.f32.mrf.mxu0
  %258 = vdwg.mxu0
  %v260 = vrot.slane %v254, 1
  %v261 = vrot.slane %v254, 2
  %v264 = vadd.f32 %v207, %v260
  %v265 = vadd.f32 %v208, %v261
  %v266 = vxor.u32 %v264, 2147483648
  %v267 = vxor.u32 %v265, 2147483648
  %v268 = vmul.f32 %v266, 1.442695
  %v269 = vpow.pop %v268
  %v270 = vmul.f32 %v267, 1.442695
  %v271 = vpow.pop %v270
  %v272 = vadd.f32 %v269, 1.0
  %v273 = vadd.f32 %v271, 1.0
  %v274 = vrcp.pop %v272
  %v275 = vmul.f32 1.0, %v274
  %v276 = vrcp.pop %v273
  %v277 = vmul.f32 1.0, %v276
  %v278 = vtanh.pop %v264
  %v279 = vtanh.pop %v265
  %v281 = vrot.slane %v64, 1
  %v282 = vrot.slane %v64, 2
  %283 = vrot.lane.b32.xlu0 %v281, 16
  %v284 = vpop.permute.xlu0 %283
  %285 = vrot.lane.b32.xlu0 %v282, 16
  %v286 = vpop.permute.xlu0 %285
  %v289 = vmul.f32 %v275, %v284
  %v290 = vmul.f32 %v277, %v286
  %293 = vrot.lane.b32.xlu0 %v278, 96
  %v294 = vpop.permute.xlu0 %293
  %295 = vrot.lane.b32.xlu0 %v279, 96
  %v296 = vpop.permute.xlu0 %295
  %v299 = vmul.f32 %v275, %v294
  %v300 = vmul.f32 %v277, %v296
  %303 = vrot.lane.b32.xlu0 %v299, 16
  %v304 = vpop.permute.xlu0 %303
  %305 = vrot.lane.b32.xlu0 %v300, 16
  %v306 = vpop.permute.xlu0 %305
  %v309 = vadd.f32 %v289, %v304
  %v310 = vadd.f32 %v290, %v306
  %v311 = vtanh.pop %v309
  %v312 = vtanh.pop %v310
  %315 = vrot.lane.b32.xlu0 %v311, 32
  %v316 = vpop.permute.xlu0 %315
  %317 = vrot.lane.b32.xlu0 %v312, 32
  %v318 = vpop.permute.xlu0 %317
  %v321 = vmul.f32 %v275, %v316
  %v322 = vmul.f32 %v277, %v318
  %v323 = vpack.c.bf16 %v321, %v321
  %v324 = vpack.c.bf16 %v322, %v322
  %v327 = vunpack.c.l.b16 %v323
  %v328 = vunpack.c.l.b16 %v324
  %v329 = vpack.c.b16 %v327, %v327
  %v330 = vpack.c.b16 %v328, %v328
  %331 = vrot.lane.b32.xlu0 %v329, 80
  %v332 = vpop.permute.xlu0 %331
  %333 = vrot.lane.b32.xlu0 %v330, 80
  %v334 = vpop.permute.xlu0 %333
  %vm337 = vcmask 125955
  %vm338 = vsmask.f32 7950
  %vm339 = vmand %vm337, %vm338
  %v340 = vld [vmem:[%s45] sm:$0x8]
  %v341 = vsel %vm339, %v332, %v340
  %342 = vst [vmem:[%s45] sm:$0x8] %v341
  %v343 = vld [vmem:[%s45 + $0x4] sm:$0x8]
  %v344 = vsel %vm339, %v334, %v343
  %345 = vst [vmem:[%s45 + $0x4] sm:$0x8] %v344
  %v346 = vld [vmem:[%s0] sm:$0x1]
  %v347 = vld [vmem:[%s0 + $0x4] sm:$0x1]
  %v348 = vunpack.c.l.bf16 %v346
  %v349 = vunpack.c.l.bf16 %v347
  %v350 = vrot.slane %v187, 7
  %vm351 = vcmask 1041409
  %v352 = vsel %vm351, %v350, %v186
  %v353 = vpack.c.b16 %v352, %v352
  %354 = vrot.lane.b32.xlu0 %v353, 80
  %v355 = vpop.permute.xlu0 %354
  %v357 = vsel %vm76, %v355, 0
  %359 = vmatprep.subr.bf16.mxu0 0
  %360 = vmatpush1.bf16.msra.mxu0 0
  %361 = vmatprep.subr.bf16.mxu0 0
  %362 = vmatpush1.bf16.msra.mxu0 0
  %363 = vmatprep.subr.bf16.mxu0 0
  %364 = vmatpush1.bf16.msra.mxu0 0
  %365 = vmatprep.subr.bf16.mxu0 0
  %366 = vmatpush1.bf16.msra.mxu0 0
  %367 = vmatprep.subr.bf16.mxu0 0
  %368 = vmatpush1.bf16.msra.mxu0 0
  %369 = vmatprep.subr.bf16.mxu0 0
  %370 = vmatpush1.bf16.msra.mxu0 0
  %371 = vmatprep.subr.bf16.mxu0 0
  %372 = vmatpush1.bf16.msra.mxu0 0
  %373 = vmatprep.subr.bf16.mxu0 0
  %374 = vmatpush1.bf16.msra.mxu0 %v74
  %375 = vmatprep.subr.bf16.mxu0 0
  %376 = vmatpush2.bf16.msra.mxu0 0
  %377 = vmatprep.subr.bf16.mxu0 0
  %378 = vmatpush2.bf16.msra.mxu0 0
  %379 = vmatprep.subr.bf16.mxu0 0
  %380 = vmatpush2.bf16.msra.mxu0 0
  %381 = vmatprep.subr.bf16.mxu0 0
  %382 = vmatpush2.bf16.msra.mxu0 0
  %383 = vmatprep.subr.bf16.mxu0 0
  %384 = vmatpush2.bf16.msra.mxu0 0
  %385 = vmatprep.subr.bf16.mxu0 0
  %386 = vmatpush2.bf16.msra.mxu0 0
  %387 = vmatprep.subr.bf16.mxu0 0
  %388 = vmatpush2.bf16.msra.mxu0 0
  %389 = vmatprep.subr.bf16.mxu0 0
  %390 = vmatpush2.bf16.msra.mxu0 0
  %391 = vmatprep.mubr.bf16.mxu0 0
  %392 = vmatmul.mubr.bf16.gmra.mxu0 %v357
  %v393 = vpop.f32.mrf.mxu0
  %v394 = vadd.f32 0.0, %v393
  %v395 = vpop.f32.mrf.mxu0
  %v396 = vpop.f32.mrf.mxu0
  %v397 = vpop.f32.mrf.mxu0
  %398 = vdwg.mxu0
  %v400 = vrot.slane %v394, 7
  %v403 = vadd.f32 %v348, %v400
  %v404 = vadd.f32 %v349, %v394
  %v405 = vxor.u32 %v403, 2147483648
  %v406 = vxor.u32 %v404, 2147483648
  %v407 = vmul.f32 %v405, 1.442695
  %v408 = vpow.pop %v407
  %v409 = vmul.f32 %v406, 1.442695
  %v410 = vpow.pop %v409
  %v411 = vadd.f32 %v408, 1.0
  %v412 = vadd.f32 %v410, 1.0
  %v413 = vrcp.pop %v411
  %v414 = vmul.f32 1.0, %v413
  %v415 = vrcp.pop %v412
  %v416 = vmul.f32 1.0, %v415
  %v417 = vtanh.pop %v403
  %v418 = vtanh.pop %v404
  %v421 = vrot.slane %v168, 7
  %v422 = vrot.slane %v169, 7
  %v425 = vmul.f32 %v414, %v421
  %v426 = vmul.f32 %v416, %v422
  %429 = vrot.lane.b32.xlu0 %v417, 96
  %v430 = vpop.permute.xlu0 %429
  %431 = vrot.lane.b32.xlu0 %v418, 96
  %v432 = vpop.permute.xlu0 %431
  %v435 = vmul.f32 %v414, %v430
  %v436 = vmul.f32 %v416, %v432
  %439 = vrot.lane.b32.xlu0 %v435, 16
  %v440 = vpop.permute.xlu0 %439
  %441 = vrot.lane.b32.xlu0 %v436, 16
  %v442 = vpop.permute.xlu0 %441
  %v445 = vadd.f32 %v425, %v440
  %v446 = vadd.f32 %v426, %v442
  %v447 = vtanh.pop %v445
  %v448 = vtanh.pop %v446
  %451 = vrot.lane.b32.xlu0 %v447, 32
  %v452 = vpop.permute.xlu0 %451
  %453 = vrot.lane.b32.xlu0 %v448, 32
  %v454 = vpop.permute.xlu0 %453
  %v457 = vmul.f32 %v414, %v452
  %v458 = vmul.f32 %v416, %v454
  %v459 = vpack.c.bf16 %v457, %v457
  %v460 = vpack.c.bf16 %v458, %v458
  %v463 = vunpack.c.l.b16 %v459
  %v464 = vunpack.c.l.b16 %v460
  %v465 = vpack.c.b16 %v463, %v463
  %v466 = vpack.c.b16 %v464, %v464
  %467 = vrot.lane.b32.xlu0 %v465, 80
  %v468 = vpop.permute.xlu0 %467
  %469 = vrot.lane.b32.xlu0 %v466, 80
  %v470 = vpop.permute.xlu0 %469
  %vm473 = vsmask.f32 7938
  %vm474 = vmand %vm196, %vm473
  %v475 = vld [vmem:[%s4] sm:$0x1]
  %v476 = vsel %vm474, %v468, %v475
  %477 = vst [vmem:[%s4] sm:$0x1] %v476
  %v478 = vld [vmem:[%s4 + $0x4] sm:$0x1]
  %v479 = vsel %vm474, %v470, %v478
  %480 = vst [vmem:[%s4 + $0x4] sm:$0x1] %v479
  %v481 = vld [vmem:[%s39] sm:$0x8]
  %v482 = vld [vmem:[%s39 + $0x4] sm:$0x8]
  %v483 = vunpack.c.l.bf16 %v481
  %v484 = vunpack.c.l.bf16 %v482
  %v485 = vrot.slane %v327, 7
  %v486 = vrot.slane %v328, 6
  %v487 = vsel %vm351, %v486, %v485
  %v488 = vpack.c.b16 %v487, %v487
  %489 = vrot.lane.b32.xlu0 %v488, 80
  %v490 = vpop.permute.xlu0 %489
  %v492 = vsel %vm76, %v490, 0
  %494 = vmatprep.subr.bf16.mxu0 0
  %495 = vmatpush1.bf16.msra.mxu0 0
  %496 = vmatprep.subr.bf16.mxu0 0
  %497 = vmatpush1.bf16.msra.mxu0 0
  %498 = vmatprep.subr.bf16.mxu0 0
  %499 = vmatpush1.bf16.msra.mxu0 0
  %500 = vmatprep.subr.bf16.mxu0 0
  %501 = vmatpush1.bf16.msra.mxu0 0
  %502 = vmatprep.subr.bf16.mxu0 0
  %503 = vmatpush1.bf16.msra.mxu0 0
  %504 = vmatprep.subr.bf16.mxu0 0
  %505 = vmatpush1.bf16.msra.mxu0 0
  %506 = vmatprep.subr.bf16.mxu0 0
  %507 = vmatpush1.bf16.msra.mxu0 0
  %508 = vmatprep.subr.bf16.mxu0 0
  %509 = vmatpush1.bf16.msra.mxu0 %v214
  %510 = vmatprep.subr.bf16.mxu0 0
  %511 = vmatpush2.bf16.msra.mxu0 0
  %512 = vmatprep.subr.bf16.mxu0 0
  %513 = vmatpush2.bf16.msra.mxu0 0
  %514 = vmatprep.subr.bf16.mxu0 0
  %515 = vmatpush2.bf16.msra.mxu0 0
  %516 = vmatprep.subr.bf16.mxu0 0
  %517 = vmatpush2.bf16.msra.mxu0 0
  %518 = vmatprep.subr.bf16.mxu0 0
  %519 = vmatpush2.bf16.msra.mxu0 0
  %520 = vmatprep.subr.bf16.mxu0 0
  %521 = vmatpush2.bf16.msra.mxu0 0
  %522 = vmatprep.subr.bf16.mxu0 0
  %523 = vmatpush2.bf16.msra.mxu0 0
  %524 = vmatprep.subr.bf16.mxu0 0
  %525 = vmatpush2.bf16.msra.mxu0 0
  %526 = vmatprep.mubr.bf16.mxu0 0
  %527 = vmatmul.mubr.bf16.gmra.mxu0 %v492
  %v528 = vpop.f32.mrf.mxu0
  %v529 = vadd.f32 0.0, %v528
  %v530 = vpop.f32.mrf.mxu0
  %v531 = vpop.f32.mrf.mxu0
  %v532 = vpop.f32.mrf.mxu0
  %533 = vdwg.mxu0
  %v535 = vrot.slane %v529, 2
  %v536 = vrot.slane %v529, 3
  %v539 = vadd.f32 %v483, %v535
  %v540 = vadd.f32 %v484, %v536
  %v541 = vxor.u32 %v539, 2147483648
  %v542 = vxor.u32 %v540, 2147483648
  %v543 = vmul.f32 %v541, 1.442695
  %v544 = vpow.pop %v543
  %v545 = vmul.f32 %v542, 1.442695
  %v546 = vpow.pop %v545
  %v547 = vadd.f32 %v544, 1.0
  %v548 = vadd.f32 %v546, 1.0
  %v549 = vrcp.pop %v547
  %v550 = vmul.f32 1.0, %v549
  %v551 = vrcp.pop %v548
  %v552 = vmul.f32 1.0, %v551
  %v553 = vtanh.pop %v539
  %v554 = vtanh.pop %v540
  %v557 = vrot.slane %v309, 1
  %v558 = vrot.slane %v310, 1
  %v561 = vmul.f32 %v550, %v557
  %v562 = vmul.f32 %v552, %v558
  %565 = vrot.lane.b32.xlu0 %v553, 96
  %v566 = vpop.permute.xlu0 %565
  %567 = vrot.lane.b32.xlu0 %v554, 96
  %v568 = vpop.permute.xlu0 %567
  %v571 = vmul.f32 %v550, %v566
  %v572 = vmul.f32 %v552, %v568
  %575 = vrot.lane.b32.xlu0 %v571, 16
  %v576 = vpop.permute.xlu0 %575
  %577 = vrot.lane.b32.xlu0 %v572, 16
  %v578 = vpop.permute.xlu0 %577
  %v581 = vadd.f32 %v561, %v576
  %v582 = vadd.f32 %v562, %v578
  %v583 = vtanh.pop %v581
  %v584 = vtanh.pop %v582
  %587 = vrot.lane.b32.xlu0 %v583, 32
  %v588 = vpop.permute.xlu0 %587
  %589 = vrot.lane.b32.xlu0 %v584, 32
  %v590 = vpop.permute.xlu0 %589
  %v593 = vmul.f32 %v550, %v588
  %v594 = vmul.f32 %v552, %v590
  %v595 = vpack.c.bf16 %v593, %v593
  %v596 = vpack.c.bf16 %v594, %v594
  %v599 = vunpack.c.l.b16 %v595
  %v600 = vunpack.c.l.b16 %v596
  %v601 = vpack.c.b16 %v599, %v599
  %v602 = vpack.c.b16 %v600, %v600
  %603 = vrot.lane.b32.xlu0 %v601, 80
  %v604 = vpop.permute.xlu0 %603
  %605 = vrot.lane.b32.xlu0 %v602, 80
  %v606 = vpop.permute.xlu0 %605
  %vm609 = vsmask.f32 3328
  %vm610 = vmand %vm337, %vm609
  %v611 = vld [vmem:[%s45] sm:$0x8]
  %v612 = vsel %vm610, %v604, %v611
  %613 = vst [vmem:[%s45] sm:$0x8] %v612
  %v614 = vld [vmem:[%s45 + $0x4] sm:$0x8]
  %v615 = vsel %vm610, %v606, %v614
  %616 = vst [vmem:[%s45 + $0x4] sm:$0x8] %v615
  %v617 = vld [vmem:[%s0] sm:$0x2]
  %v618 = vld [vmem:[%s0 + $0x4] sm:$0x2]
  %v619 = vunpack.c.l.bf16 %v617
  %v620 = vunpack.c.l.bf16 %v618
  %v621 = vrot.slane %v463, 1
  %v622 = vsel %vm351, %v464, %v621
  %v623 = vpack.c.b16 %v622, %v622
  %624 = vrot.lane.b32.xlu0 %v623, 80
  %v625 = vpop.permute.xlu0 %624
  %v627 = vsel %vm76, %v625, 0
  %629 = vmatprep.subr.bf16.mxu0 0
  %630 = vmatpush1.bf16.msra.mxu0 0
  %631 = vmatprep.subr.bf16.mxu0 0
  %632 = vmatpush1.bf16.msra.mxu0 0
  %633 = vmatprep.subr.bf16.mxu0 0
  %634 = vmatpush1.bf16.msra.mxu0 0
  %635 = vmatprep.subr.bf16.mxu0 0
  %636 = vmatpush1.bf16.msra.mxu0 0
  %637 = vmatprep.subr.bf16.mxu0 0
  %638 = vmatpush1.bf16.msra.mxu0 0
  %639 = vmatprep.subr.bf16.mxu0 0
  %640 = vmatpush1.bf16.msra.mxu0 0
  %641 = vmatprep.subr.bf16.mxu0 0
  %642 = vmatpush1.bf16.msra.mxu0 0
  %643 = vmatprep.subr.bf16.mxu0 0
  %644 = vmatpush1.bf16.msra.mxu0 %v74
  %645 = vmatprep.subr.bf16.mxu0 0
  %646 = vmatpush2.bf16.msra.mxu0 0
  %647 = vmatprep.subr.bf16.mxu0 0
  %648 = vmatpush2.bf16.msra.mxu0 0
  %649 = vmatprep.subr.bf16.mxu0 0
  %650 = vmatpush2.bf16.msra.mxu0 0
  %651 = vmatprep.subr.bf16.mxu0 0
  %652 = vmatpush2.bf16.msra.mxu0 0
  %653 = vmatprep.subr.bf16.mxu0 0
  %654 = vmatpush2.bf16.msra.mxu0 0
  %655 = vmatprep.subr.bf16.mxu0 0
  %656 = vmatpush2.bf16.msra.mxu0 0
  %657 = vmatprep.subr.bf16.mxu0 0
  %658 = vmatpush2.bf16.msra.mxu0 0
  %659 = vmatprep.subr.bf16.mxu0 0
  %660 = vmatpush2.bf16.msra.mxu0 0
  %661 = vmatprep.mubr.bf16.mxu0 0
  %662 = vmatmul.mubr.bf16.gmra.mxu0 %v627
  %v663 = vpop.f32.mrf.mxu0
  %v664 = vadd.f32 0.0, %v663
  %v665 = vpop.f32.mrf.mxu0
  %v666 = vpop.f32.mrf.mxu0
  %v667 = vpop.f32.mrf.mxu0
  %668 = vdwg.mxu0
  %v670 = vrot.slane %v664, 6
  %v671 = vrot.slane %v664, 7
  %v674 = vadd.f32 %v619, %v670
  %v675 = vadd.f32 %v620, %v671
  %v676 = vxor.u32 %v674, 2147483648
  %v677 = vxor.u32 %v675, 2147483648
  %v678 = vmul.f32 %v676, 1.442695
  %v679 = vpow.pop %v678
  %v680 = vmul.f32 %v677, 1.442695
  %v681 = vpow.pop %v680
  %v682 = vadd.f32 %v679, 1.0
  %v683 = vadd.f32 %v681, 1.0
  %v684 = vrcp.pop %v682
  %v685 = vmul.f32 1.0, %v684
  %v686 = vrcp.pop %v683
  %v687 = vmul.f32 1.0, %v686
  %v688 = vtanh.pop %v674
  %v689 = vtanh.pop %v675
  %v692 = vrot.slane %v445, 7
  %v693 = vrot.slane %v446, 7
  %v696 = vmul.f32 %v685, %v692
  %v697 = vmul.f32 %v687, %v693
  %700 = vrot.lane.b32.xlu0 %v688, 96
  %v701 = vpop.permute.xlu0 %700
  %702 = vrot.lane.b32.xlu0 %v689, 96
  %v703 = vpop.permute.xlu0 %702
  %v706 = vmul.f32 %v685, %v701
  %v707 = vmul.f32 %v687, %v703
  %710 = vrot.lane.b32.xlu0 %v706, 16
  %v711 = vpop.permute.xlu0 %710
  %712 = vrot.lane.b32.xlu0 %v707, 16
  %v713 = vpop.permute.xlu0 %712
  %v716 = vadd.f32 %v696, %v711
  %v717 = vadd.f32 %v697, %v713
  %v718 = vtanh.pop %v716
  %v719 = vtanh.pop %v717
  %722 = vrot.lane.b32.xlu0 %v718, 32
  %v723 = vpop.permute.xlu0 %722
  %724 = vrot.lane.b32.xlu0 %v719, 32
  %v725 = vpop.permute.xlu0 %724
  %v728 = vmul.f32 %v685, %v723
  %v729 = vmul.f32 %v687, %v725
  %v730 = vpack.c.bf16 %v728, %v728
  %v731 = vpack.c.bf16 %v729, %v729
  %v734 = vunpack.c.l.b16 %v730
  %v735 = vunpack.c.l.b16 %v731
  %v736 = vpack.c.b16 %v734, %v734
  %v737 = vpack.c.b16 %v735, %v735
  %738 = vrot.lane.b32.xlu0 %v736, 80
  %v739 = vpop.permute.xlu0 %738
  %740 = vrot.lane.b32.xlu0 %v737, 80
  %v741 = vpop.permute.xlu0 %740
  %vm744 = vcmask 123905
  %vm745 = vsmask.f32 1280
  %vm746 = vmand %vm744, %vm745
  %v747 = vld [vmem:[%s4] sm:$0x2]
  %v748 = vsel %vm746, %v739, %v747
  %749 = vst [vmem:[%s4] sm:$0x2] %v748
  %v750 = vld [vmem:[%s4 + $0x4] sm:$0x2]
  %v751 = vsel %vm746, %v741, %v750
  %752 = vst [vmem:[%s4 + $0x4] sm:$0x2] %v751
  %v753 = vld [vmem:[%s39] sm:$0x4]
  %v754 = vld [vmem:[%s39 + $0x4] sm:$0x4]
  %v755 = vunpack.c.l.bf16 %v753
  %v756 = vunpack.c.l.bf16 %v754
  %v757 = vrot.slane %v599, 6
  %v758 = vrot.slane %v600, 5
  %v759 = vsel %vm351, %v758, %v757
  %v760 = vpack.c.b16 %v759, %v759
  %761 = vrot.lane.b32.xlu0 %v760, 80
  %v762 = vpop.permute.xlu0 %761
  %v764 = vsel %vm76, %v762, 0
  %766 = vmatprep.subr.bf16.mxu0 0
  %767 = vmatpush1.bf16.msra.mxu0 0
  %768 = vmatprep.subr.bf16.mxu0 0
  %769 = vmatpush1.bf16.msra.mxu0 0
  %770 = vmatprep.subr.bf16.mxu0 0
  %771 = vmatpush1.bf16.msra.mxu0 0
  %772 = vmatprep.subr.bf16.mxu0 0
  %773 = vmatpush1.bf16.msra.mxu0 0
  %774 = vmatprep.subr.bf16.mxu0 0
  %775 = vmatpush1.bf16.msra.mxu0 0
  %776 = vmatprep.subr.bf16.mxu0 0
  %777 = vmatpush1.bf16.msra.mxu0 0
  %778 = vmatprep.subr.bf16.mxu0 0
  %779 = vmatpush1.bf16.msra.mxu0 0
  %780 = vmatprep.subr.bf16.mxu0 0
  %781 = vmatpush1.bf16.msra.mxu0 %v214
  %782 = vmatprep.subr.bf16.mxu0 0
  %783 = vmatpush2.bf16.msra.mxu0 0
  %784 = vmatprep.subr.bf16.mxu0 0
  %785 = vmatpush2.bf16.msra.mxu0 0
  %786 = vmatprep.subr.bf16.mxu0 0
  %787 = vmatpush2.bf16.msra.mxu0 0
  %788 = vmatprep.subr.bf16.mxu0 0
  %789 = vmatpush2.bf16.msra.mxu0 0
  %790 = vmatprep.subr.bf16.mxu0 0
  %791 = vmatpush2.bf16.msra.mxu0 0
  %792 = vmatprep.subr.bf16.mxu0 0
  %793 = vmatpush2.bf16.msra.mxu0 0
  %794 = vmatprep.subr.bf16.mxu0 0
  %795 = vmatpush2.bf16.msra.mxu0 0
  %796 = vmatprep.subr.bf16.mxu0 0
  %797 = vmatpush2.bf16.msra.mxu0 0
  %798 = vmatprep.mubr.bf16.mxu0 0
  %799 = vmatmul.mubr.bf16.gmra.mxu0 %v764
  %v800 = vpop.f32.mrf.mxu0
  %v801 = vadd.f32 0.0, %v800
  %v802 = vpop.f32.mrf.mxu0
  %v803 = vpop.f32.mrf.mxu0
  %v804 = vpop.f32.mrf.mxu0
  %805 = vdwg.mxu0
  %v807 = vrot.slane %v801, 3
  %v808 = vrot.slane %v801, 4
  %v811 = vadd.f32 %v755, %v807
  %v812 = vadd.f32 %v756, %v808
  %v813 = vxor.u32 %v811, 2147483648
  %v814 = vxor.u32 %v812, 2147483648
  %v815 = vmul.f32 %v813, 1.442695
  %v816 = vpow.pop %v815
  %v817 = vmul.f32 %v814, 1.442695
  %v818 = vpow.pop %v817
  %v819 = vadd.f32 %v816, 1.0
  %v820 = vadd.f32 %v818, 1.0
  %v821 = vrcp.pop %v819
  %v822 = vmul.f32 1.0, %v821
  %v823 = vrcp.pop %v820
  %v824 = vmul.f32 1.0, %v823
  %v825 = vtanh.pop %v811
  %v826 = vtanh.pop %v812
  %v829 = vrot.slane %v581, 1
  %v830 = vrot.slane %v582, 1
  %v833 = vmul.f32 %v822, %v829
  %v834 = vmul.f32 %v824, %v830
  %837 = vrot.lane.b32.xlu0 %v825, 96
  %v838 = vpop.permute.xlu0 %837
  %839 = vrot.lane.b32.xlu0 %v826, 96
  %v840 = vpop.permute.xlu0 %839
  %v843 = vmul.f32 %v822, %v838
  %v844 = vmul.f32 %v824, %v840
  %847 = vrot.lane.b32.xlu0 %v843, 16
  %v848 = vpop.permute.xlu0 %847
  %849 = vrot.lane.b32.xlu0 %v844, 16
  %v850 = vpop.permute.xlu0 %849
  %v853 = vadd.f32 %v833, %v848
  %v854 = vadd.f32 %v834, %v850
  %v855 = vtanh.pop %v853
  %v856 = vtanh.pop %v854
  %859 = vrot.lane.b32.xlu0 %v855, 32
  %v860 = vpop.permute.xlu0 %859
  %861 = vrot.lane.b32.xlu0 %v856, 32
  %v862 = vpop.permute.xlu0 %861
  %v865 = vmul.f32 %v822, %v860
  %v866 = vmul.f32 %v824, %v862
  %v867 = vpack.c.bf16 %v865, %v865
  %v868 = vpack.c.bf16 %v866, %v866
  %v871 = vunpack.c.l.b16 %v867
  %v872 = vunpack.c.l.b16 %v868
  %v873 = vpack.c.b16 %v871, %v871
  %v874 = vpack.c.b16 %v872, %v872
  %875 = vrot.lane.b32.xlu0 %v873, 80
  %v876 = vpop.permute.xlu0 %875
  %877 = vrot.lane.b32.xlu0 %v874, 80
  %v878 = vpop.permute.xlu0 %877
  %vm881 = vcmask 124930
  %vm882 = vsmask.f32 7946
  %vm883 = vmand %vm881, %vm882
  %v884 = vld [vmem:[%s45] sm:$0x4]
  %v885 = vsel %vm883, %v876, %v884
  %886 = vst [vmem:[%s45] sm:$0x4] %v885
  %v887 = vld [vmem:[%s45 + $0x4] sm:$0x4]
  %v888 = vsel %vm883, %v878, %v887
  %889 = vst [vmem:[%s45 + $0x4] sm:$0x4] %v888
  %v890 = vld [vmem:[%s0] sm:$0x2]
  %v891 = vld [vmem:[%s0 + $0x4] sm:$0x2]
  %v892 = vunpack.c.l.bf16 %v890
  %v893 = vunpack.c.l.bf16 %v891
  %v894 = vrot.slane %v734, 2
  %v895 = vrot.slane %v735, 1
  %v896 = vsel %vm351, %v895, %v894
  %v897 = vpack.c.b16 %v896, %v896
  %898 = vrot.lane.b32.xlu0 %v897, 80
  %v899 = vpop.permute.xlu0 %898
  %v901 = vsel %vm76, %v899, 0
  %903 = vmatprep.subr.bf16.mxu0 0
  %904 = vmatpush1.bf16.msra.mxu0 0
  %905 = vmatprep.subr.bf16.mxu0 0
  %906 = vmatpush1.bf16.msra.mxu0 0
  %907 = vmatprep.subr.bf16.mxu0 0
  %908 = vmatpush1.bf16.msra.mxu0 0
  %909 = vmatprep.subr.bf16.mxu0 0
  %910 = vmatpush1.bf16.msra.mxu0 0
  %911 = vmatprep.subr.bf16.mxu0 0
  %912 = vmatpush1.bf16.msra.mxu0 0
  %913 = vmatprep.subr.bf16.mxu0 0
  %914 = vmatpush1.bf16.msra.mxu0 0
  %915 = vmatprep.subr.bf16.mxu0 0
  %916 = vmatpush1.bf16.msra.mxu0 0
  %917 = vmatprep.subr.bf16.mxu0 0
  %918 = vmatpush1.bf16.msra.mxu0 %v74
  %919 = vmatprep.subr.bf16.mxu0 0
  %920 = vmatpush2.bf16.msra.mxu0 0
  %921 = vmatprep.subr.bf16.mxu0 0
  %922 = vmatpush2.bf16.msra.mxu0 0
  %923 = vmatprep.subr.bf16.mxu0 0
  %924 = vmatpush2.bf16.msra.mxu0 0
  %925 = vmatprep.subr.bf16.mxu0 0
  %926 = vmatpush2.bf16.msra.mxu0 0
  %927 = vmatprep.subr.bf16.mxu0 0
  %928 = vmatpush2.bf16.msra.mxu0 0
  %929 = vmatprep.subr.bf16.mxu0 0
  %930 = vmatpush2.bf16.msra.mxu0 0
  %931 = vmatprep.subr.bf16.mxu0 0
  %932 = vmatpush2.bf16.msra.mxu0 0
  %933 = vmatprep.subr.bf16.mxu0 0
  %934 = vmatpush2.bf16.msra.mxu0 0
  %935 = vmatprep.mubr.bf16.mxu0 0
  %936 = vmatmul.mubr.bf16.gmra.mxu0 %v901
  %v937 = vpop.f32.mrf.mxu0
  %v938 = vadd.f32 0.0, %v937
  %v939 = vpop.f32.mrf.mxu0
  %v940 = vpop.f32.mrf.mxu0
  %v941 = vpop.f32.mrf.mxu0
  %942 = vdwg.mxu0
  %v944 = vrot.slane %v938, 5
  %v945 = vrot.slane %v938, 6
  %v948 = vadd.f32 %v892, %v944
  %v949 = vadd.f32 %v893, %v945
  %v950 = vxor.u32 %v948, 2147483648
  %v951 = vxor.u32 %v949, 2147483648
  %v952 = vmul.f32 %v950, 1.442695
  %v953 = vpow.pop %v952
  %v954 = vmul.f32 %v951, 1.442695
  %v955 = vpow.pop %v954
  %v956 = vadd.f32 %v953, 1.0
  %v957 = vadd.f32 %v955, 1.0
  %v958 = vrcp.pop %v956
  %v959 = vmul.f32 1.0, %v958
  %v960 = vrcp.pop %v957
  %v961 = vmul.f32 1.0, %v960
  %v962 = vtanh.pop %v948
  %v963 = vtanh.pop %v949
  %v966 = vrot.slane %v716, 7
  %v967 = vrot.slane %v717, 7
  %v970 = vmul.f32 %v959, %v966
  %v971 = vmul.f32 %v961, %v967
  %974 = vrot.lane.b32.xlu0 %v962, 96
  %v975 = vpop.permute.xlu0 %974
  %976 = vrot.lane.b32.xlu0 %v963, 96
  %v977 = vpop.permute.xlu0 %976
  %v980 = vmul.f32 %v959, %v975
  %v981 = vmul.f32 %v961, %v977
  %984 = vrot.lane.b32.xlu0 %v980, 16
  %v985 = vpop.permute.xlu0 %984
  %986 = vrot.lane.b32.xlu0 %v981, 16
  %v987 = vpop.permute.xlu0 %986
  %v990 = vadd.f32 %v970, %v985
  %v991 = vadd.f32 %v971, %v987
  %v992 = vtanh.pop %v990
  %v993 = vtanh.pop %v991
  %996 = vrot.lane.b32.xlu0 %v992, 32
  %v997 = vpop.permute.xlu0 %996
  %998 = vrot.lane.b32.xlu0 %v993, 32
  %v999 = vpop.permute.xlu0 %998
  %v1002 = vmul.f32 %v959, %v997
  %v1003 = vmul.f32 %v961, %v999
  %v1004 = vpack.c.bf16 %v1002, %v1002
  %v1005 = vpack.c.bf16 %v1003, %v1003
  %v1008 = vunpack.c.l.b16 %v1004
  %v1009 = vunpack.c.l.b16 %v1005
  %v1010 = vpack.c.b16 %v1008, %v1008
  %v1011 = vpack.c.b16 %v1009, %v1009
  %1012 = vrot.lane.b32.xlu0 %v1010, 80
  %v1013 = vpop.permute.xlu0 %1012
  %1014 = vrot.lane.b32.xlu0 %v1011, 80
  %v1015 = vpop.permute.xlu0 %1014
  %vm1018 = vsmask.f32 7942
  %vm1019 = vmand %vm744, %vm1018
  %v1020 = vld [vmem:[%s4] sm:$0x2]
  %v1021 = vsel %vm1019, %v1013, %v1020
  %1022 = vst [vmem:[%s4] sm:$0x2] %v1021
  %v1023 = vld [vmem:[%s4 + $0x4] sm:$0x2]
  %v1024 = vsel %vm1019, %v1015, %v1023
  %1025 = vst [vmem:[%s4 + $0x4] sm:$0x2] %v1024
  %v1026 = vld [vmem:[%s39] sm:$0x4]
  %v1027 = vld [vmem:[%s39 + $0x4] sm:$0x4]
  %v1028 = vunpack.c.l.bf16 %v1026
  %v1029 = vunpack.c.l.bf16 %v1027
  %v1030 = vrot.slane %v871, 5
  %v1031 = vrot.slane %v872, 4
  %v1032 = vsel %vm351, %v1031, %v1030
  %v1033 = vpack.c.b16 %v1032, %v1032
  %1034 = vrot.lane.b32.xlu0 %v1033, 80
  %v1035 = vpop.permute.xlu0 %1034
  %v1037 = vsel %vm76, %v1035, 0
  %1039 = vmatprep.subr.bf16.mxu0 0
  %1040 = vmatpush1.bf16.msra.mxu0 0
  %1041 = vmatprep.subr.bf16.mxu0 0
  %1042 = vmatpush1.bf16.msra.mxu0 0
  %1043 = vmatprep.subr.bf16.mxu0 0
  %1044 = vmatpush1.bf16.msra.mxu0 0
  %1045 = vmatprep.subr.bf16.mxu0 0
  %1046 = vmatpush1.bf16.msra.mxu0 0
  %1047 = vmatprep.subr.bf16.mxu0 0
  %1048 = vmatpush1.bf16.msra.mxu0 0
  %1049 = vmatprep.subr.bf16.mxu0 0
  %1050 = vmatpush1.bf16.msra.mxu0 0
  %1051 = vmatprep.subr.bf16.mxu0 0
  %1052 = vmatpush1.bf16.msra.mxu0 0
  %1053 = vmatprep.subr.bf16.mxu0 0
  %1054 = vmatpush1.bf16.msra.mxu0 %v214
  %1055 = vmatprep.subr.bf16.mxu0 0
  %1056 = vmatpush2.bf16.msra.mxu0 0
  %1057 = vmatprep.subr.bf16.mxu0 0
  %1058 = vmatpush2.bf16.msra.mxu0 0
  %1059 = vmatprep.subr.bf16.mxu0 0
  %1060 = vmatpush2.bf16.msra.mxu0 0
  %1061 = vmatprep.subr.bf16.mxu0 0
  %1062 = vmatpush2.bf16.msra.mxu0 0
  %1063 = vmatprep.subr.bf16.mxu0 0
  %1064 = vmatpush2.bf16.msra.mxu0 0
  %1065 = vmatprep.subr.bf16.mxu0 0
  %1066 = vmatpush2.bf16.msra.mxu0 0
  %1067 = vmatprep.subr.bf16.mxu0 0
  %1068 = vmatpush2.bf16.msra.mxu0 0
  %1069 = vmatprep.subr.bf16.mxu0 0
  %1070 = vmatpush2.bf16.msra.mxu0 0
  %1071 = vmatprep.mubr.bf16.mxu0 0
  %1072 = vmatmul.mubr.bf16.gmra.mxu0 %v1037
  %v1073 = vpop.f32.mrf.mxu0
  %v1074 = vadd.f32 0.0, %v1073
  %v1075 = vpop.f32.mrf.mxu0
  %v1076 = vpop.f32.mrf.mxu0
  %v1077 = vpop.f32.mrf.mxu0
  %1078 = vdwg.mxu0
  %v1080 = vrot.slane %v1074, 4
  %v1081 = vrot.slane %v1074, 5
  %v1084 = vadd.f32 %v1028, %v1080
  %v1085 = vadd.f32 %v1029, %v1081
  %v1086 = vxor.u32 %v1084, 2147483648
  %v1087 = vxor.u32 %v1085, 2147483648
  %v1088 = vmul.f32 %v1086, 1.442695
  %v1089 = vpow.pop %v1088
  %v1090 = vmul.f32 %v1087, 1.442695
  %v1091 = vpow.pop %v1090
  %v1092 = vadd.f32 %v1089, 1.0
  %v1093 = vadd.f32 %v1091, 1.0
  %v1094 = vrcp.pop %v1092
  %v1095 = vmul.f32 1.0, %v1094
  %v1096 = vrcp.pop %v1093
  %v1097 = vmul.f32 1.0, %v1096
  %v1098 = vtanh.pop %v1084
  %v1099 = vtanh.pop %v1085
  %v1102 = vrot.slane %v853, 1
  %v1103 = vrot.slane %v854, 1
  %v1106 = vmul.f32 %v1095, %v1102
  %v1107 = vmul.f32 %v1097, %v1103
  %1110 = vrot.lane.b32.xlu0 %v1098, 96
  %v1111 = vpop.permute.xlu0 %1110
  %1112 = vrot.lane.b32.xlu0 %v1099, 96
  %v1113 = vpop.permute.xlu0 %1112
  %v1116 = vmul.f32 %v1095, %v1111
  %v1117 = vmul.f32 %v1097, %v1113
  %1120 = vrot.lane.b32.xlu0 %v1116, 16
  %v1121 = vpop.permute.xlu0 %1120
  %1122 = vrot.lane.b32.xlu0 %v1117, 16
  %v1123 = vpop.permute.xlu0 %1122
  %v1126 = vadd.f32 %v1106, %v1121
  %v1127 = vadd.f32 %v1107, %v1123
  %v1128 = vtanh.pop %v1126
  %v1129 = vtanh.pop %v1127
  %1132 = vrot.lane.b32.xlu0 %v1128, 32
  %v1133 = vpop.permute.xlu0 %1132
  %1134 = vrot.lane.b32.xlu0 %v1129, 32
  %v1135 = vpop.permute.xlu0 %1134
  %v1138 = vmul.f32 %v1095, %v1133
  %v1139 = vmul.f32 %v1097, %v1135
  %v1140 = vpack.c.bf16 %v1138, %v1138
  %v1141 = vpack.c.bf16 %v1139, %v1139
  %v1144 = vunpack.c.l.b16 %v1140
  %v1145 = vunpack.c.l.b16 %v1141
  %v1146 = vpack.c.b16 %v1144, %v1144
  %v1147 = vpack.c.b16 %v1145, %v1145
  %1148 = vrot.lane.b32.xlu0 %v1146, 80
  %v1149 = vpop.permute.xlu0 %1148
  %1150 = vrot.lane.b32.xlu0 %v1147, 80
  %v1151 = vpop.permute.xlu0 %1150
  %vm1154 = vsmask.f32 2304
  %vm1155 = vmand %vm881, %vm1154
  %v1156 = vld [vmem:[%s45] sm:$0x4]
  %v1157 = vsel %vm1155, %v1149, %v1156
  %1158 = vst [vmem:[%s45] sm:$0x4] %v1157
  %v1159 = vld [vmem:[%s45 + $0x4] sm:$0x4]
  %v1160 = vsel %vm1155, %v1151, %v1159
  %1161 = vst [vmem:[%s45 + $0x4] sm:$0x4] %v1160
  %v1162 = vld [vmem:[%s0] sm:$0x4]
  %v1163 = vld [vmem:[%s0 + $0x4] sm:$0x4]
  %v1164 = vunpack.c.l.bf16 %v1162
  %v1165 = vunpack.c.l.bf16 %v1163
  %v1166 = vrot.slane %v1008, 3
  %v1167 = vrot.slane %v1009, 2
  %v1168 = vsel %vm351, %v1167, %v1166
  %v1169 = vpack.c.b16 %v1168, %v1168
  %1170 = vrot.lane.b32.xlu0 %v1169, 80
  %v1171 = vpop.permute.xlu0 %1170
  %v1173 = vsel %vm76, %v1171, 0
  %1175 = vmatprep.subr.bf16.mxu0 0
  %1176 = vmatpush1.bf16.msra.mxu0 0
  %1177 = vmatprep.subr.bf16.mxu0 0
  %1178 = vmatpush1.bf16.msra.mxu0 0
  %1179 = vmatprep.subr.bf16.mxu0 0
  %1180 = vmatpush1.bf16.msra.mxu0 0
  %1181 = vmatprep.subr.bf16.mxu0 0
  %1182 = vmatpush1.bf16.msra.mxu0 0
  %1183 = vmatprep.subr.bf16.mxu0 0
  %1184 = vmatpush1.bf16.msra.mxu0 0
  %1185 = vmatprep.subr.bf16.mxu0 0
  %1186 = vmatpush1.bf16.msra.mxu0 0
  %1187 = vmatprep.subr.bf16.mxu0 0
  %1188 = vmatpush1.bf16.msra.mxu0 0
  %1189 = vmatprep.subr.bf16.mxu0 0
  %1190 = vmatpush1.bf16.msra.mxu0 %v74
  %1191 = vmatprep.subr.bf16.mxu0 0
  %1192 = vmatpush2.bf16.msra.mxu0 0
  %1193 = vmatprep.subr.bf16.mxu0 0
  %1194 = vmatpush2.bf16.msra.mxu0 0
  %1195 = vmatprep.subr.bf16.mxu0 0
  %1196 = vmatpush2.bf16.msra.mxu0 0
  %1197 = vmatprep.subr.bf16.mxu0 0
  %1198 = vmatpush2.bf16.msra.mxu0 0
  %1199 = vmatprep.subr.bf16.mxu0 0
  %1200 = vmatpush2.bf16.msra.mxu0 0
  %1201 = vmatprep.subr.bf16.mxu0 0
  %1202 = vmatpush2.bf16.msra.mxu0 0
  %1203 = vmatprep.subr.bf16.mxu0 0
  %1204 = vmatpush2.bf16.msra.mxu0 0
  %1205 = vmatprep.subr.bf16.mxu0 0
  %1206 = vmatpush2.bf16.msra.mxu0 0
  %1207 = vmatprep.mubr.bf16.mxu0 0
  %1208 = vmatmul.mubr.bf16.gmra.mxu0 %v1173
  %v1209 = vpop.f32.mrf.mxu0
  %v1210 = vadd.f32 0.0, %v1209
  %v1211 = vpop.f32.mrf.mxu0
  %v1212 = vpop.f32.mrf.mxu0
  %v1213 = vpop.f32.mrf.mxu0
  %1214 = vdwg.mxu0
  %v1216 = vrot.slane %v1210, 4
  %v1217 = vrot.slane %v1210, 5
  %v1220 = vadd.f32 %v1164, %v1216
  %v1221 = vadd.f32 %v1165, %v1217
  %v1222 = vxor.u32 %v1220, 2147483648
  %v1223 = vxor.u32 %v1221, 2147483648
  %v1224 = vmul.f32 %v1222, 1.442695
  %v1225 = vpow.pop %v1224
  %v1226 = vmul.f32 %v1223, 1.442695
  %v1227 = vpow.pop %v1226
  %v1228 = vadd.f32 %v1225, 1.0
  %v1229 = vadd.f32 %v1227, 1.0
  %v1230 = vrcp.pop %v1228
  %v1231 = vmul.f32 1.0, %v1230
  %v1232 = vrcp.pop %v1229
  %v1233 = vmul.f32 1.0, %v1232
  %v1234 = vtanh.pop %v1220
  %v1235 = vtanh.pop %v1221
  %v1238 = vrot.slane %v990, 7
  %v1239 = vrot.slane %v991, 7
  %v1242 = vmul.f32 %v1231, %v1238
  %v1243 = vmul.f32 %v1233, %v1239
  %1246 = vrot.lane.b32.xlu0 %v1234, 96
  %v1247 = vpop.permute.xlu0 %1246
  %1248 = vrot.lane.b32.xlu0 %v1235, 96
  %v1249 = vpop.permute.xlu0 %1248
  %v1252 = vmul.f32 %v1231, %v1247
  %v1253 = vmul.f32 %v1233, %v1249
  %1256 = vrot.lane.b32.xlu0 %v1252, 16
  %v1257 = vpop.permute.xlu0 %1256
  %1258 = vrot.lane.b32.xlu0 %v1253, 16
  %v1259 = vpop.permute.xlu0 %1258
  %v1262 = vadd.f32 %v1242, %v1257
  %v1263 = vadd.f32 %v1243, %v1259
  %v1264 = vtanh.pop %v1262
  %v1265 = vtanh.pop %v1263
  %1268 = vrot.lane.b32.xlu0 %v1264, 32
  %v1269 = vpop.permute.xlu0 %1268
  %1270 = vrot.lane.b32.xlu0 %v1265, 32
  %v1271 = vpop.permute.xlu0 %1270
  %v1274 = vmul.f32 %v1231, %v1269
  %v1275 = vmul.f32 %v1233, %v1271
  %v1276 = vpack.c.bf16 %v1274, %v1274
  %v1277 = vpack.c.bf16 %v1275, %v1275
  %v1280 = vunpack.c.l.b16 %v1276
  %v1281 = vunpack.c.l.b16 %v1277
  %v1282 = vpack.c.b16 %v1280, %v1280
  %v1283 = vpack.c.b16 %v1281, %v1281
  %1284 = vrot.lane.b32.xlu0 %v1282, 80
  %v1285 = vpop.permute.xlu0 %1284
  %1286 = vrot.lane.b32.xlu0 %v1283, 80
  %v1287 = vpop.permute.xlu0 %1286
  %v1290 = vld [vmem:[%s4] sm:$0x4]
  %v1291 = vsel %vm1155, %v1285, %v1290
  %1292 = vst [vmem:[%s4] sm:$0x4] %v1291
  %v1293 = vld [vmem:[%s4 + $0x4] sm:$0x4]
  %v1294 = vsel %vm1155, %v1287, %v1293
  %1295 = vst [vmem:[%s4 + $0x4] sm:$0x4] %v1294
  %v1296 = vld [vmem:[%s39] sm:$0x2]
  %v1297 = vld [vmem:[%s39 + $0x4] sm:$0x2]
  %v1298 = vunpack.c.l.bf16 %v1296
  %v1299 = vunpack.c.l.bf16 %v1297
  %v1300 = vrot.slane %v1144, 4
  %v1301 = vrot.slane %v1145, 3
  %v1302 = vsel %vm351, %v1301, %v1300
  %v1303 = vpack.c.b16 %v1302, %v1302
  %1304 = vrot.lane.b32.xlu0 %v1303, 80
  %v1305 = vpop.permute.xlu0 %1304
  %v1307 = vsel %vm76, %v1305, 0
  %1309 = vmatprep.subr.bf16.mxu0 0
  %1310 = vmatpush1.bf16.msra.mxu0 0
  %1311 = vmatprep.subr.bf16.mxu0 0
  %1312 = vmatpush1.bf16.msra.mxu0 0
  %1313 = vmatprep.subr.bf16.mxu0 0
  %1314 = vmatpush1.bf16.msra.mxu0 0
  %1315 = vmatprep.subr.bf16.mxu0 0
  %1316 = vmatpush1.bf16.msra.mxu0 0
  %1317 = vmatprep.subr.bf16.mxu0 0
  %1318 = vmatpush1.bf16.msra.mxu0 0
  %1319 = vmatprep.subr.bf16.mxu0 0
  %1320 = vmatpush1.bf16.msra.mxu0 0
  %1321 = vmatprep.subr.bf16.mxu0 0
  %1322 = vmatpush1.bf16.msra.mxu0 0
  %1323 = vmatprep.subr.bf16.mxu0 0
  %1324 = vmatpush1.bf16.msra.mxu0 %v214
  %1325 = vmatprep.subr.bf16.mxu0 0
  %1326 = vmatpush2.bf16.msra.mxu0 0
  %1327 = vmatprep.subr.bf16.mxu0 0
  %1328 = vmatpush2.bf16.msra.mxu0 0
  %1329 = vmatprep.subr.bf16.mxu0 0
  %1330 = vmatpush2.bf16.msra.mxu0 0
  %1331 = vmatprep.subr.bf16.mxu0 0
  %1332 = vmatpush2.bf16.msra.mxu0 0
  %1333 = vmatprep.subr.bf16.mxu0 0
  %1334 = vmatpush2.bf16.msra.mxu0 0
  %1335 = vmatprep.subr.bf16.mxu0 0
  %1336 = vmatpush2.bf16.msra.mxu0 0
  %1337 = vmatprep.subr.bf16.mxu0 0
  %1338 = vmatpush2.bf16.msra.mxu0 0
  %1339 = vmatprep.subr.bf16.mxu0 0
  %1340 = vmatpush2.bf16.msra.mxu0 0
  %1341 = vmatprep.mubr.bf16.mxu0 0
  %1342 = vmatmul.mubr.bf16.gmra.mxu0 %v1307
  %v1343 = vpop.f32.mrf.mxu0
  %v1344 = vadd.f32 0.0, %v1343
  %v1345 = vpop.f32.mrf.mxu0
  %v1346 = vpop.f32.mrf.mxu0
  %v1347 = vpop.f32.mrf.mxu0
  %1348 = vdwg.mxu0
  %v1350 = vrot.slane %v1344, 5
  %v1351 = vrot.slane %v1344, 6
  %v1354 = vadd.f32 %v1298, %v1350
  %v1355 = vadd.f32 %v1299, %v1351
  %v1356 = vxor.u32 %v1354, 2147483648
  %v1357 = vxor.u32 %v1355, 2147483648
  %v1358 = vmul.f32 %v1356, 1.442695
  %v1359 = vpow.pop %v1358
  %v1360 = vmul.f32 %v1357, 1.442695
  %v1361 = vpow.pop %v1360
  %v1362 = vadd.f32 %v1359, 1.0
  %v1363 = vadd.f32 %v1361, 1.0
  %v1364 = vrcp.pop %v1362
  %v1365 = vmul.f32 1.0, %v1364
  %v1366 = vrcp.pop %v1363
  %v1367 = vmul.f32 1.0, %v1366
  %v1368 = vtanh.pop %v1354
  %v1369 = vtanh.pop %v1355
  %v1372 = vrot.slane %v1126, 1
  %v1373 = vrot.slane %v1127, 1
  %v1376 = vmul.f32 %v1365, %v1372
  %v1377 = vmul.f32 %v1367, %v1373
  %1380 = vrot.lane.b32.xlu0 %v1368, 96
  %v1381 = vpop.permute.xlu0 %1380
  %1382 = vrot.lane.b32.xlu0 %v1369, 96
  %v1383 = vpop.permute.xlu0 %1382
  %v1386 = vmul.f32 %v1365, %v1381
  %v1387 = vmul.f32 %v1367, %v1383
  %1390 = vrot.lane.b32.xlu0 %v1386, 16
  %v1391 = vpop.permute.xlu0 %1390
  %1392 = vrot.lane.b32.xlu0 %v1387, 16
  %v1393 = vpop.permute.xlu0 %1392
  %v1396 = vadd.f32 %v1376, %v1391
  %v1397 = vadd.f32 %v1377, %v1393
  %v1398 = vtanh.pop %v1396
  %v1399 = vtanh.pop %v1397
  %1402 = vrot.lane.b32.xlu0 %v1398, 32
  %v1403 = vpop.permute.xlu0 %1402
  %1404 = vrot.lane.b32.xlu0 %v1399, 32
  %v1405 = vpop.permute.xlu0 %1404
  %v1408 = vmul.f32 %v1365, %v1403
  %v1409 = vmul.f32 %v1367, %v1405
  %v1410 = vpack.c.bf16 %v1408, %v1408
  %v1411 = vpack.c.bf16 %v1409, %v1409
  %v1414 = vunpack.c.l.b16 %v1410
  %v1415 = vunpack.c.l.b16 %v1411
  %v1416 = vpack.c.b16 %v1414, %v1414
  %v1417 = vpack.c.b16 %v1415, %v1415
  %1418 = vrot.lane.b32.xlu0 %v1416, 80
  %v1419 = vpop.permute.xlu0 %1418
  %1420 = vrot.lane.b32.xlu0 %v1417, 80
  %v1421 = vpop.permute.xlu0 %1420
  %v1424 = vld [vmem:[%s45] sm:$0x2]
  %v1425 = vsel %vm1019, %v1419, %v1424
  %1426 = vst [vmem:[%s45] sm:$0x2] %v1425
  %v1427 = vld [vmem:[%s45 + $0x4] sm:$0x2]
  %v1428 = vsel %vm1019, %v1421, %v1427
  %1429 = vst [vmem:[%s45 + $0x4] sm:$0x2] %v1428
  %v1430 = vld [vmem:[%s0] sm:$0x4]
  %v1431 = vld [vmem:[%s0 + $0x4] sm:$0x4]
  %v1432 = vunpack.c.l.bf16 %v1430
  %v1433 = vunpack.c.l.bf16 %v1431
  %v1434 = vrot.slane %v1280, 4
  %v1435 = vrot.slane %v1281, 3
  %v1436 = vsel %vm351, %v1435, %v1434
  %v1437 = vpack.c.b16 %v1436, %v1436
  %1438 = vrot.lane.b32.xlu0 %v1437, 80
  %v1439 = vpop.permute.xlu0 %1438
  %v1441 = vsel %vm76, %v1439, 0
  %1443 = vmatprep.subr.bf16.mxu0 0
  %1444 = vmatpush1.bf16.msra.mxu0 0
  %1445 = vmatprep.subr.bf16.mxu0 0
  %1446 = vmatpush1.bf16.msra.mxu0 0
  %1447 = vmatprep.subr.bf16.mxu0 0
  %1448 = vmatpush1.bf16.msra.mxu0 0
  %1449 = vmatprep.subr.bf16.mxu0 0
  %1450 = vmatpush1.bf16.msra.mxu0 0
  %1451 = vmatprep.subr.bf16.mxu0 0
  %1452 = vmatpush1.bf16.msra.mxu0 0
  %1453 = vmatprep.subr.bf16.mxu0 0
  %1454 = vmatpush1.bf16.msra.mxu0 0
  %1455 = vmatprep.subr.bf16.mxu0 0
  %1456 = vmatpush1.bf16.msra.mxu0 0
  %1457 = vmatprep.subr.bf16.mxu0 0
  %1458 = vmatpush1.bf16.msra.mxu0 %v74
  %1459 = vmatprep.subr.bf16.mxu0 0
  %1460 = vmatpush2.bf16.msra.mxu0 0
  %1461 = vmatprep.subr.bf16.mxu0 0
  %1462 = vmatpush2.bf16.msra.mxu0 0
  %1463 = vmatprep.subr.bf16.mxu0 0
  %1464 = vmatpush2.bf16.msra.mxu0 0
  %1465 = vmatprep.subr.bf16.mxu0 0
  %1466 = vmatpush2.bf16.msra.mxu0 0
  %1467 = vmatprep.subr.bf16.mxu0 0
  %1468 = vmatpush2.bf16.msra.mxu0 0
  %1469 = vmatprep.subr.bf16.mxu0 0
  %1470 = vmatpush2.bf16.msra.mxu0 0
  %1471 = vmatprep.subr.bf16.mxu0 0
  %1472 = vmatpush2.bf16.msra.mxu0 0
  %1473 = vmatprep.subr.bf16.mxu0 0
  %1474 = vmatpush2.bf16.msra.mxu0 0
  %1475 = vmatprep.mubr.bf16.mxu0 0
  %1476 = vmatmul.mubr.bf16.gmra.mxu0 %v1441
  %v1477 = vpop.f32.mrf.mxu0
  %v1478 = vadd.f32 0.0, %v1477
  %v1479 = vpop.f32.mrf.mxu0
  %v1480 = vpop.f32.mrf.mxu0
  %v1481 = vpop.f32.mrf.mxu0
  %1482 = vdwg.mxu0
  %v1484 = vrot.slane %v1478, 3
  %v1485 = vrot.slane %v1478, 4
  %v1488 = vadd.f32 %v1432, %v1484
  %v1489 = vadd.f32 %v1433, %v1485
  %v1490 = vxor.u32 %v1488, 2147483648
  %v1491 = vxor.u32 %v1489, 2147483648
  %v1492 = vmul.f32 %v1490, 1.442695
  %v1493 = vpow.pop %v1492
  %v1494 = vmul.f32 %v1491, 1.442695
  %v1495 = vpow.pop %v1494
  %v1496 = vadd.f32 %v1493, 1.0
  %v1497 = vadd.f32 %v1495, 1.0
  %v1498 = vrcp.pop %v1496
  %v1499 = vmul.f32 1.0, %v1498
  %v1500 = vrcp.pop %v1497
  %v1501 = vmul.f32 1.0, %v1500
  %v1502 = vtanh.pop %v1488
  %v1503 = vtanh.pop %v1489
  %v1506 = vrot.slane %v1262, 7
  %v1507 = vrot.slane %v1263, 7
  %v1510 = vmul.f32 %v1499, %v1506
  %v1511 = vmul.f32 %v1501, %v1507
  %1514 = vrot.lane.b32.xlu0 %v1502, 96
  %v1515 = vpop.permute.xlu0 %1514
  %1516 = vrot.lane.b32.xlu0 %v1503, 96
  %v1517 = vpop.permute.xlu0 %1516
  %v1520 = vmul.f32 %v1499, %v1515
  %v1521 = vmul.f32 %v1501, %v1517
  %1524 = vrot.lane.b32.xlu0 %v1520, 16
  %v1525 = vpop.permute.xlu0 %1524
  %1526 = vrot.lane.b32.xlu0 %v1521, 16
  %v1527 = vpop.permute.xlu0 %1526
  %v1530 = vadd.f32 %v1510, %v1525
  %v1531 = vadd.f32 %v1511, %v1527
  %v1532 = vtanh.pop %v1530
  %v1533 = vtanh.pop %v1531
  %1536 = vrot.lane.b32.xlu0 %v1532, 32
  %v1537 = vpop.permute.xlu0 %1536
  %1538 = vrot.lane.b32.xlu0 %v1533, 32
  %v1539 = vpop.permute.xlu0 %1538
  %v1542 = vmul.f32 %v1499, %v1537
  %v1543 = vmul.f32 %v1501, %v1539
  %v1544 = vpack.c.bf16 %v1542, %v1542
  %v1545 = vpack.c.bf16 %v1543, %v1543
  %v1548 = vunpack.c.l.b16 %v1544
  %v1549 = vunpack.c.l.b16 %v1545
  %v1550 = vpack.c.b16 %v1548, %v1548
  %v1551 = vpack.c.b16 %v1549, %v1549
  %1552 = vrot.lane.b32.xlu0 %v1550, 80
  %v1553 = vpop.permute.xlu0 %1552
  %1554 = vrot.lane.b32.xlu0 %v1551, 80
  %v1555 = vpop.permute.xlu0 %1554
  %v1558 = vld [vmem:[%s4] sm:$0x4]
  %v1559 = vsel %vm883, %v1553, %v1558
  %1560 = vst [vmem:[%s4] sm:$0x4] %v1559
  %v1561 = vld [vmem:[%s4 + $0x4] sm:$0x4]
  %v1562 = vsel %vm883, %v1555, %v1561
  %1563 = vst [vmem:[%s4 + $0x4] sm:$0x4] %v1562
  %v1564 = vld [vmem:[%s39] sm:$0x2]
  %v1565 = vld [vmem:[%s39 + $0x4] sm:$0x2]
  %v1566 = vunpack.c.l.bf16 %v1564
  %v1567 = vunpack.c.l.bf16 %v1565
  %v1568 = vrot.slane %v1414, 3
  %v1569 = vrot.slane %v1415, 2
  %v1570 = vsel %vm351, %v1569, %v1568
  %v1571 = vpack.c.b16 %v1570, %v1570
  %1572 = vrot.lane.b32.xlu0 %v1571, 80
  %v1573 = vpop.permute.xlu0 %1572
  %v1575 = vsel %vm76, %v1573, 0
  %1577 = vmatprep.subr.bf16.mxu0 0
  %1578 = vmatpush1.bf16.msra.mxu0 0
  %1579 = vmatprep.subr.bf16.mxu0 0
  %1580 = vmatpush1.bf16.msra.mxu0 0
  %1581 = vmatprep.subr.bf16.mxu0 0
  %1582 = vmatpush1.bf16.msra.mxu0 0
  %1583 = vmatprep.subr.bf16.mxu0 0
  %1584 = vmatpush1.bf16.msra.mxu0 0
  %1585 = vmatprep.subr.bf16.mxu0 0
  %1586 = vmatpush1.bf16.msra.mxu0 0
  %1587 = vmatprep.subr.bf16.mxu0 0
  %1588 = vmatpush1.bf16.msra.mxu0 0
  %1589 = vmatprep.subr.bf16.mxu0 0
  %1590 = vmatpush1.bf16.msra.mxu0 0
  %1591 = vmatprep.subr.bf16.mxu0 0
  %1592 = vmatpush1.bf16.msra.mxu0 %v214
  %1593 = vmatprep.subr.bf16.mxu0 0
  %1594 = vmatpush2.bf16.msra.mxu0 0
  %1595 = vmatprep.subr.bf16.mxu0 0
  %1596 = vmatpush2.bf16.msra.mxu0 0
  %1597 = vmatprep.subr.bf16.mxu0 0
  %1598 = vmatpush2.bf16.msra.mxu0 0
  %1599 = vmatprep.subr.bf16.mxu0 0
  %1600 = vmatpush2.bf16.msra.mxu0 0
  %1601 = vmatprep.subr.bf16.mxu0 0
  %1602 = vmatpush2.bf16.msra.mxu0 0
  %1603 = vmatprep.subr.bf16.mxu0 0
  %1604 = vmatpush2.bf16.msra.mxu0 0
  %1605 = vmatprep.subr.bf16.mxu0 0
  %1606 = vmatpush2.bf16.msra.mxu0 0
  %1607 = vmatprep.subr.bf16.mxu0 0
  %1608 = vmatpush2.bf16.msra.mxu0 0
  %1609 = vmatprep.mubr.bf16.mxu0 0
  %1610 = vmatmul.mubr.bf16.gmra.mxu0 %v1575
  %v1611 = vpop.f32.mrf.mxu0
  %v1612 = vadd.f32 0.0, %v1611
  %v1613 = vpop.f32.mrf.mxu0
  %v1614 = vpop.f32.mrf.mxu0
  %v1615 = vpop.f32.mrf.mxu0
  %1616 = vdwg.mxu0
  %v1618 = vrot.slane %v1612, 6
  %v1619 = vrot.slane %v1612, 7
  %v1622 = vadd.f32 %v1566, %v1618
  %v1623 = vadd.f32 %v1567, %v1619
  %v1624 = vxor.u32 %v1622, 2147483648
  %v1625 = vxor.u32 %v1623, 2147483648
  %v1626 = vmul.f32 %v1624, 1.442695
  %v1627 = vpow.pop %v1626
  %v1628 = vmul.f32 %v1625, 1.442695
  %v1629 = vpow.pop %v1628
  %v1630 = vadd.f32 %v1627, 1.0
  %v1631 = vadd.f32 %v1629, 1.0
  %v1632 = vrcp.pop %v1630
  %v1633 = vmul.f32 1.0, %v1632
  %v1634 = vrcp.pop %v1631
  %v1635 = vmul.f32 1.0, %v1634
  %v1636 = vtanh.pop %v1622
  %v1637 = vtanh.pop %v1623
  %v1640 = vrot.slane %v1396, 1
  %v1641 = vrot.slane %v1397, 1
  %v1644 = vmul.f32 %v1633, %v1640
  %v1645 = vmul.f32 %v1635, %v1641
  %1648 = vrot.lane.b32.xlu0 %v1636, 96
  %v1649 = vpop.permute.xlu0 %1648
  %1650 = vrot.lane.b32.xlu0 %v1637, 96
  %v1651 = vpop.permute.xlu0 %1650
  %v1654 = vmul.f32 %v1633, %v1649
  %v1655 = vmul.f32 %v1635, %v1651
  %1658 = vrot.lane.b32.xlu0 %v1654, 16
  %v1659 = vpop.permute.xlu0 %1658
  %1660 = vrot.lane.b32.xlu0 %v1655, 16
  %v1661 = vpop.permute.xlu0 %1660
  %v1664 = vadd.f32 %v1644, %v1659
  %v1665 = vadd.f32 %v1645, %v1661
  %v1666 = vtanh.pop %v1664
  %v1667 = vtanh.pop %v1665
  %1670 = vrot.lane.b32.xlu0 %v1666, 32
  %v1671 = vpop.permute.xlu0 %1670
  %1672 = vrot.lane.b32.xlu0 %v1667, 32
  %v1673 = vpop.permute.xlu0 %1672
  %v1676 = vmul.f32 %v1633, %v1671
  %v1677 = vmul.f32 %v1635, %v1673
  %v1678 = vpack.c.bf16 %v1676, %v1676
  %v1679 = vpack.c.bf16 %v1677, %v1677
  %v1682 = vunpack.c.l.b16 %v1678
  %v1683 = vunpack.c.l.b16 %v1679
  %v1684 = vpack.c.b16 %v1682, %v1682
  %v1685 = vpack.c.b16 %v1683, %v1683
  %1686 = vrot.lane.b32.xlu0 %v1684, 80
  %v1687 = vpop.permute.xlu0 %1686
  %1688 = vrot.lane.b32.xlu0 %v1685, 80
  %v1689 = vpop.permute.xlu0 %1688
  %v1692 = vld [vmem:[%s45] sm:$0x2]
  %v1693 = vsel %vm746, %v1687, %v1692
  %1694 = vst [vmem:[%s45] sm:$0x2] %v1693
  %v1695 = vld [vmem:[%s45 + $0x4] sm:$0x2]
  %v1696 = vsel %vm746, %v1689, %v1695
  %1697 = vst [vmem:[%s45 + $0x4] sm:$0x2] %v1696
  %v1698 = vld [vmem:[%s0] sm:$0x8]
  %v1699 = vld [vmem:[%s0 + $0x4] sm:$0x8]
  %v1700 = vunpack.c.l.bf16 %v1698
  %v1701 = vunpack.c.l.bf16 %v1699
  %v1702 = vrot.slane %v1548, 5
  %v1703 = vrot.slane %v1549, 4
  %v1704 = vsel %vm351, %v1703, %v1702
  %v1705 = vpack.c.b16 %v1704, %v1704
  %1706 = vrot.lane.b32.xlu0 %v1705, 80
  %v1707 = vpop.permute.xlu0 %1706
  %v1709 = vsel %vm76, %v1707, 0
  %1711 = vmatprep.subr.bf16.mxu0 0
  %1712 = vmatpush1.bf16.msra.mxu0 0
  %1713 = vmatprep.subr.bf16.mxu0 0
  %1714 = vmatpush1.bf16.msra.mxu0 0
  %1715 = vmatprep.subr.bf16.mxu0 0
  %1716 = vmatpush1.bf16.msra.mxu0 0
  %1717 = vmatprep.subr.bf16.mxu0 0
  %1718 = vmatpush1.bf16.msra.mxu0 0
  %1719 = vmatprep.subr.bf16.mxu0 0
  %1720 = vmatpush1.bf16.msra.mxu0 0
  %1721 = vmatprep.subr.bf16.mxu0 0
  %1722 = vmatpush1.bf16.msra.mxu0 0
  %1723 = vmatprep.subr.bf16.mxu0 0
  %1724 = vmatpush1.bf16.msra.mxu0 0
  %1725 = vmatprep.subr.bf16.mxu0 0
  %1726 = vmatpush1.bf16.msra.mxu0 %v74
  %1727 = vmatprep.subr.bf16.mxu0 0
  %1728 = vmatpush2.bf16.msra.mxu0 0
  %1729 = vmatprep.subr.bf16.mxu0 0
  %1730 = vmatpush2.bf16.msra.mxu0 0
  %1731 = vmatprep.subr.bf16.mxu0 0
  %1732 = vmatpush2.bf16.msra.mxu0 0
  %1733 = vmatprep.subr.bf16.mxu0 0
  %1734 = vmatpush2.bf16.msra.mxu0 0
  %1735 = vmatprep.subr.bf16.mxu0 0
  %1736 = vmatpush2.bf16.msra.mxu0 0
  %1737 = vmatprep.subr.bf16.mxu0 0
  %1738 = vmatpush2.bf16.msra.mxu0 0
  %1739 = vmatprep.subr.bf16.mxu0 0
  %1740 = vmatpush2.bf16.msra.mxu0 0
  %1741 = vmatprep.subr.bf16.mxu0 0
  %1742 = vmatpush2.bf16.msra.mxu0 0
  %1743 = vmatprep.mubr.bf16.mxu0 0
  %1744 = vmatmul.mubr.bf16.gmra.mxu0 %v1709
  %v1745 = vpop.f32.mrf.mxu0
  %v1746 = vadd.f32 0.0, %v1745
  %v1747 = vpop.f32.mrf.mxu0
  %v1748 = vpop.f32.mrf.mxu0
  %v1749 = vpop.f32.mrf.mxu0
  %1750 = vdwg.mxu0
  %v1752 = vrot.slane %v1746, 2
  %v1753 = vrot.slane %v1746, 3
  %v1756 = vadd.f32 %v1700, %v1752
  %v1757 = vadd.f32 %v1701, %v1753
  %v1758 = vxor.u32 %v1756, 2147483648
  %v1759 = vxor.u32 %v1757, 2147483648
  %v1760 = vmul.f32 %v1758, 1.442695
  %v1761 = vpow.pop %v1760
  %v1762 = vmul.f32 %v1759, 1.442695
  %v1763 = vpow.pop %v1762
  %v1764 = vadd.f32 %v1761, 1.0
  %v1765 = vadd.f32 %v1763, 1.0
  %v1766 = vrcp.pop %v1764
  %v1767 = vmul.f32 1.0, %v1766
  %v1768 = vrcp.pop %v1765
  %v1769 = vmul.f32 1.0, %v1768
  %v1770 = vtanh.pop %v1756
  %v1771 = vtanh.pop %v1757
  %v1774 = vrot.slane %v1530, 7
  %v1775 = vrot.slane %v1531, 7
  %v1778 = vmul.f32 %v1767, %v1774
  %v1779 = vmul.f32 %v1769, %v1775
  %1782 = vrot.lane.b32.xlu0 %v1770, 96
  %v1783 = vpop.permute.xlu0 %1782
  %1784 = vrot.lane.b32.xlu0 %v1771, 96
  %v1785 = vpop.permute.xlu0 %1784
  %v1788 = vmul.f32 %v1767, %v1783
  %v1789 = vmul.f32 %v1769, %v1785
  %1792 = vrot.lane.b32.xlu0 %v1788, 16
  %v1793 = vpop.permute.xlu0 %1792
  %1794 = vrot.lane.b32.xlu0 %v1789, 16
  %v1795 = vpop.permute.xlu0 %1794
  %v1798 = vadd.f32 %v1778, %v1793
  %v1799 = vadd.f32 %v1779, %v1795
  %v1800 = vtanh.pop %v1798
  %v1801 = vtanh.pop %v1799
  %1804 = vrot.lane.b32.xlu0 %v1800, 32
  %v1805 = vpop.permute.xlu0 %1804
  %1806 = vrot.lane.b32.xlu0 %v1801, 32
  %v1807 = vpop.permute.xlu0 %1806
  %v1810 = vmul.f32 %v1767, %v1805
  %v1811 = vmul.f32 %v1769, %v1807
  %v1812 = vpack.c.bf16 %v1810, %v1810
  %v1813 = vpack.c.bf16 %v1811, %v1811
  %v1816 = vunpack.c.l.b16 %v1812
  %v1817 = vunpack.c.l.b16 %v1813
  %v1818 = vpack.c.b16 %v1816, %v1816
  %v1819 = vpack.c.b16 %v1817, %v1817
  %1820 = vrot.lane.b32.xlu0 %v1818, 80
  %v1821 = vpop.permute.xlu0 %1820
  %1822 = vrot.lane.b32.xlu0 %v1819, 80
  %v1823 = vpop.permute.xlu0 %1822
  %v1826 = vld [vmem:[%s4] sm:$0x8]
  %v1827 = vsel %vm610, %v1821, %v1826
  %1828 = vst [vmem:[%s4] sm:$0x8] %v1827
  %v1829 = vld [vmem:[%s4 + $0x4] sm:$0x8]
  %v1830 = vsel %vm610, %v1823, %v1829
  %1831 = vst [vmem:[%s4 + $0x4] sm:$0x8] %v1830
  %v1832 = vld [vmem:[%s39] sm:$0x1]
  %v1833 = vld [vmem:[%s39 + $0x4] sm:$0x1]
  %v1834 = vunpack.c.l.bf16 %v1832
  %v1835 = vunpack.c.l.bf16 %v1833
  %v1836 = vrot.slane %v1682, 2
  %v1837 = vrot.slane %v1683, 1
  %v1838 = vsel %vm351, %v1837, %v1836
  %v1839 = vpack.c.b16 %v1838, %v1838
  %1840 = vrot.lane.b32.xlu0 %v1839, 80
  %v1841 = vpop.permute.xlu0 %1840
  %v1843 = vsel %vm76, %v1841, 0
  %1845 = vmatprep.subr.bf16.mxu0 0
  %1846 = vmatpush1.bf16.msra.mxu0 0
  %1847 = vmatprep.subr.bf16.mxu0 0
  %1848 = vmatpush1.bf16.msra.mxu0 0
  %1849 = vmatprep.subr.bf16.mxu0 0
  %1850 = vmatpush1.bf16.msra.mxu0 0
  %1851 = vmatprep.subr.bf16.mxu0 0
  %1852 = vmatpush1.bf16.msra.mxu0 0
  %1853 = vmatprep.subr.bf16.mxu0 0
  %1854 = vmatpush1.bf16.msra.mxu0 0
  %1855 = vmatprep.subr.bf16.mxu0 0
  %1856 = vmatpush1.bf16.msra.mxu0 0
  %1857 = vmatprep.subr.bf16.mxu0 0
  %1858 = vmatpush1.bf16.msra.mxu0 0
  %1859 = vmatprep.subr.bf16.mxu0 0
  %1860 = vmatpush1.bf16.msra.mxu0 %v214
  %1861 = vmatprep.subr.bf16.mxu0 0
  %1862 = vmatpush2.bf16.msra.mxu0 0
  %1863 = vmatprep.subr.bf16.mxu0 0
  %1864 = vmatpush2.bf16.msra.mxu0 0
  %1865 = vmatprep.subr.bf16.mxu0 0
  %1866 = vmatpush2.bf16.msra.mxu0 0
  %1867 = vmatprep.subr.bf16.mxu0 0
  %1868 = vmatpush2.bf16.msra.mxu0 0
  %1869 = vmatprep.subr.bf16.mxu0 0
  %1870 = vmatpush2.bf16.msra.mxu0 0
  %1871 = vmatprep.subr.bf16.mxu0 0
  %1872 = vmatpush2.bf16.msra.mxu0 0
  %1873 = vmatprep.subr.bf16.mxu0 0
  %1874 = vmatpush2.bf16.msra.mxu0 0
  %1875 = vmatprep.subr.bf16.mxu0 0
  %1876 = vmatpush2.bf16.msra.mxu0 0
  %1877 = vmatprep.mubr.bf16.mxu0 0
  %1878 = vmatmul.mubr.bf16.gmra.mxu0 %v1843
  %v1879 = vpop.f32.mrf.mxu0
  %v1880 = vadd.f32 0.0, %v1879
  %v1881 = vpop.f32.mrf.mxu0
  %v1882 = vpop.f32.mrf.mxu0
  %v1883 = vpop.f32.mrf.mxu0
  %1884 = vdwg.mxu0
  %v1886 = vrot.slane %v1880, 7
  %v1889 = vadd.f32 %v1834, %v1886
  %v1890 = vadd.f32 %v1835, %v1880
  %v1891 = vxor.u32 %v1889, 2147483648
  %v1892 = vxor.u32 %v1890, 2147483648
  %v1893 = vmul.f32 %v1891, 1.442695
  %v1894 = vpow.pop %v1893
  %v1895 = vmul.f32 %v1892, 1.442695
  %v1896 = vpow.pop %v1895
  %v1897 = vadd.f32 %v1894, 1.0
  %v1898 = vadd.f32 %v1896, 1.0
  %v1899 = vrcp.pop %v1897
  %v1900 = vmul.f32 1.0, %v1899
  %v1901 = vrcp.pop %v1898
  %v1902 = vmul.f32 1.0, %v1901
  %v1903 = vtanh.pop %v1889
  %v1904 = vtanh.pop %v1890
  %v1907 = vrot.slane %v1664, 1
  %v1908 = vrot.slane %v1665, 1
  %v1911 = vmul.f32 %v1900, %v1907
  %v1912 = vmul.f32 %v1902, %v1908
  %1915 = vrot.lane.b32.xlu0 %v1903, 96
  %v1916 = vpop.permute.xlu0 %1915
  %1917 = vrot.lane.b32.xlu0 %v1904, 96
  %v1918 = vpop.permute.xlu0 %1917
  %v1921 = vmul.f32 %v1900, %v1916
  %v1922 = vmul.f32 %v1902, %v1918
  %1925 = vrot.lane.b32.xlu0 %v1921, 16
  %v1926 = vpop.permute.xlu0 %1925
  %1927 = vrot.lane.b32.xlu0 %v1922, 16
  %v1928 = vpop.permute.xlu0 %1927
  %v1931 = vadd.f32 %v1911, %v1926
  %v1932 = vadd.f32 %v1912, %v1928
  %v1933 = vtanh.pop %v1931
  %v1934 = vtanh.pop %v1932
  %1937 = vrot.lane.b32.xlu0 %v1933, 32
  %v1938 = vpop.permute.xlu0 %1937
  %1939 = vrot.lane.b32.xlu0 %v1934, 32
  %v1940 = vpop.permute.xlu0 %1939
  %v1943 = vmul.f32 %v1900, %v1938
  %v1944 = vmul.f32 %v1902, %v1940
  %v1945 = vpack.c.bf16 %v1943, %v1943
  %v1946 = vpack.c.bf16 %v1944, %v1944
  %v1949 = vunpack.c.l.b16 %v1945
  %v1950 = vunpack.c.l.b16 %v1946
  %v1951 = vpack.c.b16 %v1949, %v1949
  %v1952 = vpack.c.b16 %v1950, %v1950
  %1953 = vrot.lane.b32.xlu0 %v1951, 80
  %v1954 = vpop.permute.xlu0 %1953
  %1955 = vrot.lane.b32.xlu0 %v1952, 80
  %v1956 = vpop.permute.xlu0 %1955
  %v1959 = vld [vmem:[%s45] sm:$0x1]
  %v1960 = vsel %vm474, %v1954, %v1959
  %1961 = vst [vmem:[%s45] sm:$0x1] %v1960
  %v1962 = vld [vmem:[%s45 + $0x4] sm:$0x1]
  %v1963 = vsel %vm474, %v1956, %v1962
  %1964 = vst [vmem:[%s45 + $0x4] sm:$0x1] %v1963
  %v1965 = vld [vmem:[%s0] sm:$0x8]
  %v1966 = vld [vmem:[%s0 + $0x4] sm:$0x8]
  %v1967 = vunpack.c.l.bf16 %v1965
  %v1968 = vunpack.c.l.bf16 %v1966
  %v1969 = vrot.slane %v1816, 6
  %v1970 = vrot.slane %v1817, 5
  %v1971 = vsel %vm351, %v1970, %v1969
  %v1972 = vpack.c.b16 %v1971, %v1971
  %1973 = vrot.lane.b32.xlu0 %v1972, 80
  %v1974 = vpop.permute.xlu0 %1973
  %v1976 = vsel %vm76, %v1974, 0
  %1978 = vmatprep.subr.bf16.mxu0 0
  %1979 = vmatpush1.bf16.msra.mxu0 0
  %1980 = vmatprep.subr.bf16.mxu0 0
  %1981 = vmatpush1.bf16.msra.mxu0 0
  %1982 = vmatprep.subr.bf16.mxu0 0
  %1983 = vmatpush1.bf16.msra.mxu0 0
  %1984 = vmatprep.subr.bf16.mxu0 0
  %1985 = vmatpush1.bf16.msra.mxu0 0
  %1986 = vmatprep.subr.bf16.mxu0 0
  %1987 = vmatpush1.bf16.msra.mxu0 0
  %1988 = vmatprep.subr.bf16.mxu0 0
  %1989 = vmatpush1.bf16.msra.mxu0 0
  %1990 = vmatprep.subr.bf16.mxu0 0
  %1991 = vmatpush1.bf16.msra.mxu0 0
  %1992 = vmatprep.subr.bf16.mxu0 0
  %1993 = vmatpush1.bf16.msra.mxu0 %v74
  %1994 = vmatprep.subr.bf16.mxu0 0
  %1995 = vmatpush2.bf16.msra.mxu0 0
  %1996 = vmatprep.subr.bf16.mxu0 0
  %1997 = vmatpush2.bf16.msra.mxu0 0
  %1998 = vmatprep.subr.bf16.mxu0 0
  %1999 = vmatpush2.bf16.msra.mxu0 0
  %2000 = vmatprep.subr.bf16.mxu0 0
  %2001 = vmatpush2.bf16.msra.mxu0 0
  %2002 = vmatprep.subr.bf16.mxu0 0
  %2003 = vmatpush2.bf16.msra.mxu0 0
  %2004 = vmatprep.subr.bf16.mxu0 0
  %2005 = vmatpush2.bf16.msra.mxu0 0
  %2006 = vmatprep.subr.bf16.mxu0 0
  %2007 = vmatpush2.bf16.msra.mxu0 0
  %2008 = vmatprep.subr.bf16.mxu0 0
  %2009 = vmatpush2.bf16.msra.mxu0 0
  %2010 = vmatprep.mubr.bf16.mxu0 0
  %2011 = vmatmul.mubr.bf16.gmra.mxu0 %v1976
  %v2012 = vpop.f32.mrf.mxu0
  %v2013 = vadd.f32 0.0, %v2012
  %v2014 = vpop.f32.mrf.mxu0
  %v2015 = vpop.f32.mrf.mxu0
  %v2016 = vpop.f32.mrf.mxu0
  %2017 = vdwg.mxu0
  %v2019 = vrot.slane %v2013, 1
  %v2020 = vrot.slane %v2013, 2
  %v2023 = vadd.f32 %v1967, %v2019
  %v2024 = vadd.f32 %v1968, %v2020
  %v2025 = vxor.u32 %v2023, 2147483648
  %v2026 = vxor.u32 %v2024, 2147483648
  %v2027 = vmul.f32 %v2025, 1.442695
  %v2028 = vpow.pop %v2027
  %v2029 = vmul.f32 %v2026, 1.442695
  %v2030 = vpow.pop %v2029
  %v2031 = vadd.f32 %v2028, 1.0
  %v2032 = vadd.f32 %v2030, 1.0
  %v2033 = vrcp.pop %v2031
  %v2034 = vmul.f32 1.0, %v2033
  %v2035 = vrcp.pop %v2032
  %v2036 = vmul.f32 1.0, %v2035
  %v2037 = vtanh.pop %v2023
  %v2038 = vtanh.pop %v2024
  %v2041 = vrot.slane %v1798, 7
  %v2042 = vrot.slane %v1799, 7
  %v2045 = vmul.f32 %v2034, %v2041
  %v2046 = vmul.f32 %v2036, %v2042
  %2049 = vrot.lane.b32.xlu0 %v2037, 96
  %v2050 = vpop.permute.xlu0 %2049
  %2051 = vrot.lane.b32.xlu0 %v2038, 96
  %v2052 = vpop.permute.xlu0 %2051
  %v2055 = vmul.f32 %v2034, %v2050
  %v2056 = vmul.f32 %v2036, %v2052
  %2059 = vrot.lane.b32.xlu0 %v2055, 16
  %v2060 = vpop.permute.xlu0 %2059
  %2061 = vrot.lane.b32.xlu0 %v2056, 16
  %v2062 = vpop.permute.xlu0 %2061
  %v2065 = vadd.f32 %v2045, %v2060
  %v2066 = vadd.f32 %v2046, %v2062
  %v2067 = vtanh.pop %v2065
  %v2068 = vtanh.pop %v2066
  %2071 = vrot.lane.b32.xlu0 %v2067, 32
  %v2072 = vpop.permute.xlu0 %2071
  %2073 = vrot.lane.b32.xlu0 %v2068, 32
  %v2074 = vpop.permute.xlu0 %2073
  %v2077 = vmul.f32 %v2034, %v2072
  %v2078 = vmul.f32 %v2036, %v2074
  %v2079 = vpack.c.bf16 %v2077, %v2077
  %v2080 = vpack.c.bf16 %v2078, %v2078
  %v2083 = vunpack.c.l.b16 %v2079
  %v2084 = vunpack.c.l.b16 %v2080
  %v2085 = vpack.c.b16 %v2083, %v2083
  %v2086 = vpack.c.b16 %v2084, %v2084
  %2087 = vrot.lane.b32.xlu0 %v2085, 80
  %v2088 = vpop.permute.xlu0 %2087
  %2089 = vrot.lane.b32.xlu0 %v2086, 80
  %v2090 = vpop.permute.xlu0 %2089
  %v2093 = vld [vmem:[%s4] sm:$0x8]
  %v2094 = vsel %vm339, %v2088, %v2093
  %2095 = vst [vmem:[%s4] sm:$0x8] %v2094
  %v2096 = vld [vmem:[%s4 + $0x4] sm:$0x8]
  %v2097 = vsel %vm339, %v2090, %v2096
  %2098 = vst [vmem:[%s4 + $0x4] sm:$0x8] %v2097
  %v2099 = vld [vmem:[%s39] sm:$0x1]
  %v2100 = vld [vmem:[%s39 + $0x4] sm:$0x1]
  %v2101 = vunpack.c.l.bf16 %v2099
  %v2102 = vunpack.c.l.bf16 %v2100
  %v2103 = vrot.slane %v1949, 1
  %v2104 = vsel %vm351, %v1950, %v2103
  %v2105 = vpack.c.b16 %v2104, %v2104
  %2106 = vrot.lane.b32.xlu0 %v2105, 80
  %v2107 = vpop.permute.xlu0 %2106
  %v2109 = vsel %vm76, %v2107, 0
  %2111 = vmatprep.subr.bf16.mxu0 0
  %2112 = vmatpush1.bf16.msra.mxu0 0
  %2113 = vmatprep.subr.bf16.mxu0 0
  %2114 = vmatpush1.bf16.msra.mxu0 0
  %2115 = vmatprep.subr.bf16.mxu0 0
  %2116 = vmatpush1.bf16.msra.mxu0 0
  %2117 = vmatprep.subr.bf16.mxu0 0
  %2118 = vmatpush1.bf16.msra.mxu0 0
  %2119 = vmatprep.subr.bf16.mxu0 0
  %2120 = vmatpush1.bf16.msra.mxu0 0
  %2121 = vmatprep.subr.bf16.mxu0 0
  %2122 = vmatpush1.bf16.msra.mxu0 0
  %2123 = vmatprep.subr.bf16.mxu0 0
  %2124 = vmatpush1.bf16.msra.mxu0 0
  %2125 = vmatprep.subr.bf16.mxu0 0
  %2126 = vmatpush1.bf16.msra.mxu0 %v214
  %2127 = vmatprep.subr.bf16.mxu0 0
  %2128 = vmatpush2.bf16.msra.mxu0 0
  %2129 = vmatprep.subr.bf16.mxu0 0
  %2130 = vmatpush2.bf16.msra.mxu0 0
  %2131 = vmatprep.subr.bf16.mxu0 0
  %2132 = vmatpush2.bf16.msra.mxu0 0
  %2133 = vmatprep.subr.bf16.mxu0 0
  %2134 = vmatpush2.bf16.msra.mxu0 0
  %2135 = vmatprep.subr.bf16.mxu0 0
  %2136 = vmatpush2.bf16.msra.mxu0 0
  %2137 = vmatprep.subr.bf16.mxu0 0
  %2138 = vmatpush2.bf16.msra.mxu0 0
  %2139 = vmatprep.subr.bf16.mxu0 0
  %2140 = vmatpush2.bf16.msra.mxu0 0
  %2141 = vmatprep.subr.bf16.mxu0 0
  %2142 = vmatpush2.bf16.msra.mxu0 0
  %2143 = vmatprep.mubr.bf16.mxu0 0
  %2144 = vmatmul.mubr.bf16.gmra.mxu0 %v2109
  %v2145 = vpop.f32.mrf.mxu0
  %v2146 = vadd.f32 0.0, %v2145
  %v2147 = vpop.f32.mrf.mxu0
  %v2148 = vpop.f32.mrf.mxu0
  %v2149 = vpop.f32.mrf.mxu0
  %2150 = vdwg.mxu0
  %v2152 = vrot.slane %v2146, 1
  %v2155 = vadd.f32 %v2101, %v2146
  %v2156 = vadd.f32 %v2102, %v2152
  %v2157 = vxor.u32 %v2155, 2147483648
  %v2158 = vxor.u32 %v2156, 2147483648
  %v2159 = vmul.f32 %v2157, 1.442695
  %v2160 = vpow.pop %v2159
  %v2161 = vmul.f32 %v2158, 1.442695
  %v2162 = vpow.pop %v2161
  %v2163 = vadd.f32 %v2160, 1.0
  %v2164 = vadd.f32 %v2162, 1.0
  %v2165 = vrcp.pop %v2163
  %v2166 = vmul.f32 1.0, %v2165
  %v2167 = vrcp.pop %v2164
  %v2168 = vmul.f32 1.0, %v2167
  %v2169 = vtanh.pop %v2155
  %v2170 = vtanh.pop %v2156
  %v2173 = vrot.slane %v1931, 1
  %v2174 = vrot.slane %v1932, 1
  %v2177 = vmul.f32 %v2166, %v2173
  %v2178 = vmul.f32 %v2168, %v2174
  %2181 = vrot.lane.b32.xlu0 %v2169, 96
  %v2182 = vpop.permute.xlu0 %2181
  %2183 = vrot.lane.b32.xlu0 %v2170, 96
  %v2184 = vpop.permute.xlu0 %2183
  %v2187 = vmul.f32 %v2166, %v2182
  %v2188 = vmul.f32 %v2168, %v2184
  %2191 = vrot.lane.b32.xlu0 %v2187, 16
  %v2192 = vpop.permute.xlu0 %2191
  %2193 = vrot.lane.b32.xlu0 %v2188, 16
  %v2194 = vpop.permute.xlu0 %2193
  %v2197 = vadd.f32 %v2177, %v2192
  %v2198 = vadd.f32 %v2178, %v2194
  %v2199 = vtanh.pop %v2197
  %v2200 = vtanh.pop %v2198
  %2203 = vrot.lane.b32.xlu0 %v2199, 32
  %v2204 = vpop.permute.xlu0 %2203
  %2205 = vrot.lane.b32.xlu0 %v2200, 32
  %v2206 = vpop.permute.xlu0 %2205
  %v2209 = vmul.f32 %v2166, %v2204
  %v2210 = vmul.f32 %v2168, %v2206
  %v2211 = vpack.c.bf16 %v2209, %v2209
  %v2212 = vpack.c.bf16 %v2210, %v2210
  %v2215 = vunpack.c.l.b16 %v2211
  %v2216 = vunpack.c.l.b16 %v2212
  %v2217 = vpack.c.b16 %v2215, %v2215
  %v2218 = vpack.c.b16 %v2216, %v2216
  %2219 = vrot.lane.b32.xlu0 %v2217, 80
  %v2220 = vpop.permute.xlu0 %2219
  %2221 = vrot.lane.b32.xlu0 %v2218, 80
  %v2222 = vpop.permute.xlu0 %2221
  %v2225 = vld [vmem:[%s45] sm:$0x1]
  %v2226 = vsel %vm198, %v2220, %v2225
  %2227 = vst [vmem:[%s45] sm:$0x1] %v2226
  %v2228 = vld [vmem:[%s45 + $0x4] sm:$0x1]
  %v2229 = vsel %vm198, %v2222, %v2228
  %2230 = vst [vmem:[%s45 + $0x4] sm:$0x1] %v2229
  %v2233 = vrot.slane %v2078, 7
  %2234 = vrot.lane.b32.xlu0 %v2077, 80
  %v2235 = vpop.permute.xlu0 %2234
  %2236 = vrot.lane.b32.xlu0 %v2233, 80
  %v2237 = vpop.permute.xlu0 %2236
  %vm2240 = vcmask 130055
  %2241 = vst.msk [vmem:[#allocation2 - $0x7] sm:$0x80] %vm2240, %v2235
  %vm2242 = vcmask 122880
  %2243 = vst.msk [vmem:[#allocation2 + $0x1] sm:$0x1] %vm2242, %v2237
  %v2246 = vrot.slane %v2066, 7
  %2247 = vrot.lane.b32.xlu0 %v2065, 112
  %v2248 = vpop.permute.xlu0 %2247
  %2249 = vrot.lane.b32.xlu0 %v2246, 112
  %v2250 = vpop.permute.xlu0 %2249
  %2253 = vst.msk [vmem:[#allocation3 - $0x7] sm:$0x80] %vm2240, %v2248
  %2254 = vst.msk [vmem:[#allocation3 + $0x1] sm:$0x1] %vm2242, %v2250
  %v2257 = vrot.slane %v2210, 7
  %v2258 = vsel %vm351, %v2257, %v2209
  %2259 = vrot.lane.b32.xlu0 %v2258, 80
  %v2260 = vpop.permute.xlu0 %2259
  %vm2262 = vcmask 123904
  %2263 = vst.msk [vmem:[#allocation4] sm:$0x3] %vm2262, %v2260
  %v2266 = vrot.slane %v2198, 7
  %v2267 = vsel %vm351, %v2266, %v2197
  %2268 = vrot.lane.b32.xlu0 %v2267, 112
  %v2269 = vpop.permute.xlu0 %2268
  %2271 = vst.msk [vmem:[#allocation5] sm:$0x3] %vm2262, %v2269
  %s2272 = ssub.s32 0, 0
  %p2273 = scmp.lt.s32.totalorder %s2272, 0
  %s2274 = scalar_select %p2273, %s2272, 0
  %s2275 = smul.addr %s2274, 4
  %s2276 = scalar_lea.vmem %s5, %s2275
  // Predicated region
  $region22: #{bert_lstm_forward.40} parent=0 // pred_check
    _
  $region23: #{bert_lstm_forward.40} parent=0 // pred_check_branch
    %2278 = sbr.rel (0) target = $region25
  $region24: #{bert_lstm_forward.40} parent=0 // pred_region
    _
  $region25: #{bert_lstm_forward.40} parent=0 // pred_fallthru
    _
  // Predicated region
  $region26: #{bert_lstm_forward.40} parent=0 // pred_check
    _
  $region27: #{bert_lstm_forward.40} parent=0 // pred_check_branch
    %2280 = sbr.rel (0) target = $region29
  $region28: #{bert_lstm_forward.40} parent=0 // pred_region
    %s2281 = ssub.s32 0, 0
  $region29: #{bert_lstm_forward.40} parent=0 // pred_fallthru
    _
  // Predicated region
  $region30: #{bert_lstm_forward.40} parent=0 // pred_check
    _
  $region31: #{bert_lstm_forward.40} parent=0 // pred_check_branch
    %2283 = sbr.rel (0) target = $region33
  $region32: #{bert_lstm_forward.40} parent=0 // pred_region
    _
  $region33: #{bert_lstm_forward.40} parent=0 // pred_fallthru
    _
  // Predicated region
  $region34: #{bert_lstm_forward.40} parent=0 // pred_check
    _
  $region35: #{bert_lstm_forward.40} parent=0 // pred_check_branch
    %2285 = sbr.rel (0) target = $region37
  $region36: #{bert_lstm_forward.40} parent=0 // pred_region
    %s2286 = ssub.s32 0, 0
    %p2287 = scmp.lt.s32.totalorder %s2286, 0
    %s2288 = scalar_select %p2287, %s2286, 0
    %s2289 = smul.addr %s2288, 4
    %s2290 = scalar_lea.vmem %s5, %s2289
  $region37: #{bert_lstm_forward.40} parent=0 // pred_fallthru
    _

</llo_original>
